<compile_context>
chip_gen: v5e
topology: v5e:2x2
jax: 0.10.0
libtpu: 0.0.40
codegen_flags: <defaults>
</compile_context>

<pallas_src>
import jax
import jax.numpy as jnp
from jax.experimental import pallas as pl
from jax.experimental.pallas import tpu as pltpu


def _dice(x, alpha, eps=1e-9):
    """Dice activation: batch-norm-style normalization over dim=0 (batch).

    Blend written as x * (alpha + (1 - alpha) * p)  ==  alpha*x*(1-p) + x*p.
    torch.var's unbiased default (ddof=1) is reproduced; guard B == 1.
    """
    mean = jnp.mean(x, axis=0, keepdims=True)
    centered = x - mean
    var = jnp.sum(centered * centered, axis=0, keepdims=True) / max(x.shape[0] - 1, 1)
    p = jax.nn.sigmoid(centered * jax.lax.rsqrt(var + eps))
    return x * (alpha + (1.0 - alpha) * p)


def din_kernel(scalars_ref, query_ref, ub_ref, mask_ref,
               wqd_ref, wcat_ref, ab1_ref,
               aw2_ref, ab2_ref, aw3_ref,
               mw1_ref, mb1_ref, mw2_ref, mb2_ref, mw3_ref,
               out_ref, interest_ref):
    t = pl.program_id(0)
    # Scalars from SMEM: [alpha1, alpha2, ab3, mb3]
    alpha1 = scalars_ref[0]
    alpha2 = scalars_ref[1]
    ab3 = scalars_ref[2]
    mb3 = scalars_ref[3]

    @pl.when(t == 0)
    def _():
        interest_ref[...] = jnp.zeros_like(interest_ref)

    query = query_ref[...]                                   # (B, E) f32
    B, Tt, E = ub_ref.shape

    # Mask applied exactly once; one lane->sublane relayout per tile, reused.
    mask3 = mask_ref[...][:, :, None]                        # (B, Tt, 1) f32
    ub = ub_ref[...] * mask3                                 # (B, Tt, E) f32

    q_bf = query.astype(jnp.bfloat16)

    # --- ActivationUnit layer 1.  Feature concat folded algebraically and the
    #     two E-contractions merged into ONE (B*Tt, 2E) @ (2E, 32) matmul:
    #       cat([q, ub, q-ub, q*ub]) @ W1
    #         == q @ (Wq + Wd) + cat([ub, q*ub], -1) @ cat([Wu - Wd, Wp], 0)
    h_q = jnp.dot(q_bf, wqd_ref[...],
                  preferred_element_type=jnp.float32)        # (B, 32)
    lhs = jnp.concatenate([ub, query[:, None, :] * ub], axis=-1)  # (B, Tt, 2E)
    lhs = lhs.reshape(B * Tt, 2 * E).astype(jnp.bfloat16)
    h1 = jnp.dot(lhs, wcat_ref[...],
                 preferred_element_type=jnp.float32)         # (B*Tt, 32)
    F1 = h1.shape[-1]
    h1 = h1.reshape(B, Tt, F1) + h_q[:, None, :] + ab1_ref[...][None]
    h1 = _dice(h1, alpha1)                                   # (B, Tt, 32)

    # --- ActivationUnit layer 2: flattened (B*Tt, 32) @ (32, 16) on the MXU.
    F2 = aw2_ref.shape[-1]
    h2 = jnp.dot(h1.reshape(B * Tt, F1).astype(jnp.bfloat16), aw2_ref[...],
                 preferred_element_type=jnp.float32) + ab2_ref[...]
    h2 = _dice(h2.reshape(B, Tt, F2), alpha2)                # (B, Tt, 16)

    # --- ActivationUnit layer 3 (16 -> 1): VPU multiply + lane reduce with
    #     keepdims so the score broadcast needs no extra relayout.
    scores = jnp.sum(h2 * aw3_ref[...][None], axis=-1, keepdims=True) + ab3

    # --- Attention pooling: ub already masked; accumulate across T tiles.
    interest_ref[...] += jnp.sum(ub * scores, axis=1)        # (B, E)

    # --- Prediction MLP epilogue on the last T tile.
    @pl.when(t == pl.num_programs(0) - 1)
    def _():
        comb = jnp.concatenate([interest_ref[...], query], axis=-1)   # (B, 2E)
        z = jnp.dot(comb.astype(jnp.bfloat16), mw1_ref[...],
                    preferred_element_type=jnp.float32) + mb1_ref[...]
        z = jnp.maximum(z, 0.0)                                       # (B, 32)
        z = jnp.dot(z.astype(jnp.bfloat16), mw2_ref[...],
                    preferred_element_type=jnp.float32) + mb2_ref[...]
        z = jnp.maximum(z, 0.0)                                       # (B, 16)
        logit = jnp.sum(z * mw3_ref[...], axis=-1) + mb3              # (B,)
        # Lane-dense (1, B) output (B on the lane axis).
        out_ref[...] = jax.nn.sigmoid(logit)[None, :]


def init_params(key, feature_dim, embed_dim, fc_dims=(32, 16), mlp_dims=(32, 16)):
    """Deterministic synthetic parameters matching the torch module's shapes."""
    ks = jax.random.split(key, 13)
    E = embed_dim

    def lin(kw, kb, d_in, d_out):
        w = jax.random.normal(kw, (d_in, d_out), jnp.float32) * 0.1
        b = jax.random.normal(kb, (1, d_out), jnp.float32) * 0.05
        return w, b

    params = {}
    params['embedding'] = jax.random.normal(
        ks[0], (feature_dim + 1, E), jnp.float32) * 0.1

    # ActivationUnit fc: Linear(4E,32), Dice, Linear(32,16), Dice, Linear(16,1)
    params['aw1'], params['ab1'] = lin(ks[1], ks[2], 4 * E, fc_dims[0])
    params['aalpha1'] = jnp.full((1, 1), 0.25, jnp.float32)
    params['aw2'], params['ab2'] = lin(ks[3], ks[4], fc_dims[0], fc_dims[1])
    params['aalpha2'] = jnp.full((1, 1), 0.25, jnp.float32)
    params['aw3'], params['ab3'] = lin(ks[5], ks[6], fc_dims[1], 1)

    # Prediction MLP: Linear(2E,32), ReLU, Linear(32,16), ReLU, Linear(16,1)
    params['mw1'], params['mb1'] = lin(ks[7], ks[8], 2 * E, mlp_dims[0])
    params['mw2'], params['mb2'] = lin(ks[9], ks[10], mlp_dims[0], mlp_dims[1])
    params['mw3'], params['mb3'] = lin(ks[11], ks[12], mlp_dims[1], 1)
    return params


def _pick_t_tile(T):
    """Largest T tile that divides T and keeps the lane-dense (B, T_tile) mask
    block legal (multiple of 128), else fall back to the full T (gridless)."""
    for cand in (512, 256, 128):
        if T % cand == 0:
            return cand
    return T


@jax.jit
def din_forward(x, params):
    """x: int32 (B, T+1); last column is the target-ad id.  Returns (B,)."""
    emb = params['embedding']
    behaviors = x[:, :-1]                                    # (B, T)
    ads = x[:, -1]                                           # (B,)
    mask = (behaviors > 0).astype(jnp.float32)               # (B, T) lane-dense
    query = jnp.take(emb, ads, axis=0)                       # (B, E)
    user_behavior = jnp.take(emb, behaviors, axis=0)         # (B, T, E), unmasked

    B, T = behaviors.shape
    E = emb.shape[1]
    t_tile = _pick_t_tile(T)
    n_t = T // t_tile

    # Fold the 4E feature concat: W1 row-slices -> (Wq+Wd) and the merged
    # stack cat([Wu-Wd, Wp], axis=0) so the kernel runs ONE 2E-contraction.
    aw1 = params['aw1']
    wq, wu, wd, wp = aw1[:E], aw1[E:2 * E], aw1[2 * E:3 * E], aw1[3 * E:]
    wqd = (wq + wd).astype(jnp.bfloat16)                               # (E, 32)
    wcat = jnp.concatenate([wu - wd, wp], axis=0).astype(jnp.bfloat16)  # (2E, 32)

    aw3_row = params['aw3'].reshape(1, -1)                   # (1, 16)
    mw3_row = params['mw3'].reshape(1, -1)                   # (1, 16)

    # Scalars to SMEM: [alpha1, alpha2, ab3, mb3].
    scalars = jnp.concatenate([
        params['aalpha1'].reshape(-1), params['aalpha2'].reshape(-1),
        params['ab3'].reshape(-1), params['mb3'].reshape(-1)])

    inputs = [
        scalars, query, user_behavior, mask,
        wqd, wcat, params['ab1'],
        params['aw2'].astype(jnp.bfloat16), params['ab2'], aw3_row,
        params['mw1'].astype(jnp.bfloat16), params['mb1'],
        params['mw2'].astype(jnp.bfloat16), params['mb2'], mw3_row,
    ]

    def full_spec(shape):
        rank = len(shape)
        return pl.BlockSpec(shape, lambda t, _r=rank: (0,) * _r)

    in_specs = [
        pl.BlockSpec(memory_space=pltpu.MemorySpace.SMEM),       # scalars
        full_spec((B, E)),                                       # query
        pl.BlockSpec((B, t_tile, E), lambda t: (0, t, 0)),       # user_behavior
        pl.BlockSpec((B, t_tile), lambda t: (0, t)),             # mask
        full_spec(wqd.shape), full_spec(wcat.shape),
        full_spec(params['ab1'].shape),
        full_spec(params['aw2'].shape), full_spec(params['ab2'].shape),
        full_spec(aw3_row.shape),
        full_spec(params['mw1'].shape), full_spec(params['mb1'].shape),
        full_spec(params['mw2'].shape), full_spec(params['mb2'].shape),
        full_spec(mw3_row.shape),
    ]

    out = pl.pallas_call(
        din_kernel,
        out_shape=jax.ShapeDtypeStruct((1, B), jnp.float32),
        grid=(n_t,),
        in_specs=in_specs,
        out_specs=pl.BlockSpec((1, B), lambda t: (0, 0)),
        scratch_shapes=[pltpu.VMEM((B, E), jnp.float32)],
        compiler_params=pltpu.CompilerParams(
            dimension_semantics=("arbitrary",)),    # interest accumulates over T
    )(*inputs)
    return out[0]                                            # (B,)


def din_reference(x, params):
    """Pure-JAX f32 reference mirroring the PyTorch forward exactly."""
    emb = params['embedding']
    behaviors = x[:, :-1]
    ads = x[:, -1]
    mask = (behaviors > 0).astype(jnp.float32)[..., None]
    query = jnp.take(emb, ads, axis=0)
    ub = jnp.take(emb, behaviors, axis=0) * mask
    B, T, E = ub.shape
    queries = jnp.broadcast_to(query[:, None, :], (B, T, E))
    feats = jnp.concatenate([queries, ub, queries - ub, queries * ub], axis=-1)
    h = feats @ params['aw1'] + params['ab1']
    h = _dice(h, params['aalpha1'][0, 0])
    h = h @ params['aw2'] + params['ab2']
    h = _dice(h, params['aalpha2'][0, 0])
    scores = h @ params['aw3'] + params['ab3']
    interest = jnp.sum(ub * scores * mask, axis=1)
    comb = jnp.concatenate([interest, query], axis=-1)
    z = jnp.maximum(comb @ params['mw1'] + params['mb1'], 0.0)
    z = jnp.maximum(z @ params['mw2'] + params['mb2'], 0.0)
    z = z @ params['mw3'] + params['mb3']
    return jax.nn.sigmoid(z[:, 0])


if __name__ == "__main__":
    feature_dim = 20
    embed_dim = 8
    batch = 4
    seq_len = 384        # 3 sequence tiles of 128 -> exercises the T-grid
                         # accumulator + pl.when epilogue path

    key = jax.random.PRNGKey(0)
    k_param, k_x = jax.random.split(key)

    params = init_params(k_param, feature_dim, embed_dim)

    # integer feature ids in [0, feature_dim]; 0 acts as padding (masked out)
    x = jax.random.randint(k_x, (batch, seq_len + 1), 0, feature_dim + 1,
                           dtype=jnp.int32)

    out = jax.block_until_ready(din_forward(x, params))
    ref = jax.block_until_ready(din_reference(x, params))

    assert out.shape == (batch,)
    assert bool(jnp.all(jnp.isfinite(out)))
    # bf16 MXU inputs with f32 accumulation -> loose tolerance vs f32 reference
    assert bool(jnp.allclose(out, ref, atol=3e-2)), (out, ref)
    print("KERNEL_OK")
</pallas_src>

<mosaic_0001>
module attributes {stable_mosaic.version = 11 : i64} {
  func.func @din_kernel(%arg0: i32, %arg1: memref<4xf32, #tpu.memory_space<smem>>, %arg2: memref<4x8xf32, #tpu.memory_space<vmem>>, %arg3: memref<4x128x8xf32, #tpu.memory_space<vmem>>, %arg4: memref<4x128xf32, #tpu.memory_space<vmem>>, %arg5: memref<8x32xbf16, #tpu.memory_space<vmem>>, %arg6: memref<16x32xbf16, #tpu.memory_space<vmem>>, %arg7: memref<1x32xf32, #tpu.memory_space<vmem>>, %arg8: memref<32x16xbf16, #tpu.memory_space<vmem>>, %arg9: memref<1x16xf32, #tpu.memory_space<vmem>>, %arg10: memref<1x16xf32, #tpu.memory_space<vmem>>, %arg11: memref<16x32xbf16, #tpu.memory_space<vmem>>, %arg12: memref<1x32xf32, #tpu.memory_space<vmem>>, %arg13: memref<32x16xbf16, #tpu.memory_space<vmem>>, %arg14: memref<1x16xf32, #tpu.memory_space<vmem>>, %arg15: memref<1x16xf32, #tpu.memory_space<vmem>>, %arg16: memref<1x4xf32, #tpu.memory_space<vmem>>, %arg17: memref<4x8xf32, #tpu.memory_space<vmem>>) attributes {dimension_semantics = [#tpu.dimension_semantics<arbitrary>], iteration_bounds = array<i64: 3>, scalar_prefetch = 0 : i64, scratch_operands = 1 : i64, tpu.core_type = #tpu.core_type<tc>, window_params = [{transform_indices = @transform_0, window_bounds = array<i64: 4>}, {pipeline_mode = #tpu.pipeline_mode<synchronous>, transform_indices = @transform_1, window_bounds = array<i64: 4, 8>}, {transform_indices = @transform_2, window_bounds = array<i64: 4, 128, 8>}, {transform_indices = @transform_3, window_bounds = array<i64: 4, 128>}, {pipeline_mode = #tpu.pipeline_mode<synchronous>, transform_indices = @transform_4, window_bounds = array<i64: 8, 32>}, {pipeline_mode = #tpu.pipeline_mode<synchronous>, transform_indices = @transform_5, window_bounds = array<i64: 16, 32>}, {pipeline_mode = #tpu.pipeline_mode<synchronous>, transform_indices = @transform_6, window_bounds = array<i64: 1, 32>}, {pipeline_mode = #tpu.pipeline_mode<synchronous>, transform_indices = @transform_7, window_bounds = array<i64: 32, 16>}, {pipeline_mode = #tpu.pipeline_mode<synchronous>, transform_indices = @transform_8, window_bounds = array<i64: 1, 16>}, {pipeline_mode = #tpu.pipeline_mode<synchronous>, transform_indices = @transform_9, window_bounds = array<i64: 1, 16>}, {pipeline_mode = #tpu.pipeline_mode<synchronous>, transform_indices = @transform_10, window_bounds = array<i64: 16, 32>}, {pipeline_mode = #tpu.pipeline_mode<synchronous>, transform_indices = @transform_11, window_bounds = array<i64: 1, 32>}, {pipeline_mode = #tpu.pipeline_mode<synchronous>, transform_indices = @transform_12, window_bounds = array<i64: 32, 16>}, {pipeline_mode = #tpu.pipeline_mode<synchronous>, transform_indices = @transform_13, window_bounds = array<i64: 1, 16>}, {pipeline_mode = #tpu.pipeline_mode<synchronous>, transform_indices = @transform_14, window_bounds = array<i64: 1, 16>}, {pipeline_mode = #tpu.pipeline_mode<synchronous>, transform_indices = @transform_15, window_bounds = array<i64: 1, 4>}]} {
    %c0 = arith.constant 0 : index
    %0 = memref.load %arg1[%c0] : memref<4xf32, #tpu.memory_space<smem>>
    %c1 = arith.constant 1 : index
    %1 = memref.load %arg1[%c1] : memref<4xf32, #tpu.memory_space<smem>>
    %c2 = arith.constant 2 : index
    %2 = memref.load %arg1[%c2] : memref<4xf32, #tpu.memory_space<smem>>
    %c3 = arith.constant 3 : index
    %3 = memref.load %arg1[%c3] : memref<4xf32, #tpu.memory_space<smem>>
    %c0_i32 = arith.constant 0 : i32
    %4 = arith.cmpi eq, %arg0, %c0_i32 : i32
    %5 = arith.extui %4 : i1 to i32
    %c0_i32_0 = arith.constant 0 : i32
    %6 = arith.cmpi ne, %5, %c0_i32_0 : i32
    scf.if %6 {
      %cst_43 = arith.constant 0.000000e+00 : f32
      %111 = vector.broadcast %cst_43 : f32 to vector<4x8xf32>
      %c0_44 = arith.constant 0 : index
      %c0_45 = arith.constant 0 : index
      %112 = vector.load %arg17[%c0_44, %c0_45] : memref<4x8xf32, #tpu.memory_space<vmem>>, vector<4x8xf32>
      tpu.vector_store %arg17[%c0_44, %c0_45], %111 {strides = array<i32>} : memref<4x8xf32, #tpu.memory_space<vmem>>, vector<4x8xf32>,
    } else {
    }
    %c0_1 = arith.constant 0 : index
    %c0_2 = arith.constant 0 : index
    %7 = vector.load %arg2[%c0_1, %c0_2] : memref<4x8xf32, #tpu.memory_space<vmem>>, vector<4x8xf32>
    %c0_3 = arith.constant 0 : index
    %c0_4 = arith.constant 0 : index
    %8 = vector.load %arg4[%c0_3, %c0_4] : memref<4x128xf32, #tpu.memory_space<vmem>>, vector<4x128xf32>
    %9 = vector.shape_cast %8 : vector<4x128xf32> to vector<4x128x1xf32>
    %c0_5 = arith.constant 0 : index
    %c0_6 = arith.constant 0 : index
    %c0_7 = arith.constant 0 : index
    %10 = vector.load %arg3[%c0_5, %c0_6, %c0_7] : memref<4x128x8xf32, #tpu.memory_space<vmem>>, vector<4x128x8xf32>
    %11 = vector.broadcast %9 : vector<4x128x1xf32> to vector<4x128x8xf32>
    %12 = arith.mulf %10, %11 : vector<4x128x8xf32>
    %13 = arith.truncf %7 : vector<4x8xf32> to vector<4x8xbf16>
    %c0_8 = arith.constant 0 : index
    %c0_9 = arith.constant 0 : index
    %14 = vector.load %arg5[%c0_8, %c0_9] : memref<8x32xbf16, #tpu.memory_space<vmem>>, vector<8x32xbf16>
    %cst = arith.constant dense<0.000000e+00> : vector<4x32xf32>
    %15 = tpu.matmul %13, %14, %cst {dimension_numbers = #tpu.dot_dimension_numbers<[1], [0], [0], [1], [0, 0, 1, 1], [], []>} : vector<4x8xbf16>, vector<8x32xbf16>, vector<4x32xf32> -> vector<4x32xf32>
    %16 = vector.shape_cast %7 : vector<4x8xf32> to vector<4x1x8xf32>
    %17 = vector.broadcast %16 : vector<4x1x8xf32> to vector<4x128x8xf32>
    %18 = arith.mulf %17, %12 : vector<4x128x8xf32>
    %19 = tpu.concatenate %12, %18 in 2 : vector<4x128x8xf32>, vector<4x128x8xf32> -> vector<4x128x16xf32>
    %20 = vector.shape_cast %19 : vector<4x128x16xf32> to vector<512x16xf32>
    %21 = arith.truncf %20 : vector<512x16xf32> to vector<512x16xbf16>
    %c0_10 = arith.constant 0 : index
    %c0_11 = arith.constant 0 : index
    %22 = vector.load %arg6[%c0_10, %c0_11] : memref<16x32xbf16, #tpu.memory_space<vmem>>, vector<16x32xbf16>
    %cst_12 = arith.constant dense<0.000000e+00> : vector<512x32xf32>
    %23 = tpu.matmul %21, %22, %cst_12 {dimension_numbers = #tpu.dot_dimension_numbers<[1], [0], [0], [1], [0, 0, 1, 1], [], []>} : vector<512x16xbf16>, vector<16x32xbf16>, vector<512x32xf32> -> vector<512x32xf32>
    %24 = vector.shape_cast %23 : vector<512x32xf32> to vector<4x128x32xf32>
    %25 = vector.shape_cast %15 : vector<4x32xf32> to vector<4x1x32xf32>
    %26 = vector.broadcast %25 : vector<4x1x32xf32> to vector<4x128x32xf32>
    %27 = arith.addf %24, %26 : vector<4x128x32xf32>
    %c0_13 = arith.constant 0 : index
    %c0_14 = arith.constant 0 : index
    %28 = vector.load %arg7[%c0_13, %c0_14] : memref<1x32xf32, #tpu.memory_space<vmem>>, vector<1x32xf32>
    %29 = vector.shape_cast %28 : vector<1x32xf32> to vector<1x1x32xf32>
    %30 = vector.broadcast %29 : vector<1x1x32xf32> to vector<4x128x32xf32>
    %31 = arith.addf %27, %30 : vector<4x128x32xf32>
    %cst_15 = arith.constant dense<0.000000e+00> : vector<128x32xf32>
    %32 = vector.multi_reduction <add>, %31, %cst_15 [0] : vector<4x128x32xf32> to vector<128x32xf32>
    %33 = vector.shape_cast %32 : vector<128x32xf32> to vector<1x128x32xf32>
    %cst_16 = arith.constant 4.000000e+00 : f32
    %34 = vector.broadcast %cst_16 : f32 to vector<1x128x32xf32>
    %35 = arith.divf %33, %34 : vector<1x128x32xf32>
    %36 = vector.broadcast %35 : vector<1x128x32xf32> to vector<4x128x32xf32>
    %37 = arith.subf %31, %36 : vector<4x128x32xf32>
    %38 = arith.mulf %37, %37 : vector<4x128x32xf32>
    %cst_17 = arith.constant dense<0.000000e+00> : vector<128x32xf32>
    %39 = vector.multi_reduction <add>, %38, %cst_17 [0] : vector<4x128x32xf32> to vector<128x32xf32>
    %40 = vector.shape_cast %39 : vector<128x32xf32> to vector<1x128x32xf32>
    %cst_18 = arith.constant 3.000000e+00 : f32
    %41 = vector.broadcast %cst_18 : f32 to vector<1x128x32xf32>
    %42 = arith.divf %40, %41 : vector<1x128x32xf32>
    %cst_19 = arith.constant 9.99999971E-10 : f32
    %43 = vector.broadcast %cst_19 : f32 to vector<1x128x32xf32>
    %44 = arith.addf %42, %43 : vector<1x128x32xf32>
    %45 = math.rsqrt %44 : vector<1x128x32xf32>
    %46 = vector.broadcast %45 : vector<1x128x32xf32> to vector<4x128x32xf32>
    %47 = arith.mulf %37, %46 : vector<4x128x32xf32>
    %48 = arith.negf %47 : vector<4x128x32xf32>
    %49 = math.exp %48 : vector<4x128x32xf32>
    %cst_20 = arith.constant 1.000000e+00 : f32
    %50 = vector.broadcast %cst_20 : f32 to vector<4x128x32xf32>
    %51 = arith.addf %50, %49 : vector<4x128x32xf32>
    %52 = arith.divf %50, %51 : vector<4x128x32xf32>
    %cst_21 = arith.constant 1.000000e+00 : f32
    %53 = arith.subf %cst_21, %0 : f32
    %54 = vector.broadcast %53 : f32 to vector<4x128x32xf32>
    %55 = arith.mulf %54, %52 : vector<4x128x32xf32>
    %56 = vector.broadcast %0 : f32 to vector<4x128x32xf32>
    %57 = arith.addf %56, %55 : vector<4x128x32xf32>
    %58 = arith.mulf %31, %57 : vector<4x128x32xf32>
    %59 = vector.shape_cast %58 : vector<4x128x32xf32> to vector<512x32xf32>
    %60 = arith.truncf %59 : vector<512x32xf32> to vector<512x32xbf16>
    %c0_22 = arith.constant 0 : index
    %c0_23 = arith.constant 0 : index
    %61 = vector.load %arg8[%c0_22, %c0_23] : memref<32x16xbf16, #tpu.memory_space<vmem>>, vector<32x16xbf16>
    %cst_24 = arith.constant dense<0.000000e+00> : vector<512x16xf32>
    %62 = tpu.matmul %60, %61, %cst_24 {dimension_numbers = #tpu.dot_dimension_numbers<[1], [0], [0], [1], [0, 0, 1, 1], [], []>} : vector<512x32xbf16>, vector<32x16xbf16>, vector<512x16xf32> -> vector<512x16xf32>
    %c0_25 = arith.constant 0 : index
    %c0_26 = arith.constant 0 : index
    %63 = vector.load %arg9[%c0_25, %c0_26] : memref<1x16xf32, #tpu.memory_space<vmem>>, vector<1x16xf32>
    %64 = vector.broadcast %63 : vector<1x16xf32> to vector<512x16xf32>
    %65 = arith.addf %62, %64 : vector<512x16xf32>
    %66 = vector.shape_cast %65 : vector<512x16xf32> to vector<4x128x16xf32>
    %cst_27 = arith.constant dense<0.000000e+00> : vector<128x16xf32>
    %67 = vector.multi_reduction <add>, %66, %cst_27 [0] : vector<4x128x16xf32> to vector<128x16xf32>
    %68 = vector.shape_cast %67 : vector<128x16xf32> to vector<1x128x16xf32>
    %cst_28 = arith.constant 4.000000e+00 : f32
    %69 = vector.broadcast %cst_28 : f32 to vector<1x128x16xf32>
    %70 = arith.divf %68, %69 : vector<1x128x16xf32>
    %71 = vector.broadcast %70 : vector<1x128x16xf32> to vector<4x128x16xf32>
    %72 = arith.subf %66, %71 : vector<4x128x16xf32>
    %73 = arith.mulf %72, %72 : vector<4x128x16xf32>
    %cst_29 = arith.constant dense<0.000000e+00> : vector<128x16xf32>
    %74 = vector.multi_reduction <add>, %73, %cst_29 [0] : vector<4x128x16xf32> to vector<128x16xf32>
    %75 = vector.shape_cast %74 : vector<128x16xf32> to vector<1x128x16xf32>
    %cst_30 = arith.constant 3.000000e+00 : f32
    %76 = vector.broadcast %cst_30 : f32 to vector<1x128x16xf32>
    %77 = arith.divf %75, %76 : vector<1x128x16xf32>
    %cst_31 = arith.constant 9.99999971E-10 : f32
    %78 = vector.broadcast %cst_31 : f32 to vector<1x128x16xf32>
    %79 = arith.addf %77, %78 : vector<1x128x16xf32>
    %80 = math.rsqrt %79 : vector<1x128x16xf32>
    %81 = vector.broadcast %80 : vector<1x128x16xf32> to vector<4x128x16xf32>
    %82 = arith.mulf %72, %81 : vector<4x128x16xf32>
    %83 = arith.negf %82 : vector<4x128x16xf32>
    %84 = math.exp %83 : vector<4x128x16xf32>
    %cst_32 = arith.constant 1.000000e+00 : f32
    %85 = vector.broadcast %cst_32 : f32 to vector<4x128x16xf32>
    %86 = arith.addf %85, %84 : vector<4x128x16xf32>
    %87 = arith.divf %85, %86 : vector<4x128x16xf32>
    %cst_33 = arith.constant 1.000000e+00 : f32
    %88 = arith.subf %cst_33, %1 : f32
    %89 = vector.broadcast %88 : f32 to vector<4x128x16xf32>
    %90 = arith.mulf %89, %87 : vector<4x128x16xf32>
    %91 = vector.broadcast %1 : f32 to vector<4x128x16xf32>
    %92 = arith.addf %91, %90 : vector<4x128x16xf32>
    %93 = arith.mulf %66, %92 : vector<4x128x16xf32>
    %c0_34 = arith.constant 0 : index
    %c0_35 = arith.constant 0 : index
    %94 = vector.load %arg10[%c0_34, %c0_35] : memref<1x16xf32, #tpu.memory_space<vmem>>, vector<1x16xf32>
    %95 = vector.shape_cast %94 : vector<1x16xf32> to vector<1x1x16xf32>
    %96 = vector.broadcast %95 : vector<1x1x16xf32> to vector<4x128x16xf32>
    %97 = arith.mulf %93, %96 : vector<4x128x16xf32>
    %cst_36 = arith.constant dense<0.000000e+00> : vector<4x128xf32>
    %98 = vector.multi_reduction <add>, %97, %cst_36 [2] : vector<4x128x16xf32> to vector<4x128xf32>
    %99 = vector.shape_cast %98 : vector<4x128xf32> to vector<4x128x1xf32>
    %100 = vector.broadcast %2 : f32 to vector<4x128x1xf32>
    %101 = arith.addf %99, %100 : vector<4x128x1xf32>
    %c0_37 = arith.constant 0 : index
    %c0_38 = arith.constant 0 : index
    %102 = vector.load %arg17[%c0_37, %c0_38] : memref<4x8xf32, #tpu.memory_space<vmem>>, vector<4x8xf32>
    %103 = vector.broadcast %101 : vector<4x128x1xf32> to vector<4x128x8xf32>
    %104 = arith.mulf %12, %103 : vector<4x128x8xf32>
    %cst_39 = arith.constant dense<0.000000e+00> : vector<4x8xf32>
    %105 = vector.multi_reduction <add>, %104, %cst_39 [1] : vector<4x128x8xf32> to vector<4x8xf32>
    %106 = arith.addf %102, %105 : vector<4x8xf32>
    %c0_40 = arith.constant 0 : index
    %c0_41 = arith.constant 0 : index
    %107 = vector.load %arg17[%c0_40, %c0_41] : memref<4x8xf32, #tpu.memory_space<vmem>>, vector<4x8xf32>
    tpu.vector_store %arg17[%c0_40, %c0_41], %106 {strides = array<i32>} : memref<4x8xf32, #tpu.memory_space<vmem>>, vector<4x8xf32>,
    %c2_i32 = arith.constant 2 : i32
    %108 = arith.cmpi eq, %arg0, %c2_i32 : i32
    %109 = arith.extui %108 : i1 to i32
    %c0_i32_42 = arith.constant 0 : i32
    %110 = arith.cmpi ne, %109, %c0_i32_42 : i32
    scf.if %110 {
      %c0_43 = arith.constant 0 : index
      %c0_44 = arith.constant 0 : index
      %111 = vector.load %arg17[%c0_43, %c0_44] : memref<4x8xf32, #tpu.memory_space<vmem>>, vector<4x8xf32>
      %112 = tpu.concatenate %111, %7 in 1 : vector<4x8xf32>, vector<4x8xf32> -> vector<4x16xf32>
      %113 = arith.truncf %112 : vector<4x16xf32> to vector<4x16xbf16>
      %c0_45 = arith.constant 0 : index
      %c0_46 = arith.constant 0 : index
      %114 = vector.load %arg11[%c0_45, %c0_46] : memref<16x32xbf16, #tpu.memory_space<vmem>>, vector<16x32xbf16>
      %cst_47 = arith.constant dense<0.000000e+00> : vector<4x32xf32>
      %115 = tpu.matmul %113, %114, %cst_47 {dimension_numbers = #tpu.dot_dimension_numbers<[1], [0], [0], [1], [0, 0, 1, 1], [], []>} : vector<4x16xbf16>, vector<16x32xbf16>, vector<4x32xf32> -> vector<4x32xf32>
      %c0_48 = arith.constant 0 : index
      %c0_49 = arith.constant 0 : index
      %116 = vector.load %arg12[%c0_48, %c0_49] : memref<1x32xf32, #tpu.memory_space<vmem>>, vector<1x32xf32>
      %117 = vector.broadcast %116 : vector<1x32xf32> to vector<4x32xf32>
      %118 = arith.addf %115, %117 : vector<4x32xf32>
      %cst_50 = arith.constant 0.000000e+00 : f32
      %119 = vector.broadcast %cst_50 : f32 to vector<4x32xf32>
      %120 = arith.maximumf %118, %119 : vector<4x32xf32>
      %121 = arith.truncf %120 : vector<4x32xf32> to vector<4x32xbf16>
      %c0_51 = arith.constant 0 : index
      %c0_52 = arith.constant 0 : index
      %122 = vector.load %arg13[%c0_51, %c0_52] : memref<32x16xbf16, #tpu.memory_space<vmem>>, vector<32x16xbf16>
      %cst_53 = arith.constant dense<0.000000e+00> : vector<4x16xf32>
      %123 = tpu.matmul %121, %122, %cst_53 {dimension_numbers = #tpu.dot_dimension_numbers<[1], [0], [0], [1], [0, 0, 1, 1], [], []>} : vector<4x32xbf16>, vector<32x16xbf16>, vector<4x16xf32> -> vector<4x16xf32>
      %c0_54 = arith.constant 0 : index
      %c0_55 = arith.constant 0 : index
      %124 = vector.load %arg14[%c0_54, %c0_55] : memref<1x16xf32, #tpu.memory_space<vmem>>, vector<1x16xf32>
      %125 = vector.broadcast %124 : vector<1x16xf32> to vector<4x16xf32>
      %126 = arith.addf %123, %125 : vector<4x16xf32>
      %cst_56 = arith.constant 0.000000e+00 : f32
      %127 = vector.broadcast %cst_56 : f32 to vector<4x16xf32>
      %128 = arith.maximumf %126, %127 : vector<4x16xf32>
      %c0_57 = arith.constant 0 : index
      %c0_58 = arith.constant 0 : index
      %129 = vector.load %arg15[%c0_57, %c0_58] : memref<1x16xf32, #tpu.memory_space<vmem>>, vector<1x16xf32>
      %130 = vector.broadcast %129 : vector<1x16xf32> to vector<4x16xf32>
      %131 = arith.mulf %128, %130 : vector<4x16xf32>
      %cst_59 = arith.constant dense<0.000000e+00> : vector<4xf32>
      %132 = vector.multi_reduction <add>, %131, %cst_59 [1] : vector<4x16xf32> to vector<4xf32>
      %133 = vector.broadcast %3 : f32 to vector<4xf32>
      %134 = arith.addf %132, %133 : vector<4xf32>
      %135 = arith.negf %134 : vector<4xf32>
      %136 = math.exp %135 : vector<4xf32>
      %cst_60 = arith.constant 1.000000e+00 : f32
      %137 = vector.broadcast %cst_60 : f32 to vector<4xf32>
      %138 = arith.addf %137, %136 : vector<4xf32>
      %139 = arith.divf %137, %138 : vector<4xf32>
      %140 = vector.shape_cast %139 : vector<4xf32> to vector<1x4xf32>
      %c0_61 = arith.constant 0 : index
      %c0_62 = arith.constant 0 : index
      %141 = vector.load %arg16[%c0_61, %c0_62] : memref<1x4xf32, #tpu.memory_space<vmem>>, vector<1x4xf32>
      tpu.vector_store %arg16[%c0_61, %c0_62], %140 {strides = array<i32>} : memref<1x4xf32, #tpu.memory_space<vmem>>, vector<1x4xf32>,
    } else {
    }
    return
  }
  func.func @transform_0(%arg0: i32) -> i32 {
    %c0_i32 = arith.constant 0 : i32
    %c0_i32_0 = arith.constant 0 : i32
    return %c0_i32 : i32
  }
  func.func @transform_1(%arg0: i32) -> (i32, i32) {
    %c0_i32 = arith.constant 0 : i32
    %c0_i32_0 = arith.constant 0 : i32
    %c0_i32_1 = arith.constant 0 : i32
    return %c0_i32, %c0_i32_0 : i32, i32
  }
  func.func @transform_2(%arg0: i32) -> (i32, i32, i32) {
    %c0_i32 = arith.constant 0 : i32
    %c0_i32_0 = arith.constant 0 : i32
    %c0_i32_1 = arith.constant 0 : i32
    return %c0_i32, %arg0, %c0_i32_0 : i32, i32, i32
  }
  func.func @transform_3(%arg0: i32) -> (i32, i32) {
    %c0_i32 = arith.constant 0 : i32
    %c0_i32_0 = arith.constant 0 : i32
    return %c0_i32, %arg0 : i32, i32
  }
  func.func @transform_4(%arg0: i32) -> (i32, i32) {
    %c0_i32 = arith.constant 0 : i32
    %c0_i32_0 = arith.constant 0 : i32
    %c0_i32_1 = arith.constant 0 : i32
    return %c0_i32, %c0_i32_0 : i32, i32
  }
  func.func @transform_5(%arg0: i32) -> (i32, i32) {
    %c0_i32 = arith.constant 0 : i32
    %c0_i32_0 = arith.constant 0 : i32
    %c0_i32_1 = arith.constant 0 : i32
    return %c0_i32, %c0_i32_0 : i32, i32
  }
  func.func @transform_6(%arg0: i32) -> (i32, i32) {
    %c0_i32 = arith.constant 0 : i32
    %c0_i32_0 = arith.constant 0 : i32
    %c0_i32_1 = arith.constant 0 : i32
    return %c0_i32, %c0_i32_0 : i32, i32
  }
  func.func @transform_7(%arg0: i32) -> (i32, i32) {
    %c0_i32 = arith.constant 0 : i32
    %c0_i32_0 = arith.constant 0 : i32
    %c0_i32_1 = arith.constant 0 : i32
    return %c0_i32, %c0_i32_0 : i32, i32
  }
  func.func @transform_8(%arg0: i32) -> (i32, i32) {
    %c0_i32 = arith.constant 0 : i32
    %c0_i32_0 = arith.constant 0 : i32
    %c0_i32_1 = arith.constant 0 : i32
    return %c0_i32, %c0_i32_0 : i32, i32
  }
  func.func @transform_9(%arg0: i32) -> (i32, i32) {
    %c0_i32 = arith.constant 0 : i32
    %c0_i32_0 = arith.constant 0 : i32
    %c0_i32_1 = arith.constant 0 : i32
    return %c0_i32, %c0_i32_0 : i32, i32
  }
  func.func @transform_10(%arg0: i32) -> (i32, i32) {
    %c0_i32 = arith.constant 0 : i32
    %c0_i32_0 = arith.constant 0 : i32
    %c0_i32_1 = arith.constant 0 : i32
    return %c0_i32, %c0_i32_0 : i32, i32
  }
  func.func @transform_11(%arg0: i32) -> (i32, i32) {
    %c0_i32 = arith.constant 0 : i32
    %c0_i32_0 = arith.constant 0 : i32
    %c0_i32_1 = arith.constant 0 : i32
    return %c0_i32, %c0_i32_0 : i32, i32
  }
  func.func @transform_12(%arg0: i32) -> (i32, i32) {
    %c0_i32 = arith.constant 0 : i32
    %c0_i32_0 = arith.constant 0 : i32
    %c0_i32_1 = arith.constant 0 : i32
    return %c0_i32, %c0_i32_0 : i32, i32
  }
  func.func @transform_13(%arg0: i32) -> (i32, i32) {
    %c0_i32 = arith.constant 0 : i32
    %c0_i32_0 = arith.constant 0 : i32
    %c0_i32_1 = arith.constant 0 : i32
    return %c0_i32, %c0_i32_0 : i32, i32
  }
  func.func @transform_14(%arg0: i32) -> (i32, i32) {
    %c0_i32 = arith.constant 0 : i32
    %c0_i32_0 = arith.constant 0 : i32
    %c0_i32_1 = arith.constant 0 : i32
    return %c0_i32, %c0_i32_0 : i32, i32
  }
  func.func @transform_15(%arg0: i32) -> (i32, i32) {
    %c0_i32 = arith.constant 0 : i32
    %c0_i32_0 = arith.constant 0 : i32
    %c0_i32_1 = arith.constant 0 : i32
    return %c0_i32, %c0_i32_0 : i32, i32
  }
}

</mosaic_0001>

<llo_original>
// kernel: din_forward.1
$region0: #{din_forward.1}
  #allocation0 [shape = 'u32[]', space=smem, size = 0x4, offset = 0x4, fixed_abs, tag = 'smem constant byte address 0x4 - core index']
  #allocation1 [shape = 'u32[72,128]{1,0:T(1,128)}', space=vmem, size = 0x9000, scoped, tag = 'internal scratch']
  #allocation2 [shape = 'f32[4,8]{1,0:T(4,128)}', space=vmem, size = 0x800, scoped, tag = 'scratch operand']
  %s0 = inlined_call_operand.vmem [shape: f32[4], index: 0, kind: input, shape index: {}]
  %s1 = inlined_call_operand.vmem [shape: f32[4,8], index: 1, kind: input, shape index: {}]
  %s2 = inlined_call_operand.vmem [shape: f32[4,384,8], index: 2, kind: input, shape index: {}]
  %s3 = inlined_call_operand.vmem [shape: f32[4,384], index: 3, kind: input, shape index: {}]
  %s4 = inlined_call_operand.vmem [shape: bf16[8,32], index: 4, kind: input, shape index: {}]
  %s5 = inlined_call_operand.vmem [shape: bf16[16,32], index: 5, kind: input, shape index: {}]
  %s6 = inlined_call_operand.vmem [shape: f32[1,32], index: 6, kind: input, shape index: {}]
  %s7 = inlined_call_operand.vmem [shape: bf16[32,16], index: 7, kind: input, shape index: {}]
  %s8 = inlined_call_operand.vmem [shape: f32[1,16], index: 8, kind: input, shape index: {}]
  %s9 = inlined_call_operand.vmem [shape: f32[1,16], index: 9, kind: input, shape index: {}]
  %s10 = inlined_call_operand.vmem [shape: bf16[16,32], index: 10, kind: input, shape index: {}]
  %s11 = inlined_call_operand.vmem [shape: f32[1,32], index: 11, kind: input, shape index: {}]
  %s12 = inlined_call_operand.vmem [shape: bf16[32,16], index: 12, kind: input, shape index: {}]
  %s13 = inlined_call_operand.vmem [shape: f32[1,16], index: 13, kind: input, shape index: {}]
  %s14 = inlined_call_operand.vmem [shape: f32[1,16], index: 14, kind: input, shape index: {}]
  %s15 = inlined_call_operand.hbm [shape: f32[1,4], index: 15, kind: output, shape index: {}]
  %s16 = sld [smem:[#allocation0]]
  $region143: #{din_forward.1} parent=0
    _
  %s18 = ssub.s32 1, %s16
  %s19 = scalar_select 0, %s18, %s16
  $region1: #{din_forward.1} parent=0
    #allocation3 [shape = 'u8[512]{0}', space=smem, size = 0x200, scoped, tag = 'input window, operand 0, single buffered']
    #allocation4 [shape = 's32[2]{0}', space=sflag, size = 0x8, scoped, tag = 'scoped memory for din_forward.1']
    #allocation5 [shape = 's32[2]{0}', space=sflag, size = 0x8, scoped, tag = 'scoped memory for din_forward.1']
    #allocation6 [shape = 'u8[524288]{0}', space=vmem, size = 0x80000, scoped, tag = 'input window, operand 2']
    #allocation7 [shape = 'u8[512]{0}', space=vmem, size = 0x400, scoped, tag = 'output window, operand 0, single buffered']
    %20 = vsyncpa [#allocation5], 0
    %21 = vsyncpa [#allocation4], 0
    loop: start=0, step=1, limit=5
    $region2: #{din_forward.1} parent=1 // loop_pre_header
      _
    $region3: #{din_forward.1} parent=1 // loop_header
      %s23 = sphi 0, %s27
      %p24 = scmp.ge.s32.totalorder %s23, 5
      %s31 = sphi 0, %s31
      %s33 = sphi 0, %s31
      %s34 = sphi 0, %s33
      %s48 = sphi 0, %s34
      %s52 = sphi 0, %s52
      %s54 = sphi 0, %s52
      %s55 = sphi 0, %s54
      %s69 = sphi 0, %s55
      %s75 = sphi 0, %s77
      %s78 = sphi 0, %s75
      %s79 = sphi 0, %s78
      %s95 = sphi 0, %s79
      %s101 = sphi 0, %s103
      %s104 = sphi 0, %s101
      %s105 = sphi 0, %s104
      %s121 = sphi 0, %s105
      %s125 = sphi 0, %s125
      %s127 = sphi 0, %s125
      %s128 = sphi 0, %s127
      %s142 = sphi 0, %s128
      %s146 = sphi 0, %s146
      %s148 = sphi 0, %s146
      %s149 = sphi 0, %s148
      %s163 = sphi 0, %s149
      %s167 = sphi 0, %s167
      %s169 = sphi 0, %s167
      %s170 = sphi 0, %s169
      %s184 = sphi 0, %s170
      %s188 = sphi 0, %s188
      %s190 = sphi 0, %s188
      %s191 = sphi 0, %s190
      %s205 = sphi 0, %s191
      %s209 = sphi 0, %s209
      %s211 = sphi 0, %s209
      %s212 = sphi 0, %s211
      %s226 = sphi 0, %s212
      %s230 = sphi 0, %s230
      %s232 = sphi 0, %s230
      %s233 = sphi 0, %s232
      %s247 = sphi 0, %s233
      %s251 = sphi 0, %s251
      %s253 = sphi 0, %s251
      %s254 = sphi 0, %s253
      %s268 = sphi 0, %s254
      %s272 = sphi 0, %s272
      %s274 = sphi 0, %s272
      %s275 = sphi 0, %s274
      %s289 = sphi 0, %s275
      %s293 = sphi 0, %s293
      %s295 = sphi 0, %s293
      %s296 = sphi 0, %s295
      %s310 = sphi 0, %s296
      %s314 = sphi 0, %s314
      %s316 = sphi 0, %s314
      %s317 = sphi 0, %s316
      %s331 = sphi 0, %s317
      %s335 = sphi 0, %s335
      %s337 = sphi 0, %s335
      %s338 = sphi 0, %s337
      %s352 = sphi 0, %s338
      %s356 = sphi 0, %s356
      %s358 = sphi 0, %s356
      %s359 = sphi 0, %s358
      %s373 = sphi 0, %s359
    $region4: #{din_forward.1} parent=1 // loop_header_branch
      %26 = sbr.rel (%p24) target = $region8
    $region5: #{din_forward.1} parent=1 // loop_body
      %s28 = ssub.s32 %s23, 1
      %s29 = ssub.s32 %s23, 2
      %s30 = sadd.s32 %s23, 1
      %s32 = sadd.s32 %s31, 1
      %p35 = scmp.eq.s32.totalorder %s23, 2
      %p36 = scmp.ne.s32.totalorder %s31, %s33
      %p37 = scmp.eq.s32.totalorder %s23, 0
      %p38 = por %p36, %p37
      %p39 = scmp.ne.s32.totalorder %s31, %s33
      %p40 = scmp.eq.s32.totalorder %s28, 2
      %p41 = por %p39, %p40
      %p42 = scmp.ne.s32.totalorder %s33, %s34
      %p43 = scmp.eq.s32.totalorder %s28, 0
      %p44 = por %p42, %p43
      %p45 = scmp.ne.s32.totalorder %s33, %s34
      %p46 = scmp.eq.s32.totalorder %s29, 2
      %p47 = por %p45, %p46
      %p49 = scmp.ne.s32.totalorder %s34, %s48
      %p50 = scmp.eq.s32.totalorder %s29, 0
      %p51 = por %p49, %p50
      %s53 = sadd.s32 %s52, 1
      %p56 = scmp.eq.s32.totalorder %s23, 2
      %p57 = scmp.ne.s32.totalorder %s52, %s54
      %p58 = scmp.eq.s32.totalorder %s23, 0
      %p59 = por %p57, %p58
      %p60 = scmp.ne.s32.totalorder %s52, %s54
      %p61 = scmp.eq.s32.totalorder %s28, 2
      %p62 = por %p60, %p61
      %p63 = scmp.ne.s32.totalorder %s54, %s55
      %p64 = scmp.eq.s32.totalorder %s28, 0
      %p65 = por %p63, %p64
      %p66 = scmp.ne.s32.totalorder %s54, %s55
      %p67 = scmp.eq.s32.totalorder %s29, 2
      %p68 = por %p66, %p67
      %p70 = scmp.ne.s32.totalorder %s55, %s69
      %p71 = scmp.eq.s32.totalorder %s29, 0
      %p72 = por %p70, %p71
      %s73 = ssub.s32 %s23, %s30
      %p74 = scmp.eq.s32.totalorder %s73, 0
      %s76 = sadd.s32 %s75, 1
      %s77 = scalar_select %p74, %s75, %s76
      %p80 = pneg %p74
      %p81 = scmp.eq.s32.totalorder %s23, 2
      %p82 = por %p80, %p81
      %p83 = scmp.ne.s32.totalorder %s75, %s78
      %p84 = scmp.eq.s32.totalorder %s23, 0
      %p85 = por %p83, %p84
      %p86 = scmp.ne.s32.totalorder %s75, %s78
      %p87 = scmp.eq.s32.totalorder %s28, 2
      %p88 = por %p86, %p87
      %p89 = scmp.ne.s32.totalorder %s78, %s79
      %p90 = scmp.eq.s32.totalorder %s28, 0
      %p91 = por %p89, %p90
      %p92 = scmp.ne.s32.totalorder %s78, %s79
      %p93 = scmp.eq.s32.totalorder %s29, 2
      %p94 = por %p92, %p93
      %p96 = scmp.ne.s32.totalorder %s79, %s95
      %p97 = scmp.eq.s32.totalorder %s29, 0
      %p98 = por %p96, %p97
      %s99 = ssub.s32 %s23, %s30
      %p100 = scmp.eq.s32.totalorder %s99, 0
      %s102 = sadd.s32 %s101, 1
      %s103 = scalar_select %p100, %s101, %s102
      %p106 = pneg %p100
      %p107 = scmp.eq.s32.totalorder %s23, 2
      %p108 = por %p106, %p107
      %p109 = scmp.ne.s32.totalorder %s101, %s104
      %p110 = scmp.eq.s32.totalorder %s23, 0
      %p111 = por %p109, %p110
      %p112 = scmp.ne.s32.totalorder %s101, %s104
      %p113 = scmp.eq.s32.totalorder %s28, 2
      %p114 = por %p112, %p113
      %p115 = scmp.ne.s32.totalorder %s104, %s105
      %p116 = scmp.eq.s32.totalorder %s28, 0
      %p117 = por %p115, %p116
      %p118 = scmp.ne.s32.totalorder %s104, %s105
      %p119 = scmp.eq.s32.totalorder %s29, 2
      %p120 = por %p118, %p119
      %p122 = scmp.ne.s32.totalorder %s105, %s121
      %p123 = scmp.eq.s32.totalorder %s29, 0
      %p124 = por %p122, %p123
      %s126 = sadd.s32 %s125, 1
      %p129 = scmp.eq.s32.totalorder %s23, 2
      %p130 = scmp.ne.s32.totalorder %s125, %s127
      %p131 = scmp.eq.s32.totalorder %s23, 0
      %p132 = por %p130, %p131
      %p133 = scmp.ne.s32.totalorder %s125, %s127
      %p134 = scmp.eq.s32.totalorder %s28, 2
      %p135 = por %p133, %p134
      %p136 = scmp.ne.s32.totalorder %s127, %s128
      %p137 = scmp.eq.s32.totalorder %s28, 0
      %p138 = por %p136, %p137
      %p139 = scmp.ne.s32.totalorder %s127, %s128
      %p140 = scmp.eq.s32.totalorder %s29, 2
      %p141 = por %p139, %p140
      %p143 = scmp.ne.s32.totalorder %s128, %s142
      %p144 = scmp.eq.s32.totalorder %s29, 0
      %p145 = por %p143, %p144
      %s147 = sadd.s32 %s146, 1
      %p150 = scmp.eq.s32.totalorder %s23, 2
      %p151 = scmp.ne.s32.totalorder %s146, %s148
      %p152 = scmp.eq.s32.totalorder %s23, 0
      %p153 = por %p151, %p152
      %p154 = scmp.ne.s32.totalorder %s146, %s148
      %p155 = scmp.eq.s32.totalorder %s28, 2
      %p156 = por %p154, %p155
      %p157 = scmp.ne.s32.totalorder %s148, %s149
      %p158 = scmp.eq.s32.totalorder %s28, 0
      %p159 = por %p157, %p158
      %p160 = scmp.ne.s32.totalorder %s148, %s149
      %p161 = scmp.eq.s32.totalorder %s29, 2
      %p162 = por %p160, %p161
      %p164 = scmp.ne.s32.totalorder %s149, %s163
      %p165 = scmp.eq.s32.totalorder %s29, 0
      %p166 = por %p164, %p165
      %s168 = sadd.s32 %s167, 1
      %p171 = scmp.eq.s32.totalorder %s23, 2
      %p172 = scmp.ne.s32.totalorder %s167, %s169
      %p173 = scmp.eq.s32.totalorder %s23, 0
      %p174 = por %p172, %p173
      %p175 = scmp.ne.s32.totalorder %s167, %s169
      %p176 = scmp.eq.s32.totalorder %s28, 2
      %p177 = por %p175, %p176
      %p178 = scmp.ne.s32.totalorder %s169, %s170
      %p179 = scmp.eq.s32.totalorder %s28, 0
      %p180 = por %p178, %p179
      %p181 = scmp.ne.s32.totalorder %s169, %s170
      %p182 = scmp.eq.s32.totalorder %s29, 2
      %p183 = por %p181, %p182
      %p185 = scmp.ne.s32.totalorder %s170, %s184
      %p186 = scmp.eq.s32.totalorder %s29, 0
      %p187 = por %p185, %p186
      %s189 = sadd.s32 %s188, 1
      %p192 = scmp.eq.s32.totalorder %s23, 2
      %p193 = scmp.ne.s32.totalorder %s188, %s190
      %p194 = scmp.eq.s32.totalorder %s23, 0
      %p195 = por %p193, %p194
      %p196 = scmp.ne.s32.totalorder %s188, %s190
      %p197 = scmp.eq.s32.totalorder %s28, 2
      %p198 = por %p196, %p197
      %p199 = scmp.ne.s32.totalorder %s190, %s191
      %p200 = scmp.eq.s32.totalorder %s28, 0
      %p201 = por %p199, %p200
      %p202 = scmp.ne.s32.totalorder %s190, %s191
      %p203 = scmp.eq.s32.totalorder %s29, 2
      %p204 = por %p202, %p203
      %p206 = scmp.ne.s32.totalorder %s191, %s205
      %p207 = scmp.eq.s32.totalorder %s29, 0
      %p208 = por %p206, %p207
      %s210 = sadd.s32 %s209, 1
      %p213 = scmp.eq.s32.totalorder %s23, 2
      %p214 = scmp.ne.s32.totalorder %s209, %s211
      %p215 = scmp.eq.s32.totalorder %s23, 0
      %p216 = por %p214, %p215
      %p217 = scmp.ne.s32.totalorder %s209, %s211
      %p218 = scmp.eq.s32.totalorder %s28, 2
      %p219 = por %p217, %p218
      %p220 = scmp.ne.s32.totalorder %s211, %s212
      %p221 = scmp.eq.s32.totalorder %s28, 0
      %p222 = por %p220, %p221
      %p223 = scmp.ne.s32.totalorder %s211, %s212
      %p224 = scmp.eq.s32.totalorder %s29, 2
      %p225 = por %p223, %p224
      %p227 = scmp.ne.s32.totalorder %s212, %s226
      %p228 = scmp.eq.s32.totalorder %s29, 0
      %p229 = por %p227, %p228
      %s231 = sadd.s32 %s230, 1
      %p234 = scmp.eq.s32.totalorder %s23, 2
      %p235 = scmp.ne.s32.totalorder %s230, %s232
      %p236 = scmp.eq.s32.totalorder %s23, 0
      %p237 = por %p235, %p236
      %p238 = scmp.ne.s32.totalorder %s230, %s232
      %p239 = scmp.eq.s32.totalorder %s28, 2
      %p240 = por %p238, %p239
      %p241 = scmp.ne.s32.totalorder %s232, %s233
      %p242 = scmp.eq.s32.totalorder %s28, 0
      %p243 = por %p241, %p242
      %p244 = scmp.ne.s32.totalorder %s232, %s233
      %p245 = scmp.eq.s32.totalorder %s29, 2
      %p246 = por %p244, %p245
      %p248 = scmp.ne.s32.totalorder %s233, %s247
      %p249 = scmp.eq.s32.totalorder %s29, 0
      %p250 = por %p248, %p249
      %s252 = sadd.s32 %s251, 1
      %p255 = scmp.eq.s32.totalorder %s23, 2
      %p256 = scmp.ne.s32.totalorder %s251, %s253
      %p257 = scmp.eq.s32.totalorder %s23, 0
      %p258 = por %p256, %p257
      %p259 = scmp.ne.s32.totalorder %s251, %s253
      %p260 = scmp.eq.s32.totalorder %s28, 2
      %p261 = por %p259, %p260
      %p262 = scmp.ne.s32.totalorder %s253, %s254
      %p263 = scmp.eq.s32.totalorder %s28, 0
      %p264 = por %p262, %p263
      %p265 = scmp.ne.s32.totalorder %s253, %s254
      %p266 = scmp.eq.s32.totalorder %s29, 2
      %p267 = por %p265, %p266
      %p269 = scmp.ne.s32.totalorder %s254, %s268
      %p270 = scmp.eq.s32.totalorder %s29, 0
      %p271 = por %p269, %p270
      %s273 = sadd.s32 %s272, 1
      %p276 = scmp.eq.s32.totalorder %s23, 2
      %p277 = scmp.ne.s32.totalorder %s272, %s274
      %p278 = scmp.eq.s32.totalorder %s23, 0
      %p279 = por %p277, %p278
      %p280 = scmp.ne.s32.totalorder %s272, %s274
      %p281 = scmp.eq.s32.totalorder %s28, 2
      %p282 = por %p280, %p281
      %p283 = scmp.ne.s32.totalorder %s274, %s275
      %p284 = scmp.eq.s32.totalorder %s28, 0
      %p285 = por %p283, %p284
      %p286 = scmp.ne.s32.totalorder %s274, %s275
      %p287 = scmp.eq.s32.totalorder %s29, 2
      %p288 = por %p286, %p287
      %p290 = scmp.ne.s32.totalorder %s275, %s289
      %p291 = scmp.eq.s32.totalorder %s29, 0
      %p292 = por %p290, %p291
      %s294 = sadd.s32 %s293, 1
      %p297 = scmp.eq.s32.totalorder %s23, 2
      %p298 = scmp.ne.s32.totalorder %s293, %s295
      %p299 = scmp.eq.s32.totalorder %s23, 0
      %p300 = por %p298, %p299
      %p301 = scmp.ne.s32.totalorder %s293, %s295
      %p302 = scmp.eq.s32.totalorder %s28, 2
      %p303 = por %p301, %p302
      %p304 = scmp.ne.s32.totalorder %s295, %s296
      %p305 = scmp.eq.s32.totalorder %s28, 0
      %p306 = por %p304, %p305
      %p307 = scmp.ne.s32.totalorder %s295, %s296
      %p308 = scmp.eq.s32.totalorder %s29, 2
      %p309 = por %p307, %p308
      %p311 = scmp.ne.s32.totalorder %s296, %s310
      %p312 = scmp.eq.s32.totalorder %s29, 0
      %p313 = por %p311, %p312
      %s315 = sadd.s32 %s314, 1
      %p318 = scmp.eq.s32.totalorder %s23, 2
      %p319 = scmp.ne.s32.totalorder %s314, %s316
      %p320 = scmp.eq.s32.totalorder %s23, 0
      %p321 = por %p319, %p320
      %p322 = scmp.ne.s32.totalorder %s314, %s316
      %p323 = scmp.eq.s32.totalorder %s28, 2
      %p324 = por %p322, %p323
      %p325 = scmp.ne.s32.totalorder %s316, %s317
      %p326 = scmp.eq.s32.totalorder %s28, 0
      %p327 = por %p325, %p326
      %p328 = scmp.ne.s32.totalorder %s316, %s317
      %p329 = scmp.eq.s32.totalorder %s29, 2
      %p330 = por %p328, %p329
      %p332 = scmp.ne.s32.totalorder %s317, %s331
      %p333 = scmp.eq.s32.totalorder %s29, 0
      %p334 = por %p332, %p333
      %s336 = sadd.s32 %s335, 1
      %p339 = scmp.eq.s32.totalorder %s23, 2
      %p340 = scmp.ne.s32.totalorder %s335, %s337
      %p341 = scmp.eq.s32.totalorder %s23, 0
      %p342 = por %p340, %p341
      %p343 = scmp.ne.s32.totalorder %s335, %s337
      %p344 = scmp.eq.s32.totalorder %s28, 2
      %p345 = por %p343, %p344
      %p346 = scmp.ne.s32.totalorder %s337, %s338
      %p347 = scmp.eq.s32.totalorder %s28, 0
      %p348 = por %p346, %p347
      %p349 = scmp.ne.s32.totalorder %s337, %s338
      %p350 = scmp.eq.s32.totalorder %s29, 2
      %p351 = por %p349, %p350
      %p353 = scmp.ne.s32.totalorder %s338, %s352
      %p354 = scmp.eq.s32.totalorder %s29, 0
      %p355 = por %p353, %p354
      %s357 = sadd.s32 %s356, 1
      %p360 = scmp.eq.s32.totalorder %s23, 2
      %p361 = scmp.ne.s32.totalorder %s356, %s358
      %p362 = scmp.eq.s32.totalorder %s23, 0
      %p363 = por %p361, %p362
      %p364 = scmp.ne.s32.totalorder %s356, %s358
      %p365 = scmp.eq.s32.totalorder %s28, 2
      %p366 = por %p364, %p365
      %p367 = scmp.ne.s32.totalorder %s358, %s359
      %p368 = scmp.eq.s32.totalorder %s28, 0
      %p369 = por %p367, %p368
      %p370 = scmp.ne.s32.totalorder %s358, %s359
      %p371 = scmp.eq.s32.totalorder %s29, 2
      %p372 = por %p370, %p371
      %p374 = scmp.ne.s32.totalorder %s359, %s373
      %p375 = scmp.eq.s32.totalorder %s29, 0
      %p376 = por %p374, %p375
      %p377 = scmp.le.s32.totalorder 1, %s23
      %p378 = scmp.lt.s32.totalorder %s23, 4
      %p379 = pnand %p377, %p378
      %p380 = pneg %p379
      // Predicated region
      $region9: #{din_forward.1} parent=5 // pred_check
        _
      $region10: #{din_forward.1} parent=5 // pred_check_branch
        %382 = sbr.rel (%p379) target = $region12
      $region11: #{din_forward.1} parent=5 // pred_region
        %s383 = ssub.s32 %s23, 1
        // Predicated region
        $region13: #{din_forward.1} parent=11 // pred_check
          %p384 = pneg %p44
        $region14: #{din_forward.1} parent=11 // pred_check_branch
          %386 = sbr.rel (%p384) target = $region16
        $region15: #{din_forward.1} parent=11 // pred_region
          %388 = vsyncadd [#allocation5], 0
          %s390 = sshll.u32 %s0, 4
          %s391 = int_to_ptr.vmem [resolvable:$true] %s390
          %393 = dma.vmem_to_smem %s391, 16, [#allocation3], [#allocation5]
        $region16: #{din_forward.1} parent=11 // pred_fallthru
          _
        // Predicated region
        $region17: #{din_forward.1} parent=11 // pred_check
          %p394 = pneg %p65
        $region18: #{din_forward.1} parent=11 // pred_check_branch
          %396 = sbr.rel (%p394) target = $region20
        $region19: #{din_forward.1} parent=11 // pred_region
          _
        $region20: #{din_forward.1} parent=11 // pred_fallthru
          _
        // Predicated region
        $region21: #{din_forward.1} parent=11 // pred_check
          %p397 = pneg %p138
        $region22: #{din_forward.1} parent=11 // pred_check_branch
          %399 = sbr.rel (%p397) target = $region24
        $region23: #{din_forward.1} parent=11 // pred_region
          _
        $region24: #{din_forward.1} parent=11 // pred_fallthru
          _
        // Predicated region
        $region25: #{din_forward.1} parent=11 // pred_check
          %p400 = pneg %p159
        $region26: #{din_forward.1} parent=11 // pred_check_branch
          %402 = sbr.rel (%p400) target = $region28
        $region27: #{din_forward.1} parent=11 // pred_region
          _
        $region28: #{din_forward.1} parent=11 // pred_fallthru
          _
        // Predicated region
        $region29: #{din_forward.1} parent=11 // pred_check
          %p403 = pneg %p180
        $region30: #{din_forward.1} parent=11 // pred_check_branch
          %405 = sbr.rel (%p403) target = $region32
        $region31: #{din_forward.1} parent=11 // pred_region
          _
        $region32: #{din_forward.1} parent=11 // pred_fallthru
          _
        // Predicated region
        $region33: #{din_forward.1} parent=11 // pred_check
          %p406 = pneg %p201
        $region34: #{din_forward.1} parent=11 // pred_check_branch
          %408 = sbr.rel (%p406) target = $region36
        $region35: #{din_forward.1} parent=11 // pred_region
          _
        $region36: #{din_forward.1} parent=11 // pred_fallthru
          _
        // Predicated region
        $region37: #{din_forward.1} parent=11 // pred_check
          %p409 = pneg %p222
        $region38: #{din_forward.1} parent=11 // pred_check_branch
          %411 = sbr.rel (%p409) target = $region40
        $region39: #{din_forward.1} parent=11 // pred_region
          _
        $region40: #{din_forward.1} parent=11 // pred_fallthru
          _
        // Predicated region
        $region41: #{din_forward.1} parent=11 // pred_check
          %p412 = pneg %p243
        $region42: #{din_forward.1} parent=11 // pred_check_branch
          %414 = sbr.rel (%p412) target = $region44
        $region43: #{din_forward.1} parent=11 // pred_region
          _
        $region44: #{din_forward.1} parent=11 // pred_fallthru
          _
        // Predicated region
        $region45: #{din_forward.1} parent=11 // pred_check
          %p415 = pneg %p264
        $region46: #{din_forward.1} parent=11 // pred_check_branch
          %417 = sbr.rel (%p415) target = $region48
        $region47: #{din_forward.1} parent=11 // pred_region
          _
        $region48: #{din_forward.1} parent=11 // pred_fallthru
          _
        // Predicated region
        $region49: #{din_forward.1} parent=11 // pred_check
          %p418 = pneg %p285
        $region50: #{din_forward.1} parent=11 // pred_check_branch
          %420 = sbr.rel (%p418) target = $region52
        $region51: #{din_forward.1} parent=11 // pred_region
          _
        $region52: #{din_forward.1} parent=11 // pred_fallthru
          _
        // Predicated region
        $region53: #{din_forward.1} parent=11 // pred_check
          %p421 = pneg %p306
        $region54: #{din_forward.1} parent=11 // pred_check_branch
          %423 = sbr.rel (%p421) target = $region56
        $region55: #{din_forward.1} parent=11 // pred_region
          _
        $region56: #{din_forward.1} parent=11 // pred_fallthru
          _
        // Predicated region
        $region57: #{din_forward.1} parent=11 // pred_check
          %p424 = pneg %p327
        $region58: #{din_forward.1} parent=11 // pred_check_branch
          %426 = sbr.rel (%p424) target = $region60
        $region59: #{din_forward.1} parent=11 // pred_region
          _
        $region60: #{din_forward.1} parent=11 // pred_fallthru
          _
        // Predicated region
        $region61: #{din_forward.1} parent=11 // pred_check
          %p427 = pneg %p348
        $region62: #{din_forward.1} parent=11 // pred_check_branch
          %429 = sbr.rel (%p427) target = $region64
        $region63: #{din_forward.1} parent=11 // pred_region
          _
        $region64: #{din_forward.1} parent=11 // pred_fallthru
          _
      $region12: #{din_forward.1} parent=5 // pred_fallthru
        _
      %p430 = scmp.lt.s32.totalorder %s23, 3
      // Predicated region
      $region65: #{din_forward.1} parent=5 // pred_check
        %p431 = pneg %p430
      $region66: #{din_forward.1} parent=5 // pred_check_branch
        %433 = sbr.rel (%p431) target = $region68
      $region67: #{din_forward.1} parent=5 // pred_region
        // Predicated region
        $region69: #{din_forward.1} parent=67 // pred_check
          %p434 = pneg %p85
        $region70: #{din_forward.1} parent=67 // pred_check_branch
          %436 = sbr.rel (%p434) target = $region72
        $region71: #{din_forward.1} parent=67 // pred_region
          %s437 = sand.u32 %s75, 1
          %s438 = sand.u32 %s75, 1
          %s439 = smul.addr %s438, 512
          %s440 = scalar_lea.vmem [#allocation6], %s439
          %s441 = smul.u32 16, %s23
          %s442 = smul.addr %s441, 8
          %s443 = scalar_lea.vmem %s2, %s442
          // Predicated region
          $region73: #{din_forward.1} parent=71 // pred_check
            _
          $region74: #{din_forward.1} parent=71 // pred_check_branch
            %445 = sbr.rel (0) target = $region76
          $region75: #{din_forward.1} parent=71 // pred_region
            // Predicated region
            $region77: #{din_forward.1} parent=75 // pred_check
              _
            $region78: #{din_forward.1} parent=75 // pred_check_branch
              %447 = sbr.rel (0) target = $region80
            $region79: #{din_forward.1} parent=75 // pred_region
              // Predicated region
              $region92: #{din_forward.1} parent=79 // pred_check
                _
              $region93: #{din_forward.1} parent=79 // pred_check_branch
                %589 = sbr.rel (0) target = $region95
              $region94: #{din_forward.1} parent=79 // pred_region
                loop: start=0, step=1, limit=1
                $region96: #{din_forward.1} parent=94 // loop_pre_header
                  _
                $region97: #{din_forward.1} parent=94 // loop_header
                  %s591 = sphi 0, %s595
                  %p592 = scmp.ge.s32.totalorder %s591, 1
                  %s596 = sphi %s443, %s443
                  %s597 = sphi %s440, %s440
                $region98: #{din_forward.1} parent=94 // loop_header_branch
                  %594 = sbr.rel (%p592) target = $region102
                $region99: #{din_forward.1} parent=94 // loop_body
                  %v598 = vld [vmem:[%s596] sm:$0xff]
                  %599 = vst [vmem:[%s597] sm:$0xff] %v598
                  %v600 = vld [vmem:[%s596 + $0x8] sm:$0xff]
                  %601 = vst [vmem:[%s597 + $0x8] sm:$0xff] %v600
                  %v602 = vld [vmem:[%s596 + $0x10] sm:$0xff]
                  %603 = vst [vmem:[%s597 + $0x10] sm:$0xff] %v602
                  %v604 = vld [vmem:[%s596 + $0x18] sm:$0xff]
                  %605 = vst [vmem:[%s597 + $0x18] sm:$0xff] %v604
                  %v606 = vld [vmem:[%s596 + $0x20] sm:$0xff]
                  %607 = vst [vmem:[%s597 + $0x20] sm:$0xff] %v606
                  %v608 = vld [vmem:[%s596 + $0x28] sm:$0xff]
                  %609 = vst [vmem:[%s597 + $0x28] sm:$0xff] %v608
                  %v610 = vld [vmem:[%s596 + $0x30] sm:$0xff]
                  %611 = vst [vmem:[%s597 + $0x30] sm:$0xff] %v610
                  %v612 = vld [vmem:[%s596 + $0x38] sm:$0xff]
                  %613 = vst [vmem:[%s597 + $0x38] sm:$0xff] %v612
                  %v614 = vld [vmem:[%s596 + $0x40] sm:$0xff]
                  %615 = vst [vmem:[%s597 + $0x40] sm:$0xff] %v614
                  %v616 = vld [vmem:[%s596 + $0x48] sm:$0xff]
                  %617 = vst [vmem:[%s597 + $0x48] sm:$0xff] %v616
                  %v618 = vld [vmem:[%s596 + $0x50] sm:$0xff]
                  %619 = vst [vmem:[%s597 + $0x50] sm:$0xff] %v618
                  %v620 = vld [vmem:[%s596 + $0x58] sm:$0xff]
                  %621 = vst [vmem:[%s597 + $0x58] sm:$0xff] %v620
                  %v622 = vld [vmem:[%s596 + $0x60] sm:$0xff]
                  %623 = vst [vmem:[%s597 + $0x60] sm:$0xff] %v622
                  %v624 = vld [vmem:[%s596 + $0x68] sm:$0xff]
                  %625 = vst [vmem:[%s597 + $0x68] sm:$0xff] %v624
                  %v626 = vld [vmem:[%s596 + $0x70] sm:$0xff]
                  %627 = vst [vmem:[%s597 + $0x70] sm:$0xff] %v626
                  %v628 = vld [vmem:[%s596 + $0x78] sm:$0xff]
                  %629 = vst [vmem:[%s597 + $0x78] sm:$0xff] %v628
                  %v630 = vld [vmem:[%s596 + $0x180] sm:$0xff]
                  %631 = vst [vmem:[%s597 + $0x80] sm:$0xff] %v630
                  %v632 = vld [vmem:[%s596 + $0x188] sm:$0xff]
                  %633 = vst [vmem:[%s597 + $0x88] sm:$0xff] %v632
                  %v634 = vld [vmem:[%s596 + $0x190] sm:$0xff]
                  %635 = vst [vmem:[%s597 + $0x90] sm:$0xff] %v634
                  %v636 = vld [vmem:[%s596 + $0x198] sm:$0xff]
                  %637 = vst [vmem:[%s597 + $0x98] sm:$0xff] %v636
                  %v638 = vld [vmem:[%s596 + $0x1a0] sm:$0xff]
                  %639 = vst [vmem:[%s597 + $0xa0] sm:$0xff] %v638
                  %v640 = vld [vmem:[%s596 + $0x1a8] sm:$0xff]
                  %641 = vst [vmem:[%s597 + $0xa8] sm:$0xff] %v640
                  %v642 = vld [vmem:[%s596 + $0x1b0] sm:$0xff]
                  %643 = vst [vmem:[%s597 + $0xb0] sm:$0xff] %v642
                  %v644 = vld [vmem:[%s596 + $0x1b8] sm:$0xff]
                  %645 = vst [vmem:[%s597 + $0xb8] sm:$0xff] %v644
                  %v646 = vld [vmem:[%s596 + $0x1c0] sm:$0xff]
                  %647 = vst [vmem:[%s597 + $0xc0] sm:$0xff] %v646
                  %v648 = vld [vmem:[%s596 + $0x1c8] sm:$0xff]
                  %649 = vst [vmem:[%s597 + $0xc8] sm:$0xff] %v648
                  %v650 = vld [vmem:[%s596 + $0x1d0] sm:$0xff]
                  %651 = vst [vmem:[%s597 + $0xd0] sm:$0xff] %v650
                  %v652 = vld [vmem:[%s596 + $0x1d8] sm:$0xff]
                  %653 = vst [vmem:[%s597 + $0xd8] sm:$0xff] %v652
                  %v654 = vld [vmem:[%s596 + $0x1e0] sm:$0xff]
                  %655 = vst [vmem:[%s597 + $0xe0] sm:$0xff] %v654
                  %v656 = vld [vmem:[%s596 + $0x1e8] sm:$0xff]
                  %657 = vst [vmem:[%s597 + $0xe8] sm:$0xff] %v656
                  %v658 = vld [vmem:[%s596 + $0x1f0] sm:$0xff]
                  %659 = vst [vmem:[%s597 + $0xf0] sm:$0xff] %v658
                  %v660 = vld [vmem:[%s596 + $0x1f8] sm:$0xff]
                  %661 = vst [vmem:[%s597 + $0xf8] sm:$0xff] %v660
                  %v662 = vld [vmem:[%s596 + $0x300] sm:$0xff]
                  %663 = vst [vmem:[%s597 + $0x100] sm:$0xff] %v662
                  %v664 = vld [vmem:[%s596 + $0x308] sm:$0xff]
                  %665 = vst [vmem:[%s597 + $0x108] sm:$0xff] %v664
                  %v666 = vld [vmem:[%s596 + $0x310] sm:$0xff]
                  %667 = vst [vmem:[%s597 + $0x110] sm:$0xff] %v666
                  %v668 = vld [vmem:[%s596 + $0x318] sm:$0xff]
                  %669 = vst [vmem:[%s597 + $0x118] sm:$0xff] %v668
                  %v670 = vld [vmem:[%s596 + $0x320] sm:$0xff]
                  %671 = vst [vmem:[%s597 + $0x120] sm:$0xff] %v670
                  %v672 = vld [vmem:[%s596 + $0x328] sm:$0xff]
                  %673 = vst [vmem:[%s597 + $0x128] sm:$0xff] %v672
                  %v674 = vld [vmem:[%s596 + $0x330] sm:$0xff]
                  %675 = vst [vmem:[%s597 + $0x130] sm:$0xff] %v674
                  %v676 = vld [vmem:[%s596 + $0x338] sm:$0xff]
                  %677 = vst [vmem:[%s597 + $0x138] sm:$0xff] %v676
                  %v678 = vld [vmem:[%s596 + $0x340] sm:$0xff]
                  %679 = vst [vmem:[%s597 + $0x140] sm:$0xff] %v678
                  %v680 = vld [vmem:[%s596 + $0x348] sm:$0xff]
                  %681 = vst [vmem:[%s597 + $0x148] sm:$0xff] %v680
                  %v682 = vld [vmem:[%s596 + $0x350] sm:$0xff]
                  %683 = vst [vmem:[%s597 + $0x150] sm:$0xff] %v682
                  %v684 = vld [vmem:[%s596 + $0x358] sm:$0xff]
                  %685 = vst [vmem:[%s597 + $0x158] sm:$0xff] %v684
                  %v686 = vld [vmem:[%s596 + $0x360] sm:$0xff]
                  %687 = vst [vmem:[%s597 + $0x160] sm:$0xff] %v686
                  %v688 = vld [vmem:[%s596 + $0x368] sm:$0xff]
                  %689 = vst [vmem:[%s597 + $0x168] sm:$0xff] %v688
                  %v690 = vld [vmem:[%s596 + $0x370] sm:$0xff]
                  %691 = vst [vmem:[%s597 + $0x170] sm:$0xff] %v690
                  %v692 = vld [vmem:[%s596 + $0x378] sm:$0xff]
                  %693 = vst [vmem:[%s597 + $0x178] sm:$0xff] %v692
                  %v694 = vld [vmem:[%s596 + $0x480] sm:$0xff]
                  %695 = vst [vmem:[%s597 + $0x180] sm:$0xff] %v694
                  %v696 = vld [vmem:[%s596 + $0x488] sm:$0xff]
                  %697 = vst [vmem:[%s597 + $0x188] sm:$0xff] %v696
                  %v698 = vld [vmem:[%s596 + $0x490] sm:$0xff]
                  %699 = vst [vmem:[%s597 + $0x190] sm:$0xff] %v698
                  %v700 = vld [vmem:[%s596 + $0x498] sm:$0xff]
                  %701 = vst [vmem:[%s597 + $0x198] sm:$0xff] %v700
                  %v702 = vld [vmem:[%s596 + $0x4a0] sm:$0xff]
                  %703 = vst [vmem:[%s597 + $0x1a0] sm:$0xff] %v702
                  %v704 = vld [vmem:[%s596 + $0x4a8] sm:$0xff]
                  %705 = vst [vmem:[%s597 + $0x1a8] sm:$0xff] %v704
                  %v706 = vld [vmem:[%s596 + $0x4b0] sm:$0xff]
                  %707 = vst [vmem:[%s597 + $0x1b0] sm:$0xff] %v706
                  %v708 = vld [vmem:[%s596 + $0x4b8] sm:$0xff]
                  %709 = vst [vmem:[%s597 + $0x1b8] sm:$0xff] %v708
                  %v710 = vld [vmem:[%s596 + $0x4c0] sm:$0xff]
                  %711 = vst [vmem:[%s597 + $0x1c0] sm:$0xff] %v710
                  %v712 = vld [vmem:[%s596 + $0x4c8] sm:$0xff]
                  %713 = vst [vmem:[%s597 + $0x1c8] sm:$0xff] %v712
                  %v714 = vld [vmem:[%s596 + $0x4d0] sm:$0xff]
                  %715 = vst [vmem:[%s597 + $0x1d0] sm:$0xff] %v714
                  %v716 = vld [vmem:[%s596 + $0x4d8] sm:$0xff]
                  %717 = vst [vmem:[%s597 + $0x1d8] sm:$0xff] %v716
                  %v718 = vld [vmem:[%s596 + $0x4e0] sm:$0xff]
                  %719 = vst [vmem:[%s597 + $0x1e0] sm:$0xff] %v718
                  %v720 = vld [vmem:[%s596 + $0x4e8] sm:$0xff]
                  %721 = vst [vmem:[%s597 + $0x1e8] sm:$0xff] %v720
                  %v722 = vld [vmem:[%s596 + $0x4f0] sm:$0xff]
                  %723 = vst [vmem:[%s597 + $0x1f0] sm:$0xff] %v722
                  %v724 = vld [vmem:[%s596 + $0x4f8] sm:$0xff]
                  %725 = vst [vmem:[%s597 + $0x1f8] sm:$0xff] %v724
                $region100: #{din_forward.1} parent=94 // loop_footer
                  %s595 = sadd.s32 1, %s591
                $region101: #{din_forward.1} parent=94 // loop_footer_branch
                  %590 = sbr.rel target = $region97
                $region102: #{din_forward.1} parent=94 // loop_exit
                  _
              $region95: #{din_forward.1} parent=79 // pred_fallthru
                _
              // Predicated region
              $region103: #{din_forward.1} parent=79 // pred_check
                _
              $region104: #{din_forward.1} parent=79 // pred_check_branch
                %727 = sbr.rel target = $region106
              $region105: #{din_forward.1} parent=79 // pred_region
                _
              $region106: #{din_forward.1} parent=79 // pred_fallthru
                _
            $region80: #{din_forward.1} parent=75 // pred_fallthru
              _
            // Predicated region
            $region81: #{din_forward.1} parent=75 // pred_check
              _
            $region82: #{din_forward.1} parent=75 // pred_check_branch
              %449 = sbr.rel target = $region84
            $region83: #{din_forward.1} parent=75 // pred_region
              %s451 = ssub.s32 256, 1
              loop: start=0, step=1, limit=1
              $region85: #{din_forward.1} parent=83 // loop_pre_header
                _
              $region86: #{din_forward.1} parent=83 // loop_header
                %s453 = sphi 0, %s457
                %p454 = scmp.ge.s32.totalorder %s453, 1
                %s458 = sphi %s443, %s443
                %s459 = sphi %s440, %s440
              $region87: #{din_forward.1} parent=83 // loop_header_branch
                %456 = sbr.rel (%p454) target = $region91
              $region88: #{din_forward.1} parent=83 // loop_body
                %v460 = vld [vmem:[%s458] sm:%s451]
                %461 = vst [vmem:[%s459] sm:%s451] %v460
                %v462 = vld [vmem:[%s458 + $0x8] sm:%s451]
                %463 = vst [vmem:[%s459 + $0x8] sm:%s451] %v462
                %v464 = vld [vmem:[%s458 + $0x10] sm:%s451]
                %465 = vst [vmem:[%s459 + $0x10] sm:%s451] %v464
                %v466 = vld [vmem:[%s458 + $0x18] sm:%s451]
                %467 = vst [vmem:[%s459 + $0x18] sm:%s451] %v466
                %v468 = vld [vmem:[%s458 + $0x20] sm:%s451]
                %469 = vst [vmem:[%s459 + $0x20] sm:%s451] %v468
                %v470 = vld [vmem:[%s458 + $0x28] sm:%s451]
                %471 = vst [vmem:[%s459 + $0x28] sm:%s451] %v470
                %v472 = vld [vmem:[%s458 + $0x30] sm:%s451]
                %473 = vst [vmem:[%s459 + $0x30] sm:%s451] %v472
                %v474 = vld [vmem:[%s458 + $0x38] sm:%s451]
                %475 = vst [vmem:[%s459 + $0x38] sm:%s451] %v474
                %v476 = vld [vmem:[%s458 + $0x40] sm:%s451]
                %477 = vst [vmem:[%s459 + $0x40] sm:%s451] %v476
                %v478 = vld [vmem:[%s458 + $0x48] sm:%s451]
                %479 = vst [vmem:[%s459 + $0x48] sm:%s451] %v478
                %v480 = vld [vmem:[%s458 + $0x50] sm:%s451]
                %481 = vst [vmem:[%s459 + $0x50] sm:%s451] %v480
                %v482 = vld [vmem:[%s458 + $0x58] sm:%s451]
                %483 = vst [vmem:[%s459 + $0x58] sm:%s451] %v482
                %v484 = vld [vmem:[%s458 + $0x60] sm:%s451]
                %485 = vst [vmem:[%s459 + $0x60] sm:%s451] %v484
                %v486 = vld [vmem:[%s458 + $0x68] sm:%s451]
                %487 = vst [vmem:[%s459 + $0x68] sm:%s451] %v486
                %v488 = vld [vmem:[%s458 + $0x70] sm:%s451]
                %489 = vst [vmem:[%s459 + $0x70] sm:%s451] %v488
                %v490 = vld [vmem:[%s458 + $0x78] sm:%s451]
                %491 = vst [vmem:[%s459 + $0x78] sm:%s451] %v490
                %v492 = vld [vmem:[%s458 + $0x180] sm:%s451]
                %493 = vst [vmem:[%s459 + $0x80] sm:%s451] %v492
                %v494 = vld [vmem:[%s458 + $0x188] sm:%s451]
                %495 = vst [vmem:[%s459 + $0x88] sm:%s451] %v494
                %v496 = vld [vmem:[%s458 + $0x190] sm:%s451]
                %497 = vst [vmem:[%s459 + $0x90] sm:%s451] %v496
                %v498 = vld [vmem:[%s458 + $0x198] sm:%s451]
                %499 = vst [vmem:[%s459 + $0x98] sm:%s451] %v498
                %v500 = vld [vmem:[%s458 + $0x1a0] sm:%s451]
                %501 = vst [vmem:[%s459 + $0xa0] sm:%s451] %v500
                %v502 = vld [vmem:[%s458 + $0x1a8] sm:%s451]
                %503 = vst [vmem:[%s459 + $0xa8] sm:%s451] %v502
                %v504 = vld [vmem:[%s458 + $0x1b0] sm:%s451]
                %505 = vst [vmem:[%s459 + $0xb0] sm:%s451] %v504
                %v506 = vld [vmem:[%s458 + $0x1b8] sm:%s451]
                %507 = vst [vmem:[%s459 + $0xb8] sm:%s451] %v506
                %v508 = vld [vmem:[%s458 + $0x1c0] sm:%s451]
                %509 = vst [vmem:[%s459 + $0xc0] sm:%s451] %v508
                %v510 = vld [vmem:[%s458 + $0x1c8] sm:%s451]
                %511 = vst [vmem:[%s459 + $0xc8] sm:%s451] %v510
                %v512 = vld [vmem:[%s458 + $0x1d0] sm:%s451]
                %513 = vst [vmem:[%s459 + $0xd0] sm:%s451] %v512
                %v514 = vld [vmem:[%s458 + $0x1d8] sm:%s451]
                %515 = vst [vmem:[%s459 + $0xd8] sm:%s451] %v514
                %v516 = vld [vmem:[%s458 + $0x1e0] sm:%s451]
                %517 = vst [vmem:[%s459 + $0xe0] sm:%s451] %v516
                %v518 = vld [vmem:[%s458 + $0x1e8] sm:%s451]
                %519 = vst [vmem:[%s459 + $0xe8] sm:%s451] %v518
                %v520 = vld [vmem:[%s458 + $0x1f0] sm:%s451]
                %521 = vst [vmem:[%s459 + $0xf0] sm:%s451] %v520
                %v522 = vld [vmem:[%s458 + $0x1f8] sm:%s451]
                %523 = vst [vmem:[%s459 + $0xf8] sm:%s451] %v522
                %v524 = vld [vmem:[%s458 + $0x300] sm:%s451]
                %525 = vst [vmem:[%s459 + $0x100] sm:%s451] %v524
                %v526 = vld [vmem:[%s458 + $0x308] sm:%s451]
                %527 = vst [vmem:[%s459 + $0x108] sm:%s451] %v526
                %v528 = vld [vmem:[%s458 + $0x310] sm:%s451]
                %529 = vst [vmem:[%s459 + $0x110] sm:%s451] %v528
                %v530 = vld [vmem:[%s458 + $0x318] sm:%s451]
                %531 = vst [vmem:[%s459 + $0x118] sm:%s451] %v530
                %v532 = vld [vmem:[%s458 + $0x320] sm:%s451]
                %533 = vst [vmem:[%s459 + $0x120] sm:%s451] %v532
                %v534 = vld [vmem:[%s458 + $0x328] sm:%s451]
                %535 = vst [vmem:[%s459 + $0x128] sm:%s451] %v534
                %v536 = vld [vmem:[%s458 + $0x330] sm:%s451]
                %537 = vst [vmem:[%s459 + $0x130] sm:%s451] %v536
                %v538 = vld [vmem:[%s458 + $0x338] sm:%s451]
                %539 = vst [vmem:[%s459 + $0x138] sm:%s451] %v538
                %v540 = vld [vmem:[%s458 + $0x340] sm:%s451]
                %541 = vst [vmem:[%s459 + $0x140] sm:%s451] %v540
                %v542 = vld [vmem:[%s458 + $0x348] sm:%s451]
                %543 = vst [vmem:[%s459 + $0x148] sm:%s451] %v542
                %v544 = vld [vmem:[%s458 + $0x350] sm:%s451]
                %545 = vst [vmem:[%s459 + $0x150] sm:%s451] %v544
                %v546 = vld [vmem:[%s458 + $0x358] sm:%s451]
                %547 = vst [vmem:[%s459 + $0x158] sm:%s451] %v546
                %v548 = vld [vmem:[%s458 + $0x360] sm:%s451]
                %549 = vst [vmem:[%s459 + $0x160] sm:%s451] %v548
                %v550 = vld [vmem:[%s458 + $0x368] sm:%s451]
                %551 = vst [vmem:[%s459 + $0x168] sm:%s451] %v550
                %v552 = vld [vmem:[%s458 + $0x370] sm:%s451]
                %553 = vst [vmem:[%s459 + $0x170] sm:%s451] %v552
                %v554 = vld [vmem:[%s458 + $0x378] sm:%s451]
                %555 = vst [vmem:[%s459 + $0x178] sm:%s451] %v554
                %v556 = vld [vmem:[%s458 + $0x480] sm:%s451]
                %557 = vst [vmem:[%s459 + $0x180] sm:%s451] %v556
                %v558 = vld [vmem:[%s458 + $0x488] sm:%s451]
                %559 = vst [vmem:[%s459 + $0x188] sm:%s451] %v558
                %v560 = vld [vmem:[%s458 + $0x490] sm:%s451]
                %561 = vst [vmem:[%s459 + $0x190] sm:%s451] %v560
                %v562 = vld [vmem:[%s458 + $0x498] sm:%s451]
                %563 = vst [vmem:[%s459 + $0x198] sm:%s451] %v562
                %v564 = vld [vmem:[%s458 + $0x4a0] sm:%s451]
                %565 = vst [vmem:[%s459 + $0x1a0] sm:%s451] %v564
                %v566 = vld [vmem:[%s458 + $0x4a8] sm:%s451]
                %567 = vst [vmem:[%s459 + $0x1a8] sm:%s451] %v566
                %v568 = vld [vmem:[%s458 + $0x4b0] sm:%s451]
                %569 = vst [vmem:[%s459 + $0x1b0] sm:%s451] %v568
                %v570 = vld [vmem:[%s458 + $0x4b8] sm:%s451]
                %571 = vst [vmem:[%s459 + $0x1b8] sm:%s451] %v570
                %v572 = vld [vmem:[%s458 + $0x4c0] sm:%s451]
                %573 = vst [vmem:[%s459 + $0x1c0] sm:%s451] %v572
                %v574 = vld [vmem:[%s458 + $0x4c8] sm:%s451]
                %575 = vst [vmem:[%s459 + $0x1c8] sm:%s451] %v574
                %v576 = vld [vmem:[%s458 + $0x4d0] sm:%s451]
                %577 = vst [vmem:[%s459 + $0x1d0] sm:%s451] %v576
                %v578 = vld [vmem:[%s458 + $0x4d8] sm:%s451]
                %579 = vst [vmem:[%s459 + $0x1d8] sm:%s451] %v578
                %v580 = vld [vmem:[%s458 + $0x4e0] sm:%s451]
                %581 = vst [vmem:[%s459 + $0x1e0] sm:%s451] %v580
                %v582 = vld [vmem:[%s458 + $0x4e8] sm:%s451]
                %583 = vst [vmem:[%s459 + $0x1e8] sm:%s451] %v582
                %v584 = vld [vmem:[%s458 + $0x4f0] sm:%s451]
                %585 = vst [vmem:[%s459 + $0x1f0] sm:%s451] %v584
                %v586 = vld [vmem:[%s458 + $0x4f8] sm:%s451]
                %587 = vst [vmem:[%s459 + $0x1f8] sm:%s451] %v586
              $region89: #{din_forward.1} parent=83 // loop_footer
                %s457 = sadd.s32 1, %s453
              $region90: #{din_forward.1} parent=83 // loop_footer_branch
                %452 = sbr.rel target = $region86
              $region91: #{din_forward.1} parent=83 // loop_exit
                _
            $region84: #{din_forward.1} parent=75 // pred_fallthru
              _
          $region76: #{din_forward.1} parent=71 // pred_fallthru
            _
          %728 = vnop
        $region72: #{din_forward.1} parent=67 // pred_fallthru
          _
        // Predicated region
        $region107: #{din_forward.1} parent=67 // pred_check
          %p729 = pneg %p111
        $region108: #{din_forward.1} parent=67 // pred_check_branch
          %731 = sbr.rel (%p729) target = $region110
        $region109: #{din_forward.1} parent=67 // pred_region
          %p732 = scmp.lt.s32.totalorder %s23, 2
          %s733 = scalar_select %p732, %s23, 2
          %s734 = smul.addr %s733, 4
          %s735 = scalar_lea.vmem %s3, %s734
        $region110: #{din_forward.1} parent=67 // pred_fallthru
          _
      $region68: #{din_forward.1} parent=5 // pred_fallthru
        _
      %p736 = scmp.le.s32.totalorder 1, %s23
      %p737 = scmp.lt.s32.totalorder %s23, 4
      %p738 = pnand %p736, %p737
      %p739 = pneg %p738
      // Predicated region
      $region111: #{din_forward.1} parent=5 // pred_check
        _
      $region112: #{din_forward.1} parent=5 // pred_check_branch
        %741 = sbr.rel (%p738) target = $region114
      $region113: #{din_forward.1} parent=5 // pred_region
        %s742 = ssub.s32 %s23, 1
        // Predicated region
        $region115: #{din_forward.1} parent=113 // pred_check
          %p743 = pneg %p44
        $region116: #{din_forward.1} parent=113 // pred_check_branch
          %745 = sbr.rel (%p743) target = $region118
        $region117: #{din_forward.1} parent=113 // pred_region
          %747 = dma.done [#allocation5], 16
        $region118: #{din_forward.1} parent=113 // pred_fallthru
          _
        %s748 = sand.u32 %s78, 1
        %s749 = sand.u32 %s78, 1
        %s750 = smul.addr %s749, 512
        %s751 = scalar_lea.vmem [#allocation6], %s750
        // Predicated region
        $region119: #{din_forward.1} parent=113 // pred_check
          %p752 = pneg %p91
        $region120: #{din_forward.1} parent=113 // pred_check_branch
          %754 = sbr.rel (%p752) target = $region122
        $region121: #{din_forward.1} parent=113 // pred_region
          _
        $region122: #{din_forward.1} parent=113 // pred_fallthru
          _
        %755 = sfence
        %p756 = pneg %p44
        %p757 = pneg %p41
        %p758 = pneg %p65
        %p759 = pneg %p62
        %s760 = sand.u32 %s78, 1
        %s761 = sand.u32 %s78, 1
        %s762 = smul.addr %s761, 512
        %s763 = scalar_lea.vmem [#allocation6], %s762
        %p764 = pneg %p91
        %p765 = pneg %p88
        %p766 = scmp.lt.s32.totalorder %s28, 2
        %s767 = scalar_select %p766, %s28, 2
        %s768 = smul.addr %s767, 4
        %s769 = scalar_lea.vmem %s3, %s768
        %p770 = pneg %p117
        %p771 = pneg %p114
        %p772 = pneg %p138
        %p773 = pneg %p135
        %p774 = pneg %p159
        %p775 = pneg %p156
        %p776 = pneg %p180
        %p777 = pneg %p177
        %p778 = pneg %p201
        %p779 = pneg %p198
        %p780 = pneg %p222
        %p781 = pneg %p219
        %p782 = pneg %p243
        %p783 = pneg %p240
        %p784 = pneg %p264
        %p785 = pneg %p261
        %p786 = pneg %p285
        %p787 = pneg %p282
        %p788 = pneg %p306
        %p789 = pneg %p303
        %p790 = pneg %p327
        %p791 = pneg %p324
        %p792 = pneg %p348
        %p793 = pneg %p345
        %p794 = pneg %p369
        %p795 = pneg %p366
        %s796 = smul.u32 16, %s28
        %p797 = scmp.lt.s32.totalorder %s28, 2
        %s798 = scalar_select %p797, %s28, 2
        %s799 = smul.addr %s798, 4
        %s800 = scalar_lea.vmem %s3, %s799
        %s802 = sld [smem:[#allocation3]]
        %s803 = sld [smem:[#allocation3 + $0x1]]
        %s804 = sld [smem:[#allocation3 + $0x2]]
        %s805 = sld [smem:[#allocation3 + $0x3]]
        %p806 = scmp.eq.s32.totalorder %s28, 0
        // Predicated region
        $region123: #{din_forward.1} parent=113 // pred_check
          %p807 = pneg %p806
        $region124: #{din_forward.1} parent=113 // pred_check_branch
          %809 = sbr.rel (%p807) target = $region126
        $region125: #{din_forward.1} parent=113 // pred_region
          %vm810 = vcmask 60416
          %811 = vst.msk [vmem:[#allocation2] sm:$0xf] %vm810, 0.0
        $region126: #{din_forward.1} parent=113 // pred_fallthru
          _
        %v812 = vld [vmem:[%s1] sm:$0xf]
        %v813 = vld [vmem:[%s800] sm:$0xf]
        %v814 = vperm.slane %v813, 0
        %v815 = vlaneseq
        %v816 = vshrl.u32 %v815, 7
        %818 = vset.pattern.permute.xlu0 %v816
        %819 = vperm.xlu0 %818, %v814
        %v820 = vpop.permute.xlu0 %819
        %v821 = vlaneseq
        %v822 = vshrl.u32 %v821, 7
        %v823 = vadd.s32 %v822, 8
        %824 = vset.pattern.permute.xlu0 %v823
        %825 = vperm.xlu0 %824, %v814
        %v826 = vpop.permute.xlu0 %825
        %v827 = vlaneseq
        %v828 = vshrl.u32 %v827, 7
        %v829 = vadd.s32 %v828, 16
        %830 = vset.pattern.permute.xlu0 %v829
        %831 = vperm.xlu0 %830, %v814
        %v832 = vpop.permute.xlu0 %831
        %v833 = vlaneseq
        %v834 = vshrl.u32 %v833, 7
        %v835 = vadd.s32 %v834, 24
        %836 = vset.pattern.permute.xlu0 %v835
        %837 = vperm.xlu0 %836, %v814
        %v838 = vpop.permute.xlu0 %837
        %v839 = vlaneseq
        %v840 = vshrl.u32 %v839, 7
        %v841 = vadd.s32 %v840, 32
        %842 = vset.pattern.permute.xlu0 %v841
        %843 = vperm.xlu0 %842, %v814
        %v844 = vpop.permute.xlu0 %843
        %v845 = vlaneseq
        %v846 = vshrl.u32 %v845, 7
        %v847 = vadd.s32 %v846, 40
        %848 = vset.pattern.permute.xlu0 %v847
        %849 = vperm.xlu0 %848, %v814
        %v850 = vpop.permute.xlu0 %849
        %v851 = vlaneseq
        %v852 = vshrl.u32 %v851, 7
        %v853 = vadd.s32 %v852, 48
        %854 = vset.pattern.permute.xlu0 %v853
        %855 = vperm.xlu0 %854, %v814
        %v856 = vpop.permute.xlu0 %855
        %v857 = vlaneseq
        %v858 = vshrl.u32 %v857, 7
        %v859 = vadd.s32 %v858, 56
        %860 = vset.pattern.permute.xlu0 %v859
        %861 = vperm.xlu0 %860, %v814
        %v862 = vpop.permute.xlu0 %861
        %v863 = vlaneseq
        %v864 = vshrl.u32 %v863, 7
        %v865 = vadd.s32 %v864, 64
        %866 = vset.pattern.permute.xlu0 %v865
        %867 = vperm.xlu0 %866, %v814
        %v868 = vpop.permute.xlu0 %867
        %v869 = vlaneseq
        %v870 = vshrl.u32 %v869, 7
        %v871 = vadd.s32 %v870, 72
        %872 = vset.pattern.permute.xlu0 %v871
        %873 = vperm.xlu0 %872, %v814
        %v874 = vpop.permute.xlu0 %873
        %v875 = vlaneseq
        %v876 = vshrl.u32 %v875, 7
        %v877 = vadd.s32 %v876, 80
        %878 = vset.pattern.permute.xlu0 %v877
        %879 = vperm.xlu0 %878, %v814
        %v880 = vpop.permute.xlu0 %879
        %v881 = vlaneseq
        %v882 = vshrl.u32 %v881, 7
        %v883 = vadd.s32 %v882, 88
        %884 = vset.pattern.permute.xlu0 %v883
        %885 = vperm.xlu0 %884, %v814
        %v886 = vpop.permute.xlu0 %885
        %v887 = vlaneseq
        %v888 = vshrl.u32 %v887, 7
        %v889 = vadd.s32 %v888, 96
        %890 = vset.pattern.permute.xlu0 %v889
        %891 = vperm.xlu0 %890, %v814
        %v892 = vpop.permute.xlu0 %891
        %v893 = vlaneseq
        %v894 = vshrl.u32 %v893, 7
        %v895 = vadd.s32 %v894, 104
        %896 = vset.pattern.permute.xlu0 %v895
        %897 = vperm.xlu0 %896, %v814
        %v898 = vpop.permute.xlu0 %897
        %v899 = vlaneseq
        %v900 = vshrl.u32 %v899, 7
        %v901 = vadd.s32 %v900, 112
        %902 = vset.pattern.permute.xlu0 %v901
        %903 = vperm.xlu0 %902, %v814
        %v904 = vpop.permute.xlu0 %903
        %v905 = vlaneseq
        %v906 = vshrl.u32 %v905, 7
        %v907 = vadd.s32 %v906, 120
        %908 = vset.pattern.permute.xlu0 %v907
        %909 = vperm.xlu0 %908, %v814
        %v910 = vpop.permute.xlu0 %909
        %v911 = vperm.slane %v813, 1
        %v912 = vlaneseq
        %v913 = vshrl.u32 %v912, 7
        %915 = vset.pattern.permute.xlu0 %v913
        %916 = vperm.xlu0 %915, %v911
        %v917 = vpop.permute.xlu0 %916
        %v918 = vlaneseq
        %v919 = vshrl.u32 %v918, 7
        %v920 = vadd.s32 %v919, 8
        %921 = vset.pattern.permute.xlu0 %v920
        %922 = vperm.xlu0 %921, %v911
        %v923 = vpop.permute.xlu0 %922
        %v924 = vlaneseq
        %v925 = vshrl.u32 %v924, 7
        %v926 = vadd.s32 %v925, 16
        %927 = vset.pattern.permute.xlu0 %v926
        %928 = vperm.xlu0 %927, %v911
        %v929 = vpop.permute.xlu0 %928
        %v930 = vlaneseq
        %v931 = vshrl.u32 %v930, 7
        %v932 = vadd.s32 %v931, 24
        %933 = vset.pattern.permute.xlu0 %v932
        %934 = vperm.xlu0 %933, %v911
        %v935 = vpop.permute.xlu0 %934
        %v936 = vlaneseq
        %v937 = vshrl.u32 %v936, 7
        %v938 = vadd.s32 %v937, 32
        %939 = vset.pattern.permute.xlu0 %v938
        %940 = vperm.xlu0 %939, %v911
        %v941 = vpop.permute.xlu0 %940
        %v942 = vlaneseq
        %v943 = vshrl.u32 %v942, 7
        %v944 = vadd.s32 %v943, 40
        %945 = vset.pattern.permute.xlu0 %v944
        %946 = vperm.xlu0 %945, %v911
        %v947 = vpop.permute.xlu0 %946
        %v948 = vlaneseq
        %v949 = vshrl.u32 %v948, 7
        %v950 = vadd.s32 %v949, 48
        %951 = vset.pattern.permute.xlu0 %v950
        %952 = vperm.xlu0 %951, %v911
        %v953 = vpop.permute.xlu0 %952
        %v954 = vlaneseq
        %v955 = vshrl.u32 %v954, 7
        %v956 = vadd.s32 %v955, 56
        %957 = vset.pattern.permute.xlu0 %v956
        %958 = vperm.xlu0 %957, %v911
        %v959 = vpop.permute.xlu0 %958
        %v960 = vlaneseq
        %v961 = vshrl.u32 %v960, 7
        %v962 = vadd.s32 %v961, 64
        %963 = vset.pattern.permute.xlu0 %v962
        %964 = vperm.xlu0 %963, %v911
        %v965 = vpop.permute.xlu0 %964
        %v966 = vlaneseq
        %v967 = vshrl.u32 %v966, 7
        %v968 = vadd.s32 %v967, 72
        %969 = vset.pattern.permute.xlu0 %v968
        %970 = vperm.xlu0 %969, %v911
        %v971 = vpop.permute.xlu0 %970
        %v972 = vlaneseq
        %v973 = vshrl.u32 %v972, 7
        %v974 = vadd.s32 %v973, 80
        %975 = vset.pattern.permute.xlu0 %v974
        %976 = vperm.xlu0 %975, %v911
        %v977 = vpop.permute.xlu0 %976
        %v978 = vlaneseq
        %v979 = vshrl.u32 %v978, 7
        %v980 = vadd.s32 %v979, 88
        %981 = vset.pattern.permute.xlu0 %v980
        %982 = vperm.xlu0 %981, %v911
        %v983 = vpop.permute.xlu0 %982
        %v984 = vlaneseq
        %v985 = vshrl.u32 %v984, 7
        %v986 = vadd.s32 %v985, 96
        %987 = vset.pattern.permute.xlu0 %v986
        %988 = vperm.xlu0 %987, %v911
        %v989 = vpop.permute.xlu0 %988
        %v990 = vlaneseq
        %v991 = vshrl.u32 %v990, 7
        %v992 = vadd.s32 %v991, 104
        %993 = vset.pattern.permute.xlu0 %v992
        %994 = vperm.xlu0 %993, %v911
        %v995 = vpop.permute.xlu0 %994
        %v996 = vlaneseq
        %v997 = vshrl.u32 %v996, 7
        %v998 = vadd.s32 %v997, 112
        %999 = vset.pattern.permute.xlu0 %v998
        %1000 = vperm.xlu0 %999, %v911
        %v1001 = vpop.permute.xlu0 %1000
        %v1002 = vlaneseq
        %v1003 = vshrl.u32 %v1002, 7
        %v1004 = vadd.s32 %v1003, 120
        %1005 = vset.pattern.permute.xlu0 %v1004
        %1006 = vperm.xlu0 %1005, %v911
        %v1007 = vpop.permute.xlu0 %1006
        %v1008 = vperm.slane %v813, 2
        %v1009 = vlaneseq
        %v1010 = vshrl.u32 %v1009, 7
        %1012 = vset.pattern.permute.xlu0 %v1010
        %1013 = vperm.xlu0 %1012, %v1008
        %v1014 = vpop.permute.xlu0 %1013
        %v1015 = vlaneseq
        %v1016 = vshrl.u32 %v1015, 7
        %v1017 = vadd.s32 %v1016, 8
        %1018 = vset.pattern.permute.xlu0 %v1017
        %1019 = vperm.xlu0 %1018, %v1008
        %v1020 = vpop.permute.xlu0 %1019
        %v1021 = vlaneseq
        %v1022 = vshrl.u32 %v1021, 7
        %v1023 = vadd.s32 %v1022, 16
        %1024 = vset.pattern.permute.xlu0 %v1023
        %1025 = vperm.xlu0 %1024, %v1008
        %v1026 = vpop.permute.xlu0 %1025
        %v1027 = vlaneseq
        %v1028 = vshrl.u32 %v1027, 7
        %v1029 = vadd.s32 %v1028, 24
        %1030 = vset.pattern.permute.xlu0 %v1029
        %1031 = vperm.xlu0 %1030, %v1008
        %v1032 = vpop.permute.xlu0 %1031
        %v1033 = vlaneseq
        %v1034 = vshrl.u32 %v1033, 7
        %v1035 = vadd.s32 %v1034, 32
        %1036 = vset.pattern.permute.xlu0 %v1035
        %1037 = vperm.xlu0 %1036, %v1008
        %v1038 = vpop.permute.xlu0 %1037
        %v1039 = vlaneseq
        %v1040 = vshrl.u32 %v1039, 7
        %v1041 = vadd.s32 %v1040, 40
        %1042 = vset.pattern.permute.xlu0 %v1041
        %1043 = vperm.xlu0 %1042, %v1008
        %v1044 = vpop.permute.xlu0 %1043
        %v1045 = vlaneseq
        %v1046 = vshrl.u32 %v1045, 7
        %v1047 = vadd.s32 %v1046, 48
        %1048 = vset.pattern.permute.xlu0 %v1047
        %1049 = vperm.xlu0 %1048, %v1008
        %v1050 = vpop.permute.xlu0 %1049
        %v1051 = vlaneseq
        %v1052 = vshrl.u32 %v1051, 7
        %v1053 = vadd.s32 %v1052, 56
        %1054 = vset.pattern.permute.xlu0 %v1053
        %1055 = vperm.xlu0 %1054, %v1008
        %v1056 = vpop.permute.xlu0 %1055
        %v1057 = vlaneseq
        %v1058 = vshrl.u32 %v1057, 7
        %v1059 = vadd.s32 %v1058, 64
        %1060 = vset.pattern.permute.xlu0 %v1059
        %1061 = vperm.xlu0 %1060, %v1008
        %v1062 = vpop.permute.xlu0 %1061
        %v1063 = vlaneseq
        %v1064 = vshrl.u32 %v1063, 7
        %v1065 = vadd.s32 %v1064, 72
        %1066 = vset.pattern.permute.xlu0 %v1065
        %1067 = vperm.xlu0 %1066, %v1008
        %v1068 = vpop.permute.xlu0 %1067
        %v1069 = vlaneseq
        %v1070 = vshrl.u32 %v1069, 7
        %v1071 = vadd.s32 %v1070, 80
        %1072 = vset.pattern.permute.xlu0 %v1071
        %1073 = vperm.xlu0 %1072, %v1008
        %v1074 = vpop.permute.xlu0 %1073
        %v1075 = vlaneseq
        %v1076 = vshrl.u32 %v1075, 7
        %v1077 = vadd.s32 %v1076, 88
        %1078 = vset.pattern.permute.xlu0 %v1077
        %1079 = vperm.xlu0 %1078, %v1008
        %v1080 = vpop.permute.xlu0 %1079
        %v1081 = vlaneseq
        %v1082 = vshrl.u32 %v1081, 7
        %v1083 = vadd.s32 %v1082, 96
        %1084 = vset.pattern.permute.xlu0 %v1083
        %1085 = vperm.xlu0 %1084, %v1008
        %v1086 = vpop.permute.xlu0 %1085
        %v1087 = vlaneseq
        %v1088 = vshrl.u32 %v1087, 7
        %v1089 = vadd.s32 %v1088, 104
        %1090 = vset.pattern.permute.xlu0 %v1089
        %1091 = vperm.xlu0 %1090, %v1008
        %v1092 = vpop.permute.xlu0 %1091
        %v1093 = vlaneseq
        %v1094 = vshrl.u32 %v1093, 7
        %v1095 = vadd.s32 %v1094, 112
        %1096 = vset.pattern.permute.xlu0 %v1095
        %1097 = vperm.xlu0 %1096, %v1008
        %v1098 = vpop.permute.xlu0 %1097
        %v1099 = vlaneseq
        %v1100 = vshrl.u32 %v1099, 7
        %v1101 = vadd.s32 %v1100, 120
        %1102 = vset.pattern.permute.xlu0 %v1101
        %1103 = vperm.xlu0 %1102, %v1008
        %v1104 = vpop.permute.xlu0 %1103
        %v1105 = vperm.slane %v813, 3
        %v1106 = vlaneseq
        %v1107 = vshrl.u32 %v1106, 7
        %1109 = vset.pattern.permute.xlu0 %v1107
        %1110 = vperm.xlu0 %1109, %v1105
        %v1111 = vpop.permute.xlu0 %1110
        %v1112 = vlaneseq
        %v1113 = vshrl.u32 %v1112, 7
        %v1114 = vadd.s32 %v1113, 8
        %1115 = vset.pattern.permute.xlu0 %v1114
        %1116 = vperm.xlu0 %1115, %v1105
        %v1117 = vpop.permute.xlu0 %1116
        %v1118 = vlaneseq
        %v1119 = vshrl.u32 %v1118, 7
        %v1120 = vadd.s32 %v1119, 16
        %1121 = vset.pattern.permute.xlu0 %v1120
        %1122 = vperm.xlu0 %1121, %v1105
        %v1123 = vpop.permute.xlu0 %1122
        %v1124 = vlaneseq
        %v1125 = vshrl.u32 %v1124, 7
        %v1126 = vadd.s32 %v1125, 24
        %1127 = vset.pattern.permute.xlu0 %v1126
        %1128 = vperm.xlu0 %1127, %v1105
        %v1129 = vpop.permute.xlu0 %1128
        %v1130 = vlaneseq
        %v1131 = vshrl.u32 %v1130, 7
        %v1132 = vadd.s32 %v1131, 32
        %1133 = vset.pattern.permute.xlu0 %v1132
        %1134 = vperm.xlu0 %1133, %v1105
        %v1135 = vpop.permute.xlu0 %1134
        %v1136 = vlaneseq
        %v1137 = vshrl.u32 %v1136, 7
        %v1138 = vadd.s32 %v1137, 40
        %1139 = vset.pattern.permute.xlu0 %v1138
        %1140 = vperm.xlu0 %1139, %v1105
        %v1141 = vpop.permute.xlu0 %1140
        %v1142 = vlaneseq
        %v1143 = vshrl.u32 %v1142, 7
        %v1144 = vadd.s32 %v1143, 48
        %1145 = vset.pattern.permute.xlu0 %v1144
        %1146 = vperm.xlu0 %1145, %v1105
        %v1147 = vpop.permute.xlu0 %1146
        %v1148 = vlaneseq
        %v1149 = vshrl.u32 %v1148, 7
        %v1150 = vadd.s32 %v1149, 56
        %1151 = vset.pattern.permute.xlu0 %v1150
        %1152 = vperm.xlu0 %1151, %v1105
        %v1153 = vpop.permute.xlu0 %1152
        %v1154 = vlaneseq
        %v1155 = vshrl.u32 %v1154, 7
        %v1156 = vadd.s32 %v1155, 64
        %1157 = vset.pattern.permute.xlu0 %v1156
        %1158 = vperm.xlu0 %1157, %v1105
        %v1159 = vpop.permute.xlu0 %1158
        %v1160 = vlaneseq
        %v1161 = vshrl.u32 %v1160, 7
        %v1162 = vadd.s32 %v1161, 72
        %1163 = vset.pattern.permute.xlu0 %v1162
        %1164 = vperm.xlu0 %1163, %v1105
        %v1165 = vpop.permute.xlu0 %1164
        %v1166 = vlaneseq
        %v1167 = vshrl.u32 %v1166, 7
        %v1168 = vadd.s32 %v1167, 80
        %1169 = vset.pattern.permute.xlu0 %v1168
        %1170 = vperm.xlu0 %1169, %v1105
        %v1171 = vpop.permute.xlu0 %1170
        %v1172 = vlaneseq
        %v1173 = vshrl.u32 %v1172, 7
        %v1174 = vadd.s32 %v1173, 88
        %1175 = vset.pattern.permute.xlu0 %v1174
        %1176 = vperm.xlu0 %1175, %v1105
        %v1177 = vpop.permute.xlu0 %1176
        %v1178 = vlaneseq
        %v1179 = vshrl.u32 %v1178, 7
        %v1180 = vadd.s32 %v1179, 96
        %1181 = vset.pattern.permute.xlu0 %v1180
        %1182 = vperm.xlu0 %1181, %v1105
        %v1183 = vpop.permute.xlu0 %1182
        %v1184 = vlaneseq
        %v1185 = vshrl.u32 %v1184, 7
        %v1186 = vadd.s32 %v1185, 104
        %1187 = vset.pattern.permute.xlu0 %v1186
        %1188 = vperm.xlu0 %1187, %v1105
        %v1189 = vpop.permute.xlu0 %1188
        %v1190 = vlaneseq
        %v1191 = vshrl.u32 %v1190, 7
        %v1192 = vadd.s32 %v1191, 112
        %1193 = vset.pattern.permute.xlu0 %v1192
        %1194 = vperm.xlu0 %1193, %v1105
        %v1195 = vpop.permute.xlu0 %1194
        %v1196 = vlaneseq
        %v1197 = vshrl.u32 %v1196, 7
        %v1198 = vadd.s32 %v1197, 120
        %1199 = vset.pattern.permute.xlu0 %v1198
        %1200 = vperm.xlu0 %1199, %v1105
        %v1201 = vpop.permute.xlu0 %1200
        %v1202 = vld [vmem:[%s751] sm:$0xff]
        %v1203 = vld [vmem:[%s751 + $0x8] sm:$0xff]
        %v1204 = vld [vmem:[%s751 + $0x10] sm:$0xff]
        %v1205 = vld [vmem:[%s751 + $0x18] sm:$0xff]
        %v1206 = vld [vmem:[%s751 + $0x20] sm:$0xff]
        %v1207 = vld [vmem:[%s751 + $0x28] sm:$0xff]
        %v1208 = vld [vmem:[%s751 + $0x30] sm:$0xff]
        %v1209 = vld [vmem:[%s751 + $0x38] sm:$0xff]
        %v1210 = vld [vmem:[%s751 + $0x40] sm:$0xff]
        %v1211 = vld [vmem:[%s751 + $0x48] sm:$0xff]
        %v1212 = vld [vmem:[%s751 + $0x50] sm:$0xff]
        %v1213 = vld [vmem:[%s751 + $0x58] sm:$0xff]
        %v1214 = vld [vmem:[%s751 + $0x60] sm:$0xff]
        %v1215 = vld [vmem:[%s751 + $0x68] sm:$0xff]
        %v1216 = vld [vmem:[%s751 + $0x70] sm:$0xff]
        %v1217 = vld [vmem:[%s751 + $0x78] sm:$0xff]
        %v1218 = vld [vmem:[%s751 + $0x80] sm:$0xff]
        %v1219 = vld [vmem:[%s751 + $0x88] sm:$0xff]
        %v1220 = vld [vmem:[%s751 + $0x90] sm:$0xff]
        %v1221 = vld [vmem:[%s751 + $0x98] sm:$0xff]
        %v1222 = vld [vmem:[%s751 + $0xa0] sm:$0xff]
        %v1223 = vld [vmem:[%s751 + $0xa8] sm:$0xff]
        %v1224 = vld [vmem:[%s751 + $0xb0] sm:$0xff]
        %v1225 = vld [vmem:[%s751 + $0xb8] sm:$0xff]
        %v1226 = vld [vmem:[%s751 + $0xc0] sm:$0xff]
        %v1227 = vld [vmem:[%s751 + $0xc8] sm:$0xff]
        %v1228 = vld [vmem:[%s751 + $0xd0] sm:$0xff]
        %v1229 = vld [vmem:[%s751 + $0xd8] sm:$0xff]
        %v1230 = vld [vmem:[%s751 + $0xe0] sm:$0xff]
        %v1231 = vld [vmem:[%s751 + $0xe8] sm:$0xff]
        %v1232 = vld [vmem:[%s751 + $0xf0] sm:$0xff]
        %v1233 = vld [vmem:[%s751 + $0xf8] sm:$0xff]
        %v1234 = vld [vmem:[%s751 + $0x100] sm:$0xff]
        %v1235 = vld [vmem:[%s751 + $0x108] sm:$0xff]
        %v1236 = vld [vmem:[%s751 + $0x110] sm:$0xff]
        %v1237 = vld [vmem:[%s751 + $0x118] sm:$0xff]
        %v1238 = vld [vmem:[%s751 + $0x120] sm:$0xff]
        %v1239 = vld [vmem:[%s751 + $0x128] sm:$0xff]
        %v1240 = vld [vmem:[%s751 + $0x130] sm:$0xff]
        %v1241 = vld [vmem:[%s751 + $0x138] sm:$0xff]
        %v1242 = vld [vmem:[%s751 + $0x140] sm:$0xff]
        %v1243 = vld [vmem:[%s751 + $0x148] sm:$0xff]
        %v1244 = vld [vmem:[%s751 + $0x150] sm:$0xff]
        %v1245 = vld [vmem:[%s751 + $0x158] sm:$0xff]
        %v1246 = vld [vmem:[%s751 + $0x160] sm:$0xff]
        %v1247 = vld [vmem:[%s751 + $0x168] sm:$0xff]
        %v1248 = vld [vmem:[%s751 + $0x170] sm:$0xff]
        %v1249 = vld [vmem:[%s751 + $0x178] sm:$0xff]
        %v1250 = vld [vmem:[%s751 + $0x180] sm:$0xff]
        %v1251 = vld [vmem:[%s751 + $0x188] sm:$0xff]
        %v1252 = vld [vmem:[%s751 + $0x190] sm:$0xff]
        %v1253 = vld [vmem:[%s751 + $0x198] sm:$0xff]
        %v1254 = vld [vmem:[%s751 + $0x1a0] sm:$0xff]
        %v1255 = vld [vmem:[%s751 + $0x1a8] sm:$0xff]
        %v1256 = vld [vmem:[%s751 + $0x1b0] sm:$0xff]
        %v1257 = vld [vmem:[%s751 + $0x1b8] sm:$0xff]
        %v1258 = vld [vmem:[%s751 + $0x1c0] sm:$0xff]
        %v1259 = vld [vmem:[%s751 + $0x1c8] sm:$0xff]
        %v1260 = vld [vmem:[%s751 + $0x1d0] sm:$0xff]
        %v1261 = vld [vmem:[%s751 + $0x1d8] sm:$0xff]
        %v1262 = vld [vmem:[%s751 + $0x1e0] sm:$0xff]
        %v1263 = vld [vmem:[%s751 + $0x1e8] sm:$0xff]
        %v1264 = vld [vmem:[%s751 + $0x1f0] sm:$0xff]
        %v1265 = vld [vmem:[%s751 + $0x1f8] sm:$0xff]
        %v1266 = vmul.f32 %v1202, %v820
        %v1267 = vmul.f32 %v1203, %v826
        %v1268 = vmul.f32 %v1204, %v832
        %v1269 = vmul.f32 %v1205, %v838
        %v1270 = vmul.f32 %v1206, %v844
        %v1271 = vmul.f32 %v1207, %v850
        %v1272 = vmul.f32 %v1208, %v856
        %v1273 = vmul.f32 %v1209, %v862
        %v1274 = vmul.f32 %v1210, %v868
        %v1275 = vmul.f32 %v1211, %v874
        %v1276 = vmul.f32 %v1212, %v880
        %v1277 = vmul.f32 %v1213, %v886
        %v1278 = vmul.f32 %v1214, %v892
        %v1279 = vmul.f32 %v1215, %v898
        %v1280 = vmul.f32 %v1216, %v904
        %v1281 = vmul.f32 %v1217, %v910
        %v1282 = vmul.f32 %v1218, %v917
        %v1283 = vmul.f32 %v1219, %v923
        %v1284 = vmul.f32 %v1220, %v929
        %v1285 = vmul.f32 %v1221, %v935
        %v1286 = vmul.f32 %v1222, %v941
        %v1287 = vmul.f32 %v1223, %v947
        %v1288 = vmul.f32 %v1224, %v953
        %v1289 = vmul.f32 %v1225, %v959
        %v1290 = vmul.f32 %v1226, %v965
        %v1291 = vmul.f32 %v1227, %v971
        %v1292 = vmul.f32 %v1228, %v977
        %v1293 = vmul.f32 %v1229, %v983
        %v1294 = vmul.f32 %v1230, %v989
        %v1295 = vmul.f32 %v1231, %v995
        %v1296 = vmul.f32 %v1232, %v1001
        %v1297 = vmul.f32 %v1233, %v1007
        %v1298 = vmul.f32 %v1234, %v1014
        %v1299 = vmul.f32 %v1235, %v1020
        %v1300 = vmul.f32 %v1236, %v1026
        %v1301 = vmul.f32 %v1237, %v1032
        %v1302 = vmul.f32 %v1238, %v1038
        %v1303 = vmul.f32 %v1239, %v1044
        %v1304 = vmul.f32 %v1240, %v1050
        %v1305 = vmul.f32 %v1241, %v1056
        %v1306 = vmul.f32 %v1242, %v1062
        %v1307 = vmul.f32 %v1243, %v1068
        %v1308 = vmul.f32 %v1244, %v1074
        %v1309 = vmul.f32 %v1245, %v1080
        %v1310 = vmul.f32 %v1246, %v1086
        %v1311 = vmul.f32 %v1247, %v1092
        %v1312 = vmul.f32 %v1248, %v1098
        %v1313 = vmul.f32 %v1249, %v1104
        %v1314 = vmul.f32 %v1250, %v1111
        %v1315 = vmul.f32 %v1251, %v1117
        %v1316 = vmul.f32 %v1252, %v1123
        %v1317 = vmul.f32 %v1253, %v1129
        %v1318 = vmul.f32 %v1254, %v1135
        %v1319 = vmul.f32 %v1255, %v1141
        %v1320 = vmul.f32 %v1256, %v1147
        %v1321 = vmul.f32 %v1257, %v1153
        %v1322 = vmul.f32 %v1258, %v1159
        %v1323 = vmul.f32 %v1259, %v1165
        %v1324 = vmul.f32 %v1260, %v1171
        %v1325 = vmul.f32 %v1261, %v1177
        %v1326 = vmul.f32 %v1262, %v1183
        %v1327 = vmul.f32 %v1263, %v1189
        %v1328 = vmul.f32 %v1264, %v1195
        %v1329 = vmul.f32 %v1265, %v1201
        %v1330 = vpack.c.bf16 %v812, %v812
        %v1331 = vld [vmem:[%s4] sm:$0xf]
        %vm1332 = vcmask 64512
        %v1334 = vsel %vm1332, %v1330, 0
        %vm1336 = vcmask 1043456
        %v1338 = vsel %vm1336, %v1331, 0
        %1340 = vmatpush.bf16.msra.mxu0 0
        %1341 = vmatpush.bf16.msra.mxu0 0
        %1342 = vmatpush.bf16.msra.mxu0 0
        %1343 = vmatpush.bf16.msra.mxu0 0
        %1344 = vmatpush.bf16.msra.mxu0 0
        %1345 = vmatpush.bf16.msra.mxu0 0
        %1346 = vmatpush.bf16.msra.mxu0 0
        %1347 = vmatpush.bf16.msra.mxu0 %v1338
        %1348 = vmatmul.bf16.gmra.mxu0 %v1334
        %v1349 = vpop.f32.mrf.mxu0
        %v1350 = vadd.f32 0.0, %v1349
        %v1351 = vpop.f32.mrf.mxu0
        %1352 = vdwg.mxu0
        %v1354 = vrot.slane %v812, 1
        %v1355 = vrot.slane %v812, 2
        %v1356 = vrot.slane %v812, 3
        %v1357 = vperm.slane %v812, 0
        %v1358 = vperm.slane %v1354, 0
        %v1359 = vperm.slane %v1355, 0
        %v1360 = vperm.slane %v1356, 0
        %v1365 = vmul.f32 %v1357, %v1266
        %v1366 = vmul.f32 %v1357, %v1267
        %v1367 = vmul.f32 %v1357, %v1268
        %v1368 = vmul.f32 %v1357, %v1269
        %v1369 = vmul.f32 %v1357, %v1270
        %v1370 = vmul.f32 %v1357, %v1271
        %v1371 = vmul.f32 %v1357, %v1272
        %v1372 = vmul.f32 %v1357, %v1273
        %v1373 = vmul.f32 %v1357, %v1274
        %v1374 = vmul.f32 %v1357, %v1275
        %v1375 = vmul.f32 %v1357, %v1276
        %v1376 = vmul.f32 %v1357, %v1277
        %v1377 = vmul.f32 %v1357, %v1278
        %v1378 = vmul.f32 %v1357, %v1279
        %v1379 = vmul.f32 %v1357, %v1280
        %v1380 = vmul.f32 %v1357, %v1281
        %v1381 = vmul.f32 %v1358, %v1282
        %v1382 = vmul.f32 %v1358, %v1283
        %v1383 = vmul.f32 %v1358, %v1284
        %v1384 = vmul.f32 %v1358, %v1285
        %v1385 = vmul.f32 %v1358, %v1286
        %v1386 = vmul.f32 %v1358, %v1287
        %v1387 = vmul.f32 %v1358, %v1288
        %v1388 = vmul.f32 %v1358, %v1289
        %v1389 = vmul.f32 %v1358, %v1290
        %v1390 = vmul.f32 %v1358, %v1291
        %v1391 = vmul.f32 %v1358, %v1292
        %v1392 = vmul.f32 %v1358, %v1293
        %v1393 = vmul.f32 %v1358, %v1294
        %v1394 = vmul.f32 %v1358, %v1295
        %v1395 = vmul.f32 %v1358, %v1296
        %v1396 = vmul.f32 %v1358, %v1297
        %v1397 = vmul.f32 %v1359, %v1298
        %v1398 = vmul.f32 %v1359, %v1299
        %v1399 = vmul.f32 %v1359, %v1300
        %v1400 = vmul.f32 %v1359, %v1301
        %v1401 = vmul.f32 %v1359, %v1302
        %v1402 = vmul.f32 %v1359, %v1303
        %v1403 = vmul.f32 %v1359, %v1304
        %v1404 = vmul.f32 %v1359, %v1305
        %v1405 = vmul.f32 %v1359, %v1306
        %v1406 = vmul.f32 %v1359, %v1307
        %v1407 = vmul.f32 %v1359, %v1308
        %v1408 = vmul.f32 %v1359, %v1309
        %v1409 = vmul.f32 %v1359, %v1310
        %v1410 = vmul.f32 %v1359, %v1311
        %v1411 = vmul.f32 %v1359, %v1312
        %v1412 = vmul.f32 %v1359, %v1313
        %v1413 = vmul.f32 %v1360, %v1314
        %v1414 = vmul.f32 %v1360, %v1315
        %v1415 = vmul.f32 %v1360, %v1316
        %v1416 = vmul.f32 %v1360, %v1317
        %v1417 = vmul.f32 %v1360, %v1318
        %v1418 = vmul.f32 %v1360, %v1319
        %v1419 = vmul.f32 %v1360, %v1320
        %v1420 = vmul.f32 %v1360, %v1321
        %v1421 = vmul.f32 %v1360, %v1322
        %v1422 = vmul.f32 %v1360, %v1323
        %v1423 = vmul.f32 %v1360, %v1324
        %v1424 = vmul.f32 %v1360, %v1325
        %v1425 = vmul.f32 %v1360, %v1326
        %v1426 = vmul.f32 %v1360, %v1327
        %v1427 = vmul.f32 %v1360, %v1328
        %v1428 = vmul.f32 %v1360, %v1329
        %1493 = vrot.lane.b32.xlu0 %v1365, 8
        %v1494 = vpop.permute.xlu0 %1493
        %1495 = vrot.lane.b32.xlu0 %v1366, 8
        %v1496 = vpop.permute.xlu0 %1495
        %1497 = vrot.lane.b32.xlu0 %v1367, 8
        %v1498 = vpop.permute.xlu0 %1497
        %1499 = vrot.lane.b32.xlu0 %v1368, 8
        %v1500 = vpop.permute.xlu0 %1499
        %1501 = vrot.lane.b32.xlu0 %v1369, 8
        %v1502 = vpop.permute.xlu0 %1501
        %1503 = vrot.lane.b32.xlu0 %v1370, 8
        %v1504 = vpop.permute.xlu0 %1503
        %1505 = vrot.lane.b32.xlu0 %v1371, 8
        %v1506 = vpop.permute.xlu0 %1505
        %1507 = vrot.lane.b32.xlu0 %v1372, 8
        %v1508 = vpop.permute.xlu0 %1507
        %1509 = vrot.lane.b32.xlu0 %v1373, 8
        %v1510 = vpop.permute.xlu0 %1509
        %1511 = vrot.lane.b32.xlu0 %v1374, 8
        %v1512 = vpop.permute.xlu0 %1511
        %1513 = vrot.lane.b32.xlu0 %v1375, 8
        %v1514 = vpop.permute.xlu0 %1513
        %1515 = vrot.lane.b32.xlu0 %v1376, 8
        %v1516 = vpop.permute.xlu0 %1515
        %1517 = vrot.lane.b32.xlu0 %v1377, 8
        %v1518 = vpop.permute.xlu0 %1517
        %1519 = vrot.lane.b32.xlu0 %v1378, 8
        %v1520 = vpop.permute.xlu0 %1519
        %1521 = vrot.lane.b32.xlu0 %v1379, 8
        %v1522 = vpop.permute.xlu0 %1521
        %1523 = vrot.lane.b32.xlu0 %v1380, 8
        %v1524 = vpop.permute.xlu0 %1523
        %1525 = vrot.lane.b32.xlu0 %v1381, 8
        %v1526 = vpop.permute.xlu0 %1525
        %1527 = vrot.lane.b32.xlu0 %v1382, 8
        %v1528 = vpop.permute.xlu0 %1527
        %1529 = vrot.lane.b32.xlu0 %v1383, 8
        %v1530 = vpop.permute.xlu0 %1529
        %1531 = vrot.lane.b32.xlu0 %v1384, 8
        %v1532 = vpop.permute.xlu0 %1531
        %1533 = vrot.lane.b32.xlu0 %v1385, 8
        %v1534 = vpop.permute.xlu0 %1533
        %1535 = vrot.lane.b32.xlu0 %v1386, 8
        %v1536 = vpop.permute.xlu0 %1535
        %1537 = vrot.lane.b32.xlu0 %v1387, 8
        %v1538 = vpop.permute.xlu0 %1537
        %1539 = vrot.lane.b32.xlu0 %v1388, 8
        %v1540 = vpop.permute.xlu0 %1539
        %1541 = vrot.lane.b32.xlu0 %v1389, 8
        %v1542 = vpop.permute.xlu0 %1541
        %1543 = vrot.lane.b32.xlu0 %v1390, 8
        %v1544 = vpop.permute.xlu0 %1543
        %1545 = vrot.lane.b32.xlu0 %v1391, 8
        %v1546 = vpop.permute.xlu0 %1545
        %1547 = vrot.lane.b32.xlu0 %v1392, 8
        %v1548 = vpop.permute.xlu0 %1547
        %1549 = vrot.lane.b32.xlu0 %v1393, 8
        %v1550 = vpop.permute.xlu0 %1549
        %1551 = vrot.lane.b32.xlu0 %v1394, 8
        %v1552 = vpop.permute.xlu0 %1551
        %1553 = vrot.lane.b32.xlu0 %v1395, 8
        %v1554 = vpop.permute.xlu0 %1553
        %1555 = vrot.lane.b32.xlu0 %v1396, 8
        %v1556 = vpop.permute.xlu0 %1555
        %1557 = vrot.lane.b32.xlu0 %v1397, 8
        %v1558 = vpop.permute.xlu0 %1557
        %1559 = vrot.lane.b32.xlu0 %v1398, 8
        %v1560 = vpop.permute.xlu0 %1559
        %1561 = vrot.lane.b32.xlu0 %v1399, 8
        %v1562 = vpop.permute.xlu0 %1561
        %1563 = vrot.lane.b32.xlu0 %v1400, 8
        %v1564 = vpop.permute.xlu0 %1563
        %1565 = vrot.lane.b32.xlu0 %v1401, 8
        %v1566 = vpop.permute.xlu0 %1565
        %1567 = vrot.lane.b32.xlu0 %v1402, 8
        %v1568 = vpop.permute.xlu0 %1567
        %1569 = vrot.lane.b32.xlu0 %v1403, 8
        %v1570 = vpop.permute.xlu0 %1569
        %1571 = vrot.lane.b32.xlu0 %v1404, 8
        %v1572 = vpop.permute.xlu0 %1571
        %1573 = vrot.lane.b32.xlu0 %v1405, 8
        %v1574 = vpop.permute.xlu0 %1573
        %1575 = vrot.lane.b32.xlu0 %v1406, 8
        %v1576 = vpop.permute.xlu0 %1575
        %1577 = vrot.lane.b32.xlu0 %v1407, 8
        %v1578 = vpop.permute.xlu0 %1577
        %1579 = vrot.lane.b32.xlu0 %v1408, 8
        %v1580 = vpop.permute.xlu0 %1579
        %1581 = vrot.lane.b32.xlu0 %v1409, 8
        %v1582 = vpop.permute.xlu0 %1581
        %1583 = vrot.lane.b32.xlu0 %v1410, 8
        %v1584 = vpop.permute.xlu0 %1583
        %1585 = vrot.lane.b32.xlu0 %v1411, 8
        %v1586 = vpop.permute.xlu0 %1585
        %1587 = vrot.lane.b32.xlu0 %v1412, 8
        %v1588 = vpop.permute.xlu0 %1587
        %1589 = vrot.lane.b32.xlu0 %v1413, 8
        %v1590 = vpop.permute.xlu0 %1589
        %1591 = vrot.lane.b32.xlu0 %v1414, 8
        %v1592 = vpop.permute.xlu0 %1591
        %1593 = vrot.lane.b32.xlu0 %v1415, 8
        %v1594 = vpop.permute.xlu0 %1593
        %1595 = vrot.lane.b32.xlu0 %v1416, 8
        %v1596 = vpop.permute.xlu0 %1595
        %1597 = vrot.lane.b32.xlu0 %v1417, 8
        %v1598 = vpop.permute.xlu0 %1597
        %1599 = vrot.lane.b32.xlu0 %v1418, 8
        %v1600 = vpop.permute.xlu0 %1599
        %1601 = vrot.lane.b32.xlu0 %v1419, 8
        %v1602 = vpop.permute.xlu0 %1601
        %1603 = vrot.lane.b32.xlu0 %v1420, 8
        %v1604 = vpop.permute.xlu0 %1603
        %1605 = vrot.lane.b32.xlu0 %v1421, 8
        %v1606 = vpop.permute.xlu0 %1605
        %1607 = vrot.lane.b32.xlu0 %v1422, 8
        %v1608 = vpop.permute.xlu0 %1607
        %1609 = vrot.lane.b32.xlu0 %v1423, 8
        %v1610 = vpop.permute.xlu0 %1609
        %1611 = vrot.lane.b32.xlu0 %v1424, 8
        %v1612 = vpop.permute.xlu0 %1611
        %1613 = vrot.lane.b32.xlu0 %v1425, 8
        %v1614 = vpop.permute.xlu0 %1613
        %1615 = vrot.lane.b32.xlu0 %v1426, 8
        %v1616 = vpop.permute.xlu0 %1615
        %1617 = vrot.lane.b32.xlu0 %v1427, 8
        %v1618 = vpop.permute.xlu0 %1617
        %1619 = vrot.lane.b32.xlu0 %v1428, 8
        %v1620 = vpop.permute.xlu0 %1619
        %v1685 = vsel %vm1332, %v1266, %v1494
        %v1686 = vsel %vm1332, %v1267, %v1496
        %v1687 = vsel %vm1332, %v1268, %v1498
        %v1688 = vsel %vm1332, %v1269, %v1500
        %v1689 = vsel %vm1332, %v1270, %v1502
        %v1690 = vsel %vm1332, %v1271, %v1504
        %v1691 = vsel %vm1332, %v1272, %v1506
        %v1692 = vsel %vm1332, %v1273, %v1508
        %v1693 = vsel %vm1332, %v1274, %v1510
        %v1694 = vsel %vm1332, %v1275, %v1512
        %v1695 = vsel %vm1332, %v1276, %v1514
        %v1696 = vsel %vm1332, %v1277, %v1516
        %v1697 = vsel %vm1332, %v1278, %v1518
        %v1698 = vsel %vm1332, %v1279, %v1520
        %v1699 = vsel %vm1332, %v1280, %v1522
        %v1700 = vsel %vm1332, %v1281, %v1524
        %v1701 = vsel %vm1332, %v1282, %v1526
        %v1702 = vsel %vm1332, %v1283, %v1528
        %v1703 = vsel %vm1332, %v1284, %v1530
        %v1704 = vsel %vm1332, %v1285, %v1532
        %v1705 = vsel %vm1332, %v1286, %v1534
        %v1706 = vsel %vm1332, %v1287, %v1536
        %v1707 = vsel %vm1332, %v1288, %v1538
        %v1708 = vsel %vm1332, %v1289, %v1540
        %v1709 = vsel %vm1332, %v1290, %v1542
        %v1710 = vsel %vm1332, %v1291, %v1544
        %v1711 = vsel %vm1332, %v1292, %v1546
        %v1712 = vsel %vm1332, %v1293, %v1548
        %v1713 = vsel %vm1332, %v1294, %v1550
        %v1714 = vsel %vm1332, %v1295, %v1552
        %v1715 = vsel %vm1332, %v1296, %v1554
        %v1716 = vsel %vm1332, %v1297, %v1556
        %v1717 = vsel %vm1332, %v1298, %v1558
        %v1718 = vsel %vm1332, %v1299, %v1560
        %v1719 = vsel %vm1332, %v1300, %v1562
        %v1720 = vsel %vm1332, %v1301, %v1564
        %v1721 = vsel %vm1332, %v1302, %v1566
        %v1722 = vsel %vm1332, %v1303, %v1568
        %v1723 = vsel %vm1332, %v1304, %v1570
        %v1724 = vsel %vm1332, %v1305, %v1572
        %v1725 = vsel %vm1332, %v1306, %v1574
        %v1726 = vsel %vm1332, %v1307, %v1576
        %v1727 = vsel %vm1332, %v1308, %v1578
        %v1728 = vsel %vm1332, %v1309, %v1580
        %v1729 = vsel %vm1332, %v1310, %v1582
        %v1730 = vsel %vm1332, %v1311, %v1584
        %v1731 = vsel %vm1332, %v1312, %v1586
        %v1732 = vsel %vm1332, %v1313, %v1588
        %v1733 = vsel %vm1332, %v1314, %v1590
        %v1734 = vsel %vm1332, %v1315, %v1592
        %v1735 = vsel %vm1332, %v1316, %v1594
        %v1736 = vsel %vm1332, %v1317, %v1596
        %v1737 = vsel %vm1332, %v1318, %v1598
        %v1738 = vsel %vm1332, %v1319, %v1600
        %v1739 = vsel %vm1332, %v1320, %v1602
        %v1740 = vsel %vm1332, %v1321, %v1604
        %v1741 = vsel %vm1332, %v1322, %v1606
        %v1742 = vsel %vm1332, %v1323, %v1608
        %v1743 = vsel %vm1332, %v1324, %v1610
        %v1744 = vsel %vm1332, %v1325, %v1612
        %v1745 = vsel %vm1332, %v1326, %v1614
        %v1746 = vsel %vm1332, %v1327, %v1616
        %v1747 = vsel %vm1332, %v1328, %v1618
        %v1748 = vsel %vm1332, %v1329, %v1620
        %v1749 = vpack.c.bf16 %v1686, %v1685
        %v1750 = vpack.c.bf16 %v1688, %v1687
        %v1751 = vpack.c.bf16 %v1690, %v1689
        %v1752 = vpack.c.bf16 %v1692, %v1691
        %v1753 = vpack.c.bf16 %v1694, %v1693
        %v1754 = vpack.c.bf16 %v1696, %v1695
        %v1755 = vpack.c.bf16 %v1698, %v1697
        %v1756 = vpack.c.bf16 %v1700, %v1699
        %v1757 = vpack.c.bf16 %v1702, %v1701
        %v1758 = vpack.c.bf16 %v1704, %v1703
        %v1759 = vpack.c.bf16 %v1706, %v1705
        %v1760 = vpack.c.bf16 %v1708, %v1707
        %v1761 = vpack.c.bf16 %v1710, %v1709
        %v1762 = vpack.c.bf16 %v1712, %v1711
        %v1763 = vpack.c.bf16 %v1714, %v1713
        %v1764 = vpack.c.bf16 %v1716, %v1715
        %v1765 = vpack.c.bf16 %v1718, %v1717
        %v1766 = vpack.c.bf16 %v1720, %v1719
        %v1767 = vpack.c.bf16 %v1722, %v1721
        %v1768 = vpack.c.bf16 %v1724, %v1723
        %v1769 = vpack.c.bf16 %v1726, %v1725
        %v1770 = vpack.c.bf16 %v1728, %v1727
        %v1771 = vpack.c.bf16 %v1730, %v1729
        %v1772 = vpack.c.bf16 %v1732, %v1731
        %v1773 = vpack.c.bf16 %v1734, %v1733
        %v1774 = vpack.c.bf16 %v1736, %v1735
        %v1775 = vpack.c.bf16 %v1738, %v1737
        %v1776 = vpack.c.bf16 %v1740, %v1739
        %v1777 = vpack.c.bf16 %v1742, %v1741
        %v1778 = vpack.c.bf16 %v1744, %v1743
        %v1779 = vpack.c.bf16 %v1746, %v1745
        %v1780 = vpack.c.bf16 %v1748, %v1747
        %v1781 = vld [vmem:[%s5] sm:$0xf]
        %v1782 = vld [vmem:[%s5 + $0x4] sm:$0xf]
        %v1785 = vunpack.c.l.b16 %v1781
        %v1786 = vunpack.c.l.b16 %v1782
        %v1787 = vpack.c.b16 %v1786, %v1785
        %vm1789 = vcmask 130048
        %v1791 = vsel %vm1789, %v1749, 0
        %v1794 = vsel %vm1789, %v1750, 0
        %v1797 = vsel %vm1789, %v1751, 0
        %v1800 = vsel %vm1789, %v1752, 0
        %v1803 = vsel %vm1789, %v1753, 0
        %v1806 = vsel %vm1789, %v1754, 0
        %v1809 = vsel %vm1789, %v1755, 0
        %v1812 = vsel %vm1789, %v1756, 0
        %v1815 = vsel %vm1789, %v1757, 0
        %v1818 = vsel %vm1789, %v1758, 0
        %v1821 = vsel %vm1789, %v1759, 0
        %v1824 = vsel %vm1789, %v1760, 0
        %v1827 = vsel %vm1789, %v1761, 0
        %v1830 = vsel %vm1789, %v1762, 0
        %v1833 = vsel %vm1789, %v1763, 0
        %v1836 = vsel %vm1789, %v1764, 0
        %v1839 = vsel %vm1789, %v1765, 0
        %v1842 = vsel %vm1789, %v1766, 0
        %v1845 = vsel %vm1789, %v1767, 0
        %v1848 = vsel %vm1789, %v1768, 0
        %v1851 = vsel %vm1789, %v1769, 0
        %v1854 = vsel %vm1789, %v1770, 0
        %v1857 = vsel %vm1789, %v1771, 0
        %v1860 = vsel %vm1789, %v1772, 0
        %v1863 = vsel %vm1789, %v1773, 0
        %v1866 = vsel %vm1789, %v1774, 0
        %v1869 = vsel %vm1789, %v1775, 0
        %v1872 = vsel %vm1789, %v1776, 0
        %v1875 = vsel %vm1789, %v1777, 0
        %v1878 = vsel %vm1789, %v1778, 0
        %v1881 = vsel %vm1789, %v1779, 0
        %v1884 = vsel %vm1789, %v1780, 0
        %1886 = vmatpush.bf16.msra.mxu0 0
        %1887 = vmatpush.bf16.msra.mxu0 0
        %1888 = vmatpush.bf16.msra.mxu0 0
        %1889 = vmatpush.bf16.msra.mxu0 0
        %1890 = vmatpush.bf16.msra.mxu0 0
        %1891 = vmatpush.bf16.msra.mxu0 0
        %1892 = vmatpush.bf16.msra.mxu0 0
        %1893 = vmatpush.bf16.msra.mxu0 %v1787
        %1894 = vmatmul.bf16.gmra.mxu0 %v1791
        %v1895 = vpop.f32.mrf.mxu0
        %v1896 = vadd.f32 0.0, %v1895
        %v1897 = vpop.f32.mrf.mxu0
        %v1898 = vadd.f32 0.0, %v1897
        %1899 = vmatmul.bf16.gmra.mxu0 %v1794
        %v1900 = vpop.f32.mrf.mxu0
        %v1901 = vadd.f32 0.0, %v1900
        %v1902 = vpop.f32.mrf.mxu0
        %v1903 = vadd.f32 0.0, %v1902
        %1904 = vmatmul.bf16.gmra.mxu0 %v1797
        %v1905 = vpop.f32.mrf.mxu0
        %v1906 = vadd.f32 0.0, %v1905
        %v1907 = vpop.f32.mrf.mxu0
        %v1908 = vadd.f32 0.0, %v1907
        %1909 = vmatmul.bf16.gmra.mxu0 %v1800
        %v1910 = vpop.f32.mrf.mxu0
        %v1911 = vadd.f32 0.0, %v1910
        %v1912 = vpop.f32.mrf.mxu0
        %v1913 = vadd.f32 0.0, %v1912
        %1914 = vmatmul.bf16.gmra.mxu0 %v1803
        %v1915 = vpop.f32.mrf.mxu0
        %v1916 = vadd.f32 0.0, %v1915
        %v1917 = vpop.f32.mrf.mxu0
        %v1918 = vadd.f32 0.0, %v1917
        %1919 = vmatmul.bf16.gmra.mxu0 %v1806
        %v1920 = vpop.f32.mrf.mxu0
        %v1921 = vadd.f32 0.0, %v1920
        %v1922 = vpop.f32.mrf.mxu0
        %v1923 = vadd.f32 0.0, %v1922
        %1924 = vmatmul.bf16.gmra.mxu0 %v1809
        %v1925 = vpop.f32.mrf.mxu0
        %v1926 = vadd.f32 0.0, %v1925
        %v1927 = vpop.f32.mrf.mxu0
        %v1928 = vadd.f32 0.0, %v1927
        %1929 = vmatmul.bf16.gmra.mxu0 %v1812
        %v1930 = vpop.f32.mrf.mxu0
        %v1931 = vadd.f32 0.0, %v1930
        %v1932 = vpop.f32.mrf.mxu0
        %v1933 = vadd.f32 0.0, %v1932
        %1934 = vmatmul.bf16.gmra.mxu0 %v1815
        %v1935 = vpop.f32.mrf.mxu0
        %v1936 = vadd.f32 0.0, %v1935
        %v1937 = vpop.f32.mrf.mxu0
        %v1938 = vadd.f32 0.0, %v1937
        %1939 = vmatmul.bf16.gmra.mxu0 %v1818
        %v1940 = vpop.f32.mrf.mxu0
        %v1941 = vadd.f32 0.0, %v1940
        %v1942 = vpop.f32.mrf.mxu0
        %v1943 = vadd.f32 0.0, %v1942
        %1944 = vmatmul.bf16.gmra.mxu0 %v1821
        %v1945 = vpop.f32.mrf.mxu0
        %v1946 = vadd.f32 0.0, %v1945
        %v1947 = vpop.f32.mrf.mxu0
        %v1948 = vadd.f32 0.0, %v1947
        %1949 = vmatmul.bf16.gmra.mxu0 %v1824
        %v1950 = vpop.f32.mrf.mxu0
        %v1951 = vadd.f32 0.0, %v1950
        %v1952 = vpop.f32.mrf.mxu0
        %v1953 = vadd.f32 0.0, %v1952
        %1954 = vmatmul.bf16.gmra.mxu0 %v1827
        %v1955 = vpop.f32.mrf.mxu0
        %v1956 = vadd.f32 0.0, %v1955
        %v1957 = vpop.f32.mrf.mxu0
        %v1958 = vadd.f32 0.0, %v1957
        %1959 = vmatmul.bf16.gmra.mxu0 %v1830
        %v1960 = vpop.f32.mrf.mxu0
        %v1961 = vadd.f32 0.0, %v1960
        %v1962 = vpop.f32.mrf.mxu0
        %v1963 = vadd.f32 0.0, %v1962
        %1964 = vmatmul.bf16.gmra.mxu0 %v1833
        %v1965 = vpop.f32.mrf.mxu0
        %v1966 = vadd.f32 0.0, %v1965
        %v1967 = vpop.f32.mrf.mxu0
        %v1968 = vadd.f32 0.0, %v1967
        %1969 = vmatmul.bf16.gmra.mxu0 %v1836
        %v1970 = vpop.f32.mrf.mxu0
        %v1971 = vadd.f32 0.0, %v1970
        %v1972 = vpop.f32.mrf.mxu0
        %v1973 = vadd.f32 0.0, %v1972
        %1974 = vmatmul.bf16.gmra.mxu0 %v1839
        %v1975 = vpop.f32.mrf.mxu0
        %v1976 = vadd.f32 0.0, %v1975
        %v1977 = vpop.f32.mrf.mxu0
        %v1978 = vadd.f32 0.0, %v1977
        %1979 = vmatmul.bf16.gmra.mxu0 %v1842
        %v1980 = vpop.f32.mrf.mxu0
        %v1981 = vadd.f32 0.0, %v1980
        %v1982 = vpop.f32.mrf.mxu0
        %v1983 = vadd.f32 0.0, %v1982
        %1984 = vmatmul.bf16.gmra.mxu0 %v1845
        %v1985 = vpop.f32.mrf.mxu0
        %v1986 = vadd.f32 0.0, %v1985
        %v1987 = vpop.f32.mrf.mxu0
        %v1988 = vadd.f32 0.0, %v1987
        %1989 = vmatmul.bf16.gmra.mxu0 %v1848
        %v1990 = vpop.f32.mrf.mxu0
        %v1991 = vadd.f32 0.0, %v1990
        %v1992 = vpop.f32.mrf.mxu0
        %v1993 = vadd.f32 0.0, %v1992
        %1994 = vmatmul.bf16.gmra.mxu0 %v1851
        %v1995 = vpop.f32.mrf.mxu0
        %v1996 = vadd.f32 0.0, %v1995
        %v1997 = vpop.f32.mrf.mxu0
        %v1998 = vadd.f32 0.0, %v1997
        %1999 = vmatmul.bf16.gmra.mxu0 %v1854
        %v2000 = vpop.f32.mrf.mxu0
        %v2001 = vadd.f32 0.0, %v2000
        %v2002 = vpop.f32.mrf.mxu0
        %v2003 = vadd.f32 0.0, %v2002
        %2004 = vmatmul.bf16.gmra.mxu0 %v1857
        %v2005 = vpop.f32.mrf.mxu0
        %v2006 = vadd.f32 0.0, %v2005
        %v2007 = vpop.f32.mrf.mxu0
        %v2008 = vadd.f32 0.0, %v2007
        %2009 = vmatmul.bf16.gmra.mxu0 %v1860
        %v2010 = vpop.f32.mrf.mxu0
        %v2011 = vadd.f32 0.0, %v2010
        %v2012 = vpop.f32.mrf.mxu0
        %v2013 = vadd.f32 0.0, %v2012
        %2014 = vmatmul.bf16.gmra.mxu0 %v1863
        %v2015 = vpop.f32.mrf.mxu0
        %v2016 = vadd.f32 0.0, %v2015
        %v2017 = vpop.f32.mrf.mxu0
        %v2018 = vadd.f32 0.0, %v2017
        %2019 = vmatmul.bf16.gmra.mxu0 %v1866
        %v2020 = vpop.f32.mrf.mxu0
        %v2021 = vadd.f32 0.0, %v2020
        %v2022 = vpop.f32.mrf.mxu0
        %v2023 = vadd.f32 0.0, %v2022
        %2024 = vmatmul.bf16.gmra.mxu0 %v1869
        %v2025 = vpop.f32.mrf.mxu0
        %v2026 = vadd.f32 0.0, %v2025
        %v2027 = vpop.f32.mrf.mxu0
        %v2028 = vadd.f32 0.0, %v2027
        %2029 = vmatmul.bf16.gmra.mxu0 %v1872
        %v2030 = vpop.f32.mrf.mxu0
        %v2031 = vadd.f32 0.0, %v2030
        %v2032 = vpop.f32.mrf.mxu0
        %v2033 = vadd.f32 0.0, %v2032
        %2034 = vmatmul.bf16.gmra.mxu0 %v1875
        %v2035 = vpop.f32.mrf.mxu0
        %v2036 = vadd.f32 0.0, %v2035
        %v2037 = vpop.f32.mrf.mxu0
        %v2038 = vadd.f32 0.0, %v2037
        %2039 = vmatmul.bf16.gmra.mxu0 %v1878
        %v2040 = vpop.f32.mrf.mxu0
        %v2041 = vadd.f32 0.0, %v2040
        %v2042 = vpop.f32.mrf.mxu0
        %v2043 = vadd.f32 0.0, %v2042
        %2044 = vmatmul.bf16.gmra.mxu0 %v1881
        %v2045 = vpop.f32.mrf.mxu0
        %v2046 = vadd.f32 0.0, %v2045
        %v2047 = vpop.f32.mrf.mxu0
        %v2048 = vadd.f32 0.0, %v2047
        %2049 = vmatmul.bf16.gmra.mxu0 %v1884
        %v2050 = vpop.f32.mrf.mxu0
        %v2051 = vadd.f32 0.0, %v2050
        %v2052 = vpop.f32.mrf.mxu0
        %v2053 = vadd.f32 0.0, %v2052
        %2054 = vdwg.mxu0
        %v2056 = vrot.slane %v1350, 1
        %v2057 = vrot.slane %v1350, 2
        %v2058 = vrot.slane %v1350, 3
        %v2059 = vperm.slane %v1350, 0
        %v2060 = vperm.slane %v2056, 0
        %v2061 = vperm.slane %v2057, 0
        %v2062 = vperm.slane %v2058, 0
        %v2067 = vadd.f32 %v1896, %v2059
        %v2068 = vadd.f32 %v1898, %v2059
        %v2069 = vadd.f32 %v1901, %v2059
        %v2070 = vadd.f32 %v1903, %v2059
        %v2071 = vadd.f32 %v1906, %v2059
        %v2072 = vadd.f32 %v1908, %v2059
        %v2073 = vadd.f32 %v1911, %v2059
        %v2074 = vadd.f32 %v1913, %v2059
        %v2075 = vadd.f32 %v1916, %v2059
        %v2076 = vadd.f32 %v1918, %v2059
        %v2077 = vadd.f32 %v1921, %v2059
        %v2078 = vadd.f32 %v1923, %v2059
        %v2079 = vadd.f32 %v1926, %v2059
        %v2080 = vadd.f32 %v1928, %v2059
        %v2081 = vadd.f32 %v1931, %v2059
        %v2082 = vadd.f32 %v1933, %v2059
        %v2083 = vadd.f32 %v1936, %v2060
        %v2084 = vadd.f32 %v1938, %v2060
        %v2085 = vadd.f32 %v1941, %v2060
        %v2086 = vadd.f32 %v1943, %v2060
        %v2087 = vadd.f32 %v1946, %v2060
        %v2088 = vadd.f32 %v1948, %v2060
        %v2089 = vadd.f32 %v1951, %v2060
        %v2090 = vadd.f32 %v1953, %v2060
        %v2091 = vadd.f32 %v1956, %v2060
        %v2092 = vadd.f32 %v1958, %v2060
        %v2093 = vadd.f32 %v1961, %v2060
        %v2094 = vadd.f32 %v1963, %v2060
        %v2095 = vadd.f32 %v1966, %v2060
        %v2096 = vadd.f32 %v1968, %v2060
        %v2097 = vadd.f32 %v1971, %v2060
        %v2098 = vadd.f32 %v1973, %v2060
        %v2099 = vadd.f32 %v1976, %v2061
        %v2100 = vadd.f32 %v1978, %v2061
        %v2101 = vadd.f32 %v1981, %v2061
        %v2102 = vadd.f32 %v1983, %v2061
        %v2103 = vadd.f32 %v1986, %v2061
        %v2104 = vadd.f32 %v1988, %v2061
        %v2105 = vadd.f32 %v1991, %v2061
        %v2106 = vadd.f32 %v1993, %v2061
        %v2107 = vadd.f32 %v1996, %v2061
        %v2108 = vadd.f32 %v1998, %v2061
        %v2109 = vadd.f32 %v2001, %v2061
        %v2110 = vadd.f32 %v2003, %v2061
        %v2111 = vadd.f32 %v2006, %v2061
        %v2112 = vadd.f32 %v2008, %v2061
        %v2113 = vadd.f32 %v2011, %v2061
        %v2114 = vadd.f32 %v2013, %v2061
        %v2115 = vadd.f32 %v2016, %v2062
        %v2116 = vadd.f32 %v2018, %v2062
        %v2117 = vadd.f32 %v2021, %v2062
        %v2118 = vadd.f32 %v2023, %v2062
        %v2119 = vadd.f32 %v2026, %v2062
        %v2120 = vadd.f32 %v2028, %v2062
        %v2121 = vadd.f32 %v2031, %v2062
        %v2122 = vadd.f32 %v2033, %v2062
        %v2123 = vadd.f32 %v2036, %v2062
        %v2124 = vadd.f32 %v2038, %v2062
        %v2125 = vadd.f32 %v2041, %v2062
        %v2126 = vadd.f32 %v2043, %v2062
        %v2127 = vadd.f32 %v2046, %v2062
        %v2128 = vadd.f32 %v2048, %v2062
        %v2129 = vadd.f32 %v2051, %v2062
        %v2130 = vadd.f32 %v2053, %v2062
        %v2131 = vld [vmem:[%s6] sm:$0x1]
        %v2133 = vperm.slane %v2131, 0
        %v2135 = vadd.f32 %v2067, %v2133
        %v2136 = vadd.f32 %v2068, %v2133
        %v2137 = vadd.f32 %v2069, %v2133
        %v2138 = vadd.f32 %v2070, %v2133
        %v2139 = vadd.f32 %v2071, %v2133
        %v2140 = vadd.f32 %v2072, %v2133
        %v2141 = vadd.f32 %v2073, %v2133
        %v2142 = vadd.f32 %v2074, %v2133
        %v2143 = vadd.f32 %v2075, %v2133
        %v2144 = vadd.f32 %v2076, %v2133
        %v2145 = vadd.f32 %v2077, %v2133
        %v2146 = vadd.f32 %v2078, %v2133
        %v2147 = vadd.f32 %v2079, %v2133
        %v2148 = vadd.f32 %v2080, %v2133
        %v2149 = vadd.f32 %v2081, %v2133
        %v2150 = vadd.f32 %v2082, %v2133
        %v2151 = vadd.f32 %v2083, %v2133
        %v2152 = vadd.f32 %v2084, %v2133
        %v2153 = vadd.f32 %v2085, %v2133
        %v2154 = vadd.f32 %v2086, %v2133
        %v2155 = vadd.f32 %v2087, %v2133
        %v2156 = vadd.f32 %v2088, %v2133
        %v2157 = vadd.f32 %v2089, %v2133
        %v2158 = vadd.f32 %v2090, %v2133
        %v2159 = vadd.f32 %v2091, %v2133
        %v2160 = vadd.f32 %v2092, %v2133
        %v2161 = vadd.f32 %v2093, %v2133
        %v2162 = vadd.f32 %v2094, %v2133
        %v2163 = vadd.f32 %v2095, %v2133
        %v2164 = vadd.f32 %v2096, %v2133
        %v2165 = vadd.f32 %v2097, %v2133
        %v2166 = vadd.f32 %v2098, %v2133
        %v2167 = vadd.f32 %v2099, %v2133
        %v2168 = vadd.f32 %v2100, %v2133
        %v2169 = vadd.f32 %v2101, %v2133
        %v2170 = vadd.f32 %v2102, %v2133
        %v2171 = vadd.f32 %v2103, %v2133
        %v2172 = vadd.f32 %v2104, %v2133
        %v2173 = vadd.f32 %v2105, %v2133
        %v2174 = vadd.f32 %v2106, %v2133
        %v2175 = vadd.f32 %v2107, %v2133
        %v2176 = vadd.f32 %v2108, %v2133
        %v2177 = vadd.f32 %v2109, %v2133
        %v2178 = vadd.f32 %v2110, %v2133
        %v2179 = vadd.f32 %v2111, %v2133
        %v2180 = vadd.f32 %v2112, %v2133
        %v2181 = vadd.f32 %v2113, %v2133
        %v2182 = vadd.f32 %v2114, %v2133
        %v2183 = vadd.f32 %v2115, %v2133
        %v2184 = vadd.f32 %v2116, %v2133
        %v2185 = vadd.f32 %v2117, %v2133
        %v2186 = vadd.f32 %v2118, %v2133
        %v2187 = vadd.f32 %v2119, %v2133
        %v2188 = vadd.f32 %v2120, %v2133
        %v2189 = vadd.f32 %v2121, %v2133
        %v2190 = vadd.f32 %v2122, %v2133
        %v2191 = vadd.f32 %v2123, %v2133
        %v2192 = vadd.f32 %v2124, %v2133
        %v2193 = vadd.f32 %v2125, %v2133
        %v2194 = vadd.f32 %v2126, %v2133
        %v2195 = vadd.f32 %v2127, %v2133
        %v2196 = vadd.f32 %v2128, %v2133
        %v2197 = vadd.f32 %v2129, %v2133
        %v2198 = vadd.f32 %v2130, %v2133
        %vm2199 = vcmask 261120
        %v2200 = vsel %vm2199, %v2135, 0.0
        %v2201 = vsel %vm2199, %v2151, 0.0
        %v2202 = vadd.f32 %v2200, %v2201
        %v2203 = vsel %vm2199, %v2167, 0.0
        %v2204 = vadd.f32 %v2202, %v2203
        %v2205 = vsel %vm2199, %v2183, 0.0
        %v2206 = vadd.f32 %v2204, %v2205
        %v2207 = vsel %vm2199, %v2136, 0.0
        %v2208 = vsel %vm2199, %v2152, 0.0
        %v2209 = vadd.f32 %v2207, %v2208
        %v2210 = vsel %vm2199, %v2168, 0.0
        %v2211 = vadd.f32 %v2209, %v2210
        %v2212 = vsel %vm2199, %v2184, 0.0
        %v2213 = vadd.f32 %v2211, %v2212
        %v2214 = vsel %vm2199, %v2137, 0.0
        %v2215 = vsel %vm2199, %v2153, 0.0
        %v2216 = vadd.f32 %v2214, %v2215
        %v2217 = vsel %vm2199, %v2169, 0.0
        %v2218 = vadd.f32 %v2216, %v2217
        %v2219 = vsel %vm2199, %v2185, 0.0
        %v2220 = vadd.f32 %v2218, %v2219
        %v2221 = vsel %vm2199, %v2138, 0.0
        %v2222 = vsel %vm2199, %v2154, 0.0
        %v2223 = vadd.f32 %v2221, %v2222
        %v2224 = vsel %vm2199, %v2170, 0.0
        %v2225 = vadd.f32 %v2223, %v2224
        %v2226 = vsel %vm2199, %v2186, 0.0
        %v2227 = vadd.f32 %v2225, %v2226
        %v2228 = vsel %vm2199, %v2139, 0.0
        %v2229 = vsel %vm2199, %v2155, 0.0
        %v2230 = vadd.f32 %v2228, %v2229
        %v2231 = vsel %vm2199, %v2171, 0.0
        %v2232 = vadd.f32 %v2230, %v2231
        %v2233 = vsel %vm2199, %v2187, 0.0
        %v2234 = vadd.f32 %v2232, %v2233
        %v2235 = vsel %vm2199, %v2140, 0.0
        %v2236 = vsel %vm2199, %v2156, 0.0
        %v2237 = vadd.f32 %v2235, %v2236
        %v2238 = vsel %vm2199, %v2172, 0.0
        %v2239 = vadd.f32 %v2237, %v2238
        %v2240 = vsel %vm2199, %v2188, 0.0
        %v2241 = vadd.f32 %v2239, %v2240
        %v2242 = vsel %vm2199, %v2141, 0.0
        %v2243 = vsel %vm2199, %v2157, 0.0
        %v2244 = vadd.f32 %v2242, %v2243
        %v2245 = vsel %vm2199, %v2173, 0.0
        %v2246 = vadd.f32 %v2244, %v2245
        %v2247 = vsel %vm2199, %v2189, 0.0
        %v2248 = vadd.f32 %v2246, %v2247
        %v2249 = vsel %vm2199, %v2142, 0.0
        %v2250 = vsel %vm2199, %v2158, 0.0
        %v2251 = vadd.f32 %v2249, %v2250
        %v2252 = vsel %vm2199, %v2174, 0.0
        %v2253 = vadd.f32 %v2251, %v2252
        %v2254 = vsel %vm2199, %v2190, 0.0
        %v2255 = vadd.f32 %v2253, %v2254
        %v2256 = vsel %vm2199, %v2143, 0.0
        %v2257 = vsel %vm2199, %v2159, 0.0
        %v2258 = vadd.f32 %v2256, %v2257
        %v2259 = vsel %vm2199, %v2175, 0.0
        %v2260 = vadd.f32 %v2258, %v2259
        %v2261 = vsel %vm2199, %v2191, 0.0
        %v2262 = vadd.f32 %v2260, %v2261
        %v2263 = vsel %vm2199, %v2144, 0.0
        %v2264 = vsel %vm2199, %v2160, 0.0
        %v2265 = vadd.f32 %v2263, %v2264
        %v2266 = vsel %vm2199, %v2176, 0.0
        %v2267 = vadd.f32 %v2265, %v2266
        %v2268 = vsel %vm2199, %v2192, 0.0
        %v2269 = vadd.f32 %v2267, %v2268
        %v2270 = vsel %vm2199, %v2145, 0.0
        %v2271 = vsel %vm2199, %v2161, 0.0
        %v2272 = vadd.f32 %v2270, %v2271
        %v2273 = vsel %vm2199, %v2177, 0.0
        %v2274 = vadd.f32 %v2272, %v2273
        %v2275 = vsel %vm2199, %v2193, 0.0
        %v2276 = vadd.f32 %v2274, %v2275
        %v2277 = vsel %vm2199, %v2146, 0.0
        %v2278 = vsel %vm2199, %v2162, 0.0
        %v2279 = vadd.f32 %v2277, %v2278
        %v2280 = vsel %vm2199, %v2178, 0.0
        %v2281 = vadd.f32 %v2279, %v2280
        %v2282 = vsel %vm2199, %v2194, 0.0
        %v2283 = vadd.f32 %v2281, %v2282
        %v2284 = vsel %vm2199, %v2147, 0.0
        %v2285 = vsel %vm2199, %v2163, 0.0
        %v2286 = vadd.f32 %v2284, %v2285
        %v2287 = vsel %vm2199, %v2179, 0.0
        %v2288 = vadd.f32 %v2286, %v2287
        %v2289 = vsel %vm2199, %v2195, 0.0
        %v2290 = vadd.f32 %v2288, %v2289
        %v2291 = vsel %vm2199, %v2148, 0.0
        %v2292 = vsel %vm2199, %v2164, 0.0
        %v2293 = vadd.f32 %v2291, %v2292
        %v2294 = vsel %vm2199, %v2180, 0.0
        %v2295 = vadd.f32 %v2293, %v2294
        %v2296 = vsel %vm2199, %v2196, 0.0
        %v2297 = vadd.f32 %v2295, %v2296
        %v2298 = vsel %vm2199, %v2149, 0.0
        %v2299 = vsel %vm2199, %v2165, 0.0
        %v2300 = vadd.f32 %v2298, %v2299
        %v2301 = vsel %vm2199, %v2181, 0.0
        %v2302 = vadd.f32 %v2300, %v2301
        %v2303 = vsel %vm2199, %v2197, 0.0
        %v2304 = vadd.f32 %v2302, %v2303
        %v2305 = vsel %vm2199, %v2150, 0.0
        %v2306 = vsel %vm2199, %v2166, 0.0
        %v2307 = vadd.f32 %v2305, %v2306
        %v2308 = vsel %vm2199, %v2182, 0.0
        %v2309 = vadd.f32 %v2307, %v2308
        %v2310 = vsel %vm2199, %v2198, 0.0
        %v2311 = vadd.f32 %v2309, %v2310
        %v2312 = vrcp.pop 4.0
        %v2313 = vmul.f32 4.0, %v2312
        %v2314 = vsub.f32 1.0, %v2313
        %v2315 = vmul.f32 %v2312, %v2314
        %v2316 = vadd.f32 %v2312, %v2315
        %vm2317 = vweird.f32 %v2312
        %v2318 = vsel %vm2317, %v2312, %v2316
        %v2319 = vmul.f32 %v2206, %v2318
        %v2320 = vmul.f32 %v2213, %v2318
        %v2321 = vmul.f32 %v2220, %v2318
        %v2322 = vmul.f32 %v2227, %v2318
        %v2323 = vmul.f32 %v2234, %v2318
        %v2324 = vmul.f32 %v2241, %v2318
        %v2325 = vmul.f32 %v2248, %v2318
        %v2326 = vmul.f32 %v2255, %v2318
        %v2327 = vmul.f32 %v2262, %v2318
        %v2328 = vmul.f32 %v2269, %v2318
        %v2329 = vmul.f32 %v2276, %v2318
        %v2330 = vmul.f32 %v2283, %v2318
        %v2331 = vmul.f32 %v2290, %v2318
        %v2332 = vmul.f32 %v2297, %v2318
        %v2333 = vmul.f32 %v2304, %v2318
        %v2334 = vmul.f32 %v2311, %v2318
        %v2335 = vsub.f32 %v2135, %v2319
        %v2336 = vsub.f32 %v2136, %v2320
        %v2337 = vsub.f32 %v2137, %v2321
        %v2338 = vsub.f32 %v2138, %v2322
        %v2339 = vsub.f32 %v2139, %v2323
        %v2340 = vsub.f32 %v2140, %v2324
        %v2341 = vsub.f32 %v2141, %v2325
        %v2342 = vsub.f32 %v2142, %v2326
        %v2343 = vsub.f32 %v2143, %v2327
        %v2344 = vsub.f32 %v2144, %v2328
        %v2345 = vsub.f32 %v2145, %v2329
        %v2346 = vsub.f32 %v2146, %v2330
        %v2347 = vsub.f32 %v2147, %v2331
        %v2348 = vsub.f32 %v2148, %v2332
        %v2349 = vsub.f32 %v2149, %v2333
        %v2350 = vsub.f32 %v2150, %v2334
        %v2351 = vsub.f32 %v2151, %v2319
        %v2352 = vsub.f32 %v2152, %v2320
        %v2353 = vsub.f32 %v2153, %v2321
        %v2354 = vsub.f32 %v2154, %v2322
        %v2355 = vsub.f32 %v2155, %v2323
        %v2356 = vsub.f32 %v2156, %v2324
        %v2357 = vsub.f32 %v2157, %v2325
        %v2358 = vsub.f32 %v2158, %v2326
        %v2359 = vsub.f32 %v2159, %v2327
        %v2360 = vsub.f32 %v2160, %v2328
        %v2361 = vsub.f32 %v2161, %v2329
        %v2362 = vsub.f32 %v2162, %v2330
        %v2363 = vsub.f32 %v2163, %v2331
        %v2364 = vsub.f32 %v2164, %v2332
        %v2365 = vsub.f32 %v2165, %v2333
        %v2366 = vsub.f32 %v2166, %v2334
        %v2367 = vsub.f32 %v2167, %v2319
        %v2368 = vsub.f32 %v2168, %v2320
        %v2369 = vsub.f32 %v2169, %v2321
        %v2370 = vsub.f32 %v2170, %v2322
        %v2371 = vsub.f32 %v2171, %v2323
        %v2372 = vsub.f32 %v2172, %v2324
        %v2373 = vsub.f32 %v2173, %v2325
        %v2374 = vsub.f32 %v2174, %v2326
        %v2375 = vsub.f32 %v2175, %v2327
        %v2376 = vsub.f32 %v2176, %v2328
        %v2377 = vsub.f32 %v2177, %v2329
        %v2378 = vsub.f32 %v2178, %v2330
        %v2379 = vsub.f32 %v2179, %v2331
        %v2380 = vsub.f32 %v2180, %v2332
        %v2381 = vsub.f32 %v2181, %v2333
        %v2382 = vsub.f32 %v2182, %v2334
        %v2383 = vsub.f32 %v2183, %v2319
        %v2384 = vsub.f32 %v2184, %v2320
        %v2385 = vsub.f32 %v2185, %v2321
        %v2386 = vsub.f32 %v2186, %v2322
        %v2387 = vsub.f32 %v2187, %v2323
        %v2388 = vsub.f32 %v2188, %v2324
        %v2389 = vsub.f32 %v2189, %v2325
        %v2390 = vsub.f32 %v2190, %v2326
        %v2391 = vsub.f32 %v2191, %v2327
        %v2392 = vsub.f32 %v2192, %v2328
        %v2393 = vsub.f32 %v2193, %v2329
        %v2394 = vsub.f32 %v2194, %v2330
        %v2395 = vsub.f32 %v2195, %v2331
        %v2396 = vsub.f32 %v2196, %v2332
        %v2397 = vsub.f32 %v2197, %v2333
        %v2398 = vsub.f32 %v2198, %v2334
        %v2399 = vmul.f32 %v2335, %v2335
        %v2400 = vmul.f32 %v2336, %v2336
        %v2401 = vmul.f32 %v2337, %v2337
        %v2402 = vmul.f32 %v2338, %v2338
        %v2403 = vmul.f32 %v2339, %v2339
        %v2404 = vmul.f32 %v2340, %v2340
        %v2405 = vmul.f32 %v2341, %v2341
        %v2406 = vmul.f32 %v2342, %v2342
        %v2407 = vmul.f32 %v2343, %v2343
        %v2408 = vmul.f32 %v2344, %v2344
        %v2409 = vmul.f32 %v2345, %v2345
        %v2410 = vmul.f32 %v2346, %v2346
        %v2411 = vmul.f32 %v2347, %v2347
        %v2412 = vmul.f32 %v2348, %v2348
        %v2413 = vmul.f32 %v2349, %v2349
        %v2414 = vmul.f32 %v2350, %v2350
        %v2415 = vmul.f32 %v2351, %v2351
        %v2416 = vmul.f32 %v2352, %v2352
        %v2417 = vmul.f32 %v2353, %v2353
        %v2418 = vmul.f32 %v2354, %v2354
        %v2419 = vmul.f32 %v2355, %v2355
        %v2420 = vmul.f32 %v2356, %v2356
        %v2421 = vmul.f32 %v2357, %v2357
        %v2422 = vmul.f32 %v2358, %v2358
        %v2423 = vmul.f32 %v2359, %v2359
        %v2424 = vmul.f32 %v2360, %v2360
        %v2425 = vmul.f32 %v2361, %v2361
        %v2426 = vmul.f32 %v2362, %v2362
        %v2427 = vmul.f32 %v2363, %v2363
        %v2428 = vmul.f32 %v2364, %v2364
        %v2429 = vmul.f32 %v2365, %v2365
        %v2430 = vmul.f32 %v2366, %v2366
        %v2431 = vmul.f32 %v2367, %v2367
        %v2432 = vmul.f32 %v2368, %v2368
        %v2433 = vmul.f32 %v2369, %v2369
        %v2434 = vmul.f32 %v2370, %v2370
        %v2435 = vmul.f32 %v2371, %v2371
        %v2436 = vmul.f32 %v2372, %v2372
        %v2437 = vmul.f32 %v2373, %v2373
        %v2438 = vmul.f32 %v2374, %v2374
        %v2439 = vmul.f32 %v2375, %v2375
        %v2440 = vmul.f32 %v2376, %v2376
        %v2441 = vmul.f32 %v2377, %v2377
        %v2442 = vmul.f32 %v2378, %v2378
        %v2443 = vmul.f32 %v2379, %v2379
        %v2444 = vmul.f32 %v2380, %v2380
        %v2445 = vmul.f32 %v2381, %v2381
        %v2446 = vmul.f32 %v2382, %v2382
        %v2447 = vmul.f32 %v2383, %v2383
        %v2448 = vmul.f32 %v2384, %v2384
        %v2449 = vmul.f32 %v2385, %v2385
        %v2450 = vmul.f32 %v2386, %v2386
        %v2451 = vmul.f32 %v2387, %v2387
        %v2452 = vmul.f32 %v2388, %v2388
        %v2453 = vmul.f32 %v2389, %v2389
        %v2454 = vmul.f32 %v2390, %v2390
        %v2455 = vmul.f32 %v2391, %v2391
        %v2456 = vmul.f32 %v2392, %v2392
        %v2457 = vmul.f32 %v2393, %v2393
        %v2458 = vmul.f32 %v2394, %v2394
        %v2459 = vmul.f32 %v2395, %v2395
        %v2460 = vmul.f32 %v2396, %v2396
        %v2461 = vmul.f32 %v2397, %v2397
        %v2462 = vmul.f32 %v2398, %v2398
        %v2463 = vsel %vm2199, %v2399, 0.0
        %v2464 = vsel %vm2199, %v2415, 0.0
        %v2465 = vadd.f32 %v2463, %v2464
        %v2466 = vsel %vm2199, %v2431, 0.0
        %v2467 = vadd.f32 %v2465, %v2466
        %v2468 = vsel %vm2199, %v2447, 0.0
        %v2469 = vadd.f32 %v2467, %v2468
        %v2470 = vsel %vm2199, %v2400, 0.0
        %v2471 = vsel %vm2199, %v2416, 0.0
        %v2472 = vadd.f32 %v2470, %v2471
        %v2473 = vsel %vm2199, %v2432, 0.0
        %v2474 = vadd.f32 %v2472, %v2473
        %v2475 = vsel %vm2199, %v2448, 0.0
        %v2476 = vadd.f32 %v2474, %v2475
        %v2477 = vsel %vm2199, %v2401, 0.0
        %v2478 = vsel %vm2199, %v2417, 0.0
        %v2479 = vadd.f32 %v2477, %v2478
        %v2480 = vsel %vm2199, %v2433, 0.0
        %v2481 = vadd.f32 %v2479, %v2480
        %v2482 = vsel %vm2199, %v2449, 0.0
        %v2483 = vadd.f32 %v2481, %v2482
        %v2484 = vsel %vm2199, %v2402, 0.0
        %v2485 = vsel %vm2199, %v2418, 0.0
        %v2486 = vadd.f32 %v2484, %v2485
        %v2487 = vsel %vm2199, %v2434, 0.0
        %v2488 = vadd.f32 %v2486, %v2487
        %v2489 = vsel %vm2199, %v2450, 0.0
        %v2490 = vadd.f32 %v2488, %v2489
        %v2491 = vsel %vm2199, %v2403, 0.0
        %v2492 = vsel %vm2199, %v2419, 0.0
        %v2493 = vadd.f32 %v2491, %v2492
        %v2494 = vsel %vm2199, %v2435, 0.0
        %v2495 = vadd.f32 %v2493, %v2494
        %v2496 = vsel %vm2199, %v2451, 0.0
        %v2497 = vadd.f32 %v2495, %v2496
        %v2498 = vsel %vm2199, %v2404, 0.0
        %v2499 = vsel %vm2199, %v2420, 0.0
        %v2500 = vadd.f32 %v2498, %v2499
        %v2501 = vsel %vm2199, %v2436, 0.0
        %v2502 = vadd.f32 %v2500, %v2501
        %v2503 = vsel %vm2199, %v2452, 0.0
        %v2504 = vadd.f32 %v2502, %v2503
        %v2505 = vsel %vm2199, %v2405, 0.0
        %v2506 = vsel %vm2199, %v2421, 0.0
        %v2507 = vadd.f32 %v2505, %v2506
        %v2508 = vsel %vm2199, %v2437, 0.0
        %v2509 = vadd.f32 %v2507, %v2508
        %v2510 = vsel %vm2199, %v2453, 0.0
        %v2511 = vadd.f32 %v2509, %v2510
        %v2512 = vsel %vm2199, %v2406, 0.0
        %v2513 = vsel %vm2199, %v2422, 0.0
        %v2514 = vadd.f32 %v2512, %v2513
        %v2515 = vsel %vm2199, %v2438, 0.0
        %v2516 = vadd.f32 %v2514, %v2515
        %v2517 = vsel %vm2199, %v2454, 0.0
        %v2518 = vadd.f32 %v2516, %v2517
        %v2519 = vsel %vm2199, %v2407, 0.0
        %v2520 = vsel %vm2199, %v2423, 0.0
        %v2521 = vadd.f32 %v2519, %v2520
        %v2522 = vsel %vm2199, %v2439, 0.0
        %v2523 = vadd.f32 %v2521, %v2522
        %v2524 = vsel %vm2199, %v2455, 0.0
        %v2525 = vadd.f32 %v2523, %v2524
        %v2526 = vsel %vm2199, %v2408, 0.0
        %v2527 = vsel %vm2199, %v2424, 0.0
        %v2528 = vadd.f32 %v2526, %v2527
        %v2529 = vsel %vm2199, %v2440, 0.0
        %v2530 = vadd.f32 %v2528, %v2529
        %v2531 = vsel %vm2199, %v2456, 0.0
        %v2532 = vadd.f32 %v2530, %v2531
        %v2533 = vsel %vm2199, %v2409, 0.0
        %v2534 = vsel %vm2199, %v2425, 0.0
        %v2535 = vadd.f32 %v2533, %v2534
        %v2536 = vsel %vm2199, %v2441, 0.0
        %v2537 = vadd.f32 %v2535, %v2536
        %v2538 = vsel %vm2199, %v2457, 0.0
        %v2539 = vadd.f32 %v2537, %v2538
        %v2540 = vsel %vm2199, %v2410, 0.0
        %v2541 = vsel %vm2199, %v2426, 0.0
        %v2542 = vadd.f32 %v2540, %v2541
        %v2543 = vsel %vm2199, %v2442, 0.0
        %v2544 = vadd.f32 %v2542, %v2543
        %v2545 = vsel %vm2199, %v2458, 0.0
        %v2546 = vadd.f32 %v2544, %v2545
        %v2547 = vsel %vm2199, %v2411, 0.0
        %v2548 = vsel %vm2199, %v2427, 0.0
        %v2549 = vadd.f32 %v2547, %v2548
        %v2550 = vsel %vm2199, %v2443, 0.0
        %v2551 = vadd.f32 %v2549, %v2550
        %v2552 = vsel %vm2199, %v2459, 0.0
        %v2553 = vadd.f32 %v2551, %v2552
        %v2554 = vsel %vm2199, %v2412, 0.0
        %v2555 = vsel %vm2199, %v2428, 0.0
        %v2556 = vadd.f32 %v2554, %v2555
        %v2557 = vsel %vm2199, %v2444, 0.0
        %v2558 = vadd.f32 %v2556, %v2557
        %v2559 = vsel %vm2199, %v2460, 0.0
        %v2560 = vadd.f32 %v2558, %v2559
        %v2561 = vsel %vm2199, %v2413, 0.0
        %v2562 = vsel %vm2199, %v2429, 0.0
        %v2563 = vadd.f32 %v2561, %v2562
        %v2564 = vsel %vm2199, %v2445, 0.0
        %v2565 = vadd.f32 %v2563, %v2564
        %v2566 = vsel %vm2199, %v2461, 0.0
        %v2567 = vadd.f32 %v2565, %v2566
        %v2568 = vsel %vm2199, %v2414, 0.0
        %v2569 = vsel %vm2199, %v2430, 0.0
        %v2570 = vadd.f32 %v2568, %v2569
        %v2571 = vsel %vm2199, %v2446, 0.0
        %v2572 = vadd.f32 %v2570, %v2571
        %v2573 = vsel %vm2199, %v2462, 0.0
        %v2574 = vadd.f32 %v2572, %v2573
        %v2575 = vrcp.pop 3.0
        %v2576 = vmul.f32 3.0, %v2575
        %v2577 = vsub.f32 1.0, %v2576
        %v2578 = vmul.f32 %v2575, %v2577
        %v2579 = vadd.f32 %v2575, %v2578
        %vm2580 = vweird.f32 %v2575
        %v2581 = vsel %vm2580, %v2575, %v2579
        %v2582 = vmul.f32 %v2469, %v2581
        %v2583 = vmul.f32 %v2476, %v2581
        %v2584 = vmul.f32 %v2483, %v2581
        %v2585 = vmul.f32 %v2490, %v2581
        %v2586 = vmul.f32 %v2497, %v2581
        %v2587 = vmul.f32 %v2504, %v2581
        %v2588 = vmul.f32 %v2511, %v2581
        %v2589 = vmul.f32 %v2518, %v2581
        %v2590 = vmul.f32 %v2525, %v2581
        %v2591 = vmul.f32 %v2532, %v2581
        %v2592 = vmul.f32 %v2539, %v2581
        %v2593 = vmul.f32 %v2546, %v2581
        %v2594 = vmul.f32 %v2553, %v2581
        %v2595 = vmul.f32 %v2560, %v2581
        %v2596 = vmul.f32 %v2567, %v2581
        %v2597 = vmul.f32 %v2574, %v2581
        %v2598 = vadd.f32 %v2582, 1e-09
        %v2599 = vadd.f32 %v2583, 1e-09
        %v2600 = vadd.f32 %v2584, 1e-09
        %v2601 = vadd.f32 %v2585, 1e-09
        %v2602 = vadd.f32 %v2586, 1e-09
        %v2603 = vadd.f32 %v2587, 1e-09
        %v2604 = vadd.f32 %v2588, 1e-09
        %v2605 = vadd.f32 %v2589, 1e-09
        %v2606 = vadd.f32 %v2590, 1e-09
        %v2607 = vadd.f32 %v2591, 1e-09
        %v2608 = vadd.f32 %v2592, 1e-09
        %v2609 = vadd.f32 %v2593, 1e-09
        %v2610 = vadd.f32 %v2594, 1e-09
        %v2611 = vadd.f32 %v2595, 1e-09
        %v2612 = vadd.f32 %v2596, 1e-09
        %v2613 = vadd.f32 %v2597, 1e-09
        %v2614 = vrsqrt.pop %v2598
        %v2615 = vmul.f32 %v2614, %v2598
        %v2616 = vmul.f32 %v2615, %v2614
        %v2617 = vmul.f32 0.5, %v2616
        %v2618 = vsub.f32 1.5, %v2617
        %v2619 = vmul.f32 %v2614, %v2618
        %vm2620 = vweird.f32 %v2598
        %vm2621 = vweird.f32 %v2614
        %vm2622 = vmor %vm2620, %vm2621
        %v2623 = vsel %vm2622, %v2614, %v2619
        %v2624 = vrsqrt.pop %v2599
        %v2625 = vmul.f32 %v2624, %v2599
        %v2626 = vmul.f32 %v2625, %v2624
        %v2627 = vmul.f32 0.5, %v2626
        %v2628 = vsub.f32 1.5, %v2627
        %v2629 = vmul.f32 %v2624, %v2628
        %vm2630 = vweird.f32 %v2599
        %vm2631 = vweird.f32 %v2624
        %vm2632 = vmor %vm2630, %vm2631
        %v2633 = vsel %vm2632, %v2624, %v2629
        %v2634 = vrsqrt.pop %v2600
        %v2635 = vmul.f32 %v2634, %v2600
        %v2636 = vmul.f32 %v2635, %v2634
        %v2637 = vmul.f32 0.5, %v2636
        %v2638 = vsub.f32 1.5, %v2637
        %v2639 = vmul.f32 %v2634, %v2638
        %vm2640 = vweird.f32 %v2600
        %vm2641 = vweird.f32 %v2634
        %vm2642 = vmor %vm2640, %vm2641
        %v2643 = vsel %vm2642, %v2634, %v2639
        %v2644 = vrsqrt.pop %v2601
        %v2645 = vmul.f32 %v2644, %v2601
        %v2646 = vmul.f32 %v2645, %v2644
        %v2647 = vmul.f32 0.5, %v2646
        %v2648 = vsub.f32 1.5, %v2647
        %v2649 = vmul.f32 %v2644, %v2648
        %vm2650 = vweird.f32 %v2601
        %vm2651 = vweird.f32 %v2644
        %vm2652 = vmor %vm2650, %vm2651
        %v2653 = vsel %vm2652, %v2644, %v2649
        %v2654 = vrsqrt.pop %v2602
        %v2655 = vmul.f32 %v2654, %v2602
        %v2656 = vmul.f32 %v2655, %v2654
        %v2657 = vmul.f32 0.5, %v2656
        %v2658 = vsub.f32 1.5, %v2657
        %v2659 = vmul.f32 %v2654, %v2658
        %vm2660 = vweird.f32 %v2602
        %vm2661 = vweird.f32 %v2654
        %vm2662 = vmor %vm2660, %vm2661
        %v2663 = vsel %vm2662, %v2654, %v2659
        %v2664 = vrsqrt.pop %v2603
        %v2665 = vmul.f32 %v2664, %v2603
        %v2666 = vmul.f32 %v2665, %v2664
        %v2667 = vmul.f32 0.5, %v2666
        %v2668 = vsub.f32 1.5, %v2667
        %v2669 = vmul.f32 %v2664, %v2668
        %vm2670 = vweird.f32 %v2603
        %vm2671 = vweird.f32 %v2664
        %vm2672 = vmor %vm2670, %vm2671
        %v2673 = vsel %vm2672, %v2664, %v2669
        %v2674 = vrsqrt.pop %v2604
        %v2675 = vmul.f32 %v2674, %v2604
        %v2676 = vmul.f32 %v2675, %v2674
        %v2677 = vmul.f32 0.5, %v2676
        %v2678 = vsub.f32 1.5, %v2677
        %v2679 = vmul.f32 %v2674, %v2678
        %vm2680 = vweird.f32 %v2604
        %vm2681 = vweird.f32 %v2674
        %vm2682 = vmor %vm2680, %vm2681
        %v2683 = vsel %vm2682, %v2674, %v2679
        %v2684 = vrsqrt.pop %v2605
        %v2685 = vmul.f32 %v2684, %v2605
        %v2686 = vmul.f32 %v2685, %v2684
        %v2687 = vmul.f32 0.5, %v2686
        %v2688 = vsub.f32 1.5, %v2687
        %v2689 = vmul.f32 %v2684, %v2688
        %vm2690 = vweird.f32 %v2605
        %vm2691 = vweird.f32 %v2684
        %vm2692 = vmor %vm2690, %vm2691
        %v2693 = vsel %vm2692, %v2684, %v2689
        %v2694 = vrsqrt.pop %v2606
        %v2695 = vmul.f32 %v2694, %v2606
        %v2696 = vmul.f32 %v2695, %v2694
        %v2697 = vmul.f32 0.5, %v2696
        %v2698 = vsub.f32 1.5, %v2697
        %v2699 = vmul.f32 %v2694, %v2698
        %vm2700 = vweird.f32 %v2606
        %vm2701 = vweird.f32 %v2694
        %vm2702 = vmor %vm2700, %vm2701
        %v2703 = vsel %vm2702, %v2694, %v2699
        %v2704 = vrsqrt.pop %v2607
        %v2705 = vmul.f32 %v2704, %v2607
        %v2706 = vmul.f32 %v2705, %v2704
        %v2707 = vmul.f32 0.5, %v2706
        %v2708 = vsub.f32 1.5, %v2707
        %v2709 = vmul.f32 %v2704, %v2708
        %vm2710 = vweird.f32 %v2607
        %vm2711 = vweird.f32 %v2704
        %vm2712 = vmor %vm2710, %vm2711
        %v2713 = vsel %vm2712, %v2704, %v2709
        %v2714 = vrsqrt.pop %v2608
        %v2715 = vmul.f32 %v2714, %v2608
        %v2716 = vmul.f32 %v2715, %v2714
        %v2717 = vmul.f32 0.5, %v2716
        %v2718 = vsub.f32 1.5, %v2717
        %v2719 = vmul.f32 %v2714, %v2718
        %vm2720 = vweird.f32 %v2608
        %vm2721 = vweird.f32 %v2714
        %vm2722 = vmor %vm2720, %vm2721
        %v2723 = vsel %vm2722, %v2714, %v2719
        %v2724 = vrsqrt.pop %v2609
        %v2725 = vmul.f32 %v2724, %v2609
        %v2726 = vmul.f32 %v2725, %v2724
        %v2727 = vmul.f32 0.5, %v2726
        %v2728 = vsub.f32 1.5, %v2727
        %v2729 = vmul.f32 %v2724, %v2728
        %vm2730 = vweird.f32 %v2609
        %vm2731 = vweird.f32 %v2724
        %vm2732 = vmor %vm2730, %vm2731
        %v2733 = vsel %vm2732, %v2724, %v2729
        %v2734 = vrsqrt.pop %v2610
        %v2735 = vmul.f32 %v2734, %v2610
        %v2736 = vmul.f32 %v2735, %v2734
        %v2737 = vmul.f32 0.5, %v2736
        %v2738 = vsub.f32 1.5, %v2737
        %v2739 = vmul.f32 %v2734, %v2738
        %vm2740 = vweird.f32 %v2610
        %vm2741 = vweird.f32 %v2734
        %vm2742 = vmor %vm2740, %vm2741
        %v2743 = vsel %vm2742, %v2734, %v2739
        %v2744 = vrsqrt.pop %v2611
        %v2745 = vmul.f32 %v2744, %v2611
        %v2746 = vmul.f32 %v2745, %v2744
        %v2747 = vmul.f32 0.5, %v2746
        %v2748 = vsub.f32 1.5, %v2747
        %v2749 = vmul.f32 %v2744, %v2748
        %vm2750 = vweird.f32 %v2611
        %vm2751 = vweird.f32 %v2744
        %vm2752 = vmor %vm2750, %vm2751
        %v2753 = vsel %vm2752, %v2744, %v2749
        %v2754 = vrsqrt.pop %v2612
        %v2755 = vmul.f32 %v2754, %v2612
        %v2756 = vmul.f32 %v2755, %v2754
        %v2757 = vmul.f32 0.5, %v2756
        %v2758 = vsub.f32 1.5, %v2757
        %v2759 = vmul.f32 %v2754, %v2758
        %vm2760 = vweird.f32 %v2612
        %vm2761 = vweird.f32 %v2754
        %vm2762 = vmor %vm2760, %vm2761
        %v2763 = vsel %vm2762, %v2754, %v2759
        %v2764 = vrsqrt.pop %v2613
        %v2765 = vmul.f32 %v2764, %v2613
        %v2766 = vmul.f32 %v2765, %v2764
        %v2767 = vmul.f32 0.5, %v2766
        %v2768 = vsub.f32 1.5, %v2767
        %v2769 = vmul.f32 %v2764, %v2768
        %vm2770 = vweird.f32 %v2613
        %vm2771 = vweird.f32 %v2764
        %vm2772 = vmor %vm2770, %vm2771
        %v2773 = vsel %vm2772, %v2764, %v2769
        %v2774 = vmul.f32 %v2335, %v2623
        %v2775 = vmul.f32 %v2336, %v2633
        %v2776 = vmul.f32 %v2337, %v2643
        %v2777 = vmul.f32 %v2338, %v2653
        %v2778 = vmul.f32 %v2339, %v2663
        %v2779 = vmul.f32 %v2340, %v2673
        %v2780 = vmul.f32 %v2341, %v2683
        %v2781 = vmul.f32 %v2342, %v2693
        %v2782 = vmul.f32 %v2343, %v2703
        %v2783 = vmul.f32 %v2344, %v2713
        %v2784 = vmul.f32 %v2345, %v2723
        %v2785 = vmul.f32 %v2346, %v2733
        %v2786 = vmul.f32 %v2347, %v2743
        %v2787 = vmul.f32 %v2348, %v2753
        %v2788 = vmul.f32 %v2349, %v2763
        %v2789 = vmul.f32 %v2350, %v2773
        %v2790 = vmul.f32 %v2351, %v2623
        %v2791 = vmul.f32 %v2352, %v2633
        %v2792 = vmul.f32 %v2353, %v2643
        %v2793 = vmul.f32 %v2354, %v2653
        %v2794 = vmul.f32 %v2355, %v2663
        %v2795 = vmul.f32 %v2356, %v2673
        %v2796 = vmul.f32 %v2357, %v2683
        %v2797 = vmul.f32 %v2358, %v2693
        %v2798 = vmul.f32 %v2359, %v2703
        %v2799 = vmul.f32 %v2360, %v2713
        %v2800 = vmul.f32 %v2361, %v2723
        %v2801 = vmul.f32 %v2362, %v2733
        %v2802 = vmul.f32 %v2363, %v2743
        %v2803 = vmul.f32 %v2364, %v2753
        %v2804 = vmul.f32 %v2365, %v2763
        %v2805 = vmul.f32 %v2366, %v2773
        %v2806 = vmul.f32 %v2367, %v2623
        %v2807 = vmul.f32 %v2368, %v2633
        %v2808 = vmul.f32 %v2369, %v2643
        %v2809 = vmul.f32 %v2370, %v2653
        %v2810 = vmul.f32 %v2371, %v2663
        %v2811 = vmul.f32 %v2372, %v2673
        %v2812 = vmul.f32 %v2373, %v2683
        %v2813 = vmul.f32 %v2374, %v2693
        %v2814 = vmul.f32 %v2375, %v2703
        %v2815 = vmul.f32 %v2376, %v2713
        %v2816 = vmul.f32 %v2377, %v2723
        %v2817 = vmul.f32 %v2378, %v2733
        %v2818 = vmul.f32 %v2379, %v2743
        %v2819 = vmul.f32 %v2380, %v2753
        %v2820 = vmul.f32 %v2381, %v2763
        %v2821 = vmul.f32 %v2382, %v2773
        %v2822 = vmul.f32 %v2383, %v2623
        %v2823 = vmul.f32 %v2384, %v2633
        %v2824 = vmul.f32 %v2385, %v2643
        %v2825 = vmul.f32 %v2386, %v2653
        %v2826 = vmul.f32 %v2387, %v2663
        %v2827 = vmul.f32 %v2388, %v2673
        %v2828 = vmul.f32 %v2389, %v2683
        %v2829 = vmul.f32 %v2390, %v2693
        %v2830 = vmul.f32 %v2391, %v2703
        %v2831 = vmul.f32 %v2392, %v2713
        %v2832 = vmul.f32 %v2393, %v2723
        %v2833 = vmul.f32 %v2394, %v2733
        %v2834 = vmul.f32 %v2395, %v2743
        %v2835 = vmul.f32 %v2396, %v2753
        %v2836 = vmul.f32 %v2397, %v2763
        %v2837 = vmul.f32 %v2398, %v2773
        %v2838 = vxor.u32 %v2774, 2147483648
        %v2839 = vxor.u32 %v2775, 2147483648
        %v2840 = vxor.u32 %v2776, 2147483648
        %v2841 = vxor.u32 %v2777, 2147483648
        %v2842 = vxor.u32 %v2778, 2147483648
        %v2843 = vxor.u32 %v2779, 2147483648
        %v2844 = vxor.u32 %v2780, 2147483648
        %v2845 = vxor.u32 %v2781, 2147483648
        %v2846 = vxor.u32 %v2782, 2147483648
        %v2847 = vxor.u32 %v2783, 2147483648
        %v2848 = vxor.u32 %v2784, 2147483648
        %v2849 = vxor.u32 %v2785, 2147483648
        %v2850 = vxor.u32 %v2786, 2147483648
        %v2851 = vxor.u32 %v2787, 2147483648
        %v2852 = vxor.u32 %v2788, 2147483648
        %v2853 = vxor.u32 %v2789, 2147483648
        %v2854 = vxor.u32 %v2790, 2147483648
        %v2855 = vxor.u32 %v2791, 2147483648
        %v2856 = vxor.u32 %v2792, 2147483648
        %v2857 = vxor.u32 %v2793, 2147483648
        %v2858 = vxor.u32 %v2794, 2147483648
        %v2859 = vxor.u32 %v2795, 2147483648
        %v2860 = vxor.u32 %v2796, 2147483648
        %v2861 = vxor.u32 %v2797, 2147483648
        %v2862 = vxor.u32 %v2798, 2147483648
        %v2863 = vxor.u32 %v2799, 2147483648
        %v2864 = vxor.u32 %v2800, 2147483648
        %v2865 = vxor.u32 %v2801, 2147483648
        %v2866 = vxor.u32 %v2802, 2147483648
        %v2867 = vxor.u32 %v2803, 2147483648
        %v2868 = vxor.u32 %v2804, 2147483648
        %v2869 = vxor.u32 %v2805, 2147483648
        %v2870 = vxor.u32 %v2806, 2147483648
        %v2871 = vxor.u32 %v2807, 2147483648
        %v2872 = vxor.u32 %v2808, 2147483648
        %v2873 = vxor.u32 %v2809, 2147483648
        %v2874 = vxor.u32 %v2810, 2147483648
        %v2875 = vxor.u32 %v2811, 2147483648
        %v2876 = vxor.u32 %v2812, 2147483648
        %v2877 = vxor.u32 %v2813, 2147483648
        %v2878 = vxor.u32 %v2814, 2147483648
        %v2879 = vxor.u32 %v2815, 2147483648
        %v2880 = vxor.u32 %v2816, 2147483648
        %v2881 = vxor.u32 %v2817, 2147483648
        %v2882 = vxor.u32 %v2818, 2147483648
        %v2883 = vxor.u32 %v2819, 2147483648
        %v2884 = vxor.u32 %v2820, 2147483648
        %v2885 = vxor.u32 %v2821, 2147483648
        %v2886 = vxor.u32 %v2822, 2147483648
        %v2887 = vxor.u32 %v2823, 2147483648
        %v2888 = vxor.u32 %v2824, 2147483648
        %v2889 = vxor.u32 %v2825, 2147483648
        %v2890 = vxor.u32 %v2826, 2147483648
        %v2891 = vxor.u32 %v2827, 2147483648
        %v2892 = vxor.u32 %v2828, 2147483648
        %v2893 = vxor.u32 %v2829, 2147483648
        %v2894 = vxor.u32 %v2830, 2147483648
        %v2895 = vxor.u32 %v2831, 2147483648
        %v2896 = vxor.u32 %v2832, 2147483648
        %v2897 = vxor.u32 %v2833, 2147483648
        %v2898 = vxor.u32 %v2834, 2147483648
        %v2899 = vxor.u32 %v2835, 2147483648
        %v2900 = vxor.u32 %v2836, 2147483648
        %v2901 = vxor.u32 %v2837, 2147483648
        %v2902 = vmul.f32 %v2838, 1.442695
        %v2903 = vpow.pop %v2902
        %v2904 = vmul.f32 %v2839, 1.442695
        %v2905 = vpow.pop %v2904
        %v2906 = vmul.f32 %v2840, 1.442695
        %v2907 = vpow.pop %v2906
        %v2908 = vmul.f32 %v2841, 1.442695
        %v2909 = vpow.pop %v2908
        %v2910 = vmul.f32 %v2842, 1.442695
        %v2911 = vpow.pop %v2910
        %v2912 = vmul.f32 %v2843, 1.442695
        %v2913 = vpow.pop %v2912
        %v2914 = vmul.f32 %v2844, 1.442695
        %v2915 = vpow.pop %v2914
        %v2916 = vmul.f32 %v2845, 1.442695
        %v2917 = vpow.pop %v2916
        %v2918 = vmul.f32 %v2846, 1.442695
        %v2919 = vpow.pop %v2918
        %v2920 = vmul.f32 %v2847, 1.442695
        %v2921 = vpow.pop %v2920
        %v2922 = vmul.f32 %v2848, 1.442695
        %v2923 = vpow.pop %v2922
        %v2924 = vmul.f32 %v2849, 1.442695
        %v2925 = vpow.pop %v2924
        %v2926 = vmul.f32 %v2850, 1.442695
        %v2927 = vpow.pop %v2926
        %v2928 = vmul.f32 %v2851, 1.442695
        %v2929 = vpow.pop %v2928
        %v2930 = vmul.f32 %v2852, 1.442695
        %v2931 = vpow.pop %v2930
        %v2932 = vmul.f32 %v2853, 1.442695
        %v2933 = vpow.pop %v2932
        %v2934 = vmul.f32 %v2854, 1.442695
        %v2935 = vpow.pop %v2934
        %v2936 = vmul.f32 %v2855, 1.442695
        %v2937 = vpow.pop %v2936
        %v2938 = vmul.f32 %v2856, 1.442695
        %v2939 = vpow.pop %v2938
        %v2940 = vmul.f32 %v2857, 1.442695
        %v2941 = vpow.pop %v2940
        %v2942 = vmul.f32 %v2858, 1.442695
        %v2943 = vpow.pop %v2942
        %v2944 = vmul.f32 %v2859, 1.442695
        %v2945 = vpow.pop %v2944
        %v2946 = vmul.f32 %v2860, 1.442695
        %v2947 = vpow.pop %v2946
        %v2948 = vmul.f32 %v2861, 1.442695
        %v2949 = vpow.pop %v2948
        %v2950 = vmul.f32 %v2862, 1.442695
        %v2951 = vpow.pop %v2950
        %v2952 = vmul.f32 %v2863, 1.442695
        %v2953 = vpow.pop %v2952
        %v2954 = vmul.f32 %v2864, 1.442695
        %v2955 = vpow.pop %v2954
        %v2956 = vmul.f32 %v2865, 1.442695
        %v2957 = vpow.pop %v2956
        %v2958 = vmul.f32 %v2866, 1.442695
        %v2959 = vpow.pop %v2958
        %v2960 = vmul.f32 %v2867, 1.442695
        %v2961 = vpow.pop %v2960
        %v2962 = vmul.f32 %v2868, 1.442695
        %v2963 = vpow.pop %v2962
        %v2964 = vmul.f32 %v2869, 1.442695
        %v2965 = vpow.pop %v2964
        %v2966 = vmul.f32 %v2870, 1.442695
        %v2967 = vpow.pop %v2966
        %v2968 = vmul.f32 %v2871, 1.442695
        %v2969 = vpow.pop %v2968
        %v2970 = vmul.f32 %v2872, 1.442695
        %v2971 = vpow.pop %v2970
        %v2972 = vmul.f32 %v2873, 1.442695
        %v2973 = vpow.pop %v2972
        %v2974 = vmul.f32 %v2874, 1.442695
        %v2975 = vpow.pop %v2974
        %v2976 = vmul.f32 %v2875, 1.442695
        %v2977 = vpow.pop %v2976
        %v2978 = vmul.f32 %v2876, 1.442695
        %v2979 = vpow.pop %v2978
        %v2980 = vmul.f32 %v2877, 1.442695
        %v2981 = vpow.pop %v2980
        %v2982 = vmul.f32 %v2878, 1.442695
        %v2983 = vpow.pop %v2982
        %v2984 = vmul.f32 %v2879, 1.442695
        %v2985 = vpow.pop %v2984
        %v2986 = vmul.f32 %v2880, 1.442695
        %v2987 = vpow.pop %v2986
        %v2988 = vmul.f32 %v2881, 1.442695
        %v2989 = vpow.pop %v2988
        %v2990 = vmul.f32 %v2882, 1.442695
        %v2991 = vpow.pop %v2990
        %v2992 = vmul.f32 %v2883, 1.442695
        %v2993 = vpow.pop %v2992
        %v2994 = vmul.f32 %v2884, 1.442695
        %v2995 = vpow.pop %v2994
        %v2996 = vmul.f32 %v2885, 1.442695
        %v2997 = vpow.pop %v2996
        %v2998 = vmul.f32 %v2886, 1.442695
        %v2999 = vpow.pop %v2998
        %v3000 = vmul.f32 %v2887, 1.442695
        %v3001 = vpow.pop %v3000
        %v3002 = vmul.f32 %v2888, 1.442695
        %v3003 = vpow.pop %v3002
        %v3004 = vmul.f32 %v2889, 1.442695
        %v3005 = vpow.pop %v3004
        %v3006 = vmul.f32 %v2890, 1.442695
        %v3007 = vpow.pop %v3006
        %v3008 = vmul.f32 %v2891, 1.442695
        %v3009 = vpow.pop %v3008
        %v3010 = vmul.f32 %v2892, 1.442695
        %v3011 = vpow.pop %v3010
        %v3012 = vmul.f32 %v2893, 1.442695
        %v3013 = vpow.pop %v3012
        %v3014 = vmul.f32 %v2894, 1.442695
        %v3015 = vpow.pop %v3014
        %v3016 = vmul.f32 %v2895, 1.442695
        %v3017 = vpow.pop %v3016
        %v3018 = vmul.f32 %v2896, 1.442695
        %v3019 = vpow.pop %v3018
        %v3020 = vmul.f32 %v2897, 1.442695
        %v3021 = vpow.pop %v3020
        %v3022 = vmul.f32 %v2898, 1.442695
        %v3023 = vpow.pop %v3022
        %v3024 = vmul.f32 %v2899, 1.442695
        %v3025 = vpow.pop %v3024
        %v3026 = vmul.f32 %v2900, 1.442695
        %v3027 = vpow.pop %v3026
        %v3028 = vmul.f32 %v2901, 1.442695
        %v3029 = vpow.pop %v3028
        %v3030 = vadd.f32 %v2903, 1.0
        %v3031 = vadd.f32 %v2905, 1.0
        %v3032 = vadd.f32 %v2907, 1.0
        %v3033 = vadd.f32 %v2909, 1.0
        %v3034 = vadd.f32 %v2911, 1.0
        %v3035 = vadd.f32 %v2913, 1.0
        %v3036 = vadd.f32 %v2915, 1.0
        %v3037 = vadd.f32 %v2917, 1.0
        %v3038 = vadd.f32 %v2919, 1.0
        %v3039 = vadd.f32 %v2921, 1.0
        %v3040 = vadd.f32 %v2923, 1.0
        %v3041 = vadd.f32 %v2925, 1.0
        %v3042 = vadd.f32 %v2927, 1.0
        %v3043 = vadd.f32 %v2929, 1.0
        %v3044 = vadd.f32 %v2931, 1.0
        %v3045 = vadd.f32 %v2933, 1.0
        %v3046 = vadd.f32 %v2935, 1.0
        %v3047 = vadd.f32 %v2937, 1.0
        %v3048 = vadd.f32 %v2939, 1.0
        %v3049 = vadd.f32 %v2941, 1.0
        %v3050 = vadd.f32 %v2943, 1.0
        %v3051 = vadd.f32 %v2945, 1.0
        %v3052 = vadd.f32 %v2947, 1.0
        %v3053 = vadd.f32 %v2949, 1.0
        %v3054 = vadd.f32 %v2951, 1.0
        %v3055 = vadd.f32 %v2953, 1.0
        %v3056 = vadd.f32 %v2955, 1.0
        %v3057 = vadd.f32 %v2957, 1.0
        %v3058 = vadd.f32 %v2959, 1.0
        %v3059 = vadd.f32 %v2961, 1.0
        %v3060 = vadd.f32 %v2963, 1.0
        %v3061 = vadd.f32 %v2965, 1.0
        %v3062 = vadd.f32 %v2967, 1.0
        %v3063 = vadd.f32 %v2969, 1.0
        %v3064 = vadd.f32 %v2971, 1.0
        %v3065 = vadd.f32 %v2973, 1.0
        %v3066 = vadd.f32 %v2975, 1.0
        %v3067 = vadd.f32 %v2977, 1.0
        %v3068 = vadd.f32 %v2979, 1.0
        %v3069 = vadd.f32 %v2981, 1.0
        %v3070 = vadd.f32 %v2983, 1.0
        %v3071 = vadd.f32 %v2985, 1.0
        %v3072 = vadd.f32 %v2987, 1.0
        %v3073 = vadd.f32 %v2989, 1.0
        %v3074 = vadd.f32 %v2991, 1.0
        %v3075 = vadd.f32 %v2993, 1.0
        %v3076 = vadd.f32 %v2995, 1.0
        %v3077 = vadd.f32 %v2997, 1.0
        %v3078 = vadd.f32 %v2999, 1.0
        %v3079 = vadd.f32 %v3001, 1.0
        %v3080 = vadd.f32 %v3003, 1.0
        %v3081 = vadd.f32 %v3005, 1.0
        %v3082 = vadd.f32 %v3007, 1.0
        %v3083 = vadd.f32 %v3009, 1.0
        %v3084 = vadd.f32 %v3011, 1.0
        %v3085 = vadd.f32 %v3013, 1.0
        %v3086 = vadd.f32 %v3015, 1.0
        %v3087 = vadd.f32 %v3017, 1.0
        %v3088 = vadd.f32 %v3019, 1.0
        %v3089 = vadd.f32 %v3021, 1.0
        %v3090 = vadd.f32 %v3023, 1.0
        %v3091 = vadd.f32 %v3025, 1.0
        %v3092 = vadd.f32 %v3027, 1.0
        %v3093 = vadd.f32 %v3029, 1.0
        %v3094 = vrcp.pop %v3030
        %v3095 = vmul.f32 %v3030, %v3094
        %v3096 = vsub.f32 1.0, %v3095
        %v3097 = vmul.f32 %v3094, %v3096
        %v3098 = vadd.f32 %v3094, %v3097
        %vm3099 = vweird.f32 %v3030
        %vm3100 = vweird.f32 %v3094
        %vm3101 = vmor %vm3099, %vm3100
        %v3102 = vsel %vm3101, %v3094, %v3098
        %v3103 = vand.u32 2147483647, %v3030
        %vm3104 = vcmp.eq.f32.partialorder %v3103, 8.507059e+37
        %v3105 = vand.u32 %v3030, 2147483648
        %v3106 = vor.u32 1.1754944e-38, %v3105
        %v3107 = vsel %vm3104, %v3106, %v3102
        %v3108 = vmul.f32 1.0, %v3107
        %v3109 = vrcp.pop %v3031
        %v3110 = vmul.f32 %v3031, %v3109
        %v3111 = vsub.f32 1.0, %v3110
        %v3112 = vmul.f32 %v3109, %v3111
        %v3113 = vadd.f32 %v3109, %v3112
        %vm3114 = vweird.f32 %v3031
        %vm3115 = vweird.f32 %v3109
        %vm3116 = vmor %vm3114, %vm3115
        %v3117 = vsel %vm3116, %v3109, %v3113
        %v3118 = vand.u32 2147483647, %v3031
        %vm3119 = vcmp.eq.f32.partialorder %v3118, 8.507059e+37
        %v3120 = vand.u32 %v3031, 2147483648
        %v3121 = vor.u32 1.1754944e-38, %v3120
        %v3122 = vsel %vm3119, %v3121, %v3117
        %v3123 = vmul.f32 1.0, %v3122
        %v3124 = vrcp.pop %v3032
        %v3125 = vmul.f32 %v3032, %v3124
        %v3126 = vsub.f32 1.0, %v3125
        %v3127 = vmul.f32 %v3124, %v3126
        %v3128 = vadd.f32 %v3124, %v3127
        %vm3129 = vweird.f32 %v3032
        %vm3130 = vweird.f32 %v3124
        %vm3131 = vmor %vm3129, %vm3130
        %v3132 = vsel %vm3131, %v3124, %v3128
        %v3133 = vand.u32 2147483647, %v3032
        %vm3134 = vcmp.eq.f32.partialorder %v3133, 8.507059e+37
        %v3135 = vand.u32 %v3032, 2147483648
        %v3136 = vor.u32 1.1754944e-38, %v3135
        %v3137 = vsel %vm3134, %v3136, %v3132
        %v3138 = vmul.f32 1.0, %v3137
        %v3139 = vrcp.pop %v3033
        %v3140 = vmul.f32 %v3033, %v3139
        %v3141 = vsub.f32 1.0, %v3140
        %v3142 = vmul.f32 %v3139, %v3141
        %v3143 = vadd.f32 %v3139, %v3142
        %vm3144 = vweird.f32 %v3033
        %vm3145 = vweird.f32 %v3139
        %vm3146 = vmor %vm3144, %vm3145
        %v3147 = vsel %vm3146, %v3139, %v3143
        %v3148 = vand.u32 2147483647, %v3033
        %vm3149 = vcmp.eq.f32.partialorder %v3148, 8.507059e+37
        %v3150 = vand.u32 %v3033, 2147483648
        %v3151 = vor.u32 1.1754944e-38, %v3150
        %v3152 = vsel %vm3149, %v3151, %v3147
        %v3153 = vmul.f32 1.0, %v3152
        %v3154 = vrcp.pop %v3034
        %v3155 = vmul.f32 %v3034, %v3154
        %v3156 = vsub.f32 1.0, %v3155
        %v3157 = vmul.f32 %v3154, %v3156
        %v3158 = vadd.f32 %v3154, %v3157
        %vm3159 = vweird.f32 %v3034
        %vm3160 = vweird.f32 %v3154
        %vm3161 = vmor %vm3159, %vm3160
        %v3162 = vsel %vm3161, %v3154, %v3158
        %v3163 = vand.u32 2147483647, %v3034
        %vm3164 = vcmp.eq.f32.partialorder %v3163, 8.507059e+37
        %v3165 = vand.u32 %v3034, 2147483648
        %v3166 = vor.u32 1.1754944e-38, %v3165
        %v3167 = vsel %vm3164, %v3166, %v3162
        %v3168 = vmul.f32 1.0, %v3167
        %v3169 = vrcp.pop %v3035
        %v3170 = vmul.f32 %v3035, %v3169
        %v3171 = vsub.f32 1.0, %v3170
        %v3172 = vmul.f32 %v3169, %v3171
        %v3173 = vadd.f32 %v3169, %v3172
        %vm3174 = vweird.f32 %v3035
        %vm3175 = vweird.f32 %v3169
        %vm3176 = vmor %vm3174, %vm3175
        %v3177 = vsel %vm3176, %v3169, %v3173
        %v3178 = vand.u32 2147483647, %v3035
        %vm3179 = vcmp.eq.f32.partialorder %v3178, 8.507059e+37
        %v3180 = vand.u32 %v3035, 2147483648
        %v3181 = vor.u32 1.1754944e-38, %v3180
        %v3182 = vsel %vm3179, %v3181, %v3177
        %v3183 = vmul.f32 1.0, %v3182
        %v3184 = vrcp.pop %v3036
        %v3185 = vmul.f32 %v3036, %v3184
        %v3186 = vsub.f32 1.0, %v3185
        %v3187 = vmul.f32 %v3184, %v3186
        %v3188 = vadd.f32 %v3184, %v3187
        %vm3189 = vweird.f32 %v3036
        %vm3190 = vweird.f32 %v3184
        %vm3191 = vmor %vm3189, %vm3190
        %v3192 = vsel %vm3191, %v3184, %v3188
        %v3193 = vand.u32 2147483647, %v3036
        %vm3194 = vcmp.eq.f32.partialorder %v3193, 8.507059e+37
        %v3195 = vand.u32 %v3036, 2147483648
        %v3196 = vor.u32 1.1754944e-38, %v3195
        %v3197 = vsel %vm3194, %v3196, %v3192
        %v3198 = vmul.f32 1.0, %v3197
        %v3199 = vrcp.pop %v3037
        %v3200 = vmul.f32 %v3037, %v3199
        %v3201 = vsub.f32 1.0, %v3200
        %v3202 = vmul.f32 %v3199, %v3201
        %v3203 = vadd.f32 %v3199, %v3202
        %vm3204 = vweird.f32 %v3037
        %vm3205 = vweird.f32 %v3199
        %vm3206 = vmor %vm3204, %vm3205
        %v3207 = vsel %vm3206, %v3199, %v3203
        %v3208 = vand.u32 2147483647, %v3037
        %vm3209 = vcmp.eq.f32.partialorder %v3208, 8.507059e+37
        %v3210 = vand.u32 %v3037, 2147483648
        %v3211 = vor.u32 1.1754944e-38, %v3210
        %v3212 = vsel %vm3209, %v3211, %v3207
        %v3213 = vmul.f32 1.0, %v3212
        %v3214 = vrcp.pop %v3038
        %v3215 = vmul.f32 %v3038, %v3214
        %v3216 = vsub.f32 1.0, %v3215
        %v3217 = vmul.f32 %v3214, %v3216
        %v3218 = vadd.f32 %v3214, %v3217
        %vm3219 = vweird.f32 %v3038
        %vm3220 = vweird.f32 %v3214
        %vm3221 = vmor %vm3219, %vm3220
        %v3222 = vsel %vm3221, %v3214, %v3218
        %v3223 = vand.u32 2147483647, %v3038
        %vm3224 = vcmp.eq.f32.partialorder %v3223, 8.507059e+37
        %v3225 = vand.u32 %v3038, 2147483648
        %v3226 = vor.u32 1.1754944e-38, %v3225
        %v3227 = vsel %vm3224, %v3226, %v3222
        %v3228 = vmul.f32 1.0, %v3227
        %v3229 = vrcp.pop %v3039
        %v3230 = vmul.f32 %v3039, %v3229
        %v3231 = vsub.f32 1.0, %v3230
        %v3232 = vmul.f32 %v3229, %v3231
        %v3233 = vadd.f32 %v3229, %v3232
        %vm3234 = vweird.f32 %v3039
        %vm3235 = vweird.f32 %v3229
        %vm3236 = vmor %vm3234, %vm3235
        %v3237 = vsel %vm3236, %v3229, %v3233
        %v3238 = vand.u32 2147483647, %v3039
        %vm3239 = vcmp.eq.f32.partialorder %v3238, 8.507059e+37
        %v3240 = vand.u32 %v3039, 2147483648
        %v3241 = vor.u32 1.1754944e-38, %v3240
        %v3242 = vsel %vm3239, %v3241, %v3237
        %v3243 = vmul.f32 1.0, %v3242
        %v3244 = vrcp.pop %v3040
        %v3245 = vmul.f32 %v3040, %v3244
        %v3246 = vsub.f32 1.0, %v3245
        %v3247 = vmul.f32 %v3244, %v3246
        %v3248 = vadd.f32 %v3244, %v3247
        %vm3249 = vweird.f32 %v3040
        %vm3250 = vweird.f32 %v3244
        %vm3251 = vmor %vm3249, %vm3250
        %v3252 = vsel %vm3251, %v3244, %v3248
        %v3253 = vand.u32 2147483647, %v3040
        %vm3254 = vcmp.eq.f32.partialorder %v3253, 8.507059e+37
        %v3255 = vand.u32 %v3040, 2147483648
        %v3256 = vor.u32 1.1754944e-38, %v3255
        %v3257 = vsel %vm3254, %v3256, %v3252
        %v3258 = vmul.f32 1.0, %v3257
        %v3259 = vrcp.pop %v3041
        %v3260 = vmul.f32 %v3041, %v3259
        %v3261 = vsub.f32 1.0, %v3260
        %v3262 = vmul.f32 %v3259, %v3261
        %v3263 = vadd.f32 %v3259, %v3262
        %vm3264 = vweird.f32 %v3041
        %vm3265 = vweird.f32 %v3259
        %vm3266 = vmor %vm3264, %vm3265
        %v3267 = vsel %vm3266, %v3259, %v3263
        %v3268 = vand.u32 2147483647, %v3041
        %vm3269 = vcmp.eq.f32.partialorder %v3268, 8.507059e+37
        %v3270 = vand.u32 %v3041, 2147483648
        %v3271 = vor.u32 1.1754944e-38, %v3270
        %v3272 = vsel %vm3269, %v3271, %v3267
        %v3273 = vmul.f32 1.0, %v3272
        %v3274 = vrcp.pop %v3042
        %v3275 = vmul.f32 %v3042, %v3274
        %v3276 = vsub.f32 1.0, %v3275
        %v3277 = vmul.f32 %v3274, %v3276
        %v3278 = vadd.f32 %v3274, %v3277
        %vm3279 = vweird.f32 %v3042
        %vm3280 = vweird.f32 %v3274
        %vm3281 = vmor %vm3279, %vm3280
        %v3282 = vsel %vm3281, %v3274, %v3278
        %v3283 = vand.u32 2147483647, %v3042
        %vm3284 = vcmp.eq.f32.partialorder %v3283, 8.507059e+37
        %v3285 = vand.u32 %v3042, 2147483648
        %v3286 = vor.u32 1.1754944e-38, %v3285
        %v3287 = vsel %vm3284, %v3286, %v3282
        %v3288 = vmul.f32 1.0, %v3287
        %v3289 = vrcp.pop %v3043
        %v3290 = vmul.f32 %v3043, %v3289
        %v3291 = vsub.f32 1.0, %v3290
        %v3292 = vmul.f32 %v3289, %v3291
        %v3293 = vadd.f32 %v3289, %v3292
        %vm3294 = vweird.f32 %v3043
        %vm3295 = vweird.f32 %v3289
        %vm3296 = vmor %vm3294, %vm3295
        %v3297 = vsel %vm3296, %v3289, %v3293
        %v3298 = vand.u32 2147483647, %v3043
        %vm3299 = vcmp.eq.f32.partialorder %v3298, 8.507059e+37
        %v3300 = vand.u32 %v3043, 2147483648
        %v3301 = vor.u32 1.1754944e-38, %v3300
        %v3302 = vsel %vm3299, %v3301, %v3297
        %v3303 = vmul.f32 1.0, %v3302
        %v3304 = vrcp.pop %v3044
        %v3305 = vmul.f32 %v3044, %v3304
        %v3306 = vsub.f32 1.0, %v3305
        %v3307 = vmul.f32 %v3304, %v3306
        %v3308 = vadd.f32 %v3304, %v3307
        %vm3309 = vweird.f32 %v3044
        %vm3310 = vweird.f32 %v3304
        %vm3311 = vmor %vm3309, %vm3310
        %v3312 = vsel %vm3311, %v3304, %v3308
        %v3313 = vand.u32 2147483647, %v3044
        %vm3314 = vcmp.eq.f32.partialorder %v3313, 8.507059e+37
        %v3315 = vand.u32 %v3044, 2147483648
        %v3316 = vor.u32 1.1754944e-38, %v3315
        %v3317 = vsel %vm3314, %v3316, %v3312
        %v3318 = vmul.f32 1.0, %v3317
        %v3319 = vrcp.pop %v3045
        %v3320 = vmul.f32 %v3045, %v3319
        %v3321 = vsub.f32 1.0, %v3320
        %v3322 = vmul.f32 %v3319, %v3321
        %v3323 = vadd.f32 %v3319, %v3322
        %vm3324 = vweird.f32 %v3045
        %vm3325 = vweird.f32 %v3319
        %vm3326 = vmor %vm3324, %vm3325
        %v3327 = vsel %vm3326, %v3319, %v3323
        %v3328 = vand.u32 2147483647, %v3045
        %vm3329 = vcmp.eq.f32.partialorder %v3328, 8.507059e+37
        %v3330 = vand.u32 %v3045, 2147483648
        %v3331 = vor.u32 1.1754944e-38, %v3330
        %v3332 = vsel %vm3329, %v3331, %v3327
        %v3333 = vmul.f32 1.0, %v3332
        %v3334 = vrcp.pop %v3046
        %v3335 = vmul.f32 %v3046, %v3334
        %v3336 = vsub.f32 1.0, %v3335
        %v3337 = vmul.f32 %v3334, %v3336
        %v3338 = vadd.f32 %v3334, %v3337
        %vm3339 = vweird.f32 %v3046
        %vm3340 = vweird.f32 %v3334
        %vm3341 = vmor %vm3339, %vm3340
        %v3342 = vsel %vm3341, %v3334, %v3338
        %v3343 = vand.u32 2147483647, %v3046
        %vm3344 = vcmp.eq.f32.partialorder %v3343, 8.507059e+37
        %v3345 = vand.u32 %v3046, 2147483648
        %v3346 = vor.u32 1.1754944e-38, %v3345
        %v3347 = vsel %vm3344, %v3346, %v3342
        %v3348 = vmul.f32 1.0, %v3347
        %v3349 = vrcp.pop %v3047
        %v3350 = vmul.f32 %v3047, %v3349
        %v3351 = vsub.f32 1.0, %v3350
        %v3352 = vmul.f32 %v3349, %v3351
        %v3353 = vadd.f32 %v3349, %v3352
        %vm3354 = vweird.f32 %v3047
        %vm3355 = vweird.f32 %v3349
        %vm3356 = vmor %vm3354, %vm3355
        %v3357 = vsel %vm3356, %v3349, %v3353
        %v3358 = vand.u32 2147483647, %v3047
        %vm3359 = vcmp.eq.f32.partialorder %v3358, 8.507059e+37
        %v3360 = vand.u32 %v3047, 2147483648
        %v3361 = vor.u32 1.1754944e-38, %v3360
        %v3362 = vsel %vm3359, %v3361, %v3357
        %v3363 = vmul.f32 1.0, %v3362
        %v3364 = vrcp.pop %v3048
        %v3365 = vmul.f32 %v3048, %v3364
        %v3366 = vsub.f32 1.0, %v3365
        %v3367 = vmul.f32 %v3364, %v3366
        %v3368 = vadd.f32 %v3364, %v3367
        %vm3369 = vweird.f32 %v3048
        %vm3370 = vweird.f32 %v3364
        %vm3371 = vmor %vm3369, %vm3370
        %v3372 = vsel %vm3371, %v3364, %v3368
        %v3373 = vand.u32 2147483647, %v3048
        %vm3374 = vcmp.eq.f32.partialorder %v3373, 8.507059e+37
        %v3375 = vand.u32 %v3048, 2147483648
        %v3376 = vor.u32 1.1754944e-38, %v3375
        %v3377 = vsel %vm3374, %v3376, %v3372
        %v3378 = vmul.f32 1.0, %v3377
        %v3379 = vrcp.pop %v3049
        %v3380 = vmul.f32 %v3049, %v3379
        %v3381 = vsub.f32 1.0, %v3380
        %v3382 = vmul.f32 %v3379, %v3381
        %v3383 = vadd.f32 %v3379, %v3382
        %vm3384 = vweird.f32 %v3049
        %vm3385 = vweird.f32 %v3379
        %vm3386 = vmor %vm3384, %vm3385
        %v3387 = vsel %vm3386, %v3379, %v3383
        %v3388 = vand.u32 2147483647, %v3049
        %vm3389 = vcmp.eq.f32.partialorder %v3388, 8.507059e+37
        %v3390 = vand.u32 %v3049, 2147483648
        %v3391 = vor.u32 1.1754944e-38, %v3390
        %v3392 = vsel %vm3389, %v3391, %v3387
        %v3393 = vmul.f32 1.0, %v3392
        %v3394 = vrcp.pop %v3050
        %v3395 = vmul.f32 %v3050, %v3394
        %v3396 = vsub.f32 1.0, %v3395
        %v3397 = vmul.f32 %v3394, %v3396
        %v3398 = vadd.f32 %v3394, %v3397
        %vm3399 = vweird.f32 %v3050
        %vm3400 = vweird.f32 %v3394
        %vm3401 = vmor %vm3399, %vm3400
        %v3402 = vsel %vm3401, %v3394, %v3398
        %v3403 = vand.u32 2147483647, %v3050
        %vm3404 = vcmp.eq.f32.partialorder %v3403, 8.507059e+37
        %v3405 = vand.u32 %v3050, 2147483648
        %v3406 = vor.u32 1.1754944e-38, %v3405
        %v3407 = vsel %vm3404, %v3406, %v3402
        %v3408 = vmul.f32 1.0, %v3407
        %v3409 = vrcp.pop %v3051
        %v3410 = vmul.f32 %v3051, %v3409
        %v3411 = vsub.f32 1.0, %v3410
        %v3412 = vmul.f32 %v3409, %v3411
        %v3413 = vadd.f32 %v3409, %v3412
        %vm3414 = vweird.f32 %v3051
        %vm3415 = vweird.f32 %v3409
        %vm3416 = vmor %vm3414, %vm3415
        %v3417 = vsel %vm3416, %v3409, %v3413
        %v3418 = vand.u32 2147483647, %v3051
        %vm3419 = vcmp.eq.f32.partialorder %v3418, 8.507059e+37
        %v3420 = vand.u32 %v3051, 2147483648
        %v3421 = vor.u32 1.1754944e-38, %v3420
        %v3422 = vsel %vm3419, %v3421, %v3417
        %v3423 = vmul.f32 1.0, %v3422
        %v3424 = vrcp.pop %v3052
        %v3425 = vmul.f32 %v3052, %v3424
        %v3426 = vsub.f32 1.0, %v3425
        %v3427 = vmul.f32 %v3424, %v3426
        %v3428 = vadd.f32 %v3424, %v3427
        %vm3429 = vweird.f32 %v3052
        %vm3430 = vweird.f32 %v3424
        %vm3431 = vmor %vm3429, %vm3430
        %v3432 = vsel %vm3431, %v3424, %v3428
        %v3433 = vand.u32 2147483647, %v3052
        %vm3434 = vcmp.eq.f32.partialorder %v3433, 8.507059e+37
        %v3435 = vand.u32 %v3052, 2147483648
        %v3436 = vor.u32 1.1754944e-38, %v3435
        %v3437 = vsel %vm3434, %v3436, %v3432
        %v3438 = vmul.f32 1.0, %v3437
        %v3439 = vrcp.pop %v3053
        %v3440 = vmul.f32 %v3053, %v3439
        %v3441 = vsub.f32 1.0, %v3440
        %v3442 = vmul.f32 %v3439, %v3441
        %v3443 = vadd.f32 %v3439, %v3442
        %vm3444 = vweird.f32 %v3053
        %vm3445 = vweird.f32 %v3439
        %vm3446 = vmor %vm3444, %vm3445
        %v3447 = vsel %vm3446, %v3439, %v3443
        %v3448 = vand.u32 2147483647, %v3053
        %vm3449 = vcmp.eq.f32.partialorder %v3448, 8.507059e+37
        %v3450 = vand.u32 %v3053, 2147483648
        %v3451 = vor.u32 1.1754944e-38, %v3450
        %v3452 = vsel %vm3449, %v3451, %v3447
        %v3453 = vmul.f32 1.0, %v3452
        %v3454 = vrcp.pop %v3054
        %v3455 = vmul.f32 %v3054, %v3454
        %v3456 = vsub.f32 1.0, %v3455
        %v3457 = vmul.f32 %v3454, %v3456
        %v3458 = vadd.f32 %v3454, %v3457
        %vm3459 = vweird.f32 %v3054
        %vm3460 = vweird.f32 %v3454
        %vm3461 = vmor %vm3459, %vm3460
        %v3462 = vsel %vm3461, %v3454, %v3458
        %v3463 = vand.u32 2147483647, %v3054
        %vm3464 = vcmp.eq.f32.partialorder %v3463, 8.507059e+37
        %v3465 = vand.u32 %v3054, 2147483648
        %v3466 = vor.u32 1.1754944e-38, %v3465
        %v3467 = vsel %vm3464, %v3466, %v3462
        %v3468 = vmul.f32 1.0, %v3467
        %v3469 = vrcp.pop %v3055
        %v3470 = vmul.f32 %v3055, %v3469
        %v3471 = vsub.f32 1.0, %v3470
        %v3472 = vmul.f32 %v3469, %v3471
        %v3473 = vadd.f32 %v3469, %v3472
        %vm3474 = vweird.f32 %v3055
        %vm3475 = vweird.f32 %v3469
        %vm3476 = vmor %vm3474, %vm3475
        %v3477 = vsel %vm3476, %v3469, %v3473
        %v3478 = vand.u32 2147483647, %v3055
        %vm3479 = vcmp.eq.f32.partialorder %v3478, 8.507059e+37
        %v3480 = vand.u32 %v3055, 2147483648
        %v3481 = vor.u32 1.1754944e-38, %v3480
        %v3482 = vsel %vm3479, %v3481, %v3477
        %v3483 = vmul.f32 1.0, %v3482
        %v3484 = vrcp.pop %v3056
        %v3485 = vmul.f32 %v3056, %v3484
        %v3486 = vsub.f32 1.0, %v3485
        %v3487 = vmul.f32 %v3484, %v3486
        %v3488 = vadd.f32 %v3484, %v3487
        %vm3489 = vweird.f32 %v3056
        %vm3490 = vweird.f32 %v3484
        %vm3491 = vmor %vm3489, %vm3490
        %v3492 = vsel %vm3491, %v3484, %v3488
        %v3493 = vand.u32 2147483647, %v3056
        %vm3494 = vcmp.eq.f32.partialorder %v3493, 8.507059e+37
        %v3495 = vand.u32 %v3056, 2147483648
        %v3496 = vor.u32 1.1754944e-38, %v3495
        %v3497 = vsel %vm3494, %v3496, %v3492
        %v3498 = vmul.f32 1.0, %v3497
        %v3499 = vrcp.pop %v3057
        %v3500 = vmul.f32 %v3057, %v3499
        %v3501 = vsub.f32 1.0, %v3500
        %v3502 = vmul.f32 %v3499, %v3501
        %v3503 = vadd.f32 %v3499, %v3502
        %vm3504 = vweird.f32 %v3057
        %vm3505 = vweird.f32 %v3499
        %vm3506 = vmor %vm3504, %vm3505
        %v3507 = vsel %vm3506, %v3499, %v3503
        %v3508 = vand.u32 2147483647, %v3057
        %vm3509 = vcmp.eq.f32.partialorder %v3508, 8.507059e+37
        %v3510 = vand.u32 %v3057, 2147483648
        %v3511 = vor.u32 1.1754944e-38, %v3510
        %v3512 = vsel %vm3509, %v3511, %v3507
        %v3513 = vmul.f32 1.0, %v3512
        %v3514 = vrcp.pop %v3058
        %v3515 = vmul.f32 %v3058, %v3514
        %v3516 = vsub.f32 1.0, %v3515
        %v3517 = vmul.f32 %v3514, %v3516
        %v3518 = vadd.f32 %v3514, %v3517
        %vm3519 = vweird.f32 %v3058
        %vm3520 = vweird.f32 %v3514
        %vm3521 = vmor %vm3519, %vm3520
        %v3522 = vsel %vm3521, %v3514, %v3518
        %v3523 = vand.u32 2147483647, %v3058
        %vm3524 = vcmp.eq.f32.partialorder %v3523, 8.507059e+37
        %v3525 = vand.u32 %v3058, 2147483648
        %v3526 = vor.u32 1.1754944e-38, %v3525
        %v3527 = vsel %vm3524, %v3526, %v3522
        %v3528 = vmul.f32 1.0, %v3527
        %v3529 = vrcp.pop %v3059
        %v3530 = vmul.f32 %v3059, %v3529
        %v3531 = vsub.f32 1.0, %v3530
        %v3532 = vmul.f32 %v3529, %v3531
        %v3533 = vadd.f32 %v3529, %v3532
        %vm3534 = vweird.f32 %v3059
        %vm3535 = vweird.f32 %v3529
        %vm3536 = vmor %vm3534, %vm3535
        %v3537 = vsel %vm3536, %v3529, %v3533
        %v3538 = vand.u32 2147483647, %v3059
        %vm3539 = vcmp.eq.f32.partialorder %v3538, 8.507059e+37
        %v3540 = vand.u32 %v3059, 2147483648
        %v3541 = vor.u32 1.1754944e-38, %v3540
        %v3542 = vsel %vm3539, %v3541, %v3537
        %v3543 = vmul.f32 1.0, %v3542
        %v3544 = vrcp.pop %v3060
        %v3545 = vmul.f32 %v3060, %v3544
        %v3546 = vsub.f32 1.0, %v3545
        %v3547 = vmul.f32 %v3544, %v3546
        %v3548 = vadd.f32 %v3544, %v3547
        %vm3549 = vweird.f32 %v3060
        %vm3550 = vweird.f32 %v3544
        %vm3551 = vmor %vm3549, %vm3550
        %v3552 = vsel %vm3551, %v3544, %v3548
        %v3553 = vand.u32 2147483647, %v3060
        %vm3554 = vcmp.eq.f32.partialorder %v3553, 8.507059e+37
        %v3555 = vand.u32 %v3060, 2147483648
        %v3556 = vor.u32 1.1754944e-38, %v3555
        %v3557 = vsel %vm3554, %v3556, %v3552
        %v3558 = vmul.f32 1.0, %v3557
        %v3559 = vrcp.pop %v3061
        %v3560 = vmul.f32 %v3061, %v3559
        %v3561 = vsub.f32 1.0, %v3560
        %v3562 = vmul.f32 %v3559, %v3561
        %v3563 = vadd.f32 %v3559, %v3562
        %vm3564 = vweird.f32 %v3061
        %vm3565 = vweird.f32 %v3559
        %vm3566 = vmor %vm3564, %vm3565
        %v3567 = vsel %vm3566, %v3559, %v3563
        %v3568 = vand.u32 2147483647, %v3061
        %vm3569 = vcmp.eq.f32.partialorder %v3568, 8.507059e+37
        %v3570 = vand.u32 %v3061, 2147483648
        %v3571 = vor.u32 1.1754944e-38, %v3570
        %v3572 = vsel %vm3569, %v3571, %v3567
        %v3573 = vmul.f32 1.0, %v3572
        %v3574 = vrcp.pop %v3062
        %v3575 = vmul.f32 %v3062, %v3574
        %v3576 = vsub.f32 1.0, %v3575
        %v3577 = vmul.f32 %v3574, %v3576
        %v3578 = vadd.f32 %v3574, %v3577
        %vm3579 = vweird.f32 %v3062
        %vm3580 = vweird.f32 %v3574
        %vm3581 = vmor %vm3579, %vm3580
        %v3582 = vsel %vm3581, %v3574, %v3578
        %v3583 = vand.u32 2147483647, %v3062
        %vm3584 = vcmp.eq.f32.partialorder %v3583, 8.507059e+37
        %v3585 = vand.u32 %v3062, 2147483648
        %v3586 = vor.u32 1.1754944e-38, %v3585
        %v3587 = vsel %vm3584, %v3586, %v3582
        %v3588 = vmul.f32 1.0, %v3587
        %v3589 = vrcp.pop %v3063
        %v3590 = vmul.f32 %v3063, %v3589
        %v3591 = vsub.f32 1.0, %v3590
        %v3592 = vmul.f32 %v3589, %v3591
        %v3593 = vadd.f32 %v3589, %v3592
        %vm3594 = vweird.f32 %v3063
        %vm3595 = vweird.f32 %v3589
        %vm3596 = vmor %vm3594, %vm3595
        %v3597 = vsel %vm3596, %v3589, %v3593
        %v3598 = vand.u32 2147483647, %v3063
        %vm3599 = vcmp.eq.f32.partialorder %v3598, 8.507059e+37
        %v3600 = vand.u32 %v3063, 2147483648
        %v3601 = vor.u32 1.1754944e-38, %v3600
        %v3602 = vsel %vm3599, %v3601, %v3597
        %v3603 = vmul.f32 1.0, %v3602
        %v3604 = vrcp.pop %v3064
        %v3605 = vmul.f32 %v3064, %v3604
        %v3606 = vsub.f32 1.0, %v3605
        %v3607 = vmul.f32 %v3604, %v3606
        %v3608 = vadd.f32 %v3604, %v3607
        %vm3609 = vweird.f32 %v3064
        %vm3610 = vweird.f32 %v3604
        %vm3611 = vmor %vm3609, %vm3610
        %v3612 = vsel %vm3611, %v3604, %v3608
        %v3613 = vand.u32 2147483647, %v3064
        %vm3614 = vcmp.eq.f32.partialorder %v3613, 8.507059e+37
        %v3615 = vand.u32 %v3064, 2147483648
        %v3616 = vor.u32 1.1754944e-38, %v3615
        %v3617 = vsel %vm3614, %v3616, %v3612
        %v3618 = vmul.f32 1.0, %v3617
        %v3619 = vrcp.pop %v3065
        %v3620 = vmul.f32 %v3065, %v3619
        %v3621 = vsub.f32 1.0, %v3620
        %v3622 = vmul.f32 %v3619, %v3621
        %v3623 = vadd.f32 %v3619, %v3622
        %vm3624 = vweird.f32 %v3065
        %vm3625 = vweird.f32 %v3619
        %vm3626 = vmor %vm3624, %vm3625
        %v3627 = vsel %vm3626, %v3619, %v3623
        %v3628 = vand.u32 2147483647, %v3065
        %vm3629 = vcmp.eq.f32.partialorder %v3628, 8.507059e+37
        %v3630 = vand.u32 %v3065, 2147483648
        %v3631 = vor.u32 1.1754944e-38, %v3630
        %v3632 = vsel %vm3629, %v3631, %v3627
        %v3633 = vmul.f32 1.0, %v3632
        %v3634 = vrcp.pop %v3066
        %v3635 = vmul.f32 %v3066, %v3634
        %v3636 = vsub.f32 1.0, %v3635
        %v3637 = vmul.f32 %v3634, %v3636
        %v3638 = vadd.f32 %v3634, %v3637
        %vm3639 = vweird.f32 %v3066
        %vm3640 = vweird.f32 %v3634
        %vm3641 = vmor %vm3639, %vm3640
        %v3642 = vsel %vm3641, %v3634, %v3638
        %v3643 = vand.u32 2147483647, %v3066
        %vm3644 = vcmp.eq.f32.partialorder %v3643, 8.507059e+37
        %v3645 = vand.u32 %v3066, 2147483648
        %v3646 = vor.u32 1.1754944e-38, %v3645
        %v3647 = vsel %vm3644, %v3646, %v3642
        %v3648 = vmul.f32 1.0, %v3647
        %v3649 = vrcp.pop %v3067
        %v3650 = vmul.f32 %v3067, %v3649
        %v3651 = vsub.f32 1.0, %v3650
        %v3652 = vmul.f32 %v3649, %v3651
        %v3653 = vadd.f32 %v3649, %v3652
        %vm3654 = vweird.f32 %v3067
        %vm3655 = vweird.f32 %v3649
        %vm3656 = vmor %vm3654, %vm3655
        %v3657 = vsel %vm3656, %v3649, %v3653
        %v3658 = vand.u32 2147483647, %v3067
        %vm3659 = vcmp.eq.f32.partialorder %v3658, 8.507059e+37
        %v3660 = vand.u32 %v3067, 2147483648
        %v3661 = vor.u32 1.1754944e-38, %v3660
        %v3662 = vsel %vm3659, %v3661, %v3657
        %v3663 = vmul.f32 1.0, %v3662
        %v3664 = vrcp.pop %v3068
        %v3665 = vmul.f32 %v3068, %v3664
        %v3666 = vsub.f32 1.0, %v3665
        %v3667 = vmul.f32 %v3664, %v3666
        %v3668 = vadd.f32 %v3664, %v3667
        %vm3669 = vweird.f32 %v3068
        %vm3670 = vweird.f32 %v3664
        %vm3671 = vmor %vm3669, %vm3670
        %v3672 = vsel %vm3671, %v3664, %v3668
        %v3673 = vand.u32 2147483647, %v3068
        %vm3674 = vcmp.eq.f32.partialorder %v3673, 8.507059e+37
        %v3675 = vand.u32 %v3068, 2147483648
        %v3676 = vor.u32 1.1754944e-38, %v3675
        %v3677 = vsel %vm3674, %v3676, %v3672
        %v3678 = vmul.f32 1.0, %v3677
        %v3679 = vrcp.pop %v3069
        %v3680 = vmul.f32 %v3069, %v3679
        %v3681 = vsub.f32 1.0, %v3680
        %v3682 = vmul.f32 %v3679, %v3681
        %v3683 = vadd.f32 %v3679, %v3682
        %vm3684 = vweird.f32 %v3069
        %vm3685 = vweird.f32 %v3679
        %vm3686 = vmor %vm3684, %vm3685
        %v3687 = vsel %vm3686, %v3679, %v3683
        %v3688 = vand.u32 2147483647, %v3069
        %vm3689 = vcmp.eq.f32.partialorder %v3688, 8.507059e+37
        %v3690 = vand.u32 %v3069, 2147483648
        %v3691 = vor.u32 1.1754944e-38, %v3690
        %v3692 = vsel %vm3689, %v3691, %v3687
        %v3693 = vmul.f32 1.0, %v3692
        %v3694 = vrcp.pop %v3070
        %v3695 = vmul.f32 %v3070, %v3694
        %v3696 = vsub.f32 1.0, %v3695
        %v3697 = vmul.f32 %v3694, %v3696
        %v3698 = vadd.f32 %v3694, %v3697
        %vm3699 = vweird.f32 %v3070
        %vm3700 = vweird.f32 %v3694
        %vm3701 = vmor %vm3699, %vm3700
        %v3702 = vsel %vm3701, %v3694, %v3698
        %v3703 = vand.u32 2147483647, %v3070
        %vm3704 = vcmp.eq.f32.partialorder %v3703, 8.507059e+37
        %v3705 = vand.u32 %v3070, 2147483648
        %v3706 = vor.u32 1.1754944e-38, %v3705
        %v3707 = vsel %vm3704, %v3706, %v3702
        %v3708 = vmul.f32 1.0, %v3707
        %v3709 = vrcp.pop %v3071
        %v3710 = vmul.f32 %v3071, %v3709
        %v3711 = vsub.f32 1.0, %v3710
        %v3712 = vmul.f32 %v3709, %v3711
        %v3713 = vadd.f32 %v3709, %v3712
        %vm3714 = vweird.f32 %v3071
        %vm3715 = vweird.f32 %v3709
        %vm3716 = vmor %vm3714, %vm3715
        %v3717 = vsel %vm3716, %v3709, %v3713
        %v3718 = vand.u32 2147483647, %v3071
        %vm3719 = vcmp.eq.f32.partialorder %v3718, 8.507059e+37
        %v3720 = vand.u32 %v3071, 2147483648
        %v3721 = vor.u32 1.1754944e-38, %v3720
        %v3722 = vsel %vm3719, %v3721, %v3717
        %v3723 = vmul.f32 1.0, %v3722
        %v3724 = vrcp.pop %v3072
        %v3725 = vmul.f32 %v3072, %v3724
        %v3726 = vsub.f32 1.0, %v3725
        %v3727 = vmul.f32 %v3724, %v3726
        %v3728 = vadd.f32 %v3724, %v3727
        %vm3729 = vweird.f32 %v3072
        %vm3730 = vweird.f32 %v3724
        %vm3731 = vmor %vm3729, %vm3730
        %v3732 = vsel %vm3731, %v3724, %v3728
        %v3733 = vand.u32 2147483647, %v3072
        %vm3734 = vcmp.eq.f32.partialorder %v3733, 8.507059e+37
        %v3735 = vand.u32 %v3072, 2147483648
        %v3736 = vor.u32 1.1754944e-38, %v3735
        %v3737 = vsel %vm3734, %v3736, %v3732
        %v3738 = vmul.f32 1.0, %v3737
        %v3739 = vrcp.pop %v3073
        %v3740 = vmul.f32 %v3073, %v3739
        %v3741 = vsub.f32 1.0, %v3740
        %v3742 = vmul.f32 %v3739, %v3741
        %v3743 = vadd.f32 %v3739, %v3742
        %vm3744 = vweird.f32 %v3073
        %vm3745 = vweird.f32 %v3739
        %vm3746 = vmor %vm3744, %vm3745
        %v3747 = vsel %vm3746, %v3739, %v3743
        %v3748 = vand.u32 2147483647, %v3073
        %vm3749 = vcmp.eq.f32.partialorder %v3748, 8.507059e+37
        %v3750 = vand.u32 %v3073, 2147483648
        %v3751 = vor.u32 1.1754944e-38, %v3750
        %v3752 = vsel %vm3749, %v3751, %v3747
        %v3753 = vmul.f32 1.0, %v3752
        %v3754 = vrcp.pop %v3074
        %v3755 = vmul.f32 %v3074, %v3754
        %v3756 = vsub.f32 1.0, %v3755
        %v3757 = vmul.f32 %v3754, %v3756
        %v3758 = vadd.f32 %v3754, %v3757
        %vm3759 = vweird.f32 %v3074
        %vm3760 = vweird.f32 %v3754
        %vm3761 = vmor %vm3759, %vm3760
        %v3762 = vsel %vm3761, %v3754, %v3758
        %v3763 = vand.u32 2147483647, %v3074
        %vm3764 = vcmp.eq.f32.partialorder %v3763, 8.507059e+37
        %v3765 = vand.u32 %v3074, 2147483648
        %v3766 = vor.u32 1.1754944e-38, %v3765
        %v3767 = vsel %vm3764, %v3766, %v3762
        %v3768 = vmul.f32 1.0, %v3767
        %v3769 = vrcp.pop %v3075
        %v3770 = vmul.f32 %v3075, %v3769
        %v3771 = vsub.f32 1.0, %v3770
        %v3772 = vmul.f32 %v3769, %v3771
        %v3773 = vadd.f32 %v3769, %v3772
        %vm3774 = vweird.f32 %v3075
        %vm3775 = vweird.f32 %v3769
        %vm3776 = vmor %vm3774, %vm3775
        %v3777 = vsel %vm3776, %v3769, %v3773
        %v3778 = vand.u32 2147483647, %v3075
        %vm3779 = vcmp.eq.f32.partialorder %v3778, 8.507059e+37
        %v3780 = vand.u32 %v3075, 2147483648
        %v3781 = vor.u32 1.1754944e-38, %v3780
        %v3782 = vsel %vm3779, %v3781, %v3777
        %v3783 = vmul.f32 1.0, %v3782
        %v3784 = vrcp.pop %v3076
        %v3785 = vmul.f32 %v3076, %v3784
        %v3786 = vsub.f32 1.0, %v3785
        %v3787 = vmul.f32 %v3784, %v3786
        %v3788 = vadd.f32 %v3784, %v3787
        %vm3789 = vweird.f32 %v3076
        %vm3790 = vweird.f32 %v3784
        %vm3791 = vmor %vm3789, %vm3790
        %v3792 = vsel %vm3791, %v3784, %v3788
        %v3793 = vand.u32 2147483647, %v3076
        %vm3794 = vcmp.eq.f32.partialorder %v3793, 8.507059e+37
        %v3795 = vand.u32 %v3076, 2147483648
        %v3796 = vor.u32 1.1754944e-38, %v3795
        %v3797 = vsel %vm3794, %v3796, %v3792
        %v3798 = vmul.f32 1.0, %v3797
        %v3799 = vrcp.pop %v3077
        %v3800 = vmul.f32 %v3077, %v3799
        %v3801 = vsub.f32 1.0, %v3800
        %v3802 = vmul.f32 %v3799, %v3801
        %v3803 = vadd.f32 %v3799, %v3802
        %vm3804 = vweird.f32 %v3077
        %vm3805 = vweird.f32 %v3799
        %vm3806 = vmor %vm3804, %vm3805
        %v3807 = vsel %vm3806, %v3799, %v3803
        %v3808 = vand.u32 2147483647, %v3077
        %vm3809 = vcmp.eq.f32.partialorder %v3808, 8.507059e+37
        %v3810 = vand.u32 %v3077, 2147483648
        %v3811 = vor.u32 1.1754944e-38, %v3810
        %v3812 = vsel %vm3809, %v3811, %v3807
        %v3813 = vmul.f32 1.0, %v3812
        %v3814 = vrcp.pop %v3078
        %v3815 = vmul.f32 %v3078, %v3814
        %v3816 = vsub.f32 1.0, %v3815
        %v3817 = vmul.f32 %v3814, %v3816
        %v3818 = vadd.f32 %v3814, %v3817
        %vm3819 = vweird.f32 %v3078
        %vm3820 = vweird.f32 %v3814
        %vm3821 = vmor %vm3819, %vm3820
        %v3822 = vsel %vm3821, %v3814, %v3818
        %v3823 = vand.u32 2147483647, %v3078
        %vm3824 = vcmp.eq.f32.partialorder %v3823, 8.507059e+37
        %v3825 = vand.u32 %v3078, 2147483648
        %v3826 = vor.u32 1.1754944e-38, %v3825
        %v3827 = vsel %vm3824, %v3826, %v3822
        %v3828 = vmul.f32 1.0, %v3827
        %v3829 = vrcp.pop %v3079
        %v3830 = vmul.f32 %v3079, %v3829
        %v3831 = vsub.f32 1.0, %v3830
        %v3832 = vmul.f32 %v3829, %v3831
        %v3833 = vadd.f32 %v3829, %v3832
        %vm3834 = vweird.f32 %v3079
        %vm3835 = vweird.f32 %v3829
        %vm3836 = vmor %vm3834, %vm3835
        %v3837 = vsel %vm3836, %v3829, %v3833
        %v3838 = vand.u32 2147483647, %v3079
        %vm3839 = vcmp.eq.f32.partialorder %v3838, 8.507059e+37
        %v3840 = vand.u32 %v3079, 2147483648
        %v3841 = vor.u32 1.1754944e-38, %v3840
        %v3842 = vsel %vm3839, %v3841, %v3837
        %v3843 = vmul.f32 1.0, %v3842
        %v3844 = vrcp.pop %v3080
        %v3845 = vmul.f32 %v3080, %v3844
        %v3846 = vsub.f32 1.0, %v3845
        %v3847 = vmul.f32 %v3844, %v3846
        %v3848 = vadd.f32 %v3844, %v3847
        %vm3849 = vweird.f32 %v3080
        %vm3850 = vweird.f32 %v3844
        %vm3851 = vmor %vm3849, %vm3850
        %v3852 = vsel %vm3851, %v3844, %v3848
        %v3853 = vand.u32 2147483647, %v3080
        %vm3854 = vcmp.eq.f32.partialorder %v3853, 8.507059e+37
        %v3855 = vand.u32 %v3080, 2147483648
        %v3856 = vor.u32 1.1754944e-38, %v3855
        %v3857 = vsel %vm3854, %v3856, %v3852
        %v3858 = vmul.f32 1.0, %v3857
        %v3859 = vrcp.pop %v3081
        %v3860 = vmul.f32 %v3081, %v3859
        %v3861 = vsub.f32 1.0, %v3860
        %v3862 = vmul.f32 %v3859, %v3861
        %v3863 = vadd.f32 %v3859, %v3862
        %vm3864 = vweird.f32 %v3081
        %vm3865 = vweird.f32 %v3859
        %vm3866 = vmor %vm3864, %vm3865
        %v3867 = vsel %vm3866, %v3859, %v3863
        %v3868 = vand.u32 2147483647, %v3081
        %vm3869 = vcmp.eq.f32.partialorder %v3868, 8.507059e+37
        %v3870 = vand.u32 %v3081, 2147483648
        %v3871 = vor.u32 1.1754944e-38, %v3870
        %v3872 = vsel %vm3869, %v3871, %v3867
        %v3873 = vmul.f32 1.0, %v3872
        %v3874 = vrcp.pop %v3082
        %v3875 = vmul.f32 %v3082, %v3874
        %v3876 = vsub.f32 1.0, %v3875
        %v3877 = vmul.f32 %v3874, %v3876
        %v3878 = vadd.f32 %v3874, %v3877
        %vm3879 = vweird.f32 %v3082
        %vm3880 = vweird.f32 %v3874
        %vm3881 = vmor %vm3879, %vm3880
        %v3882 = vsel %vm3881, %v3874, %v3878
        %v3883 = vand.u32 2147483647, %v3082
        %vm3884 = vcmp.eq.f32.partialorder %v3883, 8.507059e+37
        %v3885 = vand.u32 %v3082, 2147483648
        %v3886 = vor.u32 1.1754944e-38, %v3885
        %v3887 = vsel %vm3884, %v3886, %v3882
        %v3888 = vmul.f32 1.0, %v3887
        %v3889 = vrcp.pop %v3083
        %v3890 = vmul.f32 %v3083, %v3889
        %v3891 = vsub.f32 1.0, %v3890
        %v3892 = vmul.f32 %v3889, %v3891
        %v3893 = vadd.f32 %v3889, %v3892
        %vm3894 = vweird.f32 %v3083
        %vm3895 = vweird.f32 %v3889
        %vm3896 = vmor %vm3894, %vm3895
        %v3897 = vsel %vm3896, %v3889, %v3893
        %v3898 = vand.u32 2147483647, %v3083
        %vm3899 = vcmp.eq.f32.partialorder %v3898, 8.507059e+37
        %v3900 = vand.u32 %v3083, 2147483648
        %v3901 = vor.u32 1.1754944e-38, %v3900
        %v3902 = vsel %vm3899, %v3901, %v3897
        %v3903 = vmul.f32 1.0, %v3902
        %v3904 = vrcp.pop %v3084
        %v3905 = vmul.f32 %v3084, %v3904
        %v3906 = vsub.f32 1.0, %v3905
        %v3907 = vmul.f32 %v3904, %v3906
        %v3908 = vadd.f32 %v3904, %v3907
        %vm3909 = vweird.f32 %v3084
        %vm3910 = vweird.f32 %v3904
        %vm3911 = vmor %vm3909, %vm3910
        %v3912 = vsel %vm3911, %v3904, %v3908
        %v3913 = vand.u32 2147483647, %v3084
        %vm3914 = vcmp.eq.f32.partialorder %v3913, 8.507059e+37
        %v3915 = vand.u32 %v3084, 2147483648
        %v3916 = vor.u32 1.1754944e-38, %v3915
        %v3917 = vsel %vm3914, %v3916, %v3912
        %v3918 = vmul.f32 1.0, %v3917
        %v3919 = vrcp.pop %v3085
        %v3920 = vmul.f32 %v3085, %v3919
        %v3921 = vsub.f32 1.0, %v3920
        %v3922 = vmul.f32 %v3919, %v3921
        %v3923 = vadd.f32 %v3919, %v3922
        %vm3924 = vweird.f32 %v3085
        %vm3925 = vweird.f32 %v3919
        %vm3926 = vmor %vm3924, %vm3925
        %v3927 = vsel %vm3926, %v3919, %v3923
        %v3928 = vand.u32 2147483647, %v3085
        %vm3929 = vcmp.eq.f32.partialorder %v3928, 8.507059e+37
        %v3930 = vand.u32 %v3085, 2147483648
        %v3931 = vor.u32 1.1754944e-38, %v3930
        %v3932 = vsel %vm3929, %v3931, %v3927
        %v3933 = vmul.f32 1.0, %v3932
        %v3934 = vrcp.pop %v3086
        %v3935 = vmul.f32 %v3086, %v3934
        %v3936 = vsub.f32 1.0, %v3935
        %v3937 = vmul.f32 %v3934, %v3936
        %v3938 = vadd.f32 %v3934, %v3937
        %vm3939 = vweird.f32 %v3086
        %vm3940 = vweird.f32 %v3934
        %vm3941 = vmor %vm3939, %vm3940
        %v3942 = vsel %vm3941, %v3934, %v3938
        %v3943 = vand.u32 2147483647, %v3086
        %vm3944 = vcmp.eq.f32.partialorder %v3943, 8.507059e+37
        %v3945 = vand.u32 %v3086, 2147483648
        %v3946 = vor.u32 1.1754944e-38, %v3945
        %v3947 = vsel %vm3944, %v3946, %v3942
        %v3948 = vmul.f32 1.0, %v3947
        %v3949 = vrcp.pop %v3087
        %v3950 = vmul.f32 %v3087, %v3949
        %v3951 = vsub.f32 1.0, %v3950
        %v3952 = vmul.f32 %v3949, %v3951
        %v3953 = vadd.f32 %v3949, %v3952
        %vm3954 = vweird.f32 %v3087
        %vm3955 = vweird.f32 %v3949
        %vm3956 = vmor %vm3954, %vm3955
        %v3957 = vsel %vm3956, %v3949, %v3953
        %v3958 = vand.u32 2147483647, %v3087
        %vm3959 = vcmp.eq.f32.partialorder %v3958, 8.507059e+37
        %v3960 = vand.u32 %v3087, 2147483648
        %v3961 = vor.u32 1.1754944e-38, %v3960
        %v3962 = vsel %vm3959, %v3961, %v3957
        %v3963 = vmul.f32 1.0, %v3962
        %v3964 = vrcp.pop %v3088
        %v3965 = vmul.f32 %v3088, %v3964
        %v3966 = vsub.f32 1.0, %v3965
        %v3967 = vmul.f32 %v3964, %v3966
        %v3968 = vadd.f32 %v3964, %v3967
        %vm3969 = vweird.f32 %v3088
        %vm3970 = vweird.f32 %v3964
        %vm3971 = vmor %vm3969, %vm3970
        %v3972 = vsel %vm3971, %v3964, %v3968
        %v3973 = vand.u32 2147483647, %v3088
        %vm3974 = vcmp.eq.f32.partialorder %v3973, 8.507059e+37
        %v3975 = vand.u32 %v3088, 2147483648
        %v3976 = vor.u32 1.1754944e-38, %v3975
        %v3977 = vsel %vm3974, %v3976, %v3972
        %v3978 = vmul.f32 1.0, %v3977
        %v3979 = vrcp.pop %v3089
        %v3980 = vmul.f32 %v3089, %v3979
        %v3981 = vsub.f32 1.0, %v3980
        %v3982 = vmul.f32 %v3979, %v3981
        %v3983 = vadd.f32 %v3979, %v3982
        %vm3984 = vweird.f32 %v3089
        %vm3985 = vweird.f32 %v3979
        %vm3986 = vmor %vm3984, %vm3985
        %v3987 = vsel %vm3986, %v3979, %v3983
        %v3988 = vand.u32 2147483647, %v3089
        %vm3989 = vcmp.eq.f32.partialorder %v3988, 8.507059e+37
        %v3990 = vand.u32 %v3089, 2147483648
        %v3991 = vor.u32 1.1754944e-38, %v3990
        %v3992 = vsel %vm3989, %v3991, %v3987
        %v3993 = vmul.f32 1.0, %v3992
        %v3994 = vrcp.pop %v3090
        %v3995 = vmul.f32 %v3090, %v3994
        %v3996 = vsub.f32 1.0, %v3995
        %v3997 = vmul.f32 %v3994, %v3996
        %v3998 = vadd.f32 %v3994, %v3997
        %vm3999 = vweird.f32 %v3090
        %vm4000 = vweird.f32 %v3994
        %vm4001 = vmor %vm3999, %vm4000
        %v4002 = vsel %vm4001, %v3994, %v3998
        %v4003 = vand.u32 2147483647, %v3090
        %vm4004 = vcmp.eq.f32.partialorder %v4003, 8.507059e+37
        %v4005 = vand.u32 %v3090, 2147483648
        %v4006 = vor.u32 1.1754944e-38, %v4005
        %v4007 = vsel %vm4004, %v4006, %v4002
        %v4008 = vmul.f32 1.0, %v4007
        %v4009 = vrcp.pop %v3091
        %v4010 = vmul.f32 %v3091, %v4009
        %v4011 = vsub.f32 1.0, %v4010
        %v4012 = vmul.f32 %v4009, %v4011
        %v4013 = vadd.f32 %v4009, %v4012
        %vm4014 = vweird.f32 %v3091
        %vm4015 = vweird.f32 %v4009
        %vm4016 = vmor %vm4014, %vm4015
        %v4017 = vsel %vm4016, %v4009, %v4013
        %v4018 = vand.u32 2147483647, %v3091
        %vm4019 = vcmp.eq.f32.partialorder %v4018, 8.507059e+37
        %v4020 = vand.u32 %v3091, 2147483648
        %v4021 = vor.u32 1.1754944e-38, %v4020
        %v4022 = vsel %vm4019, %v4021, %v4017
        %v4023 = vmul.f32 1.0, %v4022
        %v4024 = vrcp.pop %v3092
        %v4025 = vmul.f32 %v3092, %v4024
        %v4026 = vsub.f32 1.0, %v4025
        %v4027 = vmul.f32 %v4024, %v4026
        %v4028 = vadd.f32 %v4024, %v4027
        %vm4029 = vweird.f32 %v3092
        %vm4030 = vweird.f32 %v4024
        %vm4031 = vmor %vm4029, %vm4030
        %v4032 = vsel %vm4031, %v4024, %v4028
        %v4033 = vand.u32 2147483647, %v3092
        %vm4034 = vcmp.eq.f32.partialorder %v4033, 8.507059e+37
        %v4035 = vand.u32 %v3092, 2147483648
        %v4036 = vor.u32 1.1754944e-38, %v4035
        %v4037 = vsel %vm4034, %v4036, %v4032
        %v4038 = vmul.f32 1.0, %v4037
        %v4039 = vrcp.pop %v3093
        %v4040 = vmul.f32 %v3093, %v4039
        %v4041 = vsub.f32 1.0, %v4040
        %v4042 = vmul.f32 %v4039, %v4041
        %v4043 = vadd.f32 %v4039, %v4042
        %vm4044 = vweird.f32 %v3093
        %vm4045 = vweird.f32 %v4039
        %vm4046 = vmor %vm4044, %vm4045
        %v4047 = vsel %vm4046, %v4039, %v4043
        %v4048 = vand.u32 2147483647, %v3093
        %vm4049 = vcmp.eq.f32.partialorder %v4048, 8.507059e+37
        %v4050 = vand.u32 %v3093, 2147483648
        %v4051 = vor.u32 1.1754944e-38, %v4050
        %v4052 = vsel %vm4049, %v4051, %v4047
        %v4053 = vmul.f32 1.0, %v4052
        %s4054 = ssub.f32 1.0, %s802
        %v4055 = vstv %s4054
        %v4056 = vmul.f32 %v4055, %v3108
        %v4057 = vmul.f32 %v4055, %v3123
        %v4058 = vmul.f32 %v4055, %v3138
        %v4059 = vmul.f32 %v4055, %v3153
        %v4060 = vmul.f32 %v4055, %v3168
        %v4061 = vmul.f32 %v4055, %v3183
        %v4062 = vmul.f32 %v4055, %v3198
        %v4063 = vmul.f32 %v4055, %v3213
        %v4064 = vmul.f32 %v4055, %v3228
        %v4065 = vmul.f32 %v4055, %v3243
        %v4066 = vmul.f32 %v4055, %v3258
        %v4067 = vmul.f32 %v4055, %v3273
        %v4068 = vmul.f32 %v4055, %v3288
        %v4069 = vmul.f32 %v4055, %v3303
        %v4070 = vmul.f32 %v4055, %v3318
        %v4071 = vmul.f32 %v4055, %v3333
        %v4072 = vmul.f32 %v4055, %v3348
        %v4073 = vmul.f32 %v4055, %v3363
        %v4074 = vmul.f32 %v4055, %v3378
        %v4075 = vmul.f32 %v4055, %v3393
        %v4076 = vmul.f32 %v4055, %v3408
        %v4077 = vmul.f32 %v4055, %v3423
        %v4078 = vmul.f32 %v4055, %v3438
        %v4079 = vmul.f32 %v4055, %v3453
        %v4080 = vmul.f32 %v4055, %v3468
        %v4081 = vmul.f32 %v4055, %v3483
        %v4082 = vmul.f32 %v4055, %v3498
        %v4083 = vmul.f32 %v4055, %v3513
        %v4084 = vmul.f32 %v4055, %v3528
        %v4085 = vmul.f32 %v4055, %v3543
        %v4086 = vmul.f32 %v4055, %v3558
        %v4087 = vmul.f32 %v4055, %v3573
        %v4088 = vmul.f32 %v4055, %v3588
        %v4089 = vmul.f32 %v4055, %v3603
        %v4090 = vmul.f32 %v4055, %v3618
        %v4091 = vmul.f32 %v4055, %v3633
        %v4092 = vmul.f32 %v4055, %v3648
        %v4093 = vmul.f32 %v4055, %v3663
        %v4094 = vmul.f32 %v4055, %v3678
        %v4095 = vmul.f32 %v4055, %v3693
        %v4096 = vmul.f32 %v4055, %v3708
        %v4097 = vmul.f32 %v4055, %v3723
        %v4098 = vmul.f32 %v4055, %v3738
        %v4099 = vmul.f32 %v4055, %v3753
        %v4100 = vmul.f32 %v4055, %v3768
        %v4101 = vmul.f32 %v4055, %v3783
        %v4102 = vmul.f32 %v4055, %v3798
        %v4103 = vmul.f32 %v4055, %v3813
        %v4104 = vmul.f32 %v4055, %v3828
        %v4105 = vmul.f32 %v4055, %v3843
        %v4106 = vmul.f32 %v4055, %v3858
        %v4107 = vmul.f32 %v4055, %v3873
        %v4108 = vmul.f32 %v4055, %v3888
        %v4109 = vmul.f32 %v4055, %v3903
        %v4110 = vmul.f32 %v4055, %v3918
        %v4111 = vmul.f32 %v4055, %v3933
        %v4112 = vmul.f32 %v4055, %v3948
        %v4113 = vmul.f32 %v4055, %v3963
        %v4114 = vmul.f32 %v4055, %v3978
        %v4115 = vmul.f32 %v4055, %v3993
        %v4116 = vmul.f32 %v4055, %v4008
        %v4117 = vmul.f32 %v4055, %v4023
        %v4118 = vmul.f32 %v4055, %v4038
        %v4119 = vmul.f32 %v4055, %v4053
        %v4120 = vstv %s802
        %v4121 = vadd.f32 %v4120, %v4056
        %v4122 = vadd.f32 %v4120, %v4057
        %v4123 = vadd.f32 %v4120, %v4058
        %v4124 = vadd.f32 %v4120, %v4059
        %v4125 = vadd.f32 %v4120, %v4060
        %v4126 = vadd.f32 %v4120, %v4061
        %v4127 = vadd.f32 %v4120, %v4062
        %v4128 = vadd.f32 %v4120, %v4063
        %v4129 = vadd.f32 %v4120, %v4064
        %v4130 = vadd.f32 %v4120, %v4065
        %v4131 = vadd.f32 %v4120, %v4066
        %v4132 = vadd.f32 %v4120, %v4067
        %v4133 = vadd.f32 %v4120, %v4068
        %v4134 = vadd.f32 %v4120, %v4069
        %v4135 = vadd.f32 %v4120, %v4070
        %v4136 = vadd.f32 %v4120, %v4071
        %v4137 = vadd.f32 %v4120, %v4072
        %v4138 = vadd.f32 %v4120, %v4073
        %v4139 = vadd.f32 %v4120, %v4074
        %v4140 = vadd.f32 %v4120, %v4075
        %v4141 = vadd.f32 %v4120, %v4076
        %v4142 = vadd.f32 %v4120, %v4077
        %v4143 = vadd.f32 %v4120, %v4078
        %v4144 = vadd.f32 %v4120, %v4079
        %v4145 = vadd.f32 %v4120, %v4080
        %v4146 = vadd.f32 %v4120, %v4081
        %v4147 = vadd.f32 %v4120, %v4082
        %v4148 = vadd.f32 %v4120, %v4083
        %v4149 = vadd.f32 %v4120, %v4084
        %v4150 = vadd.f32 %v4120, %v4085
        %v4151 = vadd.f32 %v4120, %v4086
        %v4152 = vadd.f32 %v4120, %v4087
        %v4153 = vadd.f32 %v4120, %v4088
        %v4154 = vadd.f32 %v4120, %v4089
        %v4155 = vadd.f32 %v4120, %v4090
        %v4156 = vadd.f32 %v4120, %v4091
        %v4157 = vadd.f32 %v4120, %v4092
        %v4158 = vadd.f32 %v4120, %v4093
        %v4159 = vadd.f32 %v4120, %v4094
        %v4160 = vadd.f32 %v4120, %v4095
        %v4161 = vadd.f32 %v4120, %v4096
        %v4162 = vadd.f32 %v4120, %v4097
        %v4163 = vadd.f32 %v4120, %v4098
        %v4164 = vadd.f32 %v4120, %v4099
        %v4165 = vadd.f32 %v4120, %v4100
        %v4166 = vadd.f32 %v4120, %v4101
        %v4167 = vadd.f32 %v4120, %v4102
        %v4168 = vadd.f32 %v4120, %v4103
        %v4169 = vadd.f32 %v4120, %v4104
        %v4170 = vadd.f32 %v4120, %v4105
        %v4171 = vadd.f32 %v4120, %v4106
        %v4172 = vadd.f32 %v4120, %v4107
        %v4173 = vadd.f32 %v4120, %v4108
        %v4174 = vadd.f32 %v4120, %v4109
        %v4175 = vadd.f32 %v4120, %v4110
        %v4176 = vadd.f32 %v4120, %v4111
        %v4177 = vadd.f32 %v4120, %v4112
        %v4178 = vadd.f32 %v4120, %v4113
        %v4179 = vadd.f32 %v4120, %v4114
        %v4180 = vadd.f32 %v4120, %v4115
        %v4181 = vadd.f32 %v4120, %v4116
        %v4182 = vadd.f32 %v4120, %v4117
        %v4183 = vadd.f32 %v4120, %v4118
        %v4184 = vadd.f32 %v4120, %v4119
        %v4185 = vmul.f32 %v2135, %v4121
        %v4186 = vmul.f32 %v2136, %v4122
        %v4187 = vmul.f32 %v2137, %v4123
        %v4188 = vmul.f32 %v2138, %v4124
        %v4189 = vmul.f32 %v2139, %v4125
        %v4190 = vmul.f32 %v2140, %v4126
        %v4191 = vmul.f32 %v2141, %v4127
        %v4192 = vmul.f32 %v2142, %v4128
        %v4193 = vmul.f32 %v2143, %v4129
        %v4194 = vmul.f32 %v2144, %v4130
        %v4195 = vmul.f32 %v2145, %v4131
        %v4196 = vmul.f32 %v2146, %v4132
        %v4197 = vmul.f32 %v2147, %v4133
        %v4198 = vmul.f32 %v2148, %v4134
        %v4199 = vmul.f32 %v2149, %v4135
        %v4200 = vmul.f32 %v2150, %v4136
        %v4201 = vmul.f32 %v2151, %v4137
        %v4202 = vmul.f32 %v2152, %v4138
        %v4203 = vmul.f32 %v2153, %v4139
        %v4204 = vmul.f32 %v2154, %v4140
        %v4205 = vmul.f32 %v2155, %v4141
        %v4206 = vmul.f32 %v2156, %v4142
        %v4207 = vmul.f32 %v2157, %v4143
        %v4208 = vmul.f32 %v2158, %v4144
        %v4209 = vmul.f32 %v2159, %v4145
        %v4210 = vmul.f32 %v2160, %v4146
        %v4211 = vmul.f32 %v2161, %v4147
        %v4212 = vmul.f32 %v2162, %v4148
        %v4213 = vmul.f32 %v2163, %v4149
        %v4214 = vmul.f32 %v2164, %v4150
        %v4215 = vmul.f32 %v2165, %v4151
        %v4216 = vmul.f32 %v2166, %v4152
        %v4217 = vmul.f32 %v2167, %v4153
        %v4218 = vmul.f32 %v2168, %v4154
        %v4219 = vmul.f32 %v2169, %v4155
        %v4220 = vmul.f32 %v2170, %v4156
        %v4221 = vmul.f32 %v2171, %v4157
        %v4222 = vmul.f32 %v2172, %v4158
        %v4223 = vmul.f32 %v2173, %v4159
        %v4224 = vmul.f32 %v2174, %v4160
        %v4225 = vmul.f32 %v2175, %v4161
        %v4226 = vmul.f32 %v2176, %v4162
        %v4227 = vmul.f32 %v2177, %v4163
        %v4228 = vmul.f32 %v2178, %v4164
        %v4229 = vmul.f32 %v2179, %v4165
        %v4230 = vmul.f32 %v2180, %v4166
        %v4231 = vmul.f32 %v2181, %v4167
        %v4232 = vmul.f32 %v2182, %v4168
        %v4233 = vmul.f32 %v2183, %v4169
        %v4234 = vmul.f32 %v2184, %v4170
        %v4235 = vmul.f32 %v2185, %v4171
        %v4236 = vmul.f32 %v2186, %v4172
        %v4237 = vmul.f32 %v2187, %v4173
        %v4238 = vmul.f32 %v2188, %v4174
        %v4239 = vmul.f32 %v2189, %v4175
        %v4240 = vmul.f32 %v2190, %v4176
        %v4241 = vmul.f32 %v2191, %v4177
        %v4242 = vmul.f32 %v2192, %v4178
        %v4243 = vmul.f32 %v2193, %v4179
        %v4244 = vmul.f32 %v2194, %v4180
        %v4245 = vmul.f32 %v2195, %v4181
        %v4246 = vmul.f32 %v2196, %v4182
        %v4247 = vmul.f32 %v2197, %v4183
        %v4248 = vmul.f32 %v2198, %v4184
        %v4249 = vpack.c.bf16 %v4186, %v4185
        %v4250 = vpack.c.bf16 %v4188, %v4187
        %v4251 = vpack.c.bf16 %v4190, %v4189
        %v4252 = vpack.c.bf16 %v4192, %v4191
        %v4253 = vpack.c.bf16 %v4194, %v4193
        %v4254 = vpack.c.bf16 %v4196, %v4195
        %v4255 = vpack.c.bf16 %v4198, %v4197
        %v4256 = vpack.c.bf16 %v4200, %v4199
        %v4257 = vpack.c.bf16 %v4202, %v4201
        %v4258 = vpack.c.bf16 %v4204, %v4203
        %v4259 = vpack.c.bf16 %v4206, %v4205
        %v4260 = vpack.c.bf16 %v4208, %v4207
        %v4261 = vpack.c.bf16 %v4210, %v4209
        %v4262 = vpack.c.bf16 %v4212, %v4211
        %v4263 = vpack.c.bf16 %v4214, %v4213
        %v4264 = vpack.c.bf16 %v4216, %v4215
        %v4265 = vpack.c.bf16 %v4218, %v4217
        %v4266 = vpack.c.bf16 %v4220, %v4219
        %v4267 = vpack.c.bf16 %v4222, %v4221
        %v4268 = vpack.c.bf16 %v4224, %v4223
        %v4269 = vpack.c.bf16 %v4226, %v4225
        %v4270 = vpack.c.bf16 %v4228, %v4227
        %v4271 = vpack.c.bf16 %v4230, %v4229
        %v4272 = vpack.c.bf16 %v4232, %v4231
        %v4273 = vpack.c.bf16 %v4234, %v4233
        %v4274 = vpack.c.bf16 %v4236, %v4235
        %v4275 = vpack.c.bf16 %v4238, %v4237
        %v4276 = vpack.c.bf16 %v4240, %v4239
        %v4277 = vpack.c.bf16 %v4242, %v4241
        %v4278 = vpack.c.bf16 %v4244, %v4243
        %v4279 = vpack.c.bf16 %v4246, %v4245
        %v4280 = vpack.c.bf16 %v4248, %v4247
        %v4281 = vld [vmem:[%s7] sm:$0xf]
        %v4282 = vld [vmem:[%s7 + $0x4] sm:$0xf]
        %v4283 = vld [vmem:[%s7 + $0x8] sm:$0xf]
        %v4284 = vld [vmem:[%s7 + $0xc] sm:$0xf]
        %v4285 = vld [vmem:[%s8] sm:$0x1]
        %v4287 = vperm.slane %v4285, 0
        %v4293 = vunpack.c.l.b16 %v4281
        %v4294 = vunpack.c.l.b16 %v4282
        %v4295 = vunpack.c.l.b16 %v4283
        %v4296 = vunpack.c.l.b16 %v4284
        %v4297 = vpack.c.b16 %v4294, %v4293
        %v4298 = vpack.c.b16 %v4296, %v4295
        %v4302 = vsel %vm2199, %v4249, 0
        %v4305 = vsel %vm2199, %v4250, 0
        %v4308 = vsel %vm2199, %v4251, 0
        %v4311 = vsel %vm2199, %v4252, 0
        %v4314 = vsel %vm2199, %v4253, 0
        %v4317 = vsel %vm2199, %v4254, 0
        %v4320 = vsel %vm2199, %v4255, 0
        %v4323 = vsel %vm2199, %v4256, 0
        %v4326 = vsel %vm2199, %v4257, 0
        %v4329 = vsel %vm2199, %v4258, 0
        %v4332 = vsel %vm2199, %v4259, 0
        %v4335 = vsel %vm2199, %v4260, 0
        %v4338 = vsel %vm2199, %v4261, 0
        %v4341 = vsel %vm2199, %v4262, 0
        %v4344 = vsel %vm2199, %v4263, 0
        %v4347 = vsel %vm2199, %v4264, 0
        %v4350 = vsel %vm2199, %v4265, 0
        %v4353 = vsel %vm2199, %v4266, 0
        %v4356 = vsel %vm2199, %v4267, 0
        %v4359 = vsel %vm2199, %v4268, 0
        %v4362 = vsel %vm2199, %v4269, 0
        %v4365 = vsel %vm2199, %v4270, 0
        %v4368 = vsel %vm2199, %v4271, 0
        %v4371 = vsel %vm2199, %v4272, 0
        %v4374 = vsel %vm2199, %v4273, 0
        %v4377 = vsel %vm2199, %v4274, 0
        %v4380 = vsel %vm2199, %v4275, 0
        %v4383 = vsel %vm2199, %v4276, 0
        %v4386 = vsel %vm2199, %v4277, 0
        %v4389 = vsel %vm2199, %v4278, 0
        %v4392 = vsel %vm2199, %v4279, 0
        %v4395 = vsel %vm2199, %v4280, 0
        %4397 = vmatpush.bf16.msra.mxu0 0
        %4398 = vmatpush.bf16.msra.mxu0 0
        %4399 = vmatpush.bf16.msra.mxu0 0
        %4400 = vmatpush.bf16.msra.mxu0 0
        %4401 = vmatpush.bf16.msra.mxu0 0
        %4402 = vmatpush.bf16.msra.mxu0 0
        %4403 = vmatpush.bf16.msra.mxu0 %v4298
        %4404 = vmatpush.bf16.msra.mxu0 %v4297
        %4405 = vmatmul.bf16.gmra.mxu0 %v4302
        %v4406 = vpop.f32.mrf.mxu0
        %v4407 = vadd.f32 %v4287, %v4406
        %v4408 = vpop.f32.mrf.mxu0
        %v4409 = vadd.f32 %v4287, %v4408
        %4410 = vmatmul.bf16.gmra.mxu0 %v4305
        %v4411 = vpop.f32.mrf.mxu0
        %v4412 = vadd.f32 %v4287, %v4411
        %v4413 = vpop.f32.mrf.mxu0
        %v4414 = vadd.f32 %v4287, %v4413
        %4415 = vmatmul.bf16.gmra.mxu0 %v4308
        %v4416 = vpop.f32.mrf.mxu0
        %v4417 = vadd.f32 %v4287, %v4416
        %v4418 = vpop.f32.mrf.mxu0
        %v4419 = vadd.f32 %v4287, %v4418
        %4420 = vmatmul.bf16.gmra.mxu0 %v4311
        %v4421 = vpop.f32.mrf.mxu0
        %v4422 = vadd.f32 %v4287, %v4421
        %v4423 = vpop.f32.mrf.mxu0
        %v4424 = vadd.f32 %v4287, %v4423
        %4425 = vmatmul.bf16.gmra.mxu0 %v4314
        %v4426 = vpop.f32.mrf.mxu0
        %v4427 = vadd.f32 %v4287, %v4426
        %v4428 = vpop.f32.mrf.mxu0
        %v4429 = vadd.f32 %v4287, %v4428
        %4430 = vmatmul.bf16.gmra.mxu0 %v4317
        %v4431 = vpop.f32.mrf.mxu0
        %v4432 = vadd.f32 %v4287, %v4431
        %v4433 = vpop.f32.mrf.mxu0
        %v4434 = vadd.f32 %v4287, %v4433
        %4435 = vmatmul.bf16.gmra.mxu0 %v4320
        %v4436 = vpop.f32.mrf.mxu0
        %v4437 = vadd.f32 %v4287, %v4436
        %v4438 = vpop.f32.mrf.mxu0
        %v4439 = vadd.f32 %v4287, %v4438
        %4440 = vmatmul.bf16.gmra.mxu0 %v4323
        %v4441 = vpop.f32.mrf.mxu0
        %v4442 = vadd.f32 %v4287, %v4441
        %v4443 = vpop.f32.mrf.mxu0
        %v4444 = vadd.f32 %v4287, %v4443
        %4445 = vmatmul.bf16.gmra.mxu0 %v4326
        %v4446 = vpop.f32.mrf.mxu0
        %v4447 = vadd.f32 %v4287, %v4446
        %v4448 = vpop.f32.mrf.mxu0
        %v4449 = vadd.f32 %v4287, %v4448
        %4450 = vmatmul.bf16.gmra.mxu0 %v4329
        %v4451 = vpop.f32.mrf.mxu0
        %v4452 = vadd.f32 %v4287, %v4451
        %v4453 = vpop.f32.mrf.mxu0
        %v4454 = vadd.f32 %v4287, %v4453
        %4455 = vmatmul.bf16.gmra.mxu0 %v4332
        %v4456 = vpop.f32.mrf.mxu0
        %v4457 = vadd.f32 %v4287, %v4456
        %v4458 = vpop.f32.mrf.mxu0
        %v4459 = vadd.f32 %v4287, %v4458
        %4460 = vmatmul.bf16.gmra.mxu0 %v4335
        %v4461 = vpop.f32.mrf.mxu0
        %v4462 = vadd.f32 %v4287, %v4461
        %v4463 = vpop.f32.mrf.mxu0
        %v4464 = vadd.f32 %v4287, %v4463
        %4465 = vmatmul.bf16.gmra.mxu0 %v4338
        %v4466 = vpop.f32.mrf.mxu0
        %v4467 = vadd.f32 %v4287, %v4466
        %v4468 = vpop.f32.mrf.mxu0
        %v4469 = vadd.f32 %v4287, %v4468
        %4470 = vmatmul.bf16.gmra.mxu0 %v4341
        %v4471 = vpop.f32.mrf.mxu0
        %v4472 = vadd.f32 %v4287, %v4471
        %v4473 = vpop.f32.mrf.mxu0
        %v4474 = vadd.f32 %v4287, %v4473
        %4475 = vmatmul.bf16.gmra.mxu0 %v4344
        %v4476 = vpop.f32.mrf.mxu0
        %v4477 = vadd.f32 %v4287, %v4476
        %v4478 = vpop.f32.mrf.mxu0
        %v4479 = vadd.f32 %v4287, %v4478
        %4480 = vmatmul.bf16.gmra.mxu0 %v4347
        %v4481 = vpop.f32.mrf.mxu0
        %v4482 = vadd.f32 %v4287, %v4481
        %v4483 = vpop.f32.mrf.mxu0
        %v4484 = vadd.f32 %v4287, %v4483
        %4485 = vmatmul.bf16.gmra.mxu0 %v4350
        %v4486 = vpop.f32.mrf.mxu0
        %v4487 = vadd.f32 %v4287, %v4486
        %v4488 = vpop.f32.mrf.mxu0
        %v4489 = vadd.f32 %v4287, %v4488
        %4490 = vmatmul.bf16.gmra.mxu0 %v4353
        %v4491 = vpop.f32.mrf.mxu0
        %v4492 = vadd.f32 %v4287, %v4491
        %v4493 = vpop.f32.mrf.mxu0
        %v4494 = vadd.f32 %v4287, %v4493
        %4495 = vmatmul.bf16.gmra.mxu0 %v4356
        %v4496 = vpop.f32.mrf.mxu0
        %v4497 = vadd.f32 %v4287, %v4496
        %v4498 = vpop.f32.mrf.mxu0
        %v4499 = vadd.f32 %v4287, %v4498
        %4500 = vmatmul.bf16.gmra.mxu0 %v4359
        %v4501 = vpop.f32.mrf.mxu0
        %v4502 = vadd.f32 %v4287, %v4501
        %v4503 = vpop.f32.mrf.mxu0
        %v4504 = vadd.f32 %v4287, %v4503
        %4505 = vmatmul.bf16.gmra.mxu0 %v4362
        %v4506 = vpop.f32.mrf.mxu0
        %v4507 = vadd.f32 %v4287, %v4506
        %v4508 = vpop.f32.mrf.mxu0
        %v4509 = vadd.f32 %v4287, %v4508
        %4510 = vmatmul.bf16.gmra.mxu0 %v4365
        %v4511 = vpop.f32.mrf.mxu0
        %v4512 = vadd.f32 %v4287, %v4511
        %v4513 = vpop.f32.mrf.mxu0
        %v4514 = vadd.f32 %v4287, %v4513
        %4515 = vmatmul.bf16.gmra.mxu0 %v4368
        %v4516 = vpop.f32.mrf.mxu0
        %v4517 = vadd.f32 %v4287, %v4516
        %v4518 = vpop.f32.mrf.mxu0
        %v4519 = vadd.f32 %v4287, %v4518
        %4520 = vmatmul.bf16.gmra.mxu0 %v4371
        %v4521 = vpop.f32.mrf.mxu0
        %v4522 = vadd.f32 %v4287, %v4521
        %v4523 = vpop.f32.mrf.mxu0
        %v4524 = vadd.f32 %v4287, %v4523
        %4525 = vmatmul.bf16.gmra.mxu0 %v4374
        %v4526 = vpop.f32.mrf.mxu0
        %v4527 = vadd.f32 %v4287, %v4526
        %v4528 = vpop.f32.mrf.mxu0
        %v4529 = vadd.f32 %v4287, %v4528
        %4530 = vmatmul.bf16.gmra.mxu0 %v4377
        %v4531 = vpop.f32.mrf.mxu0
        %v4532 = vadd.f32 %v4287, %v4531
        %v4533 = vpop.f32.mrf.mxu0
        %v4534 = vadd.f32 %v4287, %v4533
        %4535 = vmatmul.bf16.gmra.mxu0 %v4380
        %v4536 = vpop.f32.mrf.mxu0
        %v4537 = vadd.f32 %v4287, %v4536
        %v4538 = vpop.f32.mrf.mxu0
        %v4539 = vadd.f32 %v4287, %v4538
        %4540 = vmatmul.bf16.gmra.mxu0 %v4383
        %v4541 = vpop.f32.mrf.mxu0
        %v4542 = vadd.f32 %v4287, %v4541
        %v4543 = vpop.f32.mrf.mxu0
        %v4544 = vadd.f32 %v4287, %v4543
        %4545 = vmatmul.bf16.gmra.mxu0 %v4386
        %v4546 = vpop.f32.mrf.mxu0
        %v4547 = vadd.f32 %v4287, %v4546
        %v4548 = vpop.f32.mrf.mxu0
        %v4549 = vadd.f32 %v4287, %v4548
        %4550 = vmatmul.bf16.gmra.mxu0 %v4389
        %v4551 = vpop.f32.mrf.mxu0
        %v4552 = vadd.f32 %v4287, %v4551
        %v4553 = vpop.f32.mrf.mxu0
        %v4554 = vadd.f32 %v4287, %v4553
        %4555 = vmatmul.bf16.gmra.mxu0 %v4392
        %v4556 = vpop.f32.mrf.mxu0
        %v4557 = vadd.f32 %v4287, %v4556
        %v4558 = vpop.f32.mrf.mxu0
        %v4559 = vadd.f32 %v4287, %v4558
        %4560 = vmatmul.bf16.gmra.mxu0 %v4395
        %v4561 = vpop.f32.mrf.mxu0
        %v4562 = vadd.f32 %v4287, %v4561
        %v4563 = vpop.f32.mrf.mxu0
        %v4564 = vadd.f32 %v4287, %v4563
        %4565 = vdwg.mxu0
        %v4566 = vsel %vm1789, %v4407, 0.0
        %v4567 = vsel %vm1789, %v4447, 0.0
        %v4568 = vadd.f32 %v4566, %v4567
        %v4569 = vsel %vm1789, %v4487, 0.0
        %v4570 = vadd.f32 %v4568, %v4569
        %v4571 = vsel %vm1789, %v4527, 0.0
        %v4572 = vadd.f32 %v4570, %v4571
        %v4573 = vsel %vm1789, %v4409, 0.0
        %v4574 = vsel %vm1789, %v4449, 0.0
        %v4575 = vadd.f32 %v4573, %v4574
        %v4576 = vsel %vm1789, %v4489, 0.0
        %v4577 = vadd.f32 %v4575, %v4576
        %v4578 = vsel %vm1789, %v4529, 0.0
        %v4579 = vadd.f32 %v4577, %v4578
        %v4580 = vsel %vm1789, %v4412, 0.0
        %v4581 = vsel %vm1789, %v4452, 0.0
        %v4582 = vadd.f32 %v4580, %v4581
        %v4583 = vsel %vm1789, %v4492, 0.0
        %v4584 = vadd.f32 %v4582, %v4583
        %v4585 = vsel %vm1789, %v4532, 0.0
        %v4586 = vadd.f32 %v4584, %v4585
        %v4587 = vsel %vm1789, %v4414, 0.0
        %v4588 = vsel %vm1789, %v4454, 0.0
        %v4589 = vadd.f32 %v4587, %v4588
        %v4590 = vsel %vm1789, %v4494, 0.0
        %v4591 = vadd.f32 %v4589, %v4590
        %v4592 = vsel %vm1789, %v4534, 0.0
        %v4593 = vadd.f32 %v4591, %v4592
        %v4594 = vsel %vm1789, %v4417, 0.0
        %v4595 = vsel %vm1789, %v4457, 0.0
        %v4596 = vadd.f32 %v4594, %v4595
        %v4597 = vsel %vm1789, %v4497, 0.0
        %v4598 = vadd.f32 %v4596, %v4597
        %v4599 = vsel %vm1789, %v4537, 0.0
        %v4600 = vadd.f32 %v4598, %v4599
        %v4601 = vsel %vm1789, %v4419, 0.0
        %v4602 = vsel %vm1789, %v4459, 0.0
        %v4603 = vadd.f32 %v4601, %v4602
        %v4604 = vsel %vm1789, %v4499, 0.0
        %v4605 = vadd.f32 %v4603, %v4604
        %v4606 = vsel %vm1789, %v4539, 0.0
        %v4607 = vadd.f32 %v4605, %v4606
        %v4608 = vsel %vm1789, %v4422, 0.0
        %v4609 = vsel %vm1789, %v4462, 0.0
        %v4610 = vadd.f32 %v4608, %v4609
        %v4611 = vsel %vm1789, %v4502, 0.0
        %v4612 = vadd.f32 %v4610, %v4611
        %v4613 = vsel %vm1789, %v4542, 0.0
        %v4614 = vadd.f32 %v4612, %v4613
        %v4615 = vsel %vm1789, %v4424, 0.0
        %v4616 = vsel %vm1789, %v4464, 0.0
        %v4617 = vadd.f32 %v4615, %v4616
        %v4618 = vsel %vm1789, %v4504, 0.0
        %v4619 = vadd.f32 %v4617, %v4618
        %v4620 = vsel %vm1789, %v4544, 0.0
        %v4621 = vadd.f32 %v4619, %v4620
        %v4622 = vsel %vm1789, %v4427, 0.0
        %v4623 = vsel %vm1789, %v4467, 0.0
        %v4624 = vadd.f32 %v4622, %v4623
        %v4625 = vsel %vm1789, %v4507, 0.0
        %v4626 = vadd.f32 %v4624, %v4625
        %v4627 = vsel %vm1789, %v4547, 0.0
        %v4628 = vadd.f32 %v4626, %v4627
        %v4629 = vsel %vm1789, %v4429, 0.0
        %v4630 = vsel %vm1789, %v4469, 0.0
        %v4631 = vadd.f32 %v4629, %v4630
        %v4632 = vsel %vm1789, %v4509, 0.0
        %v4633 = vadd.f32 %v4631, %v4632
        %v4634 = vsel %vm1789, %v4549, 0.0
        %v4635 = vadd.f32 %v4633, %v4634
        %v4636 = vsel %vm1789, %v4432, 0.0
        %v4637 = vsel %vm1789, %v4472, 0.0
        %v4638 = vadd.f32 %v4636, %v4637
        %v4639 = vsel %vm1789, %v4512, 0.0
        %v4640 = vadd.f32 %v4638, %v4639
        %v4641 = vsel %vm1789, %v4552, 0.0
        %v4642 = vadd.f32 %v4640, %v4641
        %v4643 = vsel %vm1789, %v4434, 0.0
        %v4644 = vsel %vm1789, %v4474, 0.0
        %v4645 = vadd.f32 %v4643, %v4644
        %v4646 = vsel %vm1789, %v4514, 0.0
        %v4647 = vadd.f32 %v4645, %v4646
        %v4648 = vsel %vm1789, %v4554, 0.0
        %v4649 = vadd.f32 %v4647, %v4648
        %v4650 = vsel %vm1789, %v4437, 0.0
        %v4651 = vsel %vm1789, %v4477, 0.0
        %v4652 = vadd.f32 %v4650, %v4651
        %v4653 = vsel %vm1789, %v4517, 0.0
        %v4654 = vadd.f32 %v4652, %v4653
        %v4655 = vsel %vm1789, %v4557, 0.0
        %v4656 = vadd.f32 %v4654, %v4655
        %v4657 = vsel %vm1789, %v4439, 0.0
        %v4658 = vsel %vm1789, %v4479, 0.0
        %v4659 = vadd.f32 %v4657, %v4658
        %v4660 = vsel %vm1789, %v4519, 0.0
        %v4661 = vadd.f32 %v4659, %v4660
        %v4662 = vsel %vm1789, %v4559, 0.0
        %v4663 = vadd.f32 %v4661, %v4662
        %v4664 = vsel %vm1789, %v4442, 0.0
        %v4665 = vsel %vm1789, %v4482, 0.0
        %v4666 = vadd.f32 %v4664, %v4665
        %v4667 = vsel %vm1789, %v4522, 0.0
        %v4668 = vadd.f32 %v4666, %v4667
        %v4669 = vsel %vm1789, %v4562, 0.0
        %v4670 = vadd.f32 %v4668, %v4669
        %v4671 = vsel %vm1789, %v4444, 0.0
        %v4672 = vsel %vm1789, %v4484, 0.0
        %v4673 = vadd.f32 %v4671, %v4672
        %v4674 = vsel %vm1789, %v4524, 0.0
        %v4675 = vadd.f32 %v4673, %v4674
        %v4676 = vsel %vm1789, %v4564, 0.0
        %v4677 = vadd.f32 %v4675, %v4676
        %v4678 = vmul.f32 %v4572, %v2318
        %v4679 = vmul.f32 %v4579, %v2318
        %v4680 = vmul.f32 %v4586, %v2318
        %v4681 = vmul.f32 %v4593, %v2318
        %v4682 = vmul.f32 %v4600, %v2318
        %v4683 = vmul.f32 %v4607, %v2318
        %v4684 = vmul.f32 %v4614, %v2318
        %v4685 = vmul.f32 %v4621, %v2318
        %v4686 = vmul.f32 %v4628, %v2318
        %v4687 = vmul.f32 %v4635, %v2318
        %v4688 = vmul.f32 %v4642, %v2318
        %v4689 = vmul.f32 %v4649, %v2318
        %v4690 = vmul.f32 %v4656, %v2318
        %v4691 = vmul.f32 %v4663, %v2318
        %v4692 = vmul.f32 %v4670, %v2318
        %v4693 = vmul.f32 %v4677, %v2318
        %v4694 = vsub.f32 %v4407, %v4678
        %v4695 = vsub.f32 %v4409, %v4679
        %v4696 = vsub.f32 %v4412, %v4680
        %v4697 = vsub.f32 %v4414, %v4681
        %v4698 = vsub.f32 %v4417, %v4682
        %v4699 = vsub.f32 %v4419, %v4683
        %v4700 = vsub.f32 %v4422, %v4684
        %v4701 = vsub.f32 %v4424, %v4685
        %v4702 = vsub.f32 %v4427, %v4686
        %v4703 = vsub.f32 %v4429, %v4687
        %v4704 = vsub.f32 %v4432, %v4688
        %v4705 = vsub.f32 %v4434, %v4689
        %v4706 = vsub.f32 %v4437, %v4690
        %v4707 = vsub.f32 %v4439, %v4691
        %v4708 = vsub.f32 %v4442, %v4692
        %v4709 = vsub.f32 %v4444, %v4693
        %v4710 = vsub.f32 %v4447, %v4678
        %v4711 = vsub.f32 %v4449, %v4679
        %v4712 = vsub.f32 %v4452, %v4680
        %v4713 = vsub.f32 %v4454, %v4681
        %v4714 = vsub.f32 %v4457, %v4682
        %v4715 = vsub.f32 %v4459, %v4683
        %v4716 = vsub.f32 %v4462, %v4684
        %v4717 = vsub.f32 %v4464, %v4685
        %v4718 = vsub.f32 %v4467, %v4686
        %v4719 = vsub.f32 %v4469, %v4687
        %v4720 = vsub.f32 %v4472, %v4688
        %v4721 = vsub.f32 %v4474, %v4689
        %v4722 = vsub.f32 %v4477, %v4690
        %v4723 = vsub.f32 %v4479, %v4691
        %v4724 = vsub.f32 %v4482, %v4692
        %v4725 = vsub.f32 %v4484, %v4693
        %v4726 = vsub.f32 %v4487, %v4678
        %v4727 = vsub.f32 %v4489, %v4679
        %v4728 = vsub.f32 %v4492, %v4680
        %v4729 = vsub.f32 %v4494, %v4681
        %v4730 = vsub.f32 %v4497, %v4682
        %v4731 = vsub.f32 %v4499, %v4683
        %v4732 = vsub.f32 %v4502, %v4684
        %v4733 = vsub.f32 %v4504, %v4685
        %v4734 = vsub.f32 %v4507, %v4686
        %v4735 = vsub.f32 %v4509, %v4687
        %v4736 = vsub.f32 %v4512, %v4688
        %v4737 = vsub.f32 %v4514, %v4689
        %v4738 = vsub.f32 %v4517, %v4690
        %v4739 = vsub.f32 %v4519, %v4691
        %v4740 = vsub.f32 %v4522, %v4692
        %v4741 = vsub.f32 %v4524, %v4693
        %v4742 = vsub.f32 %v4527, %v4678
        %v4743 = vsub.f32 %v4529, %v4679
        %v4744 = vsub.f32 %v4532, %v4680
        %v4745 = vsub.f32 %v4534, %v4681
        %v4746 = vsub.f32 %v4537, %v4682
        %v4747 = vsub.f32 %v4539, %v4683
        %v4748 = vsub.f32 %v4542, %v4684
        %v4749 = vsub.f32 %v4544, %v4685
        %v4750 = vsub.f32 %v4547, %v4686
        %v4751 = vsub.f32 %v4549, %v4687
        %v4752 = vsub.f32 %v4552, %v4688
        %v4753 = vsub.f32 %v4554, %v4689
        %v4754 = vsub.f32 %v4557, %v4690
        %v4755 = vsub.f32 %v4559, %v4691
        %v4756 = vsub.f32 %v4562, %v4692
        %v4757 = vsub.f32 %v4564, %v4693
        %v4758 = vmul.f32 %v4694, %v4694
        %v4759 = vmul.f32 %v4695, %v4695
        %v4760 = vmul.f32 %v4696, %v4696
        %v4761 = vmul.f32 %v4697, %v4697
        %v4762 = vmul.f32 %v4698, %v4698
        %v4763 = vmul.f32 %v4699, %v4699
        %v4764 = vmul.f32 %v4700, %v4700
        %v4765 = vmul.f32 %v4701, %v4701
        %v4766 = vmul.f32 %v4702, %v4702
        %v4767 = vmul.f32 %v4703, %v4703
        %v4768 = vmul.f32 %v4704, %v4704
        %v4769 = vmul.f32 %v4705, %v4705
        %v4770 = vmul.f32 %v4706, %v4706
        %v4771 = vmul.f32 %v4707, %v4707
        %v4772 = vmul.f32 %v4708, %v4708
        %v4773 = vmul.f32 %v4709, %v4709
        %v4774 = vmul.f32 %v4710, %v4710
        %v4775 = vmul.f32 %v4711, %v4711
        %v4776 = vmul.f32 %v4712, %v4712
        %v4777 = vmul.f32 %v4713, %v4713
        %v4778 = vmul.f32 %v4714, %v4714
        %v4779 = vmul.f32 %v4715, %v4715
        %v4780 = vmul.f32 %v4716, %v4716
        %v4781 = vmul.f32 %v4717, %v4717
        %v4782 = vmul.f32 %v4718, %v4718
        %v4783 = vmul.f32 %v4719, %v4719
        %v4784 = vmul.f32 %v4720, %v4720
        %v4785 = vmul.f32 %v4721, %v4721
        %v4786 = vmul.f32 %v4722, %v4722
        %v4787 = vmul.f32 %v4723, %v4723
        %v4788 = vmul.f32 %v4724, %v4724
        %v4789 = vmul.f32 %v4725, %v4725
        %v4790 = vmul.f32 %v4726, %v4726
        %v4791 = vmul.f32 %v4727, %v4727
        %v4792 = vmul.f32 %v4728, %v4728
        %v4793 = vmul.f32 %v4729, %v4729
        %v4794 = vmul.f32 %v4730, %v4730
        %v4795 = vmul.f32 %v4731, %v4731
        %v4796 = vmul.f32 %v4732, %v4732
        %v4797 = vmul.f32 %v4733, %v4733
        %v4798 = vmul.f32 %v4734, %v4734
        %v4799 = vmul.f32 %v4735, %v4735
        %v4800 = vmul.f32 %v4736, %v4736
        %v4801 = vmul.f32 %v4737, %v4737
        %v4802 = vmul.f32 %v4738, %v4738
        %v4803 = vmul.f32 %v4739, %v4739
        %v4804 = vmul.f32 %v4740, %v4740
        %v4805 = vmul.f32 %v4741, %v4741
        %v4806 = vmul.f32 %v4742, %v4742
        %v4807 = vmul.f32 %v4743, %v4743
        %v4808 = vmul.f32 %v4744, %v4744
        %v4809 = vmul.f32 %v4745, %v4745
        %v4810 = vmul.f32 %v4746, %v4746
        %v4811 = vmul.f32 %v4747, %v4747
        %v4812 = vmul.f32 %v4748, %v4748
        %v4813 = vmul.f32 %v4749, %v4749
        %v4814 = vmul.f32 %v4750, %v4750
        %v4815 = vmul.f32 %v4751, %v4751
        %v4816 = vmul.f32 %v4752, %v4752
        %v4817 = vmul.f32 %v4753, %v4753
        %v4818 = vmul.f32 %v4754, %v4754
        %v4819 = vmul.f32 %v4755, %v4755
        %v4820 = vmul.f32 %v4756, %v4756
        %v4821 = vmul.f32 %v4757, %v4757
        %v4822 = vsel %vm1789, %v4758, 0.0
        %v4823 = vsel %vm1789, %v4774, 0.0
        %v4824 = vadd.f32 %v4822, %v4823
        %v4825 = vsel %vm1789, %v4790, 0.0
        %v4826 = vadd.f32 %v4824, %v4825
        %v4827 = vsel %vm1789, %v4806, 0.0
        %v4828 = vadd.f32 %v4826, %v4827
        %v4829 = vsel %vm1789, %v4759, 0.0
        %v4830 = vsel %vm1789, %v4775, 0.0
        %v4831 = vadd.f32 %v4829, %v4830
        %v4832 = vsel %vm1789, %v4791, 0.0
        %v4833 = vadd.f32 %v4831, %v4832
        %v4834 = vsel %vm1789, %v4807, 0.0
        %v4835 = vadd.f32 %v4833, %v4834
        %v4836 = vsel %vm1789, %v4760, 0.0
        %v4837 = vsel %vm1789, %v4776, 0.0
        %v4838 = vadd.f32 %v4836, %v4837
        %v4839 = vsel %vm1789, %v4792, 0.0
        %v4840 = vadd.f32 %v4838, %v4839
        %v4841 = vsel %vm1789, %v4808, 0.0
        %v4842 = vadd.f32 %v4840, %v4841
        %v4843 = vsel %vm1789, %v4761, 0.0
        %v4844 = vsel %vm1789, %v4777, 0.0
        %v4845 = vadd.f32 %v4843, %v4844
        %v4846 = vsel %vm1789, %v4793, 0.0
        %v4847 = vadd.f32 %v4845, %v4846
        %v4848 = vsel %vm1789, %v4809, 0.0
        %v4849 = vadd.f32 %v4847, %v4848
        %v4850 = vsel %vm1789, %v4762, 0.0
        %v4851 = vsel %vm1789, %v4778, 0.0
        %v4852 = vadd.f32 %v4850, %v4851
        %v4853 = vsel %vm1789, %v4794, 0.0
        %v4854 = vadd.f32 %v4852, %v4853
        %v4855 = vsel %vm1789, %v4810, 0.0
        %v4856 = vadd.f32 %v4854, %v4855
        %v4857 = vsel %vm1789, %v4763, 0.0
        %v4858 = vsel %vm1789, %v4779, 0.0
        %v4859 = vadd.f32 %v4857, %v4858
        %v4860 = vsel %vm1789, %v4795, 0.0
        %v4861 = vadd.f32 %v4859, %v4860
        %v4862 = vsel %vm1789, %v4811, 0.0
        %v4863 = vadd.f32 %v4861, %v4862
        %v4864 = vsel %vm1789, %v4764, 0.0
        %v4865 = vsel %vm1789, %v4780, 0.0
        %v4866 = vadd.f32 %v4864, %v4865
        %v4867 = vsel %vm1789, %v4796, 0.0
        %v4868 = vadd.f32 %v4866, %v4867
        %v4869 = vsel %vm1789, %v4812, 0.0
        %v4870 = vadd.f32 %v4868, %v4869
        %v4871 = vsel %vm1789, %v4765, 0.0
        %v4872 = vsel %vm1789, %v4781, 0.0
        %v4873 = vadd.f32 %v4871, %v4872
        %v4874 = vsel %vm1789, %v4797, 0.0
        %v4875 = vadd.f32 %v4873, %v4874
        %v4876 = vsel %vm1789, %v4813, 0.0
        %v4877 = vadd.f32 %v4875, %v4876
        %v4878 = vsel %vm1789, %v4766, 0.0
        %v4879 = vsel %vm1789, %v4782, 0.0
        %v4880 = vadd.f32 %v4878, %v4879
        %v4881 = vsel %vm1789, %v4798, 0.0
        %v4882 = vadd.f32 %v4880, %v4881
        %v4883 = vsel %vm1789, %v4814, 0.0
        %v4884 = vadd.f32 %v4882, %v4883
        %v4885 = vsel %vm1789, %v4767, 0.0
        %v4886 = vsel %vm1789, %v4783, 0.0
        %v4887 = vadd.f32 %v4885, %v4886
        %v4888 = vsel %vm1789, %v4799, 0.0
        %v4889 = vadd.f32 %v4887, %v4888
        %v4890 = vsel %vm1789, %v4815, 0.0
        %v4891 = vadd.f32 %v4889, %v4890
        %v4892 = vsel %vm1789, %v4768, 0.0
        %v4893 = vsel %vm1789, %v4784, 0.0
        %v4894 = vadd.f32 %v4892, %v4893
        %v4895 = vsel %vm1789, %v4800, 0.0
        %v4896 = vadd.f32 %v4894, %v4895
        %v4897 = vsel %vm1789, %v4816, 0.0
        %v4898 = vadd.f32 %v4896, %v4897
        %v4899 = vsel %vm1789, %v4769, 0.0
        %v4900 = vsel %vm1789, %v4785, 0.0
        %v4901 = vadd.f32 %v4899, %v4900
        %v4902 = vsel %vm1789, %v4801, 0.0
        %v4903 = vadd.f32 %v4901, %v4902
        %v4904 = vsel %vm1789, %v4817, 0.0
        %v4905 = vadd.f32 %v4903, %v4904
        %v4906 = vsel %vm1789, %v4770, 0.0
        %v4907 = vsel %vm1789, %v4786, 0.0
        %v4908 = vadd.f32 %v4906, %v4907
        %v4909 = vsel %vm1789, %v4802, 0.0
        %v4910 = vadd.f32 %v4908, %v4909
        %v4911 = vsel %vm1789, %v4818, 0.0
        %v4912 = vadd.f32 %v4910, %v4911
        %v4913 = vsel %vm1789, %v4771, 0.0
        %v4914 = vsel %vm1789, %v4787, 0.0
        %v4915 = vadd.f32 %v4913, %v4914
        %v4916 = vsel %vm1789, %v4803, 0.0
        %v4917 = vadd.f32 %v4915, %v4916
        %v4918 = vsel %vm1789, %v4819, 0.0
        %v4919 = vadd.f32 %v4917, %v4918
        %v4920 = vsel %vm1789, %v4772, 0.0
        %v4921 = vsel %vm1789, %v4788, 0.0
        %v4922 = vadd.f32 %v4920, %v4921
        %v4923 = vsel %vm1789, %v4804, 0.0
        %v4924 = vadd.f32 %v4922, %v4923
        %v4925 = vsel %vm1789, %v4820, 0.0
        %v4926 = vadd.f32 %v4924, %v4925
        %v4927 = vsel %vm1789, %v4773, 0.0
        %v4928 = vsel %vm1789, %v4789, 0.0
        %v4929 = vadd.f32 %v4927, %v4928
        %v4930 = vsel %vm1789, %v4805, 0.0
        %v4931 = vadd.f32 %v4929, %v4930
        %v4932 = vsel %vm1789, %v4821, 0.0
        %v4933 = vadd.f32 %v4931, %v4932
        %v4934 = vmul.f32 %v4828, %v2581
        %v4935 = vmul.f32 %v4835, %v2581
        %v4936 = vmul.f32 %v4842, %v2581
        %v4937 = vmul.f32 %v4849, %v2581
        %v4938 = vmul.f32 %v4856, %v2581
        %v4939 = vmul.f32 %v4863, %v2581
        %v4940 = vmul.f32 %v4870, %v2581
        %v4941 = vmul.f32 %v4877, %v2581
        %v4942 = vmul.f32 %v4884, %v2581
        %v4943 = vmul.f32 %v4891, %v2581
        %v4944 = vmul.f32 %v4898, %v2581
        %v4945 = vmul.f32 %v4905, %v2581
        %v4946 = vmul.f32 %v4912, %v2581
        %v4947 = vmul.f32 %v4919, %v2581
        %v4948 = vmul.f32 %v4926, %v2581
        %v4949 = vmul.f32 %v4933, %v2581
        %v4950 = vadd.f32 %v4934, 1e-09
        %v4951 = vadd.f32 %v4935, 1e-09
        %v4952 = vadd.f32 %v4936, 1e-09
        %v4953 = vadd.f32 %v4937, 1e-09
        %v4954 = vadd.f32 %v4938, 1e-09
        %v4955 = vadd.f32 %v4939, 1e-09
        %v4956 = vadd.f32 %v4940, 1e-09
        %v4957 = vadd.f32 %v4941, 1e-09
        %v4958 = vadd.f32 %v4942, 1e-09
        %v4959 = vadd.f32 %v4943, 1e-09
        %v4960 = vadd.f32 %v4944, 1e-09
        %v4961 = vadd.f32 %v4945, 1e-09
        %v4962 = vadd.f32 %v4946, 1e-09
        %v4963 = vadd.f32 %v4947, 1e-09
        %v4964 = vadd.f32 %v4948, 1e-09
        %v4965 = vadd.f32 %v4949, 1e-09
        %v4966 = vrsqrt.pop %v4950
        %v4967 = vmul.f32 %v4966, %v4950
        %v4968 = vmul.f32 %v4967, %v4966
        %v4969 = vmul.f32 0.5, %v4968
        %v4970 = vsub.f32 1.5, %v4969
        %v4971 = vmul.f32 %v4966, %v4970
        %vm4972 = vweird.f32 %v4950
        %vm4973 = vweird.f32 %v4966
        %vm4974 = vmor %vm4972, %vm4973
        %v4975 = vsel %vm4974, %v4966, %v4971
        %v4976 = vrsqrt.pop %v4951
        %v4977 = vmul.f32 %v4976, %v4951
        %v4978 = vmul.f32 %v4977, %v4976
        %v4979 = vmul.f32 0.5, %v4978
        %v4980 = vsub.f32 1.5, %v4979
        %v4981 = vmul.f32 %v4976, %v4980
        %vm4982 = vweird.f32 %v4951
        %vm4983 = vweird.f32 %v4976
        %vm4984 = vmor %vm4982, %vm4983
        %v4985 = vsel %vm4984, %v4976, %v4981
        %v4986 = vrsqrt.pop %v4952
        %v4987 = vmul.f32 %v4986, %v4952
        %v4988 = vmul.f32 %v4987, %v4986
        %v4989 = vmul.f32 0.5, %v4988
        %v4990 = vsub.f32 1.5, %v4989
        %v4991 = vmul.f32 %v4986, %v4990
        %vm4992 = vweird.f32 %v4952
        %vm4993 = vweird.f32 %v4986
        %vm4994 = vmor %vm4992, %vm4993
        %v4995 = vsel %vm4994, %v4986, %v4991
        %v4996 = vrsqrt.pop %v4953
        %v4997 = vmul.f32 %v4996, %v4953
        %v4998 = vmul.f32 %v4997, %v4996
        %v4999 = vmul.f32 0.5, %v4998
        %v5000 = vsub.f32 1.5, %v4999
        %v5001 = vmul.f32 %v4996, %v5000
        %vm5002 = vweird.f32 %v4953
        %vm5003 = vweird.f32 %v4996
        %vm5004 = vmor %vm5002, %vm5003
        %v5005 = vsel %vm5004, %v4996, %v5001
        %v5006 = vrsqrt.pop %v4954
        %v5007 = vmul.f32 %v5006, %v4954
        %v5008 = vmul.f32 %v5007, %v5006
        %v5009 = vmul.f32 0.5, %v5008
        %v5010 = vsub.f32 1.5, %v5009
        %v5011 = vmul.f32 %v5006, %v5010
        %vm5012 = vweird.f32 %v4954
        %vm5013 = vweird.f32 %v5006
        %vm5014 = vmor %vm5012, %vm5013
        %v5015 = vsel %vm5014, %v5006, %v5011
        %v5016 = vrsqrt.pop %v4955
        %v5017 = vmul.f32 %v5016, %v4955
        %v5018 = vmul.f32 %v5017, %v5016
        %v5019 = vmul.f32 0.5, %v5018
        %v5020 = vsub.f32 1.5, %v5019
        %v5021 = vmul.f32 %v5016, %v5020
        %vm5022 = vweird.f32 %v4955
        %vm5023 = vweird.f32 %v5016
        %vm5024 = vmor %vm5022, %vm5023
        %v5025 = vsel %vm5024, %v5016, %v5021
        %v5026 = vrsqrt.pop %v4956
        %v5027 = vmul.f32 %v5026, %v4956
        %v5028 = vmul.f32 %v5027, %v5026
        %v5029 = vmul.f32 0.5, %v5028
        %v5030 = vsub.f32 1.5, %v5029
        %v5031 = vmul.f32 %v5026, %v5030
        %vm5032 = vweird.f32 %v4956
        %vm5033 = vweird.f32 %v5026
        %vm5034 = vmor %vm5032, %vm5033
        %v5035 = vsel %vm5034, %v5026, %v5031
        %v5036 = vrsqrt.pop %v4957
        %v5037 = vmul.f32 %v5036, %v4957
        %v5038 = vmul.f32 %v5037, %v5036
        %v5039 = vmul.f32 0.5, %v5038
        %v5040 = vsub.f32 1.5, %v5039
        %v5041 = vmul.f32 %v5036, %v5040
        %vm5042 = vweird.f32 %v4957
        %vm5043 = vweird.f32 %v5036
        %vm5044 = vmor %vm5042, %vm5043
        %v5045 = vsel %vm5044, %v5036, %v5041
        %v5046 = vrsqrt.pop %v4958
        %v5047 = vmul.f32 %v5046, %v4958
        %v5048 = vmul.f32 %v5047, %v5046
        %v5049 = vmul.f32 0.5, %v5048
        %v5050 = vsub.f32 1.5, %v5049
        %v5051 = vmul.f32 %v5046, %v5050
        %vm5052 = vweird.f32 %v4958
        %vm5053 = vweird.f32 %v5046
        %vm5054 = vmor %vm5052, %vm5053
        %v5055 = vsel %vm5054, %v5046, %v5051
        %v5056 = vrsqrt.pop %v4959
        %v5057 = vmul.f32 %v5056, %v4959
        %v5058 = vmul.f32 %v5057, %v5056
        %v5059 = vmul.f32 0.5, %v5058
        %v5060 = vsub.f32 1.5, %v5059
        %v5061 = vmul.f32 %v5056, %v5060
        %vm5062 = vweird.f32 %v4959
        %vm5063 = vweird.f32 %v5056
        %vm5064 = vmor %vm5062, %vm5063
        %v5065 = vsel %vm5064, %v5056, %v5061
        %v5066 = vrsqrt.pop %v4960
        %v5067 = vmul.f32 %v5066, %v4960
        %v5068 = vmul.f32 %v5067, %v5066
        %v5069 = vmul.f32 0.5, %v5068
        %v5070 = vsub.f32 1.5, %v5069
        %v5071 = vmul.f32 %v5066, %v5070
        %vm5072 = vweird.f32 %v4960
        %vm5073 = vweird.f32 %v5066
        %vm5074 = vmor %vm5072, %vm5073
        %v5075 = vsel %vm5074, %v5066, %v5071
        %v5076 = vrsqrt.pop %v4961
        %v5077 = vmul.f32 %v5076, %v4961
        %v5078 = vmul.f32 %v5077, %v5076
        %v5079 = vmul.f32 0.5, %v5078
        %v5080 = vsub.f32 1.5, %v5079
        %v5081 = vmul.f32 %v5076, %v5080
        %vm5082 = vweird.f32 %v4961
        %vm5083 = vweird.f32 %v5076
        %vm5084 = vmor %vm5082, %vm5083
        %v5085 = vsel %vm5084, %v5076, %v5081
        %v5086 = vrsqrt.pop %v4962
        %v5087 = vmul.f32 %v5086, %v4962
        %v5088 = vmul.f32 %v5087, %v5086
        %v5089 = vmul.f32 0.5, %v5088
        %v5090 = vsub.f32 1.5, %v5089
        %v5091 = vmul.f32 %v5086, %v5090
        %vm5092 = vweird.f32 %v4962
        %vm5093 = vweird.f32 %v5086
        %vm5094 = vmor %vm5092, %vm5093
        %v5095 = vsel %vm5094, %v5086, %v5091
        %v5096 = vrsqrt.pop %v4963
        %v5097 = vmul.f32 %v5096, %v4963
        %v5098 = vmul.f32 %v5097, %v5096
        %v5099 = vmul.f32 0.5, %v5098
        %v5100 = vsub.f32 1.5, %v5099
        %v5101 = vmul.f32 %v5096, %v5100
        %vm5102 = vweird.f32 %v4963
        %vm5103 = vweird.f32 %v5096
        %vm5104 = vmor %vm5102, %vm5103
        %v5105 = vsel %vm5104, %v5096, %v5101
        %v5106 = vrsqrt.pop %v4964
        %v5107 = vmul.f32 %v5106, %v4964
        %v5108 = vmul.f32 %v5107, %v5106
        %v5109 = vmul.f32 0.5, %v5108
        %v5110 = vsub.f32 1.5, %v5109
        %v5111 = vmul.f32 %v5106, %v5110
        %vm5112 = vweird.f32 %v4964
        %vm5113 = vweird.f32 %v5106
        %vm5114 = vmor %vm5112, %vm5113
        %v5115 = vsel %vm5114, %v5106, %v5111
        %v5116 = vrsqrt.pop %v4965
        %v5117 = vmul.f32 %v5116, %v4965
        %v5118 = vmul.f32 %v5117, %v5116
        %v5119 = vmul.f32 0.5, %v5118
        %v5120 = vsub.f32 1.5, %v5119
        %v5121 = vmul.f32 %v5116, %v5120
        %vm5122 = vweird.f32 %v4965
        %vm5123 = vweird.f32 %v5116
        %vm5124 = vmor %vm5122, %vm5123
        %v5125 = vsel %vm5124, %v5116, %v5121
        %v5126 = vmul.f32 %v4694, %v4975
        %v5127 = vmul.f32 %v4695, %v4985
        %v5128 = vmul.f32 %v4696, %v4995
        %v5129 = vmul.f32 %v4697, %v5005
        %v5130 = vmul.f32 %v4698, %v5015
        %v5131 = vmul.f32 %v4699, %v5025
        %v5132 = vmul.f32 %v4700, %v5035
        %v5133 = vmul.f32 %v4701, %v5045
        %v5134 = vmul.f32 %v4702, %v5055
        %v5135 = vmul.f32 %v4703, %v5065
        %v5136 = vmul.f32 %v4704, %v5075
        %v5137 = vmul.f32 %v4705, %v5085
        %v5138 = vmul.f32 %v4706, %v5095
        %v5139 = vmul.f32 %v4707, %v5105
        %v5140 = vmul.f32 %v4708, %v5115
        %v5141 = vmul.f32 %v4709, %v5125
        %v5142 = vmul.f32 %v4710, %v4975
        %v5143 = vmul.f32 %v4711, %v4985
        %v5144 = vmul.f32 %v4712, %v4995
        %v5145 = vmul.f32 %v4713, %v5005
        %v5146 = vmul.f32 %v4714, %v5015
        %v5147 = vmul.f32 %v4715, %v5025
        %v5148 = vmul.f32 %v4716, %v5035
        %v5149 = vmul.f32 %v4717, %v5045
        %v5150 = vmul.f32 %v4718, %v5055
        %v5151 = vmul.f32 %v4719, %v5065
        %v5152 = vmul.f32 %v4720, %v5075
        %v5153 = vmul.f32 %v4721, %v5085
        %v5154 = vmul.f32 %v4722, %v5095
        %v5155 = vmul.f32 %v4723, %v5105
        %v5156 = vmul.f32 %v4724, %v5115
        %v5157 = vmul.f32 %v4725, %v5125
        %v5158 = vmul.f32 %v4726, %v4975
        %v5159 = vmul.f32 %v4727, %v4985
        %v5160 = vmul.f32 %v4728, %v4995
        %v5161 = vmul.f32 %v4729, %v5005
        %v5162 = vmul.f32 %v4730, %v5015
        %v5163 = vmul.f32 %v4731, %v5025
        %v5164 = vmul.f32 %v4732, %v5035
        %v5165 = vmul.f32 %v4733, %v5045
        %v5166 = vmul.f32 %v4734, %v5055
        %v5167 = vmul.f32 %v4735, %v5065
        %v5168 = vmul.f32 %v4736, %v5075
        %v5169 = vmul.f32 %v4737, %v5085
        %v5170 = vmul.f32 %v4738, %v5095
        %v5171 = vmul.f32 %v4739, %v5105
        %v5172 = vmul.f32 %v4740, %v5115
        %v5173 = vmul.f32 %v4741, %v5125
        %v5174 = vmul.f32 %v4742, %v4975
        %v5175 = vmul.f32 %v4743, %v4985
        %v5176 = vmul.f32 %v4744, %v4995
        %v5177 = vmul.f32 %v4745, %v5005
        %v5178 = vmul.f32 %v4746, %v5015
        %v5179 = vmul.f32 %v4747, %v5025
        %v5180 = vmul.f32 %v4748, %v5035
        %v5181 = vmul.f32 %v4749, %v5045
        %v5182 = vmul.f32 %v4750, %v5055
        %v5183 = vmul.f32 %v4751, %v5065
        %v5184 = vmul.f32 %v4752, %v5075
        %v5185 = vmul.f32 %v4753, %v5085
        %v5186 = vmul.f32 %v4754, %v5095
        %v5187 = vmul.f32 %v4755, %v5105
        %v5188 = vmul.f32 %v4756, %v5115
        %v5189 = vmul.f32 %v4757, %v5125
        %v5190 = vxor.u32 %v5126, 2147483648
        %v5191 = vxor.u32 %v5127, 2147483648
        %v5192 = vxor.u32 %v5128, 2147483648
        %v5193 = vxor.u32 %v5129, 2147483648
        %v5194 = vxor.u32 %v5130, 2147483648
        %v5195 = vxor.u32 %v5131, 2147483648
        %v5196 = vxor.u32 %v5132, 2147483648
        %v5197 = vxor.u32 %v5133, 2147483648
        %v5198 = vxor.u32 %v5134, 2147483648
        %v5199 = vxor.u32 %v5135, 2147483648
        %v5200 = vxor.u32 %v5136, 2147483648
        %v5201 = vxor.u32 %v5137, 2147483648
        %v5202 = vxor.u32 %v5138, 2147483648
        %v5203 = vxor.u32 %v5139, 2147483648
        %v5204 = vxor.u32 %v5140, 2147483648
        %v5205 = vxor.u32 %v5141, 2147483648
        %v5206 = vxor.u32 %v5142, 2147483648
        %v5207 = vxor.u32 %v5143, 2147483648
        %v5208 = vxor.u32 %v5144, 2147483648
        %v5209 = vxor.u32 %v5145, 2147483648
        %v5210 = vxor.u32 %v5146, 2147483648
        %v5211 = vxor.u32 %v5147, 2147483648
        %v5212 = vxor.u32 %v5148, 2147483648
        %v5213 = vxor.u32 %v5149, 2147483648
        %v5214 = vxor.u32 %v5150, 2147483648
        %v5215 = vxor.u32 %v5151, 2147483648
        %v5216 = vxor.u32 %v5152, 2147483648
        %v5217 = vxor.u32 %v5153, 2147483648
        %v5218 = vxor.u32 %v5154, 2147483648
        %v5219 = vxor.u32 %v5155, 2147483648
        %v5220 = vxor.u32 %v5156, 2147483648
        %v5221 = vxor.u32 %v5157, 2147483648
        %v5222 = vxor.u32 %v5158, 2147483648
        %v5223 = vxor.u32 %v5159, 2147483648
        %v5224 = vxor.u32 %v5160, 2147483648
        %v5225 = vxor.u32 %v5161, 2147483648
        %v5226 = vxor.u32 %v5162, 2147483648
        %v5227 = vxor.u32 %v5163, 2147483648
        %v5228 = vxor.u32 %v5164, 2147483648
        %v5229 = vxor.u32 %v5165, 2147483648
        %v5230 = vxor.u32 %v5166, 2147483648
        %v5231 = vxor.u32 %v5167, 2147483648
        %v5232 = vxor.u32 %v5168, 2147483648
        %v5233 = vxor.u32 %v5169, 2147483648
        %v5234 = vxor.u32 %v5170, 2147483648
        %v5235 = vxor.u32 %v5171, 2147483648
        %v5236 = vxor.u32 %v5172, 2147483648
        %v5237 = vxor.u32 %v5173, 2147483648
        %v5238 = vxor.u32 %v5174, 2147483648
        %v5239 = vxor.u32 %v5175, 2147483648
        %v5240 = vxor.u32 %v5176, 2147483648
        %v5241 = vxor.u32 %v5177, 2147483648
        %v5242 = vxor.u32 %v5178, 2147483648
        %v5243 = vxor.u32 %v5179, 2147483648
        %v5244 = vxor.u32 %v5180, 2147483648
        %v5245 = vxor.u32 %v5181, 2147483648
        %v5246 = vxor.u32 %v5182, 2147483648
        %v5247 = vxor.u32 %v5183, 2147483648
        %v5248 = vxor.u32 %v5184, 2147483648
        %v5249 = vxor.u32 %v5185, 2147483648
        %v5250 = vxor.u32 %v5186, 2147483648
        %v5251 = vxor.u32 %v5187, 2147483648
        %v5252 = vxor.u32 %v5188, 2147483648
        %v5253 = vxor.u32 %v5189, 2147483648
        %v5254 = vmul.f32 %v5190, 1.442695
        %v5255 = vpow.pop %v5254
        %v5256 = vmul.f32 %v5191, 1.442695
        %v5257 = vpow.pop %v5256
        %v5258 = vmul.f32 %v5192, 1.442695
        %v5259 = vpow.pop %v5258
        %v5260 = vmul.f32 %v5193, 1.442695
        %v5261 = vpow.pop %v5260
        %v5262 = vmul.f32 %v5194, 1.442695
        %v5263 = vpow.pop %v5262
        %v5264 = vmul.f32 %v5195, 1.442695
        %v5265 = vpow.pop %v5264
        %v5266 = vmul.f32 %v5196, 1.442695
        %v5267 = vpow.pop %v5266
        %v5268 = vmul.f32 %v5197, 1.442695
        %v5269 = vpow.pop %v5268
        %v5270 = vmul.f32 %v5198, 1.442695
        %v5271 = vpow.pop %v5270
        %v5272 = vmul.f32 %v5199, 1.442695
        %v5273 = vpow.pop %v5272
        %v5274 = vmul.f32 %v5200, 1.442695
        %v5275 = vpow.pop %v5274
        %v5276 = vmul.f32 %v5201, 1.442695
        %v5277 = vpow.pop %v5276
        %v5278 = vmul.f32 %v5202, 1.442695
        %v5279 = vpow.pop %v5278
        %v5280 = vmul.f32 %v5203, 1.442695
        %v5281 = vpow.pop %v5280
        %v5282 = vmul.f32 %v5204, 1.442695
        %v5283 = vpow.pop %v5282
        %v5284 = vmul.f32 %v5205, 1.442695
        %v5285 = vpow.pop %v5284
        %v5286 = vmul.f32 %v5206, 1.442695
        %v5287 = vpow.pop %v5286
        %v5288 = vmul.f32 %v5207, 1.442695
        %v5289 = vpow.pop %v5288
        %v5290 = vmul.f32 %v5208, 1.442695
        %v5291 = vpow.pop %v5290
        %v5292 = vmul.f32 %v5209, 1.442695
        %v5293 = vpow.pop %v5292
        %v5294 = vmul.f32 %v5210, 1.442695
        %v5295 = vpow.pop %v5294
        %v5296 = vmul.f32 %v5211, 1.442695
        %v5297 = vpow.pop %v5296
        %v5298 = vmul.f32 %v5212, 1.442695
        %v5299 = vpow.pop %v5298
        %v5300 = vmul.f32 %v5213, 1.442695
        %v5301 = vpow.pop %v5300
        %v5302 = vmul.f32 %v5214, 1.442695
        %v5303 = vpow.pop %v5302
        %v5304 = vmul.f32 %v5215, 1.442695
        %v5305 = vpow.pop %v5304
        %v5306 = vmul.f32 %v5216, 1.442695
        %v5307 = vpow.pop %v5306
        %v5308 = vmul.f32 %v5217, 1.442695
        %v5309 = vpow.pop %v5308
        %v5310 = vmul.f32 %v5218, 1.442695
        %v5311 = vpow.pop %v5310
        %v5312 = vmul.f32 %v5219, 1.442695
        %v5313 = vpow.pop %v5312
        %v5314 = vmul.f32 %v5220, 1.442695
        %v5315 = vpow.pop %v5314
        %v5316 = vmul.f32 %v5221, 1.442695
        %v5317 = vpow.pop %v5316
        %v5318 = vmul.f32 %v5222, 1.442695
        %v5319 = vpow.pop %v5318
        %v5320 = vmul.f32 %v5223, 1.442695
        %v5321 = vpow.pop %v5320
        %v5322 = vmul.f32 %v5224, 1.442695
        %v5323 = vpow.pop %v5322
        %v5324 = vmul.f32 %v5225, 1.442695
        %v5325 = vpow.pop %v5324
        %v5326 = vmul.f32 %v5226, 1.442695
        %v5327 = vpow.pop %v5326
        %v5328 = vmul.f32 %v5227, 1.442695
        %v5329 = vpow.pop %v5328
        %v5330 = vmul.f32 %v5228, 1.442695
        %v5331 = vpow.pop %v5330
        %v5332 = vmul.f32 %v5229, 1.442695
        %v5333 = vpow.pop %v5332
        %v5334 = vmul.f32 %v5230, 1.442695
        %v5335 = vpow.pop %v5334
        %v5336 = vmul.f32 %v5231, 1.442695
        %v5337 = vpow.pop %v5336
        %v5338 = vmul.f32 %v5232, 1.442695
        %v5339 = vpow.pop %v5338
        %v5340 = vmul.f32 %v5233, 1.442695
        %v5341 = vpow.pop %v5340
        %v5342 = vmul.f32 %v5234, 1.442695
        %v5343 = vpow.pop %v5342
        %v5344 = vmul.f32 %v5235, 1.442695
        %v5345 = vpow.pop %v5344
        %v5346 = vmul.f32 %v5236, 1.442695
        %v5347 = vpow.pop %v5346
        %v5348 = vmul.f32 %v5237, 1.442695
        %v5349 = vpow.pop %v5348
        %v5350 = vmul.f32 %v5238, 1.442695
        %v5351 = vpow.pop %v5350
        %v5352 = vmul.f32 %v5239, 1.442695
        %v5353 = vpow.pop %v5352
        %v5354 = vmul.f32 %v5240, 1.442695
        %v5355 = vpow.pop %v5354
        %v5356 = vmul.f32 %v5241, 1.442695
        %v5357 = vpow.pop %v5356
        %v5358 = vmul.f32 %v5242, 1.442695
        %v5359 = vpow.pop %v5358
        %v5360 = vmul.f32 %v5243, 1.442695
        %v5361 = vpow.pop %v5360
        %v5362 = vmul.f32 %v5244, 1.442695
        %v5363 = vpow.pop %v5362
        %v5364 = vmul.f32 %v5245, 1.442695
        %v5365 = vpow.pop %v5364
        %v5366 = vmul.f32 %v5246, 1.442695
        %v5367 = vpow.pop %v5366
        %v5368 = vmul.f32 %v5247, 1.442695
        %v5369 = vpow.pop %v5368
        %v5370 = vmul.f32 %v5248, 1.442695
        %v5371 = vpow.pop %v5370
        %v5372 = vmul.f32 %v5249, 1.442695
        %v5373 = vpow.pop %v5372
        %v5374 = vmul.f32 %v5250, 1.442695
        %v5375 = vpow.pop %v5374
        %v5376 = vmul.f32 %v5251, 1.442695
        %v5377 = vpow.pop %v5376
        %v5378 = vmul.f32 %v5252, 1.442695
        %v5379 = vpow.pop %v5378
        %v5380 = vmul.f32 %v5253, 1.442695
        %v5381 = vpow.pop %v5380
        %v5382 = vadd.f32 %v5255, 1.0
        %v5383 = vadd.f32 %v5257, 1.0
        %v5384 = vadd.f32 %v5259, 1.0
        %v5385 = vadd.f32 %v5261, 1.0
        %v5386 = vadd.f32 %v5263, 1.0
        %v5387 = vadd.f32 %v5265, 1.0
        %v5388 = vadd.f32 %v5267, 1.0
        %v5389 = vadd.f32 %v5269, 1.0
        %v5390 = vadd.f32 %v5271, 1.0
        %v5391 = vadd.f32 %v5273, 1.0
        %v5392 = vadd.f32 %v5275, 1.0
        %v5393 = vadd.f32 %v5277, 1.0
        %v5394 = vadd.f32 %v5279, 1.0
        %v5395 = vadd.f32 %v5281, 1.0
        %v5396 = vadd.f32 %v5283, 1.0
        %v5397 = vadd.f32 %v5285, 1.0
        %v5398 = vadd.f32 %v5287, 1.0
        %v5399 = vadd.f32 %v5289, 1.0
        %v5400 = vadd.f32 %v5291, 1.0
        %v5401 = vadd.f32 %v5293, 1.0
        %v5402 = vadd.f32 %v5295, 1.0
        %v5403 = vadd.f32 %v5297, 1.0
        %v5404 = vadd.f32 %v5299, 1.0
        %v5405 = vadd.f32 %v5301, 1.0
        %v5406 = vadd.f32 %v5303, 1.0
        %v5407 = vadd.f32 %v5305, 1.0
        %v5408 = vadd.f32 %v5307, 1.0
        %v5409 = vadd.f32 %v5309, 1.0
        %v5410 = vadd.f32 %v5311, 1.0
        %v5411 = vadd.f32 %v5313, 1.0
        %v5412 = vadd.f32 %v5315, 1.0
        %v5413 = vadd.f32 %v5317, 1.0
        %v5414 = vadd.f32 %v5319, 1.0
        %v5415 = vadd.f32 %v5321, 1.0
        %v5416 = vadd.f32 %v5323, 1.0
        %v5417 = vadd.f32 %v5325, 1.0
        %v5418 = vadd.f32 %v5327, 1.0
        %v5419 = vadd.f32 %v5329, 1.0
        %v5420 = vadd.f32 %v5331, 1.0
        %v5421 = vadd.f32 %v5333, 1.0
        %v5422 = vadd.f32 %v5335, 1.0
        %v5423 = vadd.f32 %v5337, 1.0
        %v5424 = vadd.f32 %v5339, 1.0
        %v5425 = vadd.f32 %v5341, 1.0
        %v5426 = vadd.f32 %v5343, 1.0
        %v5427 = vadd.f32 %v5345, 1.0
        %v5428 = vadd.f32 %v5347, 1.0
        %v5429 = vadd.f32 %v5349, 1.0
        %v5430 = vadd.f32 %v5351, 1.0
        %v5431 = vadd.f32 %v5353, 1.0
        %v5432 = vadd.f32 %v5355, 1.0
        %v5433 = vadd.f32 %v5357, 1.0
        %v5434 = vadd.f32 %v5359, 1.0
        %v5435 = vadd.f32 %v5361, 1.0
        %v5436 = vadd.f32 %v5363, 1.0
        %v5437 = vadd.f32 %v5365, 1.0
        %v5438 = vadd.f32 %v5367, 1.0
        %v5439 = vadd.f32 %v5369, 1.0
        %v5440 = vadd.f32 %v5371, 1.0
        %v5441 = vadd.f32 %v5373, 1.0
        %v5442 = vadd.f32 %v5375, 1.0
        %v5443 = vadd.f32 %v5377, 1.0
        %v5444 = vadd.f32 %v5379, 1.0
        %v5445 = vadd.f32 %v5381, 1.0
        %v5446 = vrcp.pop %v5382
        %v5447 = vmul.f32 %v5382, %v5446
        %v5448 = vsub.f32 1.0, %v5447
        %v5449 = vmul.f32 %v5446, %v5448
        %v5450 = vadd.f32 %v5446, %v5449
        %vm5451 = vweird.f32 %v5382
        %vm5452 = vweird.f32 %v5446
        %vm5453 = vmor %vm5451, %vm5452
        %v5454 = vsel %vm5453, %v5446, %v5450
        %v5455 = vand.u32 2147483647, %v5382
        %vm5456 = vcmp.eq.f32.partialorder %v5455, 8.507059e+37
        %v5457 = vand.u32 %v5382, 2147483648
        %v5458 = vor.u32 1.1754944e-38, %v5457
        %v5459 = vsel %vm5456, %v5458, %v5454
        %v5460 = vmul.f32 1.0, %v5459
        %v5461 = vrcp.pop %v5383
        %v5462 = vmul.f32 %v5383, %v5461
        %v5463 = vsub.f32 1.0, %v5462
        %v5464 = vmul.f32 %v5461, %v5463
        %v5465 = vadd.f32 %v5461, %v5464
        %vm5466 = vweird.f32 %v5383
        %vm5467 = vweird.f32 %v5461
        %vm5468 = vmor %vm5466, %vm5467
        %v5469 = vsel %vm5468, %v5461, %v5465
        %v5470 = vand.u32 2147483647, %v5383
        %vm5471 = vcmp.eq.f32.partialorder %v5470, 8.507059e+37
        %v5472 = vand.u32 %v5383, 2147483648
        %v5473 = vor.u32 1.1754944e-38, %v5472
        %v5474 = vsel %vm5471, %v5473, %v5469
        %v5475 = vmul.f32 1.0, %v5474
        %v5476 = vrcp.pop %v5384
        %v5477 = vmul.f32 %v5384, %v5476
        %v5478 = vsub.f32 1.0, %v5477
        %v5479 = vmul.f32 %v5476, %v5478
        %v5480 = vadd.f32 %v5476, %v5479
        %vm5481 = vweird.f32 %v5384
        %vm5482 = vweird.f32 %v5476
        %vm5483 = vmor %vm5481, %vm5482
        %v5484 = vsel %vm5483, %v5476, %v5480
        %v5485 = vand.u32 2147483647, %v5384
        %vm5486 = vcmp.eq.f32.partialorder %v5485, 8.507059e+37
        %v5487 = vand.u32 %v5384, 2147483648
        %v5488 = vor.u32 1.1754944e-38, %v5487
        %v5489 = vsel %vm5486, %v5488, %v5484
        %v5490 = vmul.f32 1.0, %v5489
        %v5491 = vrcp.pop %v5385
        %v5492 = vmul.f32 %v5385, %v5491
        %v5493 = vsub.f32 1.0, %v5492
        %v5494 = vmul.f32 %v5491, %v5493
        %v5495 = vadd.f32 %v5491, %v5494
        %vm5496 = vweird.f32 %v5385
        %vm5497 = vweird.f32 %v5491
        %vm5498 = vmor %vm5496, %vm5497
        %v5499 = vsel %vm5498, %v5491, %v5495
        %v5500 = vand.u32 2147483647, %v5385
        %vm5501 = vcmp.eq.f32.partialorder %v5500, 8.507059e+37
        %v5502 = vand.u32 %v5385, 2147483648
        %v5503 = vor.u32 1.1754944e-38, %v5502
        %v5504 = vsel %vm5501, %v5503, %v5499
        %v5505 = vmul.f32 1.0, %v5504
        %v5506 = vrcp.pop %v5386
        %v5507 = vmul.f32 %v5386, %v5506
        %v5508 = vsub.f32 1.0, %v5507
        %v5509 = vmul.f32 %v5506, %v5508
        %v5510 = vadd.f32 %v5506, %v5509
        %vm5511 = vweird.f32 %v5386
        %vm5512 = vweird.f32 %v5506
        %vm5513 = vmor %vm5511, %vm5512
        %v5514 = vsel %vm5513, %v5506, %v5510
        %v5515 = vand.u32 2147483647, %v5386
        %vm5516 = vcmp.eq.f32.partialorder %v5515, 8.507059e+37
        %v5517 = vand.u32 %v5386, 2147483648
        %v5518 = vor.u32 1.1754944e-38, %v5517
        %v5519 = vsel %vm5516, %v5518, %v5514
        %v5520 = vmul.f32 1.0, %v5519
        %v5521 = vrcp.pop %v5387
        %v5522 = vmul.f32 %v5387, %v5521
        %v5523 = vsub.f32 1.0, %v5522
        %v5524 = vmul.f32 %v5521, %v5523
        %v5525 = vadd.f32 %v5521, %v5524
        %vm5526 = vweird.f32 %v5387
        %vm5527 = vweird.f32 %v5521
        %vm5528 = vmor %vm5526, %vm5527
        %v5529 = vsel %vm5528, %v5521, %v5525
        %v5530 = vand.u32 2147483647, %v5387
        %vm5531 = vcmp.eq.f32.partialorder %v5530, 8.507059e+37
        %v5532 = vand.u32 %v5387, 2147483648
        %v5533 = vor.u32 1.1754944e-38, %v5532
        %v5534 = vsel %vm5531, %v5533, %v5529
        %v5535 = vmul.f32 1.0, %v5534
        %v5536 = vrcp.pop %v5388
        %v5537 = vmul.f32 %v5388, %v5536
        %v5538 = vsub.f32 1.0, %v5537
        %v5539 = vmul.f32 %v5536, %v5538
        %v5540 = vadd.f32 %v5536, %v5539
        %vm5541 = vweird.f32 %v5388
        %vm5542 = vweird.f32 %v5536
        %vm5543 = vmor %vm5541, %vm5542
        %v5544 = vsel %vm5543, %v5536, %v5540
        %v5545 = vand.u32 2147483647, %v5388
        %vm5546 = vcmp.eq.f32.partialorder %v5545, 8.507059e+37
        %v5547 = vand.u32 %v5388, 2147483648
        %v5548 = vor.u32 1.1754944e-38, %v5547
        %v5549 = vsel %vm5546, %v5548, %v5544
        %v5550 = vmul.f32 1.0, %v5549
        %v5551 = vrcp.pop %v5389
        %v5552 = vmul.f32 %v5389, %v5551
        %v5553 = vsub.f32 1.0, %v5552
        %v5554 = vmul.f32 %v5551, %v5553
        %v5555 = vadd.f32 %v5551, %v5554
        %vm5556 = vweird.f32 %v5389
        %vm5557 = vweird.f32 %v5551
        %vm5558 = vmor %vm5556, %vm5557
        %v5559 = vsel %vm5558, %v5551, %v5555
        %v5560 = vand.u32 2147483647, %v5389
        %vm5561 = vcmp.eq.f32.partialorder %v5560, 8.507059e+37
        %v5562 = vand.u32 %v5389, 2147483648
        %v5563 = vor.u32 1.1754944e-38, %v5562
        %v5564 = vsel %vm5561, %v5563, %v5559
        %v5565 = vmul.f32 1.0, %v5564
        %v5566 = vrcp.pop %v5390
        %v5567 = vmul.f32 %v5390, %v5566
        %v5568 = vsub.f32 1.0, %v5567
        %v5569 = vmul.f32 %v5566, %v5568
        %v5570 = vadd.f32 %v5566, %v5569
        %vm5571 = vweird.f32 %v5390
        %vm5572 = vweird.f32 %v5566
        %vm5573 = vmor %vm5571, %vm5572
        %v5574 = vsel %vm5573, %v5566, %v5570
        %v5575 = vand.u32 2147483647, %v5390
        %vm5576 = vcmp.eq.f32.partialorder %v5575, 8.507059e+37
        %v5577 = vand.u32 %v5390, 2147483648
        %v5578 = vor.u32 1.1754944e-38, %v5577
        %v5579 = vsel %vm5576, %v5578, %v5574
        %v5580 = vmul.f32 1.0, %v5579
        %v5581 = vrcp.pop %v5391
        %v5582 = vmul.f32 %v5391, %v5581
        %v5583 = vsub.f32 1.0, %v5582
        %v5584 = vmul.f32 %v5581, %v5583
        %v5585 = vadd.f32 %v5581, %v5584
        %vm5586 = vweird.f32 %v5391
        %vm5587 = vweird.f32 %v5581
        %vm5588 = vmor %vm5586, %vm5587
        %v5589 = vsel %vm5588, %v5581, %v5585
        %v5590 = vand.u32 2147483647, %v5391
        %vm5591 = vcmp.eq.f32.partialorder %v5590, 8.507059e+37
        %v5592 = vand.u32 %v5391, 2147483648
        %v5593 = vor.u32 1.1754944e-38, %v5592
        %v5594 = vsel %vm5591, %v5593, %v5589
        %v5595 = vmul.f32 1.0, %v5594
        %v5596 = vrcp.pop %v5392
        %v5597 = vmul.f32 %v5392, %v5596
        %v5598 = vsub.f32 1.0, %v5597
        %v5599 = vmul.f32 %v5596, %v5598
        %v5600 = vadd.f32 %v5596, %v5599
        %vm5601 = vweird.f32 %v5392
        %vm5602 = vweird.f32 %v5596
        %vm5603 = vmor %vm5601, %vm5602
        %v5604 = vsel %vm5603, %v5596, %v5600
        %v5605 = vand.u32 2147483647, %v5392
        %vm5606 = vcmp.eq.f32.partialorder %v5605, 8.507059e+37
        %v5607 = vand.u32 %v5392, 2147483648
        %v5608 = vor.u32 1.1754944e-38, %v5607
        %v5609 = vsel %vm5606, %v5608, %v5604
        %v5610 = vmul.f32 1.0, %v5609
        %v5611 = vrcp.pop %v5393
        %v5612 = vmul.f32 %v5393, %v5611
        %v5613 = vsub.f32 1.0, %v5612
        %v5614 = vmul.f32 %v5611, %v5613
        %v5615 = vadd.f32 %v5611, %v5614
        %vm5616 = vweird.f32 %v5393
        %vm5617 = vweird.f32 %v5611
        %vm5618 = vmor %vm5616, %vm5617
        %v5619 = vsel %vm5618, %v5611, %v5615
        %v5620 = vand.u32 2147483647, %v5393
        %vm5621 = vcmp.eq.f32.partialorder %v5620, 8.507059e+37
        %v5622 = vand.u32 %v5393, 2147483648
        %v5623 = vor.u32 1.1754944e-38, %v5622
        %v5624 = vsel %vm5621, %v5623, %v5619
        %v5625 = vmul.f32 1.0, %v5624
        %v5626 = vrcp.pop %v5394
        %v5627 = vmul.f32 %v5394, %v5626
        %v5628 = vsub.f32 1.0, %v5627
        %v5629 = vmul.f32 %v5626, %v5628
        %v5630 = vadd.f32 %v5626, %v5629
        %vm5631 = vweird.f32 %v5394
        %vm5632 = vweird.f32 %v5626
        %vm5633 = vmor %vm5631, %vm5632
        %v5634 = vsel %vm5633, %v5626, %v5630
        %v5635 = vand.u32 2147483647, %v5394
        %vm5636 = vcmp.eq.f32.partialorder %v5635, 8.507059e+37
        %v5637 = vand.u32 %v5394, 2147483648
        %v5638 = vor.u32 1.1754944e-38, %v5637
        %v5639 = vsel %vm5636, %v5638, %v5634
        %v5640 = vmul.f32 1.0, %v5639
        %v5641 = vrcp.pop %v5395
        %v5642 = vmul.f32 %v5395, %v5641
        %v5643 = vsub.f32 1.0, %v5642
        %v5644 = vmul.f32 %v5641, %v5643
        %v5645 = vadd.f32 %v5641, %v5644
        %vm5646 = vweird.f32 %v5395
        %vm5647 = vweird.f32 %v5641
        %vm5648 = vmor %vm5646, %vm5647
        %v5649 = vsel %vm5648, %v5641, %v5645
        %v5650 = vand.u32 2147483647, %v5395
        %vm5651 = vcmp.eq.f32.partialorder %v5650, 8.507059e+37
        %v5652 = vand.u32 %v5395, 2147483648
        %v5653 = vor.u32 1.1754944e-38, %v5652
        %v5654 = vsel %vm5651, %v5653, %v5649
        %v5655 = vmul.f32 1.0, %v5654
        %v5656 = vrcp.pop %v5396
        %v5657 = vmul.f32 %v5396, %v5656
        %v5658 = vsub.f32 1.0, %v5657
        %v5659 = vmul.f32 %v5656, %v5658
        %v5660 = vadd.f32 %v5656, %v5659
        %vm5661 = vweird.f32 %v5396
        %vm5662 = vweird.f32 %v5656
        %vm5663 = vmor %vm5661, %vm5662
        %v5664 = vsel %vm5663, %v5656, %v5660
        %v5665 = vand.u32 2147483647, %v5396
        %vm5666 = vcmp.eq.f32.partialorder %v5665, 8.507059e+37
        %v5667 = vand.u32 %v5396, 2147483648
        %v5668 = vor.u32 1.1754944e-38, %v5667
        %v5669 = vsel %vm5666, %v5668, %v5664
        %v5670 = vmul.f32 1.0, %v5669
        %v5671 = vrcp.pop %v5397
        %v5672 = vmul.f32 %v5397, %v5671
        %v5673 = vsub.f32 1.0, %v5672
        %v5674 = vmul.f32 %v5671, %v5673
        %v5675 = vadd.f32 %v5671, %v5674
        %vm5676 = vweird.f32 %v5397
        %vm5677 = vweird.f32 %v5671
        %vm5678 = vmor %vm5676, %vm5677
        %v5679 = vsel %vm5678, %v5671, %v5675
        %v5680 = vand.u32 2147483647, %v5397
        %vm5681 = vcmp.eq.f32.partialorder %v5680, 8.507059e+37
        %v5682 = vand.u32 %v5397, 2147483648
        %v5683 = vor.u32 1.1754944e-38, %v5682
        %v5684 = vsel %vm5681, %v5683, %v5679
        %v5685 = vmul.f32 1.0, %v5684
        %v5686 = vrcp.pop %v5398
        %v5687 = vmul.f32 %v5398, %v5686
        %v5688 = vsub.f32 1.0, %v5687
        %v5689 = vmul.f32 %v5686, %v5688
        %v5690 = vadd.f32 %v5686, %v5689
        %vm5691 = vweird.f32 %v5398
        %vm5692 = vweird.f32 %v5686
        %vm5693 = vmor %vm5691, %vm5692
        %v5694 = vsel %vm5693, %v5686, %v5690
        %v5695 = vand.u32 2147483647, %v5398
        %vm5696 = vcmp.eq.f32.partialorder %v5695, 8.507059e+37
        %v5697 = vand.u32 %v5398, 2147483648
        %v5698 = vor.u32 1.1754944e-38, %v5697
        %v5699 = vsel %vm5696, %v5698, %v5694
        %v5700 = vmul.f32 1.0, %v5699
        %v5701 = vrcp.pop %v5399
        %v5702 = vmul.f32 %v5399, %v5701
        %v5703 = vsub.f32 1.0, %v5702
        %v5704 = vmul.f32 %v5701, %v5703
        %v5705 = vadd.f32 %v5701, %v5704
        %vm5706 = vweird.f32 %v5399
        %vm5707 = vweird.f32 %v5701
        %vm5708 = vmor %vm5706, %vm5707
        %v5709 = vsel %vm5708, %v5701, %v5705
        %v5710 = vand.u32 2147483647, %v5399
        %vm5711 = vcmp.eq.f32.partialorder %v5710, 8.507059e+37
        %v5712 = vand.u32 %v5399, 2147483648
        %v5713 = vor.u32 1.1754944e-38, %v5712
        %v5714 = vsel %vm5711, %v5713, %v5709
        %v5715 = vmul.f32 1.0, %v5714
        %v5716 = vrcp.pop %v5400
        %v5717 = vmul.f32 %v5400, %v5716
        %v5718 = vsub.f32 1.0, %v5717
        %v5719 = vmul.f32 %v5716, %v5718
        %v5720 = vadd.f32 %v5716, %v5719
        %vm5721 = vweird.f32 %v5400
        %vm5722 = vweird.f32 %v5716
        %vm5723 = vmor %vm5721, %vm5722
        %v5724 = vsel %vm5723, %v5716, %v5720
        %v5725 = vand.u32 2147483647, %v5400
        %vm5726 = vcmp.eq.f32.partialorder %v5725, 8.507059e+37
        %v5727 = vand.u32 %v5400, 2147483648
        %v5728 = vor.u32 1.1754944e-38, %v5727
        %v5729 = vsel %vm5726, %v5728, %v5724
        %v5730 = vmul.f32 1.0, %v5729
        %v5731 = vrcp.pop %v5401
        %v5732 = vmul.f32 %v5401, %v5731
        %v5733 = vsub.f32 1.0, %v5732
        %v5734 = vmul.f32 %v5731, %v5733
        %v5735 = vadd.f32 %v5731, %v5734
        %vm5736 = vweird.f32 %v5401
        %vm5737 = vweird.f32 %v5731
        %vm5738 = vmor %vm5736, %vm5737
        %v5739 = vsel %vm5738, %v5731, %v5735
        %v5740 = vand.u32 2147483647, %v5401
        %vm5741 = vcmp.eq.f32.partialorder %v5740, 8.507059e+37
        %v5742 = vand.u32 %v5401, 2147483648
        %v5743 = vor.u32 1.1754944e-38, %v5742
        %v5744 = vsel %vm5741, %v5743, %v5739
        %v5745 = vmul.f32 1.0, %v5744
        %v5746 = vrcp.pop %v5402
        %v5747 = vmul.f32 %v5402, %v5746
        %v5748 = vsub.f32 1.0, %v5747
        %v5749 = vmul.f32 %v5746, %v5748
        %v5750 = vadd.f32 %v5746, %v5749
        %vm5751 = vweird.f32 %v5402
        %vm5752 = vweird.f32 %v5746
        %vm5753 = vmor %vm5751, %vm5752
        %v5754 = vsel %vm5753, %v5746, %v5750
        %v5755 = vand.u32 2147483647, %v5402
        %vm5756 = vcmp.eq.f32.partialorder %v5755, 8.507059e+37
        %v5757 = vand.u32 %v5402, 2147483648
        %v5758 = vor.u32 1.1754944e-38, %v5757
        %v5759 = vsel %vm5756, %v5758, %v5754
        %v5760 = vmul.f32 1.0, %v5759
        %v5761 = vrcp.pop %v5403
        %v5762 = vmul.f32 %v5403, %v5761
        %v5763 = vsub.f32 1.0, %v5762
        %v5764 = vmul.f32 %v5761, %v5763
        %v5765 = vadd.f32 %v5761, %v5764
        %vm5766 = vweird.f32 %v5403
        %vm5767 = vweird.f32 %v5761
        %vm5768 = vmor %vm5766, %vm5767
        %v5769 = vsel %vm5768, %v5761, %v5765
        %v5770 = vand.u32 2147483647, %v5403
        %vm5771 = vcmp.eq.f32.partialorder %v5770, 8.507059e+37
        %v5772 = vand.u32 %v5403, 2147483648
        %v5773 = vor.u32 1.1754944e-38, %v5772
        %v5774 = vsel %vm5771, %v5773, %v5769
        %v5775 = vmul.f32 1.0, %v5774
        %v5776 = vrcp.pop %v5404
        %v5777 = vmul.f32 %v5404, %v5776
        %v5778 = vsub.f32 1.0, %v5777
        %v5779 = vmul.f32 %v5776, %v5778
        %v5780 = vadd.f32 %v5776, %v5779
        %vm5781 = vweird.f32 %v5404
        %vm5782 = vweird.f32 %v5776
        %vm5783 = vmor %vm5781, %vm5782
        %v5784 = vsel %vm5783, %v5776, %v5780
        %v5785 = vand.u32 2147483647, %v5404
        %vm5786 = vcmp.eq.f32.partialorder %v5785, 8.507059e+37
        %v5787 = vand.u32 %v5404, 2147483648
        %v5788 = vor.u32 1.1754944e-38, %v5787
        %v5789 = vsel %vm5786, %v5788, %v5784
        %v5790 = vmul.f32 1.0, %v5789
        %v5791 = vrcp.pop %v5405
        %v5792 = vmul.f32 %v5405, %v5791
        %v5793 = vsub.f32 1.0, %v5792
        %v5794 = vmul.f32 %v5791, %v5793
        %v5795 = vadd.f32 %v5791, %v5794
        %vm5796 = vweird.f32 %v5405
        %vm5797 = vweird.f32 %v5791
        %vm5798 = vmor %vm5796, %vm5797
        %v5799 = vsel %vm5798, %v5791, %v5795
        %v5800 = vand.u32 2147483647, %v5405
        %vm5801 = vcmp.eq.f32.partialorder %v5800, 8.507059e+37
        %v5802 = vand.u32 %v5405, 2147483648
        %v5803 = vor.u32 1.1754944e-38, %v5802
        %v5804 = vsel %vm5801, %v5803, %v5799
        %v5805 = vmul.f32 1.0, %v5804
        %v5806 = vrcp.pop %v5406
        %v5807 = vmul.f32 %v5406, %v5806
        %v5808 = vsub.f32 1.0, %v5807
        %v5809 = vmul.f32 %v5806, %v5808
        %v5810 = vadd.f32 %v5806, %v5809
        %vm5811 = vweird.f32 %v5406
        %vm5812 = vweird.f32 %v5806
        %vm5813 = vmor %vm5811, %vm5812
        %v5814 = vsel %vm5813, %v5806, %v5810
        %v5815 = vand.u32 2147483647, %v5406
        %vm5816 = vcmp.eq.f32.partialorder %v5815, 8.507059e+37
        %v5817 = vand.u32 %v5406, 2147483648
        %v5818 = vor.u32 1.1754944e-38, %v5817
        %v5819 = vsel %vm5816, %v5818, %v5814
        %v5820 = vmul.f32 1.0, %v5819
        %v5821 = vrcp.pop %v5407
        %v5822 = vmul.f32 %v5407, %v5821
        %v5823 = vsub.f32 1.0, %v5822
        %v5824 = vmul.f32 %v5821, %v5823
        %v5825 = vadd.f32 %v5821, %v5824
        %vm5826 = vweird.f32 %v5407
        %vm5827 = vweird.f32 %v5821
        %vm5828 = vmor %vm5826, %vm5827
        %v5829 = vsel %vm5828, %v5821, %v5825
        %v5830 = vand.u32 2147483647, %v5407
        %vm5831 = vcmp.eq.f32.partialorder %v5830, 8.507059e+37
        %v5832 = vand.u32 %v5407, 2147483648
        %v5833 = vor.u32 1.1754944e-38, %v5832
        %v5834 = vsel %vm5831, %v5833, %v5829
        %v5835 = vmul.f32 1.0, %v5834
        %v5836 = vrcp.pop %v5408
        %v5837 = vmul.f32 %v5408, %v5836
        %v5838 = vsub.f32 1.0, %v5837
        %v5839 = vmul.f32 %v5836, %v5838
        %v5840 = vadd.f32 %v5836, %v5839
        %vm5841 = vweird.f32 %v5408
        %vm5842 = vweird.f32 %v5836
        %vm5843 = vmor %vm5841, %vm5842
        %v5844 = vsel %vm5843, %v5836, %v5840
        %v5845 = vand.u32 2147483647, %v5408
        %vm5846 = vcmp.eq.f32.partialorder %v5845, 8.507059e+37
        %v5847 = vand.u32 %v5408, 2147483648
        %v5848 = vor.u32 1.1754944e-38, %v5847
        %v5849 = vsel %vm5846, %v5848, %v5844
        %v5850 = vmul.f32 1.0, %v5849
        %v5851 = vrcp.pop %v5409
        %v5852 = vmul.f32 %v5409, %v5851
        %v5853 = vsub.f32 1.0, %v5852
        %v5854 = vmul.f32 %v5851, %v5853
        %v5855 = vadd.f32 %v5851, %v5854
        %vm5856 = vweird.f32 %v5409
        %vm5857 = vweird.f32 %v5851
        %vm5858 = vmor %vm5856, %vm5857
        %v5859 = vsel %vm5858, %v5851, %v5855
        %v5860 = vand.u32 2147483647, %v5409
        %vm5861 = vcmp.eq.f32.partialorder %v5860, 8.507059e+37
        %v5862 = vand.u32 %v5409, 2147483648
        %v5863 = vor.u32 1.1754944e-38, %v5862
        %v5864 = vsel %vm5861, %v5863, %v5859
        %v5865 = vmul.f32 1.0, %v5864
        %v5866 = vrcp.pop %v5410
        %v5867 = vmul.f32 %v5410, %v5866
        %v5868 = vsub.f32 1.0, %v5867
        %v5869 = vmul.f32 %v5866, %v5868
        %v5870 = vadd.f32 %v5866, %v5869
        %vm5871 = vweird.f32 %v5410
        %vm5872 = vweird.f32 %v5866
        %vm5873 = vmor %vm5871, %vm5872
        %v5874 = vsel %vm5873, %v5866, %v5870
        %v5875 = vand.u32 2147483647, %v5410
        %vm5876 = vcmp.eq.f32.partialorder %v5875, 8.507059e+37
        %v5877 = vand.u32 %v5410, 2147483648
        %v5878 = vor.u32 1.1754944e-38, %v5877
        %v5879 = vsel %vm5876, %v5878, %v5874
        %v5880 = vmul.f32 1.0, %v5879
        %v5881 = vrcp.pop %v5411
        %v5882 = vmul.f32 %v5411, %v5881
        %v5883 = vsub.f32 1.0, %v5882
        %v5884 = vmul.f32 %v5881, %v5883
        %v5885 = vadd.f32 %v5881, %v5884
        %vm5886 = vweird.f32 %v5411
        %vm5887 = vweird.f32 %v5881
        %vm5888 = vmor %vm5886, %vm5887
        %v5889 = vsel %vm5888, %v5881, %v5885
        %v5890 = vand.u32 2147483647, %v5411
        %vm5891 = vcmp.eq.f32.partialorder %v5890, 8.507059e+37
        %v5892 = vand.u32 %v5411, 2147483648
        %v5893 = vor.u32 1.1754944e-38, %v5892
        %v5894 = vsel %vm5891, %v5893, %v5889
        %v5895 = vmul.f32 1.0, %v5894
        %v5896 = vrcp.pop %v5412
        %v5897 = vmul.f32 %v5412, %v5896
        %v5898 = vsub.f32 1.0, %v5897
        %v5899 = vmul.f32 %v5896, %v5898
        %v5900 = vadd.f32 %v5896, %v5899
        %vm5901 = vweird.f32 %v5412
        %vm5902 = vweird.f32 %v5896
        %vm5903 = vmor %vm5901, %vm5902
        %v5904 = vsel %vm5903, %v5896, %v5900
        %v5905 = vand.u32 2147483647, %v5412
        %vm5906 = vcmp.eq.f32.partialorder %v5905, 8.507059e+37
        %v5907 = vand.u32 %v5412, 2147483648
        %v5908 = vor.u32 1.1754944e-38, %v5907
        %v5909 = vsel %vm5906, %v5908, %v5904
        %v5910 = vmul.f32 1.0, %v5909
        %v5911 = vrcp.pop %v5413
        %v5912 = vmul.f32 %v5413, %v5911
        %v5913 = vsub.f32 1.0, %v5912
        %v5914 = vmul.f32 %v5911, %v5913
        %v5915 = vadd.f32 %v5911, %v5914
        %vm5916 = vweird.f32 %v5413
        %vm5917 = vweird.f32 %v5911
        %vm5918 = vmor %vm5916, %vm5917
        %v5919 = vsel %vm5918, %v5911, %v5915
        %v5920 = vand.u32 2147483647, %v5413
        %vm5921 = vcmp.eq.f32.partialorder %v5920, 8.507059e+37
        %v5922 = vand.u32 %v5413, 2147483648
        %v5923 = vor.u32 1.1754944e-38, %v5922
        %v5924 = vsel %vm5921, %v5923, %v5919
        %v5925 = vmul.f32 1.0, %v5924
        %v5926 = vrcp.pop %v5414
        %v5927 = vmul.f32 %v5414, %v5926
        %v5928 = vsub.f32 1.0, %v5927
        %v5929 = vmul.f32 %v5926, %v5928
        %v5930 = vadd.f32 %v5926, %v5929
        %vm5931 = vweird.f32 %v5414
        %vm5932 = vweird.f32 %v5926
        %vm5933 = vmor %vm5931, %vm5932
        %v5934 = vsel %vm5933, %v5926, %v5930
        %v5935 = vand.u32 2147483647, %v5414
        %vm5936 = vcmp.eq.f32.partialorder %v5935, 8.507059e+37
        %v5937 = vand.u32 %v5414, 2147483648
        %v5938 = vor.u32 1.1754944e-38, %v5937
        %v5939 = vsel %vm5936, %v5938, %v5934
        %v5940 = vmul.f32 1.0, %v5939
        %v5941 = vrcp.pop %v5415
        %v5942 = vmul.f32 %v5415, %v5941
        %v5943 = vsub.f32 1.0, %v5942
        %v5944 = vmul.f32 %v5941, %v5943
        %v5945 = vadd.f32 %v5941, %v5944
        %vm5946 = vweird.f32 %v5415
        %vm5947 = vweird.f32 %v5941
        %vm5948 = vmor %vm5946, %vm5947
        %v5949 = vsel %vm5948, %v5941, %v5945
        %v5950 = vand.u32 2147483647, %v5415
        %vm5951 = vcmp.eq.f32.partialorder %v5950, 8.507059e+37
        %v5952 = vand.u32 %v5415, 2147483648
        %v5953 = vor.u32 1.1754944e-38, %v5952
        %v5954 = vsel %vm5951, %v5953, %v5949
        %v5955 = vmul.f32 1.0, %v5954
        %v5956 = vrcp.pop %v5416
        %v5957 = vmul.f32 %v5416, %v5956
        %v5958 = vsub.f32 1.0, %v5957
        %v5959 = vmul.f32 %v5956, %v5958
        %v5960 = vadd.f32 %v5956, %v5959
        %vm5961 = vweird.f32 %v5416
        %vm5962 = vweird.f32 %v5956
        %vm5963 = vmor %vm5961, %vm5962
        %v5964 = vsel %vm5963, %v5956, %v5960
        %v5965 = vand.u32 2147483647, %v5416
        %vm5966 = vcmp.eq.f32.partialorder %v5965, 8.507059e+37
        %v5967 = vand.u32 %v5416, 2147483648
        %v5968 = vor.u32 1.1754944e-38, %v5967
        %v5969 = vsel %vm5966, %v5968, %v5964
        %v5970 = vmul.f32 1.0, %v5969
        %v5971 = vrcp.pop %v5417
        %v5972 = vmul.f32 %v5417, %v5971
        %v5973 = vsub.f32 1.0, %v5972
        %v5974 = vmul.f32 %v5971, %v5973
        %v5975 = vadd.f32 %v5971, %v5974
        %vm5976 = vweird.f32 %v5417
        %vm5977 = vweird.f32 %v5971
        %vm5978 = vmor %vm5976, %vm5977
        %v5979 = vsel %vm5978, %v5971, %v5975
        %v5980 = vand.u32 2147483647, %v5417
        %vm5981 = vcmp.eq.f32.partialorder %v5980, 8.507059e+37
        %v5982 = vand.u32 %v5417, 2147483648
        %v5983 = vor.u32 1.1754944e-38, %v5982
        %v5984 = vsel %vm5981, %v5983, %v5979
        %v5985 = vmul.f32 1.0, %v5984
        %v5986 = vrcp.pop %v5418
        %v5987 = vmul.f32 %v5418, %v5986
        %v5988 = vsub.f32 1.0, %v5987
        %v5989 = vmul.f32 %v5986, %v5988
        %v5990 = vadd.f32 %v5986, %v5989
        %vm5991 = vweird.f32 %v5418
        %vm5992 = vweird.f32 %v5986
        %vm5993 = vmor %vm5991, %vm5992
        %v5994 = vsel %vm5993, %v5986, %v5990
        %v5995 = vand.u32 2147483647, %v5418
        %vm5996 = vcmp.eq.f32.partialorder %v5995, 8.507059e+37
        %v5997 = vand.u32 %v5418, 2147483648
        %v5998 = vor.u32 1.1754944e-38, %v5997
        %v5999 = vsel %vm5996, %v5998, %v5994
        %v6000 = vmul.f32 1.0, %v5999
        %v6001 = vrcp.pop %v5419
        %v6002 = vmul.f32 %v5419, %v6001
        %v6003 = vsub.f32 1.0, %v6002
        %v6004 = vmul.f32 %v6001, %v6003
        %v6005 = vadd.f32 %v6001, %v6004
        %vm6006 = vweird.f32 %v5419
        %vm6007 = vweird.f32 %v6001
        %vm6008 = vmor %vm6006, %vm6007
        %v6009 = vsel %vm6008, %v6001, %v6005
        %v6010 = vand.u32 2147483647, %v5419
        %vm6011 = vcmp.eq.f32.partialorder %v6010, 8.507059e+37
        %v6012 = vand.u32 %v5419, 2147483648
        %v6013 = vor.u32 1.1754944e-38, %v6012
        %v6014 = vsel %vm6011, %v6013, %v6009
        %v6015 = vmul.f32 1.0, %v6014
        %v6016 = vrcp.pop %v5420
        %v6017 = vmul.f32 %v5420, %v6016
        %v6018 = vsub.f32 1.0, %v6017
        %v6019 = vmul.f32 %v6016, %v6018
        %v6020 = vadd.f32 %v6016, %v6019
        %vm6021 = vweird.f32 %v5420
        %vm6022 = vweird.f32 %v6016
        %vm6023 = vmor %vm6021, %vm6022
        %v6024 = vsel %vm6023, %v6016, %v6020
        %v6025 = vand.u32 2147483647, %v5420
        %vm6026 = vcmp.eq.f32.partialorder %v6025, 8.507059e+37
        %v6027 = vand.u32 %v5420, 2147483648
        %v6028 = vor.u32 1.1754944e-38, %v6027
        %v6029 = vsel %vm6026, %v6028, %v6024
        %v6030 = vmul.f32 1.0, %v6029
        %v6031 = vrcp.pop %v5421
        %v6032 = vmul.f32 %v5421, %v6031
        %v6033 = vsub.f32 1.0, %v6032
        %v6034 = vmul.f32 %v6031, %v6033
        %v6035 = vadd.f32 %v6031, %v6034
        %vm6036 = vweird.f32 %v5421
        %vm6037 = vweird.f32 %v6031
        %vm6038 = vmor %vm6036, %vm6037
        %v6039 = vsel %vm6038, %v6031, %v6035
        %v6040 = vand.u32 2147483647, %v5421
        %vm6041 = vcmp.eq.f32.partialorder %v6040, 8.507059e+37
        %v6042 = vand.u32 %v5421, 2147483648
        %v6043 = vor.u32 1.1754944e-38, %v6042
        %v6044 = vsel %vm6041, %v6043, %v6039
        %v6045 = vmul.f32 1.0, %v6044
        %v6046 = vrcp.pop %v5422
        %v6047 = vmul.f32 %v5422, %v6046
        %v6048 = vsub.f32 1.0, %v6047
        %v6049 = vmul.f32 %v6046, %v6048
        %v6050 = vadd.f32 %v6046, %v6049
        %vm6051 = vweird.f32 %v5422
        %vm6052 = vweird.f32 %v6046
        %vm6053 = vmor %vm6051, %vm6052
        %v6054 = vsel %vm6053, %v6046, %v6050
        %v6055 = vand.u32 2147483647, %v5422
        %vm6056 = vcmp.eq.f32.partialorder %v6055, 8.507059e+37
        %v6057 = vand.u32 %v5422, 2147483648
        %v6058 = vor.u32 1.1754944e-38, %v6057
        %v6059 = vsel %vm6056, %v6058, %v6054
        %v6060 = vmul.f32 1.0, %v6059
        %v6061 = vrcp.pop %v5423
        %v6062 = vmul.f32 %v5423, %v6061
        %v6063 = vsub.f32 1.0, %v6062
        %v6064 = vmul.f32 %v6061, %v6063
        %v6065 = vadd.f32 %v6061, %v6064
        %vm6066 = vweird.f32 %v5423
        %vm6067 = vweird.f32 %v6061
        %vm6068 = vmor %vm6066, %vm6067
        %v6069 = vsel %vm6068, %v6061, %v6065
        %v6070 = vand.u32 2147483647, %v5423
        %vm6071 = vcmp.eq.f32.partialorder %v6070, 8.507059e+37
        %v6072 = vand.u32 %v5423, 2147483648
        %v6073 = vor.u32 1.1754944e-38, %v6072
        %v6074 = vsel %vm6071, %v6073, %v6069
        %v6075 = vmul.f32 1.0, %v6074
        %v6076 = vrcp.pop %v5424
        %v6077 = vmul.f32 %v5424, %v6076
        %v6078 = vsub.f32 1.0, %v6077
        %v6079 = vmul.f32 %v6076, %v6078
        %v6080 = vadd.f32 %v6076, %v6079
        %vm6081 = vweird.f32 %v5424
        %vm6082 = vweird.f32 %v6076
        %vm6083 = vmor %vm6081, %vm6082
        %v6084 = vsel %vm6083, %v6076, %v6080
        %v6085 = vand.u32 2147483647, %v5424
        %vm6086 = vcmp.eq.f32.partialorder %v6085, 8.507059e+37
        %v6087 = vand.u32 %v5424, 2147483648
        %v6088 = vor.u32 1.1754944e-38, %v6087
        %v6089 = vsel %vm6086, %v6088, %v6084
        %v6090 = vmul.f32 1.0, %v6089
        %v6091 = vrcp.pop %v5425
        %v6092 = vmul.f32 %v5425, %v6091
        %v6093 = vsub.f32 1.0, %v6092
        %v6094 = vmul.f32 %v6091, %v6093
        %v6095 = vadd.f32 %v6091, %v6094
        %vm6096 = vweird.f32 %v5425
        %vm6097 = vweird.f32 %v6091
        %vm6098 = vmor %vm6096, %vm6097
        %v6099 = vsel %vm6098, %v6091, %v6095
        %v6100 = vand.u32 2147483647, %v5425
        %vm6101 = vcmp.eq.f32.partialorder %v6100, 8.507059e+37
        %v6102 = vand.u32 %v5425, 2147483648
        %v6103 = vor.u32 1.1754944e-38, %v6102
        %v6104 = vsel %vm6101, %v6103, %v6099
        %v6105 = vmul.f32 1.0, %v6104
        %v6106 = vrcp.pop %v5426
        %v6107 = vmul.f32 %v5426, %v6106
        %v6108 = vsub.f32 1.0, %v6107
        %v6109 = vmul.f32 %v6106, %v6108
        %v6110 = vadd.f32 %v6106, %v6109
        %vm6111 = vweird.f32 %v5426
        %vm6112 = vweird.f32 %v6106
        %vm6113 = vmor %vm6111, %vm6112
        %v6114 = vsel %vm6113, %v6106, %v6110
        %v6115 = vand.u32 2147483647, %v5426
        %vm6116 = vcmp.eq.f32.partialorder %v6115, 8.507059e+37
        %v6117 = vand.u32 %v5426, 2147483648
        %v6118 = vor.u32 1.1754944e-38, %v6117
        %v6119 = vsel %vm6116, %v6118, %v6114
        %v6120 = vmul.f32 1.0, %v6119
        %v6121 = vrcp.pop %v5427
        %v6122 = vmul.f32 %v5427, %v6121
        %v6123 = vsub.f32 1.0, %v6122
        %v6124 = vmul.f32 %v6121, %v6123
        %v6125 = vadd.f32 %v6121, %v6124
        %vm6126 = vweird.f32 %v5427
        %vm6127 = vweird.f32 %v6121
        %vm6128 = vmor %vm6126, %vm6127
        %v6129 = vsel %vm6128, %v6121, %v6125
        %v6130 = vand.u32 2147483647, %v5427
        %vm6131 = vcmp.eq.f32.partialorder %v6130, 8.507059e+37
        %v6132 = vand.u32 %v5427, 2147483648
        %v6133 = vor.u32 1.1754944e-38, %v6132
        %v6134 = vsel %vm6131, %v6133, %v6129
        %v6135 = vmul.f32 1.0, %v6134
        %v6136 = vrcp.pop %v5428
        %v6137 = vmul.f32 %v5428, %v6136
        %v6138 = vsub.f32 1.0, %v6137
        %v6139 = vmul.f32 %v6136, %v6138
        %v6140 = vadd.f32 %v6136, %v6139
        %vm6141 = vweird.f32 %v5428
        %vm6142 = vweird.f32 %v6136
        %vm6143 = vmor %vm6141, %vm6142
        %v6144 = vsel %vm6143, %v6136, %v6140
        %v6145 = vand.u32 2147483647, %v5428
        %vm6146 = vcmp.eq.f32.partialorder %v6145, 8.507059e+37
        %v6147 = vand.u32 %v5428, 2147483648
        %v6148 = vor.u32 1.1754944e-38, %v6147
        %v6149 = vsel %vm6146, %v6148, %v6144
        %v6150 = vmul.f32 1.0, %v6149
        %v6151 = vrcp.pop %v5429
        %v6152 = vmul.f32 %v5429, %v6151
        %v6153 = vsub.f32 1.0, %v6152
        %v6154 = vmul.f32 %v6151, %v6153
        %v6155 = vadd.f32 %v6151, %v6154
        %vm6156 = vweird.f32 %v5429
        %vm6157 = vweird.f32 %v6151
        %vm6158 = vmor %vm6156, %vm6157
        %v6159 = vsel %vm6158, %v6151, %v6155
        %v6160 = vand.u32 2147483647, %v5429
        %vm6161 = vcmp.eq.f32.partialorder %v6160, 8.507059e+37
        %v6162 = vand.u32 %v5429, 2147483648
        %v6163 = vor.u32 1.1754944e-38, %v6162
        %v6164 = vsel %vm6161, %v6163, %v6159
        %v6165 = vmul.f32 1.0, %v6164
        %v6166 = vrcp.pop %v5430
        %v6167 = vmul.f32 %v5430, %v6166
        %v6168 = vsub.f32 1.0, %v6167
        %v6169 = vmul.f32 %v6166, %v6168
        %v6170 = vadd.f32 %v6166, %v6169
        %vm6171 = vweird.f32 %v5430
        %vm6172 = vweird.f32 %v6166
        %vm6173 = vmor %vm6171, %vm6172
        %v6174 = vsel %vm6173, %v6166, %v6170
        %v6175 = vand.u32 2147483647, %v5430
        %vm6176 = vcmp.eq.f32.partialorder %v6175, 8.507059e+37
        %v6177 = vand.u32 %v5430, 2147483648
        %v6178 = vor.u32 1.1754944e-38, %v6177
        %v6179 = vsel %vm6176, %v6178, %v6174
        %v6180 = vmul.f32 1.0, %v6179
        %v6181 = vrcp.pop %v5431
        %v6182 = vmul.f32 %v5431, %v6181
        %v6183 = vsub.f32 1.0, %v6182
        %v6184 = vmul.f32 %v6181, %v6183
        %v6185 = vadd.f32 %v6181, %v6184
        %vm6186 = vweird.f32 %v5431
        %vm6187 = vweird.f32 %v6181
        %vm6188 = vmor %vm6186, %vm6187
        %v6189 = vsel %vm6188, %v6181, %v6185
        %v6190 = vand.u32 2147483647, %v5431
        %vm6191 = vcmp.eq.f32.partialorder %v6190, 8.507059e+37
        %v6192 = vand.u32 %v5431, 2147483648
        %v6193 = vor.u32 1.1754944e-38, %v6192
        %v6194 = vsel %vm6191, %v6193, %v6189
        %v6195 = vmul.f32 1.0, %v6194
        %v6196 = vrcp.pop %v5432
        %v6197 = vmul.f32 %v5432, %v6196
        %v6198 = vsub.f32 1.0, %v6197
        %v6199 = vmul.f32 %v6196, %v6198
        %v6200 = vadd.f32 %v6196, %v6199
        %vm6201 = vweird.f32 %v5432
        %vm6202 = vweird.f32 %v6196
        %vm6203 = vmor %vm6201, %vm6202
        %v6204 = vsel %vm6203, %v6196, %v6200
        %v6205 = vand.u32 2147483647, %v5432
        %vm6206 = vcmp.eq.f32.partialorder %v6205, 8.507059e+37
        %v6207 = vand.u32 %v5432, 2147483648
        %v6208 = vor.u32 1.1754944e-38, %v6207
        %v6209 = vsel %vm6206, %v6208, %v6204
        %v6210 = vmul.f32 1.0, %v6209
        %v6211 = vrcp.pop %v5433
        %v6212 = vmul.f32 %v5433, %v6211
        %v6213 = vsub.f32 1.0, %v6212
        %v6214 = vmul.f32 %v6211, %v6213
        %v6215 = vadd.f32 %v6211, %v6214
        %vm6216 = vweird.f32 %v5433
        %vm6217 = vweird.f32 %v6211
        %vm6218 = vmor %vm6216, %vm6217
        %v6219 = vsel %vm6218, %v6211, %v6215
        %v6220 = vand.u32 2147483647, %v5433
        %vm6221 = vcmp.eq.f32.partialorder %v6220, 8.507059e+37
        %v6222 = vand.u32 %v5433, 2147483648
        %v6223 = vor.u32 1.1754944e-38, %v6222
        %v6224 = vsel %vm6221, %v6223, %v6219
        %v6225 = vmul.f32 1.0, %v6224
        %v6226 = vrcp.pop %v5434
        %v6227 = vmul.f32 %v5434, %v6226
        %v6228 = vsub.f32 1.0, %v6227
        %v6229 = vmul.f32 %v6226, %v6228
        %v6230 = vadd.f32 %v6226, %v6229
        %vm6231 = vweird.f32 %v5434
        %vm6232 = vweird.f32 %v6226
        %vm6233 = vmor %vm6231, %vm6232
        %v6234 = vsel %vm6233, %v6226, %v6230
        %v6235 = vand.u32 2147483647, %v5434
        %vm6236 = vcmp.eq.f32.partialorder %v6235, 8.507059e+37
        %v6237 = vand.u32 %v5434, 2147483648
        %v6238 = vor.u32 1.1754944e-38, %v6237
        %v6239 = vsel %vm6236, %v6238, %v6234
        %v6240 = vmul.f32 1.0, %v6239
        %v6241 = vrcp.pop %v5435
        %v6242 = vmul.f32 %v5435, %v6241
        %v6243 = vsub.f32 1.0, %v6242
        %v6244 = vmul.f32 %v6241, %v6243
        %v6245 = vadd.f32 %v6241, %v6244
        %vm6246 = vweird.f32 %v5435
        %vm6247 = vweird.f32 %v6241
        %vm6248 = vmor %vm6246, %vm6247
        %v6249 = vsel %vm6248, %v6241, %v6245
        %v6250 = vand.u32 2147483647, %v5435
        %vm6251 = vcmp.eq.f32.partialorder %v6250, 8.507059e+37
        %v6252 = vand.u32 %v5435, 2147483648
        %v6253 = vor.u32 1.1754944e-38, %v6252
        %v6254 = vsel %vm6251, %v6253, %v6249
        %v6255 = vmul.f32 1.0, %v6254
        %v6256 = vrcp.pop %v5436
        %v6257 = vmul.f32 %v5436, %v6256
        %v6258 = vsub.f32 1.0, %v6257
        %v6259 = vmul.f32 %v6256, %v6258
        %v6260 = vadd.f32 %v6256, %v6259
        %vm6261 = vweird.f32 %v5436
        %vm6262 = vweird.f32 %v6256
        %vm6263 = vmor %vm6261, %vm6262
        %v6264 = vsel %vm6263, %v6256, %v6260
        %v6265 = vand.u32 2147483647, %v5436
        %vm6266 = vcmp.eq.f32.partialorder %v6265, 8.507059e+37
        %v6267 = vand.u32 %v5436, 2147483648
        %v6268 = vor.u32 1.1754944e-38, %v6267
        %v6269 = vsel %vm6266, %v6268, %v6264
        %v6270 = vmul.f32 1.0, %v6269
        %v6271 = vrcp.pop %v5437
        %v6272 = vmul.f32 %v5437, %v6271
        %v6273 = vsub.f32 1.0, %v6272
        %v6274 = vmul.f32 %v6271, %v6273
        %v6275 = vadd.f32 %v6271, %v6274
        %vm6276 = vweird.f32 %v5437
        %vm6277 = vweird.f32 %v6271
        %vm6278 = vmor %vm6276, %vm6277
        %v6279 = vsel %vm6278, %v6271, %v6275
        %v6280 = vand.u32 2147483647, %v5437
        %vm6281 = vcmp.eq.f32.partialorder %v6280, 8.507059e+37
        %v6282 = vand.u32 %v5437, 2147483648
        %v6283 = vor.u32 1.1754944e-38, %v6282
        %v6284 = vsel %vm6281, %v6283, %v6279
        %v6285 = vmul.f32 1.0, %v6284
        %v6286 = vrcp.pop %v5438
        %v6287 = vmul.f32 %v5438, %v6286
        %v6288 = vsub.f32 1.0, %v6287
        %v6289 = vmul.f32 %v6286, %v6288
        %v6290 = vadd.f32 %v6286, %v6289
        %vm6291 = vweird.f32 %v5438
        %vm6292 = vweird.f32 %v6286
        %vm6293 = vmor %vm6291, %vm6292
        %v6294 = vsel %vm6293, %v6286, %v6290
        %v6295 = vand.u32 2147483647, %v5438
        %vm6296 = vcmp.eq.f32.partialorder %v6295, 8.507059e+37
        %v6297 = vand.u32 %v5438, 2147483648
        %v6298 = vor.u32 1.1754944e-38, %v6297
        %v6299 = vsel %vm6296, %v6298, %v6294
        %v6300 = vmul.f32 1.0, %v6299
        %v6301 = vrcp.pop %v5439
        %v6302 = vmul.f32 %v5439, %v6301
        %v6303 = vsub.f32 1.0, %v6302
        %v6304 = vmul.f32 %v6301, %v6303
        %v6305 = vadd.f32 %v6301, %v6304
        %vm6306 = vweird.f32 %v5439
        %vm6307 = vweird.f32 %v6301
        %vm6308 = vmor %vm6306, %vm6307
        %v6309 = vsel %vm6308, %v6301, %v6305
        %v6310 = vand.u32 2147483647, %v5439
        %vm6311 = vcmp.eq.f32.partialorder %v6310, 8.507059e+37
        %v6312 = vand.u32 %v5439, 2147483648
        %v6313 = vor.u32 1.1754944e-38, %v6312
        %v6314 = vsel %vm6311, %v6313, %v6309
        %v6315 = vmul.f32 1.0, %v6314
        %v6316 = vrcp.pop %v5440
        %v6317 = vmul.f32 %v5440, %v6316
        %v6318 = vsub.f32 1.0, %v6317
        %v6319 = vmul.f32 %v6316, %v6318
        %v6320 = vadd.f32 %v6316, %v6319
        %vm6321 = vweird.f32 %v5440
        %vm6322 = vweird.f32 %v6316
        %vm6323 = vmor %vm6321, %vm6322
        %v6324 = vsel %vm6323, %v6316, %v6320
        %v6325 = vand.u32 2147483647, %v5440
        %vm6326 = vcmp.eq.f32.partialorder %v6325, 8.507059e+37
        %v6327 = vand.u32 %v5440, 2147483648
        %v6328 = vor.u32 1.1754944e-38, %v6327
        %v6329 = vsel %vm6326, %v6328, %v6324
        %v6330 = vmul.f32 1.0, %v6329
        %v6331 = vrcp.pop %v5441
        %v6332 = vmul.f32 %v5441, %v6331
        %v6333 = vsub.f32 1.0, %v6332
        %v6334 = vmul.f32 %v6331, %v6333
        %v6335 = vadd.f32 %v6331, %v6334
        %vm6336 = vweird.f32 %v5441
        %vm6337 = vweird.f32 %v6331
        %vm6338 = vmor %vm6336, %vm6337
        %v6339 = vsel %vm6338, %v6331, %v6335
        %v6340 = vand.u32 2147483647, %v5441
        %vm6341 = vcmp.eq.f32.partialorder %v6340, 8.507059e+37
        %v6342 = vand.u32 %v5441, 2147483648
        %v6343 = vor.u32 1.1754944e-38, %v6342
        %v6344 = vsel %vm6341, %v6343, %v6339
        %v6345 = vmul.f32 1.0, %v6344
        %v6346 = vrcp.pop %v5442
        %v6347 = vmul.f32 %v5442, %v6346
        %v6348 = vsub.f32 1.0, %v6347
        %v6349 = vmul.f32 %v6346, %v6348
        %v6350 = vadd.f32 %v6346, %v6349
        %vm6351 = vweird.f32 %v5442
        %vm6352 = vweird.f32 %v6346
        %vm6353 = vmor %vm6351, %vm6352
        %v6354 = vsel %vm6353, %v6346, %v6350
        %v6355 = vand.u32 2147483647, %v5442
        %vm6356 = vcmp.eq.f32.partialorder %v6355, 8.507059e+37
        %v6357 = vand.u32 %v5442, 2147483648
        %v6358 = vor.u32 1.1754944e-38, %v6357
        %v6359 = vsel %vm6356, %v6358, %v6354
        %v6360 = vmul.f32 1.0, %v6359
        %v6361 = vrcp.pop %v5443
        %v6362 = vmul.f32 %v5443, %v6361
        %v6363 = vsub.f32 1.0, %v6362
        %v6364 = vmul.f32 %v6361, %v6363
        %v6365 = vadd.f32 %v6361, %v6364
        %vm6366 = vweird.f32 %v5443
        %vm6367 = vweird.f32 %v6361
        %vm6368 = vmor %vm6366, %vm6367
        %v6369 = vsel %vm6368, %v6361, %v6365
        %v6370 = vand.u32 2147483647, %v5443
        %vm6371 = vcmp.eq.f32.partialorder %v6370, 8.507059e+37
        %v6372 = vand.u32 %v5443, 2147483648
        %v6373 = vor.u32 1.1754944e-38, %v6372
        %v6374 = vsel %vm6371, %v6373, %v6369
        %v6375 = vmul.f32 1.0, %v6374
        %v6376 = vrcp.pop %v5444
        %v6377 = vmul.f32 %v5444, %v6376
        %v6378 = vsub.f32 1.0, %v6377
        %v6379 = vmul.f32 %v6376, %v6378
        %v6380 = vadd.f32 %v6376, %v6379
        %vm6381 = vweird.f32 %v5444
        %vm6382 = vweird.f32 %v6376
        %vm6383 = vmor %vm6381, %vm6382
        %v6384 = vsel %vm6383, %v6376, %v6380
        %v6385 = vand.u32 2147483647, %v5444
        %vm6386 = vcmp.eq.f32.partialorder %v6385, 8.507059e+37
        %v6387 = vand.u32 %v5444, 2147483648
        %v6388 = vor.u32 1.1754944e-38, %v6387
        %v6389 = vsel %vm6386, %v6388, %v6384
        %v6390 = vmul.f32 1.0, %v6389
        %v6391 = vrcp.pop %v5445
        %v6392 = vmul.f32 %v5445, %v6391
        %v6393 = vsub.f32 1.0, %v6392
        %v6394 = vmul.f32 %v6391, %v6393
        %v6395 = vadd.f32 %v6391, %v6394
        %vm6396 = vweird.f32 %v5445
        %vm6397 = vweird.f32 %v6391
        %vm6398 = vmor %vm6396, %vm6397
        %v6399 = vsel %vm6398, %v6391, %v6395
        %v6400 = vand.u32 2147483647, %v5445
        %vm6401 = vcmp.eq.f32.partialorder %v6400, 8.507059e+37
        %v6402 = vand.u32 %v5445, 2147483648
        %v6403 = vor.u32 1.1754944e-38, %v6402
        %v6404 = vsel %vm6401, %v6403, %v6399
        %v6405 = vmul.f32 1.0, %v6404
        %s6406 = ssub.f32 1.0, %s803
        %v6407 = vstv %s6406
        %v6408 = vmul.f32 %v6407, %v5460
        %v6409 = vmul.f32 %v6407, %v5475
        %v6410 = vmul.f32 %v6407, %v5490
        %v6411 = vmul.f32 %v6407, %v5505
        %v6412 = vmul.f32 %v6407, %v5520
        %v6413 = vmul.f32 %v6407, %v5535
        %v6414 = vmul.f32 %v6407, %v5550
        %v6415 = vmul.f32 %v6407, %v5565
        %v6416 = vmul.f32 %v6407, %v5580
        %v6417 = vmul.f32 %v6407, %v5595
        %v6418 = vmul.f32 %v6407, %v5610
        %v6419 = vmul.f32 %v6407, %v5625
        %v6420 = vmul.f32 %v6407, %v5640
        %v6421 = vmul.f32 %v6407, %v5655
        %v6422 = vmul.f32 %v6407, %v5670
        %v6423 = vmul.f32 %v6407, %v5685
        %v6424 = vmul.f32 %v6407, %v5700
        %v6425 = vmul.f32 %v6407, %v5715
        %v6426 = vmul.f32 %v6407, %v5730
        %v6427 = vmul.f32 %v6407, %v5745
        %v6428 = vmul.f32 %v6407, %v5760
        %v6429 = vmul.f32 %v6407, %v5775
        %v6430 = vmul.f32 %v6407, %v5790
        %v6431 = vmul.f32 %v6407, %v5805
        %v6432 = vmul.f32 %v6407, %v5820
        %v6433 = vmul.f32 %v6407, %v5835
        %v6434 = vmul.f32 %v6407, %v5850
        %v6435 = vmul.f32 %v6407, %v5865
        %v6436 = vmul.f32 %v6407, %v5880
        %v6437 = vmul.f32 %v6407, %v5895
        %v6438 = vmul.f32 %v6407, %v5910
        %v6439 = vmul.f32 %v6407, %v5925
        %v6440 = vmul.f32 %v6407, %v5940
        %v6441 = vmul.f32 %v6407, %v5955
        %v6442 = vmul.f32 %v6407, %v5970
        %v6443 = vmul.f32 %v6407, %v5985
        %v6444 = vmul.f32 %v6407, %v6000
        %v6445 = vmul.f32 %v6407, %v6015
        %v6446 = vmul.f32 %v6407, %v6030
        %v6447 = vmul.f32 %v6407, %v6045
        %v6448 = vmul.f32 %v6407, %v6060
        %v6449 = vmul.f32 %v6407, %v6075
        %v6450 = vmul.f32 %v6407, %v6090
        %v6451 = vmul.f32 %v6407, %v6105
        %v6452 = vmul.f32 %v6407, %v6120
        %v6453 = vmul.f32 %v6407, %v6135
        %v6454 = vmul.f32 %v6407, %v6150
        %v6455 = vmul.f32 %v6407, %v6165
        %v6456 = vmul.f32 %v6407, %v6180
        %v6457 = vmul.f32 %v6407, %v6195
        %v6458 = vmul.f32 %v6407, %v6210
        %v6459 = vmul.f32 %v6407, %v6225
        %v6460 = vmul.f32 %v6407, %v6240
        %v6461 = vmul.f32 %v6407, %v6255
        %v6462 = vmul.f32 %v6407, %v6270
        %v6463 = vmul.f32 %v6407, %v6285
        %v6464 = vmul.f32 %v6407, %v6300
        %v6465 = vmul.f32 %v6407, %v6315
        %v6466 = vmul.f32 %v6407, %v6330
        %v6467 = vmul.f32 %v6407, %v6345
        %v6468 = vmul.f32 %v6407, %v6360
        %v6469 = vmul.f32 %v6407, %v6375
        %v6470 = vmul.f32 %v6407, %v6390
        %v6471 = vmul.f32 %v6407, %v6405
        %v6472 = vstv %s803
        %v6473 = vadd.f32 %v6472, %v6408
        %v6474 = vadd.f32 %v6472, %v6409
        %v6475 = vadd.f32 %v6472, %v6410
        %v6476 = vadd.f32 %v6472, %v6411
        %v6477 = vadd.f32 %v6472, %v6412
        %v6478 = vadd.f32 %v6472, %v6413
        %v6479 = vadd.f32 %v6472, %v6414
        %v6480 = vadd.f32 %v6472, %v6415
        %v6481 = vadd.f32 %v6472, %v6416
        %v6482 = vadd.f32 %v6472, %v6417
        %v6483 = vadd.f32 %v6472, %v6418
        %v6484 = vadd.f32 %v6472, %v6419
        %v6485 = vadd.f32 %v6472, %v6420
        %v6486 = vadd.f32 %v6472, %v6421
        %v6487 = vadd.f32 %v6472, %v6422
        %v6488 = vadd.f32 %v6472, %v6423
        %v6489 = vadd.f32 %v6472, %v6424
        %v6490 = vadd.f32 %v6472, %v6425
        %v6491 = vadd.f32 %v6472, %v6426
        %v6492 = vadd.f32 %v6472, %v6427
        %v6493 = vadd.f32 %v6472, %v6428
        %v6494 = vadd.f32 %v6472, %v6429
        %v6495 = vadd.f32 %v6472, %v6430
        %v6496 = vadd.f32 %v6472, %v6431
        %v6497 = vadd.f32 %v6472, %v6432
        %v6498 = vadd.f32 %v6472, %v6433
        %v6499 = vadd.f32 %v6472, %v6434
        %v6500 = vadd.f32 %v6472, %v6435
        %v6501 = vadd.f32 %v6472, %v6436
        %v6502 = vadd.f32 %v6472, %v6437
        %v6503 = vadd.f32 %v6472, %v6438
        %v6504 = vadd.f32 %v6472, %v6439
        %v6505 = vadd.f32 %v6472, %v6440
        %v6506 = vadd.f32 %v6472, %v6441
        %v6507 = vadd.f32 %v6472, %v6442
        %v6508 = vadd.f32 %v6472, %v6443
        %v6509 = vadd.f32 %v6472, %v6444
        %v6510 = vadd.f32 %v6472, %v6445
        %v6511 = vadd.f32 %v6472, %v6446
        %v6512 = vadd.f32 %v6472, %v6447
        %v6513 = vadd.f32 %v6472, %v6448
        %v6514 = vadd.f32 %v6472, %v6449
        %v6515 = vadd.f32 %v6472, %v6450
        %v6516 = vadd.f32 %v6472, %v6451
        %v6517 = vadd.f32 %v6472, %v6452
        %v6518 = vadd.f32 %v6472, %v6453
        %v6519 = vadd.f32 %v6472, %v6454
        %v6520 = vadd.f32 %v6472, %v6455
        %v6521 = vadd.f32 %v6472, %v6456
        %v6522 = vadd.f32 %v6472, %v6457
        %v6523 = vadd.f32 %v6472, %v6458
        %v6524 = vadd.f32 %v6472, %v6459
        %v6525 = vadd.f32 %v6472, %v6460
        %v6526 = vadd.f32 %v6472, %v6461
        %v6527 = vadd.f32 %v6472, %v6462
        %v6528 = vadd.f32 %v6472, %v6463
        %v6529 = vadd.f32 %v6472, %v6464
        %v6530 = vadd.f32 %v6472, %v6465
        %v6531 = vadd.f32 %v6472, %v6466
        %v6532 = vadd.f32 %v6472, %v6467
        %v6533 = vadd.f32 %v6472, %v6468
        %v6534 = vadd.f32 %v6472, %v6469
        %v6535 = vadd.f32 %v6472, %v6470
        %v6536 = vadd.f32 %v6472, %v6471
        %v6537 = vmul.f32 %v4407, %v6473
        %v6538 = vmul.f32 %v4409, %v6474
        %v6539 = vmul.f32 %v4412, %v6475
        %v6540 = vmul.f32 %v4414, %v6476
        %v6541 = vmul.f32 %v4417, %v6477
        %v6542 = vmul.f32 %v4419, %v6478
        %v6543 = vmul.f32 %v4422, %v6479
        %v6544 = vmul.f32 %v4424, %v6480
        %v6545 = vmul.f32 %v4427, %v6481
        %v6546 = vmul.f32 %v4429, %v6482
        %v6547 = vmul.f32 %v4432, %v6483
        %v6548 = vmul.f32 %v4434, %v6484
        %v6549 = vmul.f32 %v4437, %v6485
        %v6550 = vmul.f32 %v4439, %v6486
        %v6551 = vmul.f32 %v4442, %v6487
        %v6552 = vmul.f32 %v4444, %v6488
        %v6553 = vmul.f32 %v4447, %v6489
        %v6554 = vmul.f32 %v4449, %v6490
        %v6555 = vmul.f32 %v4452, %v6491
        %v6556 = vmul.f32 %v4454, %v6492
        %v6557 = vmul.f32 %v4457, %v6493
        %v6558 = vmul.f32 %v4459, %v6494
        %v6559 = vmul.f32 %v4462, %v6495
        %v6560 = vmul.f32 %v4464, %v6496
        %v6561 = vmul.f32 %v4467, %v6497
        %v6562 = vmul.f32 %v4469, %v6498
        %v6563 = vmul.f32 %v4472, %v6499
        %v6564 = vmul.f32 %v4474, %v6500
        %v6565 = vmul.f32 %v4477, %v6501
        %v6566 = vmul.f32 %v4479, %v6502
        %v6567 = vmul.f32 %v4482, %v6503
        %v6568 = vmul.f32 %v4484, %v6504
        %v6569 = vmul.f32 %v4487, %v6505
        %v6570 = vmul.f32 %v4489, %v6506
        %v6571 = vmul.f32 %v4492, %v6507
        %v6572 = vmul.f32 %v4494, %v6508
        %v6573 = vmul.f32 %v4497, %v6509
        %v6574 = vmul.f32 %v4499, %v6510
        %v6575 = vmul.f32 %v4502, %v6511
        %v6576 = vmul.f32 %v4504, %v6512
        %v6577 = vmul.f32 %v4507, %v6513
        %v6578 = vmul.f32 %v4509, %v6514
        %v6579 = vmul.f32 %v4512, %v6515
        %v6580 = vmul.f32 %v4514, %v6516
        %v6581 = vmul.f32 %v4517, %v6517
        %v6582 = vmul.f32 %v4519, %v6518
        %v6583 = vmul.f32 %v4522, %v6519
        %v6584 = vmul.f32 %v4524, %v6520
        %v6585 = vmul.f32 %v4527, %v6521
        %v6586 = vmul.f32 %v4529, %v6522
        %v6587 = vmul.f32 %v4532, %v6523
        %v6588 = vmul.f32 %v4534, %v6524
        %v6589 = vmul.f32 %v4537, %v6525
        %v6590 = vmul.f32 %v4539, %v6526
        %v6591 = vmul.f32 %v4542, %v6527
        %v6592 = vmul.f32 %v4544, %v6528
        %v6593 = vmul.f32 %v4547, %v6529
        %v6594 = vmul.f32 %v4549, %v6530
        %v6595 = vmul.f32 %v4552, %v6531
        %v6596 = vmul.f32 %v4554, %v6532
        %v6597 = vmul.f32 %v4557, %v6533
        %v6598 = vmul.f32 %v4559, %v6534
        %v6599 = vmul.f32 %v4562, %v6535
        %v6600 = vmul.f32 %v4564, %v6536
        %v6601 = vld [vmem:[%s9] sm:$0x1]
        %v6603 = vperm.slane %v6601, 0
        %v6605 = vmul.f32 %v6537, %v6603
        %v6606 = vmul.f32 %v6538, %v6603
        %v6607 = vmul.f32 %v6539, %v6603
        %v6608 = vmul.f32 %v6540, %v6603
        %v6609 = vmul.f32 %v6541, %v6603
        %v6610 = vmul.f32 %v6542, %v6603
        %v6611 = vmul.f32 %v6543, %v6603
        %v6612 = vmul.f32 %v6544, %v6603
        %v6613 = vmul.f32 %v6545, %v6603
        %v6614 = vmul.f32 %v6546, %v6603
        %v6615 = vmul.f32 %v6547, %v6603
        %v6616 = vmul.f32 %v6548, %v6603
        %v6617 = vmul.f32 %v6549, %v6603
        %v6618 = vmul.f32 %v6550, %v6603
        %v6619 = vmul.f32 %v6551, %v6603
        %v6620 = vmul.f32 %v6552, %v6603
        %v6621 = vmul.f32 %v6553, %v6603
        %v6622 = vmul.f32 %v6554, %v6603
        %v6623 = vmul.f32 %v6555, %v6603
        %v6624 = vmul.f32 %v6556, %v6603
        %v6625 = vmul.f32 %v6557, %v6603
        %v6626 = vmul.f32 %v6558, %v6603
        %v6627 = vmul.f32 %v6559, %v6603
        %v6628 = vmul.f32 %v6560, %v6603
        %v6629 = vmul.f32 %v6561, %v6603
        %v6630 = vmul.f32 %v6562, %v6603
        %v6631 = vmul.f32 %v6563, %v6603
        %v6632 = vmul.f32 %v6564, %v6603
        %v6633 = vmul.f32 %v6565, %v6603
        %v6634 = vmul.f32 %v6566, %v6603
        %v6635 = vmul.f32 %v6567, %v6603
        %v6636 = vmul.f32 %v6568, %v6603
        %v6637 = vmul.f32 %v6569, %v6603
        %v6638 = vmul.f32 %v6570, %v6603
        %v6639 = vmul.f32 %v6571, %v6603
        %v6640 = vmul.f32 %v6572, %v6603
        %v6641 = vmul.f32 %v6573, %v6603
        %v6642 = vmul.f32 %v6574, %v6603
        %v6643 = vmul.f32 %v6575, %v6603
        %v6644 = vmul.f32 %v6576, %v6603
        %v6645 = vmul.f32 %v6577, %v6603
        %v6646 = vmul.f32 %v6578, %v6603
        %v6647 = vmul.f32 %v6579, %v6603
        %v6648 = vmul.f32 %v6580, %v6603
        %v6649 = vmul.f32 %v6581, %v6603
        %v6650 = vmul.f32 %v6582, %v6603
        %v6651 = vmul.f32 %v6583, %v6603
        %v6652 = vmul.f32 %v6584, %v6603
        %v6653 = vmul.f32 %v6585, %v6603
        %v6654 = vmul.f32 %v6586, %v6603
        %v6655 = vmul.f32 %v6587, %v6603
        %v6656 = vmul.f32 %v6588, %v6603
        %v6657 = vmul.f32 %v6589, %v6603
        %v6658 = vmul.f32 %v6590, %v6603
        %v6659 = vmul.f32 %v6591, %v6603
        %v6660 = vmul.f32 %v6592, %v6603
        %v6661 = vmul.f32 %v6593, %v6603
        %v6662 = vmul.f32 %v6594, %v6603
        %v6663 = vmul.f32 %v6595, %v6603
        %v6664 = vmul.f32 %v6596, %v6603
        %v6665 = vmul.f32 %v6597, %v6603
        %v6666 = vmul.f32 %v6598, %v6603
        %v6667 = vmul.f32 %v6599, %v6603
        %v6668 = vmul.f32 %v6600, %v6603
        %v6669 = vsel %vm1789, %v6605, 0.0
        %6670 = vadd.xlane.f32.xlu0 %v6669
        %v6671 = vpop.xlane.xlu0 %6670
        %v6672 = vsel %vm1789, %v6606, 0.0
        %6673 = vadd.xlane.f32.xlu0 %v6672
        %v6674 = vpop.xlane.xlu0 %6673
        %v6675 = vsel %vm1789, %v6607, 0.0
        %6676 = vadd.xlane.f32.xlu0 %v6675
        %v6677 = vpop.xlane.xlu0 %6676
        %v6678 = vsel %vm1789, %v6608, 0.0
        %6679 = vadd.xlane.f32.xlu0 %v6678
        %v6680 = vpop.xlane.xlu0 %6679
        %v6681 = vsel %vm1789, %v6609, 0.0
        %6682 = vadd.xlane.f32.xlu0 %v6681
        %v6683 = vpop.xlane.xlu0 %6682
        %v6684 = vsel %vm1789, %v6610, 0.0
        %6685 = vadd.xlane.f32.xlu0 %v6684
        %v6686 = vpop.xlane.xlu0 %6685
        %v6687 = vsel %vm1789, %v6611, 0.0
        %6688 = vadd.xlane.f32.xlu0 %v6687
        %v6689 = vpop.xlane.xlu0 %6688
        %v6690 = vsel %vm1789, %v6612, 0.0
        %6691 = vadd.xlane.f32.xlu0 %v6690
        %v6692 = vpop.xlane.xlu0 %6691
        %v6693 = vsel %vm1789, %v6613, 0.0
        %6694 = vadd.xlane.f32.xlu0 %v6693
        %v6695 = vpop.xlane.xlu0 %6694
        %v6696 = vsel %vm1789, %v6614, 0.0
        %6697 = vadd.xlane.f32.xlu0 %v6696
        %v6698 = vpop.xlane.xlu0 %6697
        %v6699 = vsel %vm1789, %v6615, 0.0
        %6700 = vadd.xlane.f32.xlu0 %v6699
        %v6701 = vpop.xlane.xlu0 %6700
        %v6702 = vsel %vm1789, %v6616, 0.0
        %6703 = vadd.xlane.f32.xlu0 %v6702
        %v6704 = vpop.xlane.xlu0 %6703
        %v6705 = vsel %vm1789, %v6617, 0.0
        %6706 = vadd.xlane.f32.xlu0 %v6705
        %v6707 = vpop.xlane.xlu0 %6706
        %v6708 = vsel %vm1789, %v6618, 0.0
        %6709 = vadd.xlane.f32.xlu0 %v6708
        %v6710 = vpop.xlane.xlu0 %6709
        %v6711 = vsel %vm1789, %v6619, 0.0
        %6712 = vadd.xlane.f32.xlu0 %v6711
        %v6713 = vpop.xlane.xlu0 %6712
        %v6714 = vsel %vm1789, %v6620, 0.0
        %6715 = vadd.xlane.f32.xlu0 %v6714
        %v6716 = vpop.xlane.xlu0 %6715
        %v6717 = vsel %vm1789, %v6621, 0.0
        %6718 = vadd.xlane.f32.xlu0 %v6717
        %v6719 = vpop.xlane.xlu0 %6718
        %v6720 = vsel %vm1789, %v6622, 0.0
        %6721 = vadd.xlane.f32.xlu0 %v6720
        %v6722 = vpop.xlane.xlu0 %6721
        %v6723 = vsel %vm1789, %v6623, 0.0
        %6724 = vadd.xlane.f32.xlu0 %v6723
        %v6725 = vpop.xlane.xlu0 %6724
        %v6726 = vsel %vm1789, %v6624, 0.0
        %6727 = vadd.xlane.f32.xlu0 %v6726
        %v6728 = vpop.xlane.xlu0 %6727
        %v6729 = vsel %vm1789, %v6625, 0.0
        %6730 = vadd.xlane.f32.xlu0 %v6729
        %v6731 = vpop.xlane.xlu0 %6730
        %v6732 = vsel %vm1789, %v6626, 0.0
        %6733 = vadd.xlane.f32.xlu0 %v6732
        %v6734 = vpop.xlane.xlu0 %6733
        %v6735 = vsel %vm1789, %v6627, 0.0
        %6736 = vadd.xlane.f32.xlu0 %v6735
        %v6737 = vpop.xlane.xlu0 %6736
        %v6738 = vsel %vm1789, %v6628, 0.0
        %6739 = vadd.xlane.f32.xlu0 %v6738
        %v6740 = vpop.xlane.xlu0 %6739
        %v6741 = vsel %vm1789, %v6629, 0.0
        %6742 = vadd.xlane.f32.xlu0 %v6741
        %v6743 = vpop.xlane.xlu0 %6742
        %v6744 = vsel %vm1789, %v6630, 0.0
        %6745 = vadd.xlane.f32.xlu0 %v6744
        %v6746 = vpop.xlane.xlu0 %6745
        %v6747 = vsel %vm1789, %v6631, 0.0
        %6748 = vadd.xlane.f32.xlu0 %v6747
        %v6749 = vpop.xlane.xlu0 %6748
        %v6750 = vsel %vm1789, %v6632, 0.0
        %6751 = vadd.xlane.f32.xlu0 %v6750
        %v6752 = vpop.xlane.xlu0 %6751
        %v6753 = vsel %vm1789, %v6633, 0.0
        %6754 = vadd.xlane.f32.xlu0 %v6753
        %v6755 = vpop.xlane.xlu0 %6754
        %v6756 = vsel %vm1789, %v6634, 0.0
        %6757 = vadd.xlane.f32.xlu0 %v6756
        %v6758 = vpop.xlane.xlu0 %6757
        %v6759 = vsel %vm1789, %v6635, 0.0
        %6760 = vadd.xlane.f32.xlu0 %v6759
        %v6761 = vpop.xlane.xlu0 %6760
        %v6762 = vsel %vm1789, %v6636, 0.0
        %6763 = vadd.xlane.f32.xlu0 %v6762
        %v6764 = vpop.xlane.xlu0 %6763
        %v6765 = vsel %vm1789, %v6637, 0.0
        %6766 = vadd.xlane.f32.xlu0 %v6765
        %v6767 = vpop.xlane.xlu0 %6766
        %v6768 = vsel %vm1789, %v6638, 0.0
        %6769 = vadd.xlane.f32.xlu0 %v6768
        %v6770 = vpop.xlane.xlu0 %6769
        %v6771 = vsel %vm1789, %v6639, 0.0
        %6772 = vadd.xlane.f32.xlu0 %v6771
        %v6773 = vpop.xlane.xlu0 %6772
        %v6774 = vsel %vm1789, %v6640, 0.0
        %6775 = vadd.xlane.f32.xlu0 %v6774
        %v6776 = vpop.xlane.xlu0 %6775
        %v6777 = vsel %vm1789, %v6641, 0.0
        %6778 = vadd.xlane.f32.xlu0 %v6777
        %v6779 = vpop.xlane.xlu0 %6778
        %v6780 = vsel %vm1789, %v6642, 0.0
        %6781 = vadd.xlane.f32.xlu0 %v6780
        %v6782 = vpop.xlane.xlu0 %6781
        %v6783 = vsel %vm1789, %v6643, 0.0
        %6784 = vadd.xlane.f32.xlu0 %v6783
        %v6785 = vpop.xlane.xlu0 %6784
        %v6786 = vsel %vm1789, %v6644, 0.0
        %6787 = vadd.xlane.f32.xlu0 %v6786
        %v6788 = vpop.xlane.xlu0 %6787
        %v6789 = vsel %vm1789, %v6645, 0.0
        %6790 = vadd.xlane.f32.xlu0 %v6789
        %v6791 = vpop.xlane.xlu0 %6790
        %v6792 = vsel %vm1789, %v6646, 0.0
        %6793 = vadd.xlane.f32.xlu0 %v6792
        %v6794 = vpop.xlane.xlu0 %6793
        %v6795 = vsel %vm1789, %v6647, 0.0
        %6796 = vadd.xlane.f32.xlu0 %v6795
        %v6797 = vpop.xlane.xlu0 %6796
        %v6798 = vsel %vm1789, %v6648, 0.0
        %6799 = vadd.xlane.f32.xlu0 %v6798
        %v6800 = vpop.xlane.xlu0 %6799
        %v6801 = vsel %vm1789, %v6649, 0.0
        %6802 = vadd.xlane.f32.xlu0 %v6801
        %v6803 = vpop.xlane.xlu0 %6802
        %v6804 = vsel %vm1789, %v6650, 0.0
        %6805 = vadd.xlane.f32.xlu0 %v6804
        %v6806 = vpop.xlane.xlu0 %6805
        %v6807 = vsel %vm1789, %v6651, 0.0
        %6808 = vadd.xlane.f32.xlu0 %v6807
        %v6809 = vpop.xlane.xlu0 %6808
        %v6810 = vsel %vm1789, %v6652, 0.0
        %6811 = vadd.xlane.f32.xlu0 %v6810
        %v6812 = vpop.xlane.xlu0 %6811
        %v6813 = vsel %vm1789, %v6653, 0.0
        %6814 = vadd.xlane.f32.xlu0 %v6813
        %v6815 = vpop.xlane.xlu0 %6814
        %v6816 = vsel %vm1789, %v6654, 0.0
        %6817 = vadd.xlane.f32.xlu0 %v6816
        %v6818 = vpop.xlane.xlu0 %6817
        %v6819 = vsel %vm1789, %v6655, 0.0
        %6820 = vadd.xlane.f32.xlu0 %v6819
        %v6821 = vpop.xlane.xlu0 %6820
        %v6822 = vsel %vm1789, %v6656, 0.0
        %6823 = vadd.xlane.f32.xlu0 %v6822
        %v6824 = vpop.xlane.xlu0 %6823
        %v6825 = vsel %vm1789, %v6657, 0.0
        %6826 = vadd.xlane.f32.xlu0 %v6825
        %v6827 = vpop.xlane.xlu0 %6826
        %v6828 = vsel %vm1789, %v6658, 0.0
        %6829 = vadd.xlane.f32.xlu0 %v6828
        %v6830 = vpop.xlane.xlu0 %6829
        %v6831 = vsel %vm1789, %v6659, 0.0
        %6832 = vadd.xlane.f32.xlu0 %v6831
        %v6833 = vpop.xlane.xlu0 %6832
        %v6834 = vsel %vm1789, %v6660, 0.0
        %6835 = vadd.xlane.f32.xlu0 %v6834
        %v6836 = vpop.xlane.xlu0 %6835
        %v6837 = vsel %vm1789, %v6661, 0.0
        %6838 = vadd.xlane.f32.xlu0 %v6837
        %v6839 = vpop.xlane.xlu0 %6838
        %v6840 = vsel %vm1789, %v6662, 0.0
        %6841 = vadd.xlane.f32.xlu0 %v6840
        %v6842 = vpop.xlane.xlu0 %6841
        %v6843 = vsel %vm1789, %v6663, 0.0
        %6844 = vadd.xlane.f32.xlu0 %v6843
        %v6845 = vpop.xlane.xlu0 %6844
        %v6846 = vsel %vm1789, %v6664, 0.0
        %6847 = vadd.xlane.f32.xlu0 %v6846
        %v6848 = vpop.xlane.xlu0 %6847
        %v6849 = vsel %vm1789, %v6665, 0.0
        %6850 = vadd.xlane.f32.xlu0 %v6849
        %v6851 = vpop.xlane.xlu0 %6850
        %v6852 = vsel %vm1789, %v6666, 0.0
        %6853 = vadd.xlane.f32.xlu0 %v6852
        %v6854 = vpop.xlane.xlu0 %6853
        %v6855 = vsel %vm1789, %v6667, 0.0
        %6856 = vadd.xlane.f32.xlu0 %v6855
        %v6857 = vpop.xlane.xlu0 %6856
        %v6858 = vsel %vm1789, %v6668, 0.0
        %6859 = vadd.xlane.f32.xlu0 %v6858
        %v6860 = vpop.xlane.xlu0 %6859
        %v6861 = vstv %s804
        %v6862 = vadd.f32 %v6671, %v6861
        %v6863 = vadd.f32 %v6674, %v6861
        %v6864 = vadd.f32 %v6677, %v6861
        %v6865 = vadd.f32 %v6680, %v6861
        %v6866 = vadd.f32 %v6683, %v6861
        %v6867 = vadd.f32 %v6686, %v6861
        %v6868 = vadd.f32 %v6689, %v6861
        %v6869 = vadd.f32 %v6692, %v6861
        %v6870 = vadd.f32 %v6695, %v6861
        %v6871 = vadd.f32 %v6698, %v6861
        %v6872 = vadd.f32 %v6701, %v6861
        %v6873 = vadd.f32 %v6704, %v6861
        %v6874 = vadd.f32 %v6707, %v6861
        %v6875 = vadd.f32 %v6710, %v6861
        %v6876 = vadd.f32 %v6713, %v6861
        %v6877 = vadd.f32 %v6716, %v6861
        %v6878 = vadd.f32 %v6719, %v6861
        %v6879 = vadd.f32 %v6722, %v6861
        %v6880 = vadd.f32 %v6725, %v6861
        %v6881 = vadd.f32 %v6728, %v6861
        %v6882 = vadd.f32 %v6731, %v6861
        %v6883 = vadd.f32 %v6734, %v6861
        %v6884 = vadd.f32 %v6737, %v6861
        %v6885 = vadd.f32 %v6740, %v6861
        %v6886 = vadd.f32 %v6743, %v6861
        %v6887 = vadd.f32 %v6746, %v6861
        %v6888 = vadd.f32 %v6749, %v6861
        %v6889 = vadd.f32 %v6752, %v6861
        %v6890 = vadd.f32 %v6755, %v6861
        %v6891 = vadd.f32 %v6758, %v6861
        %v6892 = vadd.f32 %v6761, %v6861
        %v6893 = vadd.f32 %v6764, %v6861
        %v6894 = vadd.f32 %v6767, %v6861
        %v6895 = vadd.f32 %v6770, %v6861
        %v6896 = vadd.f32 %v6773, %v6861
        %v6897 = vadd.f32 %v6776, %v6861
        %v6898 = vadd.f32 %v6779, %v6861
        %v6899 = vadd.f32 %v6782, %v6861
        %v6900 = vadd.f32 %v6785, %v6861
        %v6901 = vadd.f32 %v6788, %v6861
        %v6902 = vadd.f32 %v6791, %v6861
        %v6903 = vadd.f32 %v6794, %v6861
        %v6904 = vadd.f32 %v6797, %v6861
        %v6905 = vadd.f32 %v6800, %v6861
        %v6906 = vadd.f32 %v6803, %v6861
        %v6907 = vadd.f32 %v6806, %v6861
        %v6908 = vadd.f32 %v6809, %v6861
        %v6909 = vadd.f32 %v6812, %v6861
        %v6910 = vadd.f32 %v6815, %v6861
        %v6911 = vadd.f32 %v6818, %v6861
        %v6912 = vadd.f32 %v6821, %v6861
        %v6913 = vadd.f32 %v6824, %v6861
        %v6914 = vadd.f32 %v6827, %v6861
        %v6915 = vadd.f32 %v6830, %v6861
        %v6916 = vadd.f32 %v6833, %v6861
        %v6917 = vadd.f32 %v6836, %v6861
        %v6918 = vadd.f32 %v6839, %v6861
        %v6919 = vadd.f32 %v6842, %v6861
        %v6920 = vadd.f32 %v6845, %v6861
        %v6921 = vadd.f32 %v6848, %v6861
        %v6922 = vadd.f32 %v6851, %v6861
        %v6923 = vadd.f32 %v6854, %v6861
        %v6924 = vadd.f32 %v6857, %v6861
        %v6925 = vadd.f32 %v6860, %v6861
        %v6926 = vld [vmem:[#allocation2] sm:$0xf]
        %v6927 = vmul.f32 %v1266, %v6862
        %v6928 = vmul.f32 %v1267, %v6863
        %v6929 = vmul.f32 %v1268, %v6864
        %v6930 = vmul.f32 %v1269, %v6865
        %v6931 = vmul.f32 %v1270, %v6866
        %v6932 = vmul.f32 %v1271, %v6867
        %v6933 = vmul.f32 %v1272, %v6868
        %v6934 = vmul.f32 %v1273, %v6869
        %v6935 = vmul.f32 %v1274, %v6870
        %v6936 = vmul.f32 %v1275, %v6871
        %v6937 = vmul.f32 %v1276, %v6872
        %v6938 = vmul.f32 %v1277, %v6873
        %v6939 = vmul.f32 %v1278, %v6874
        %v6940 = vmul.f32 %v1279, %v6875
        %v6941 = vmul.f32 %v1280, %v6876
        %v6942 = vmul.f32 %v1281, %v6877
        %v6943 = vmul.f32 %v1282, %v6878
        %v6944 = vmul.f32 %v1283, %v6879
        %v6945 = vmul.f32 %v1284, %v6880
        %v6946 = vmul.f32 %v1285, %v6881
        %v6947 = vmul.f32 %v1286, %v6882
        %v6948 = vmul.f32 %v1287, %v6883
        %v6949 = vmul.f32 %v1288, %v6884
        %v6950 = vmul.f32 %v1289, %v6885
        %v6951 = vmul.f32 %v1290, %v6886
        %v6952 = vmul.f32 %v1291, %v6887
        %v6953 = vmul.f32 %v1292, %v6888
        %v6954 = vmul.f32 %v1293, %v6889
        %v6955 = vmul.f32 %v1294, %v6890
        %v6956 = vmul.f32 %v1295, %v6891
        %v6957 = vmul.f32 %v1296, %v6892
        %v6958 = vmul.f32 %v1297, %v6893
        %v6959 = vmul.f32 %v1298, %v6894
        %v6960 = vmul.f32 %v1299, %v6895
        %v6961 = vmul.f32 %v1300, %v6896
        %v6962 = vmul.f32 %v1301, %v6897
        %v6963 = vmul.f32 %v1302, %v6898
        %v6964 = vmul.f32 %v1303, %v6899
        %v6965 = vmul.f32 %v1304, %v6900
        %v6966 = vmul.f32 %v1305, %v6901
        %v6967 = vmul.f32 %v1306, %v6902
        %v6968 = vmul.f32 %v1307, %v6903
        %v6969 = vmul.f32 %v1308, %v6904
        %v6970 = vmul.f32 %v1309, %v6905
        %v6971 = vmul.f32 %v1310, %v6906
        %v6972 = vmul.f32 %v1311, %v6907
        %v6973 = vmul.f32 %v1312, %v6908
        %v6974 = vmul.f32 %v1313, %v6909
        %v6975 = vmul.f32 %v1314, %v6910
        %v6976 = vmul.f32 %v1315, %v6911
        %v6977 = vmul.f32 %v1316, %v6912
        %v6978 = vmul.f32 %v1317, %v6913
        %v6979 = vmul.f32 %v1318, %v6914
        %v6980 = vmul.f32 %v1319, %v6915
        %v6981 = vmul.f32 %v1320, %v6916
        %v6982 = vmul.f32 %v1321, %v6917
        %v6983 = vmul.f32 %v1322, %v6918
        %v6984 = vmul.f32 %v1323, %v6919
        %v6985 = vmul.f32 %v1324, %v6920
        %v6986 = vmul.f32 %v1325, %v6921
        %v6987 = vmul.f32 %v1326, %v6922
        %v6988 = vmul.f32 %v1327, %v6923
        %v6989 = vmul.f32 %v1328, %v6924
        %v6990 = vmul.f32 %v1329, %v6925
        %v6991 = vsel %vm1332, %v6927, 0.0
        %v6992 = vsel %vm1332, %v6928, 0.0
        %v6993 = vadd.f32 %v6991, %v6992
        %v6994 = vsel %vm1332, %v6929, 0.0
        %v6995 = vadd.f32 %v6993, %v6994
        %v6996 = vsel %vm1332, %v6930, 0.0
        %v6997 = vadd.f32 %v6995, %v6996
        %v6998 = vsel %vm1332, %v6931, 0.0
        %v6999 = vadd.f32 %v6997, %v6998
        %v7000 = vsel %vm1332, %v6932, 0.0
        %v7001 = vadd.f32 %v6999, %v7000
        %v7002 = vsel %vm1332, %v6933, 0.0
        %v7003 = vadd.f32 %v7001, %v7002
        %v7004 = vsel %vm1332, %v6934, 0.0
        %v7005 = vadd.f32 %v7003, %v7004
        %v7006 = vsel %vm1332, %v6935, 0.0
        %v7007 = vadd.f32 %v7005, %v7006
        %v7008 = vsel %vm1332, %v6936, 0.0
        %v7009 = vadd.f32 %v7007, %v7008
        %v7010 = vsel %vm1332, %v6937, 0.0
        %v7011 = vadd.f32 %v7009, %v7010
        %v7012 = vsel %vm1332, %v6938, 0.0
        %v7013 = vadd.f32 %v7011, %v7012
        %v7014 = vsel %vm1332, %v6939, 0.0
        %v7015 = vadd.f32 %v7013, %v7014
        %v7016 = vsel %vm1332, %v6940, 0.0
        %v7017 = vadd.f32 %v7015, %v7016
        %v7018 = vsel %vm1332, %v6941, 0.0
        %v7019 = vadd.f32 %v7017, %v7018
        %v7020 = vsel %vm1332, %v6942, 0.0
        %v7021 = vadd.f32 %v7019, %v7020
        %v7022 = vrot.slane %v7021, 4
        %v7023 = vadd.f32 %v7021, %v7022
        %v7024 = vrot.slane %v7023, 2
        %v7025 = vadd.f32 %v7023, %v7024
        %v7026 = vrot.slane %v7025, 1
        %v7027 = vadd.f32 %v7025, %v7026
        %v7028 = vsel %vm1332, %v6943, 0.0
        %v7029 = vsel %vm1332, %v6944, 0.0
        %v7030 = vadd.f32 %v7028, %v7029
        %v7031 = vsel %vm1332, %v6945, 0.0
        %v7032 = vadd.f32 %v7030, %v7031
        %v7033 = vsel %vm1332, %v6946, 0.0
        %v7034 = vadd.f32 %v7032, %v7033
        %v7035 = vsel %vm1332, %v6947, 0.0
        %v7036 = vadd.f32 %v7034, %v7035
        %v7037 = vsel %vm1332, %v6948, 0.0
        %v7038 = vadd.f32 %v7036, %v7037
        %v7039 = vsel %vm1332, %v6949, 0.0
        %v7040 = vadd.f32 %v7038, %v7039
        %v7041 = vsel %vm1332, %v6950, 0.0
        %v7042 = vadd.f32 %v7040, %v7041
        %v7043 = vsel %vm1332, %v6951, 0.0
        %v7044 = vadd.f32 %v7042, %v7043
        %v7045 = vsel %vm1332, %v6952, 0.0
        %v7046 = vadd.f32 %v7044, %v7045
        %v7047 = vsel %vm1332, %v6953, 0.0
        %v7048 = vadd.f32 %v7046, %v7047
        %v7049 = vsel %vm1332, %v6954, 0.0
        %v7050 = vadd.f32 %v7048, %v7049
        %v7051 = vsel %vm1332, %v6955, 0.0
        %v7052 = vadd.f32 %v7050, %v7051
        %v7053 = vsel %vm1332, %v6956, 0.0
        %v7054 = vadd.f32 %v7052, %v7053
        %v7055 = vsel %vm1332, %v6957, 0.0
        %v7056 = vadd.f32 %v7054, %v7055
        %v7057 = vsel %vm1332, %v6958, 0.0
        %v7058 = vadd.f32 %v7056, %v7057
        %v7059 = vrot.slane %v7058, 4
        %v7060 = vadd.f32 %v7058, %v7059
        %v7061 = vrot.slane %v7060, 2
        %v7062 = vadd.f32 %v7060, %v7061
        %v7063 = vrot.slane %v7062, 1
        %v7064 = vadd.f32 %v7062, %v7063
        %v7065 = vsel %vm1332, %v6959, 0.0
        %v7066 = vsel %vm1332, %v6960, 0.0
        %v7067 = vadd.f32 %v7065, %v7066
        %v7068 = vsel %vm1332, %v6961, 0.0
        %v7069 = vadd.f32 %v7067, %v7068
        %v7070 = vsel %vm1332, %v6962, 0.0
        %v7071 = vadd.f32 %v7069, %v7070
        %v7072 = vsel %vm1332, %v6963, 0.0
        %v7073 = vadd.f32 %v7071, %v7072
        %v7074 = vsel %vm1332, %v6964, 0.0
        %v7075 = vadd.f32 %v7073, %v7074
        %v7076 = vsel %vm1332, %v6965, 0.0
        %v7077 = vadd.f32 %v7075, %v7076
        %v7078 = vsel %vm1332, %v6966, 0.0
        %v7079 = vadd.f32 %v7077, %v7078
        %v7080 = vsel %vm1332, %v6967, 0.0
        %v7081 = vadd.f32 %v7079, %v7080
        %v7082 = vsel %vm1332, %v6968, 0.0
        %v7083 = vadd.f32 %v7081, %v7082
        %v7084 = vsel %vm1332, %v6969, 0.0
        %v7085 = vadd.f32 %v7083, %v7084
        %v7086 = vsel %vm1332, %v6970, 0.0
        %v7087 = vadd.f32 %v7085, %v7086
        %v7088 = vsel %vm1332, %v6971, 0.0
        %v7089 = vadd.f32 %v7087, %v7088
        %v7090 = vsel %vm1332, %v6972, 0.0
        %v7091 = vadd.f32 %v7089, %v7090
        %v7092 = vsel %vm1332, %v6973, 0.0
        %v7093 = vadd.f32 %v7091, %v7092
        %v7094 = vsel %vm1332, %v6974, 0.0
        %v7095 = vadd.f32 %v7093, %v7094
        %v7096 = vrot.slane %v7095, 4
        %v7097 = vadd.f32 %v7095, %v7096
        %v7098 = vrot.slane %v7097, 2
        %v7099 = vadd.f32 %v7097, %v7098
        %v7100 = vrot.slane %v7099, 1
        %v7101 = vadd.f32 %v7099, %v7100
        %v7102 = vsel %vm1332, %v6975, 0.0
        %v7103 = vsel %vm1332, %v6976, 0.0
        %v7104 = vadd.f32 %v7102, %v7103
        %v7105 = vsel %vm1332, %v6977, 0.0
        %v7106 = vadd.f32 %v7104, %v7105
        %v7107 = vsel %vm1332, %v6978, 0.0
        %v7108 = vadd.f32 %v7106, %v7107
        %v7109 = vsel %vm1332, %v6979, 0.0
        %v7110 = vadd.f32 %v7108, %v7109
        %v7111 = vsel %vm1332, %v6980, 0.0
        %v7112 = vadd.f32 %v7110, %v7111
        %v7113 = vsel %vm1332, %v6981, 0.0
        %v7114 = vadd.f32 %v7112, %v7113
        %v7115 = vsel %vm1332, %v6982, 0.0
        %v7116 = vadd.f32 %v7114, %v7115
        %v7117 = vsel %vm1332, %v6983, 0.0
        %v7118 = vadd.f32 %v7116, %v7117
        %v7119 = vsel %vm1332, %v6984, 0.0
        %v7120 = vadd.f32 %v7118, %v7119
        %v7121 = vsel %vm1332, %v6985, 0.0
        %v7122 = vadd.f32 %v7120, %v7121
        %v7123 = vsel %vm1332, %v6986, 0.0
        %v7124 = vadd.f32 %v7122, %v7123
        %v7125 = vsel %vm1332, %v6987, 0.0
        %v7126 = vadd.f32 %v7124, %v7125
        %v7127 = vsel %vm1332, %v6988, 0.0
        %v7128 = vadd.f32 %v7126, %v7127
        %v7129 = vsel %vm1332, %v6989, 0.0
        %v7130 = vadd.f32 %v7128, %v7129
        %v7131 = vsel %vm1332, %v6990, 0.0
        %v7132 = vadd.f32 %v7130, %v7131
        %v7133 = vrot.slane %v7132, 4
        %v7134 = vadd.f32 %v7132, %v7133
        %v7135 = vrot.slane %v7134, 2
        %v7136 = vadd.f32 %v7134, %v7135
        %v7137 = vrot.slane %v7136, 1
        %v7138 = vadd.f32 %v7136, %v7137
        %vm7143 = vcmask 1041409
        %v7144 = vsel %vm7143, %v7064, %v7027
        %vm7145 = vcmask 1042434
        %v7146 = vsel %vm7145, %v7101, %v7144
        %vm7147 = vcmask 1043459
        %v7148 = vsel %vm7147, %v7138, %v7146
        %v7150 = vadd.f32 %v6926, %v7148
        %vm7151 = vcmask 60416
        %7152 = vst.msk [vmem:[#allocation2] sm:$0xf] %vm7151, %v7150
        %p7153 = scmp.eq.s32.totalorder %s28, 2
        // Predicated region
        $region127: #{din_forward.1} parent=113 // pred_check
          %p7154 = pneg %p7153
        $region128: #{din_forward.1} parent=113 // pred_check_branch
          %7156 = sbr.rel (%p7154) target = $region130
        $region129: #{din_forward.1} parent=113 // pred_region
          %v7157 = vld [vmem:[#allocation2] sm:$0xf]
          %7158 = vrot.lane.b32.xlu0 %v812, 8
          %v7159 = vpop.permute.xlu0 %7158
          %v7161 = vsel %vm1332, %v7157, %v7159
          %v7162 = vpack.c.bf16 %v7161, %v7161
          %v7163 = vld [vmem:[%s10] sm:$0xf]
          %v7164 = vld [vmem:[%s10 + $0x4] sm:$0xf]
          %v7165 = vld [vmem:[%s11] sm:$0x1]
          %v7167 = vperm.slane %v7165, 0
          %v7171 = vunpack.c.l.b16 %v7163
          %v7172 = vunpack.c.l.b16 %v7164
          %v7173 = vpack.c.b16 %v7172, %v7171
          %v7176 = vsel %vm1789, %v7162, 0
          %7178 = vmatpush.bf16.msra.mxu0 0
          %7179 = vmatpush.bf16.msra.mxu0 0
          %7180 = vmatpush.bf16.msra.mxu0 0
          %7181 = vmatpush.bf16.msra.mxu0 0
          %7182 = vmatpush.bf16.msra.mxu0 0
          %7183 = vmatpush.bf16.msra.mxu0 0
          %7184 = vmatpush.bf16.msra.mxu0 0
          %7185 = vmatpush.bf16.msra.mxu0 %v7173
          %7186 = vmatmul.bf16.gmra.mxu0 %v7176
          %v7187 = vpop.f32.mrf.mxu0
          %v7188 = vadd.f32 %v7167, %v7187
          %v7189 = vpop.f32.mrf.mxu0
          %7190 = vdwg.mxu0
          %v7191 = vmax.f32 %v7188, 0.0
          %v7192 = vpack.c.bf16 %v7191, %v7191
          %v7193 = vld [vmem:[%s12] sm:$0xf]
          %v7194 = vld [vmem:[%s12 + $0x4] sm:$0xf]
          %v7195 = vld [vmem:[%s12 + $0x8] sm:$0xf]
          %v7196 = vld [vmem:[%s12 + $0xc] sm:$0xf]
          %v7197 = vld [vmem:[%s13] sm:$0x1]
          %v7199 = vperm.slane %v7197, 0
          %v7205 = vunpack.c.l.b16 %v7193
          %v7206 = vunpack.c.l.b16 %v7194
          %v7207 = vunpack.c.l.b16 %v7195
          %v7208 = vunpack.c.l.b16 %v7196
          %v7209 = vpack.c.b16 %v7206, %v7205
          %v7210 = vpack.c.b16 %v7208, %v7207
          %v7214 = vsel %vm2199, %v7192, 0
          %7216 = vmatpush.bf16.msra.mxu0 0
          %7217 = vmatpush.bf16.msra.mxu0 0
          %7218 = vmatpush.bf16.msra.mxu0 0
          %7219 = vmatpush.bf16.msra.mxu0 0
          %7220 = vmatpush.bf16.msra.mxu0 0
          %7221 = vmatpush.bf16.msra.mxu0 0
          %7222 = vmatpush.bf16.msra.mxu0 %v7210
          %7223 = vmatpush.bf16.msra.mxu0 %v7209
          %7224 = vmatmul.bf16.gmra.mxu0 %v7214
          %v7225 = vpop.f32.mrf.mxu0
          %v7226 = vadd.f32 %v7199, %v7225
          %v7227 = vpop.f32.mrf.mxu0
          %7228 = vdwg.mxu0
          %v7229 = vmax.f32 %v7226, 0.0
          %v7230 = vld [vmem:[%s14] sm:$0x1]
          %v7232 = vperm.slane %v7230, 0
          %v7234 = vmul.f32 %v7229, %v7232
          %vm7235 = vcmask 125952
          %v7236 = vsel %vm7235, %v7234, 0.0
          %7237 = vadd.xlane.f32.xlu0 %v7236
          %v7238 = vpop.xlane.xlu0 %7237
          %v7239 = vstv %s805
          %v7240 = vadd.f32 %v7238, %v7239
          %v7241 = vxor.u32 %v7240, 2147483648
          %v7242 = vmul.f32 %v7241, 1.442695
          %v7243 = vpow.pop %v7242
          %v7244 = vadd.f32 %v7243, 1.0
          %v7245 = vrcp.pop %v7244
          %v7246 = vmul.f32 %v7244, %v7245
          %v7247 = vsub.f32 1.0, %v7246
          %v7248 = vmul.f32 %v7245, %v7247
          %v7249 = vadd.f32 %v7245, %v7248
          %vm7250 = vweird.f32 %v7244
          %vm7251 = vweird.f32 %v7245
          %vm7252 = vmor %vm7250, %vm7251
          %v7253 = vsel %vm7252, %v7245, %v7249
          %v7254 = vand.u32 2147483647, %v7244
          %vm7255 = vcmp.eq.f32.partialorder %v7254, 8.507059e+37
          %v7256 = vand.u32 %v7244, 2147483648
          %v7257 = vor.u32 1.1754944e-38, %v7256
          %v7258 = vsel %vm7255, %v7257, %v7253
          %v7259 = vmul.f32 1.0, %v7258
          %v7261 = vlaneseq
          %v7262 = vand.u32 %v7261, 127
          %v7263 = vperm.slane %v7259, %v7262
          %vm7265 = vcmask 24576
          %7266 = vst.msk [vmem:[#allocation7] sm:$0x1] %vm7265, %v7263
        $region130: #{din_forward.1} parent=113 // pred_fallthru
          _
        // Predicated region
        $region131: #{din_forward.1} parent=113 // pred_check
          %p7267 = pneg %p366
        $region132: #{din_forward.1} parent=113 // pred_check_branch
          %7269 = sbr.rel (%p7267) target = $region134
        $region133: #{din_forward.1} parent=113 // pred_region
          %7271 = vsyncadd [#allocation4], 0
          %s7273 = sshll.u32 [#allocation7], 4
          %s7274 = int_to_ptr.vmem [resolvable:$true] %s7273
          %s7275 = sshll.u32 %s15, 4
          %s7276 = int_to_ptr.hbm [resolvable:$true] %s7275
          %7278 = dma.vmem_to_hbm [thread:$0]  %s7274, 16, %s7276, [#allocation4]
        $region134: #{din_forward.1} parent=113 // pred_fallthru
          _
        // Predicated region
        $region135: #{din_forward.1} parent=113 // pred_check
          %p7279 = pneg %p366
        $region136: #{din_forward.1} parent=113 // pred_check_branch
          %7281 = sbr.rel (%p7279) target = $region138
        $region137: #{din_forward.1} parent=113 // pred_region
          %7283 = dma.done [#allocation4], 16
        $region138: #{din_forward.1} parent=113 // pred_fallthru
          _
      $region114: #{din_forward.1} parent=5 // pred_fallthru
        _
      %p7284 = scmp.le.s32.totalorder 2, %s23
      // Predicated region
      $region139: #{din_forward.1} parent=5 // pred_check
        %p7285 = pneg %p7284
      $region140: #{din_forward.1} parent=5 // pred_check_branch
        %7287 = sbr.rel (%p7285) target = $region142
      $region141: #{din_forward.1} parent=5 // pred_region
        %s7288 = ssub.s32 %s23, 2
      $region142: #{din_forward.1} parent=5 // pred_fallthru
        _
    $region6: #{din_forward.1} parent=1 // loop_footer
      %s27 = sadd.s32 1, %s23
    $region7: #{din_forward.1} parent=1 // loop_footer_branch
      %22 = sbr.rel target = $region3
    $region8: #{din_forward.1} parent=1 // loop_exit
      _
    %7289 = vsyncpa [#allocation4], 1
    %s7290 = scalar_lea.sflag [#allocation4], 1
    %7291 = vsyncpa %s7290, 1
    %7292 = vsyncpa [#allocation5], 1
    %s7293 = scalar_lea.sflag [#allocation5], 1
    %7294 = vsyncpa %s7293, 1

</llo_original>
